<compile_context>
chip_gen: v6e
topology: v6e:2x2x1
jax: 0.10.0
libtpu: 0.0.40
codegen_flags: <defaults>
</compile_context>

<pallas_src>
import functools

import jax
import jax.numpy as jnp
from jax.experimental import pallas as pl
from jax.experimental.pallas import tpu as pltpu


# ----------------------------------------------------------------------------
# small helpers
# ----------------------------------------------------------------------------

_VMEM_LIMIT = 48 * 1024 * 1024   # safe on v5e/v6e (128 MiB) and v7x (64 MiB)


def _round_up(x, m):
    return ((x + m - 1) // m) * m


def _pick_tile(mp):
    # mp is always a multiple of 128
    for t in (512, 256, 128):
        if mp % t == 0:
            return t
    return mp


# ----------------------------------------------------------------------------
# Pallas kernels
# ----------------------------------------------------------------------------

def _conv_mm_kernel(w_ref, p_ref, b_ref, o_ref, *, activation, pre_relu):
    """o = act(W @ P + b).  W:(Cout,K) bf16, P:(K,TM) bf16, b:(Cout,1) f32."""
    p = p_ref[...]
    if pre_relu:
        p = jnp.maximum(p, 0)
    acc = jnp.dot(w_ref[...], p, preferred_element_type=jnp.float32)
    acc = acc + b_ref[...]
    if activation == "relu":
        acc = jnp.maximum(acc, 0.0)
    elif activation == "sigmoid":
        acc = jax.nn.sigmoid(acc)   # f32 epilogue (v5e has no bf16 EUP)
    o_ref[...] = acc


def _conv_mm_skip_kernel(w_ref, p_ref, b_ref, s_ref, o_ref, *,
                         pre_relu, final_relu):
    """Residual fusion: o = [relu](W @ P + b + skip)."""
    p = p_ref[...]
    if pre_relu:
        p = jnp.maximum(p, 0)
    acc = jnp.dot(w_ref[...], p, preferred_element_type=jnp.float32)
    acc = acc + b_ref[...] + s_ref[...]
    if final_relu:
        acc = jnp.maximum(acc, 0.0)
    o_ref[...] = acc


def _mask_split_kernel(w_ref, p_ref, b_ref, amp_ref, mask_ref, a1_ref, a2_ref):
    """Masknet final conv + sigmoid + mask split fused."""
    acc = jnp.dot(w_ref[...], p_ref[...], preferred_element_type=jnp.float32)
    mask = jax.nn.sigmoid(acc + b_ref[...])
    amp = amp_ref[...]
    mask_ref[...] = mask
    a1_ref[...] = mask * amp
    a2_ref[...] = (1.0 - mask) * amp


def _neg_add_kernel(a_ref, b_ref, o_ref):
    o_ref[...] = -(a_ref[...] + b_ref[...])


def _vq_kernel(z_ref, e_ref, et_ref, zq_ref, idx_ref, mse_ref, ppl_ref,
               msum, esum, *, M, TM):
    """Vector quantization in (D, M) layout.

    z:(D,TM) f32, e:(K,D) f32, et:(D,K) f32.
    Outputs: zq:(D,TM), idx:(1,TM) int32, mse:(1,1), perplexity:(1,1).
    Accumulates sum-of-squared-error and code counts across M tiles.
    """
    i = pl.program_id(0)

    @pl.when(i == 0)
    def _():
        msum[...] = jnp.zeros_like(msum)
        esum[...] = jnp.zeros_like(esum)

    z = z_ref[...]                                           # (D, TM)
    e = e_ref[...]                                           # (K, D)
    et = et_ref[...]                                         # (D, K)
    kc = e.shape[0]
    d_dim = z.shape[0]

    zz = jnp.sum(z * z, axis=0, keepdims=True)               # (1, TM)
    ee = jnp.sum(e * e, axis=1, keepdims=True)               # (K, 1)
    cross = jnp.dot(e, z, preferred_element_type=jnp.float32)  # (K, TM)
    d = zz + ee - 2.0 * cross                                # (K, TM)

    iota_k = jax.lax.broadcasted_iota(jnp.int32, d.shape, 0)
    dmin = jnp.min(d, axis=0, keepdims=True)
    # first index attaining the minimum (matches torch.argmin tie-breaking)
    idx = jnp.min(jnp.where(d == dmin, iota_k, kc), axis=0, keepdims=True)

    col = jax.lax.broadcasted_iota(jnp.int32, d.shape, 1) + i * TM
    valid = (col < M).astype(jnp.float32)                    # mask pad columns
    onehot = jnp.where(iota_k == idx, 1.0, 0.0) * valid      # (K, TM)

    zq = jnp.dot(et, onehot, preferred_element_type=jnp.float32)  # (D, TM)

    diff = zq - z                     # pad columns are exactly 0 on both sides
    sq = jnp.sum(diff * diff, axis=1, keepdims=True)         # (D, 1)
    msum[...] = msum[...] + jnp.sum(sq, axis=0, keepdims=True)
    esum[...] = esum[...] + jnp.sum(onehot, axis=1, keepdims=True)

    zq_ref[...] = zq
    idx_ref[...] = idx.astype(jnp.int32)

    # finalize every step; last step's value is what lands in HBM
    mse_ref[...] = msum[...] * (1.0 / (M * d_dim))
    e_mean = esum[...] * (1.0 / M)
    ent = jnp.sum(e_mean * jnp.log(e_mean + 1e-10), axis=(0, 1), keepdims=True)
    ppl_ref[...] = jnp.exp(-ent)


def _ssim_kernel(xp_ref, yp_ref, o_ref, *, B, H, W, c1, c2):
    """Separable 11x11 box filters of x, y, xx, yy, xy + SSIM map + mean."""
    def box(a):                       # a: (H+10, W+10), zero padded
        h = a[:, 0:W]
        for j in range(1, 11):
            h = h + a[:, j:j + W]
        v = h[0:H, :]
        for r in range(1, 11):
            v = v + h[r:r + H, :]
        return v * (1.0 / 121.0)

    total = jnp.zeros((1, 1), jnp.float32)
    for b in range(B):                # B is small & static
        xb = xp_ref[b]
        yb = yp_ref[b]
        mu_x = box(xb)
        mu_y = box(yb)
        e_xx = box(xb * xb)
        e_yy = box(yb * yb)
        e_xy = box(xb * yb)
        s_x = e_xx - mu_x * mu_x
        s_y = e_yy - mu_y * mu_y
        s_xy = e_xy - mu_x * mu_y
        num = (2.0 * mu_x * mu_y + c1) * (2.0 * s_xy + c2)
        den = (mu_x * mu_x + mu_y * mu_y + c1) * (s_x + s_y + c2)
        total = total + jnp.sum(num / den, axis=(0, 1), keepdims=True)
    o_ref[...] = total * (1.0 / (B * H * W))


# ----------------------------------------------------------------------------
# Pallas wrappers
# ----------------------------------------------------------------------------

def pallas_conv_mm(w, p, b, activation=None, pre_relu=False,
                   skip=None, final_relu=False):
    """(Cout,K) @ (K,M) + b, tiled over M (lane-dense output)."""
    cout, k = w.shape
    _, m = p.shape
    mp = _round_up(m, 128)
    if mp != m:
        p = jnp.pad(p, ((0, 0), (0, mp - m)))
        if skip is not None:
            skip = jnp.pad(skip, ((0, 0), (0, mp - m)))
    tm = _pick_tile(mp)
    grid = (mp // tm,)

    w_bf = w.astype(jnp.bfloat16)
    p_bf = p.astype(jnp.bfloat16)
    b2 = b.reshape(cout, 1).astype(jnp.float32)

    in_specs = [pl.BlockSpec((cout, k), lambda i: (0, 0)),
                pl.BlockSpec((k, tm), lambda i: (0, i)),
                pl.BlockSpec((cout, 1), lambda i: (0, 0))]
    args = [w_bf, p_bf, b2]
    if skip is not None:
        in_specs.append(pl.BlockSpec((cout, tm), lambda i: (0, i)))
        args.append(skip.astype(jnp.float32))
        kernel = functools.partial(_conv_mm_skip_kernel,
                                   pre_relu=pre_relu, final_relu=final_relu)
    else:
        kernel = functools.partial(_conv_mm_kernel,
                                   activation=activation, pre_relu=pre_relu)

    out = pl.pallas_call(
        kernel,
        out_shape=jax.ShapeDtypeStruct((cout, mp), jnp.float32),
        grid=grid,
        in_specs=in_specs,
        out_specs=pl.BlockSpec((cout, tm), lambda i: (0, i)),
        compiler_params=pltpu.CompilerParams(
            dimension_semantics=("parallel",),
            vmem_limit_bytes=_VMEM_LIMIT),
    )(*args)
    return out[:, :m] if mp != m else out


def pallas_conv_sigmoid_split(w, p, b, amp_flat):
    """Masknet final conv fused with sigmoid and mask/amp split."""
    cout, k = w.shape                       # cout == 1
    _, m = p.shape
    mp = _round_up(m, 128)
    if mp != m:
        p = jnp.pad(p, ((0, 0), (0, mp - m)))
        amp_flat = jnp.pad(amp_flat, ((0, 0), (0, mp - m)))
    tm = _pick_tile(mp)
    grid = (mp // tm,)

    mask, a1, a2 = pl.pallas_call(
        _mask_split_kernel,
        out_shape=(jax.ShapeDtypeStruct((cout, mp), jnp.float32),) * 3,
        grid=grid,
        in_specs=[pl.BlockSpec((cout, k), lambda i: (0, 0)),
                  pl.BlockSpec((k, tm), lambda i: (0, i)),
                  pl.BlockSpec((cout, 1), lambda i: (0, 0)),
                  pl.BlockSpec((cout, tm), lambda i: (0, i))],
        out_specs=(pl.BlockSpec((cout, tm), lambda i: (0, i)),) * 3,
        compiler_params=pltpu.CompilerParams(
            dimension_semantics=("parallel",),
            vmem_limit_bytes=_VMEM_LIMIT),
    )(w.astype(jnp.bfloat16), p.astype(jnp.bfloat16),
      b.reshape(cout, 1).astype(jnp.float32), amp_flat.astype(jnp.float32))
    return mask[:, :m], a1[:, :m], a2[:, :m]


def pallas_vector_quantize(z_t, codebook):
    """z_t: (D, M) f32, codebook: (K, D) f32."""
    d_dim, m = z_t.shape
    kc = codebook.shape[0]
    mp = _round_up(m, 128)
    if mp != m:
        z_t = jnp.pad(z_t, ((0, 0), (0, mp - m)))
    tm = _pick_tile(mp)
    grid = (mp // tm,)

    kernel = functools.partial(_vq_kernel, M=m, TM=tm)
    zq, idx, mse, ppl = pl.pallas_call(
        kernel,
        out_shape=(jax.ShapeDtypeStruct((d_dim, mp), jnp.float32),
                   jax.ShapeDtypeStruct((1, mp), jnp.int32),
                   jax.ShapeDtypeStruct((1, 1), jnp.float32),
                   jax.ShapeDtypeStruct((1, 1), jnp.float32)),
        grid=grid,
        in_specs=[pl.BlockSpec((d_dim, tm), lambda i: (0, i)),
                  pl.BlockSpec((kc, d_dim), lambda i: (0, 0)),
                  pl.BlockSpec((d_dim, kc), lambda i: (0, 0))],
        out_specs=(pl.BlockSpec((d_dim, tm), lambda i: (0, i)),
                   pl.BlockSpec((1, tm), lambda i: (0, i)),
                   pl.BlockSpec((1, 1), lambda i: (0, 0)),
                   pl.BlockSpec((1, 1), lambda i: (0, 0))),
        scratch_shapes=[pltpu.VMEM((1, 1), jnp.float32),
                        pltpu.VMEM((kc, 1), jnp.float32)],
        compiler_params=pltpu.CompilerParams(
            dimension_semantics=("arbitrary",),
            vmem_limit_bytes=_VMEM_LIMIT),
    )(z_t.astype(jnp.float32), codebook.astype(jnp.float32),
      codebook.T.astype(jnp.float32))
    return zq[:, :m], idx[0, :m], mse[0, 0], ppl[0, 0]


def pallas_neg_add(a, b):
    """-(a + b), flattened lane-dense."""
    shape = a.shape
    total = a.size
    lp = _round_up(total, 128)
    a2 = jnp.pad(a.reshape(1, total), ((0, 0), (0, lp - total)))
    b2 = jnp.pad(b.reshape(1, total), ((0, 0), (0, lp - total)))
    tm = _pick_tile(lp)
    out = pl.pallas_call(
        _neg_add_kernel,
        out_shape=jax.ShapeDtypeStruct((1, lp), jnp.float32),
        grid=(lp // tm,),
        in_specs=[pl.BlockSpec((1, tm), lambda i: (0, i))] * 2,
        out_specs=pl.BlockSpec((1, tm), lambda i: (0, i)),
        compiler_params=pltpu.CompilerParams(
            dimension_semantics=("parallel",)),
    )(a2.astype(jnp.float32), b2.astype(jnp.float32))
    return out[:, :total].reshape(shape)


def pallas_ssim_loss(x_cm, y_cm, c1=1e-4, c2=9e-4):
    """x_cm, y_cm: (1, N, H, W) channel-major; returns 1 - mean(ssim_map)."""
    x3 = x_cm[0]
    y3 = y_cm[0]
    n, h, w = x3.shape
    xp = jnp.pad(x3, ((0, 0), (5, 5), (5, 5))).astype(jnp.float32)
    yp = jnp.pad(y3, ((0, 0), (5, 5), (5, 5))).astype(jnp.float32)
    kernel = functools.partial(_ssim_kernel, B=n, H=h, W=w, c1=c1, c2=c2)
    out = pl.pallas_call(
        kernel,
        out_shape=jax.ShapeDtypeStruct((1, 1), jnp.float32),
        grid=(1,),
        in_specs=[pl.BlockSpec((n, h + 10, w + 10), lambda i: (0, 0, 0))] * 2,
        out_specs=pl.BlockSpec((1, 1), lambda i: (0, 0)),
        compiler_params=pltpu.CompilerParams(
            dimension_semantics=("arbitrary",)),
    )(xp, yp)
    return 1.0 - out[0, 0]


# ----------------------------------------------------------------------------
# Conv glue (im2col in channel-major layout, matmul in Pallas)
# ----------------------------------------------------------------------------

def im2col_cm(x, kh, kw, stride, pad):
    """x: (C, N, H, W) -> patches (C*kh*kw, N*Ho*Wo)."""
    x = jnp.pad(x, ((0, 0), (0, 0), (pad, pad), (pad, pad)))
    c, n, h, w = x.shape
    ho = (h - kh) // stride + 1
    wo = (w - kw) // stride + 1
    cols = []
    for i in range(kh):
        for j in range(kw):
            cols.append(x[:, :, i:i + stride * ho:stride, j:j + stride * wo:stride])
    p = jnp.stack(cols, axis=1)                       # (C, kh*kw, N, Ho, Wo)
    return p.reshape(c * kh * kw, n * ho * wo), ho, wo


def conv2d_cm(x, w, b, stride=1, pad=0, activation=None, pre_relu=False,
              skip=None, final_relu=False):
    """x: (Cin, N, H, W); w: (Cout, Cin, kh, kw); b: (Cout,) -> (Cout, N, Ho, Wo)."""
    cout, cin, kh, kw = w.shape
    n = x.shape[1]
    patches, ho, wo = im2col_cm(x, kh, kw, stride, pad)
    w_flat = w.reshape(cout, cin * kh * kw)
    skip_flat = None if skip is None else skip.reshape(cout, -1)
    out = pallas_conv_mm(w_flat, patches, b, activation=activation,
                         pre_relu=pre_relu, skip=skip_flat,
                         final_relu=final_relu)
    return out.reshape(cout, n, ho, wo)


def conv_transpose2d_cm(x, w, b, stride, pad, activation=None):
    """x: (Cin, N, H, W); w: (Cin, Cout, kh, kw) (PyTorch ConvTranspose2d layout)."""
    cin, n, h, wdt = x.shape
    _, cout, kh, kw = w.shape
    if stride > 1:
        hd = (h - 1) * stride + 1
        wd = (wdt - 1) * stride + 1
        xd = jnp.zeros((cin, n, hd, wd), x.dtype)
        xd = xd.at[:, :, ::stride, ::stride].set(x)
    else:
        xd = x
    w_eq = jnp.flip(w, axis=(2, 3)).transpose(1, 0, 2, 3)   # (Cout, Cin, kh, kw)
    return conv2d_cm(xd, w_eq, b, stride=1, pad=kh - 1 - pad,
                     activation=activation)


# ----------------------------------------------------------------------------
# Parameter init (deterministic stand-ins)
# ----------------------------------------------------------------------------

def _conv_params(key, cout, cin, kh, kw):
    fan_in = cin * kh * kw
    w = jax.random.normal(key, (cout, cin, kh, kw), jnp.float32) / jnp.sqrt(fan_in)
    b = jnp.zeros((cout,), jnp.float32)
    return w, b


def _convT_params(key, cin, cout, kh, kw):
    fan_in = cin * kh * kw
    w = jax.random.normal(key, (cin, cout, kh, kw), jnp.float32) / jnp.sqrt(fan_in)
    b = jnp.zeros((cout,), jnp.float32)
    return w, b


def init_masknet(key, hidden=16):
    k1, k2, k3 = jax.random.split(key, 3)
    return {"c1": _conv_params(k1, hidden, 1, 3, 3),
            "c2": _conv_params(k2, hidden, hidden, 3, 3),
            "c3": _conv_params(k3, 1, hidden, 3, 3)}


def init_residual_stack(key, in_dim, h_dim, res_h_dim, n_layers):
    layers = []
    for _ in range(n_layers):
        k1, k2, key = jax.random.split(key, 3)
        layers.append({"c3": _conv_params(k1, res_h_dim, in_dim, 3, 3),
                       "c1": _conv_params(k2, h_dim, res_h_dim, 1, 1)})
    return layers


def init_encoder(key, in_dim, h_dim, res_h_dim, n_res_layers):
    k1, k2, k3, k4 = jax.random.split(key, 4)
    return {"c1": _conv_params(k1, h_dim // 2, in_dim, 4, 4),
            "c2": _conv_params(k2, h_dim, h_dim // 2, 4, 4),
            "c3": _conv_params(k3, h_dim, h_dim, 3, 3),
            "res": init_residual_stack(k4, h_dim, h_dim, res_h_dim, n_res_layers)}


def init_decoder(key, in_dim, h_dim, res_h_dim, n_res_layers, out_dim):
    k1, k2, k3, k4 = jax.random.split(key, 4)
    return {"ct1": _convT_params(k1, in_dim, h_dim, 3, 3),
            "res": init_residual_stack(k2, h_dim, h_dim, res_h_dim, n_res_layers),
            "ct2": _convT_params(k3, h_dim, h_dim // 2, 4, 4),
            "ct3": _convT_params(k4, h_dim // 2, out_dim, 4, 4)}


def init_vqvae(key, in_dim, h_dim, res_h_dim, n_res_layers, n_embeddings,
               embedding_dim):
    ke, kq, kc, kd = jax.random.split(key, 4)
    return {
        "enc": init_encoder(ke, in_dim, h_dim, res_h_dim, n_res_layers),
        "pre_quant": _conv_params(kq, embedding_dim, h_dim, 1, 1),
        "codebook": jax.random.uniform(kc, (n_embeddings, embedding_dim),
                                       jnp.float32,
                                       -1.0 / n_embeddings, 1.0 / n_embeddings),
        "dec": init_decoder(kd, embedding_dim, h_dim, res_h_dim, n_res_layers,
                            in_dim),
    }


def init_mmslim(key, h_dim, res_h_dim, n_res_layers, n_embeddings, embedding_dim):
    km, k1, k2 = jax.random.split(key, 3)
    return {"masknet": init_masknet(km),
            "vqvae_1": init_vqvae(k1, 1, h_dim, res_h_dim, n_res_layers,
                                  n_embeddings, embedding_dim),
            "vqvae_2": init_vqvae(k2, 1, h_dim, res_h_dim, n_res_layers,
                                  n_embeddings, embedding_dim)}


# ----------------------------------------------------------------------------
# Model forward (glue around Pallas kernels, channel-major layout throughout)
# ----------------------------------------------------------------------------

def masknet_forward_and_split(p, x_cm, amp_cm):
    _, n, h, w = x_cm.shape
    hid = conv2d_cm(x_cm, *p["c1"], stride=1, pad=1, activation="relu")
    hid = conv2d_cm(hid, *p["c2"], stride=1, pad=1, activation="relu")
    w3, b3 = p["c3"]
    cout, cin, kh, kw = w3.shape
    patches, ho, wo = im2col_cm(hid, kh, kw, 1, 1)
    amp_flat = amp_cm.reshape(1, n * h * w)
    mask, a1, a2 = pallas_conv_sigmoid_split(
        w3.reshape(cout, cin * kh * kw), patches, b3, amp_flat)
    shape = (1, n, ho, wo)
    return mask.reshape(shape), a1.reshape(shape), a2.reshape(shape)


def residual_stack_forward(layers, x):
    n_layers = len(layers)
    for i, lyr in enumerate(layers):
        # ResidualLayer: ReLU -> Conv3x3 -> ReLU -> Conv1x1, then fused skip-add.
        h = conv2d_cm(x, *lyr["c3"], stride=1, pad=1, pre_relu=True,
                      activation="relu")
        x = conv2d_cm(h, *lyr["c1"], stride=1, pad=0, skip=x,
                      final_relu=(i == n_layers - 1))  # final stack-level ReLU
    return x


def encoder_forward(p, x):
    h = conv2d_cm(x, *p["c1"], stride=2, pad=1, activation="relu")
    h = conv2d_cm(h, *p["c2"], stride=2, pad=1, activation="relu")
    h = conv2d_cm(h, *p["c3"], stride=1, pad=1)
    return residual_stack_forward(p["res"], h)


def decoder_forward(p, z):
    h = conv_transpose2d_cm(z, *p["ct1"], stride=1, pad=1)
    h = residual_stack_forward(p["res"], h)
    h = conv_transpose2d_cm(h, *p["ct2"], stride=2, pad=1, activation="relu")
    return conv_transpose2d_cm(h, *p["ct3"], stride=2, pad=1)


def vqvae_forward(p, x_cm, beta):
    z_e = encoder_forward(p["enc"], x_cm)                      # (h_dim, N, Hf, Wf)
    z_e = conv2d_cm(z_e, *p["pre_quant"], stride=1, pad=0)     # (D, N, Hf, Wf)
    d, n, hf, wf = z_e.shape
    z_t = z_e.reshape(d, n * hf * wf)
    zq, indices, mse, perplexity = pallas_vector_quantize(z_t, p["codebook"])
    # ||sg(zq) - z||^2 + beta * ||zq - sg(z)||^2 (forward value of both = mse)
    embedding_loss = mse + beta * mse
    z_q = zq.reshape(d, n, hf, wf)
    x_hat = decoder_forward(p["dec"], z_q)                     # (1, N, H, W)
    return embedding_loss, x_hat, perplexity, indices


def mmslim_forward(params, x, amp, beta):
    # NCHW -> channel-major (C, N, H, W); C == 1 so this is a cheap transpose.
    x_cm = jnp.transpose(x, (1, 0, 2, 3))
    amp_cm = jnp.transpose(amp, (1, 0, 2, 3))

    mask_cm, amp1_cm, amp2_cm = masknet_forward_and_split(
        params["masknet"], x_cm, amp_cm)

    amp1_loss, amp1_hat, amp1_ppl, _idx1 = vqvae_forward(
        params["vqvae_1"], amp1_cm, beta)
    amp2_loss, amp2_hat, amp2_ppl, _idx2 = vqvae_forward(
        params["vqvae_2"], amp2_cm, beta)

    amp_hat_cm = pallas_neg_add(amp1_hat, amp2_hat)            # (a1 + a2) * -1
    ssim1 = pallas_ssim_loss(amp1_cm, amp1_hat)
    ssim2 = pallas_ssim_loss(amp2_cm, amp2_hat)

    amp_hat = jnp.transpose(amp_hat_cm, (1, 0, 2, 3))
    mask = jnp.transpose(mask_cm, (1, 0, 2, 3))
    return (amp_hat, amp1_loss, amp2_loss, amp1_ppl, amp2_ppl,
            ssim1, ssim2, mask)


# ----------------------------------------------------------------------------
# Main
# ----------------------------------------------------------------------------

if __name__ == "__main__":
    key = jax.random.PRNGKey(0)
    kx, ka, kp = jax.random.split(key, 3)

    B, C, H, W = 2, 1, 16, 16           # amp has 1 channel (ssim conv is 1x1x11x11)
    h_dim, res_h_dim, n_res_layers = 32, 16, 2
    n_embeddings, embedding_dim, beta = 64, 8, 0.25

    x = jax.random.normal(kx, (B, C, H, W), jnp.float32)
    amp = jax.random.normal(ka, (B, C, H, W), jnp.float32)
    params = init_mmslim(kp, h_dim, res_h_dim, n_res_layers, n_embeddings,
                         embedding_dim)

    fwd = jax.jit(functools.partial(mmslim_forward, beta=beta))
    outs = fwd(params, x, amp)
    jax.block_until_ready(outs)

    amp_hat = outs[0]
    assert amp_hat.shape == (B, C, H, W)
    print("KERNEL_OK")
</pallas_src>

<mosaic_0001>
module attributes {stable_mosaic.version = 11 : i64} {
  func.func @_conv_mm_kernel(%arg0: i32, %arg1: memref<16x9xbf16, #tpu.memory_space<vmem>>, %arg2: memref<9x512xbf16, #tpu.memory_space<vmem>>, %arg3: memref<16x1xf32, #tpu.memory_space<vmem>>, %arg4: memref<16x512xf32, #tpu.memory_space<vmem>>) attributes {dimension_semantics = [#tpu.dimension_semantics<parallel>], iteration_bounds = array<i64: 1>, scalar_prefetch = 0 : i64, scratch_operands = 0 : i64, tpu.core_type = #tpu.core_type<tc>, window_params = [{pipeline_mode = #tpu.pipeline_mode<synchronous>, transform_indices = @transform_0, window_bounds = array<i64: 16, 9>}, {transform_indices = @transform_1, window_bounds = array<i64: 9, 512>}, {pipeline_mode = #tpu.pipeline_mode<synchronous>, transform_indices = @transform_2, window_bounds = array<i64: 16, 1>}, {transform_indices = @transform_3, window_bounds = array<i64: 16, 512>}]} {
    %c0 = arith.constant 0 : index
    %c0_0 = arith.constant 0 : index
    %0 = vector.load %arg2[%c0, %c0_0] : memref<9x512xbf16, #tpu.memory_space<vmem>>, vector<9x512xbf16>
    %c0_1 = arith.constant 0 : index
    %c0_2 = arith.constant 0 : index
    %1 = vector.load %arg1[%c0_1, %c0_2] : memref<16x9xbf16, #tpu.memory_space<vmem>>, vector<16x9xbf16>
    %cst = arith.constant dense<0.000000e+00> : vector<16x512xf32>
    %2 = tpu.matmul %1, %0, %cst {dimension_numbers = #tpu.dot_dimension_numbers<[1], [0], [0], [1], [0, 0, 1, 1], [], []>} : vector<16x9xbf16>, vector<9x512xbf16>, vector<16x512xf32> -> vector<16x512xf32>
    %c0_3 = arith.constant 0 : index
    %c0_4 = arith.constant 0 : index
    %3 = vector.load %arg3[%c0_3, %c0_4] : memref<16x1xf32, #tpu.memory_space<vmem>>, vector<16x1xf32>
    %4 = vector.broadcast %3 : vector<16x1xf32> to vector<16x512xf32>
    %5 = arith.addf %2, %4 : vector<16x512xf32>
    %cst_5 = arith.constant 0.000000e+00 : f32
    %6 = vector.broadcast %cst_5 : f32 to vector<16x512xf32>
    %7 = arith.maximumf %5, %6 : vector<16x512xf32>
    %c0_6 = arith.constant 0 : index
    %c0_7 = arith.constant 0 : index
    %8 = vector.load %arg4[%c0_6, %c0_7] : memref<16x512xf32, #tpu.memory_space<vmem>>, vector<16x512xf32>
    tpu.vector_store %arg4[%c0_6, %c0_7], %7 {strides = array<i32>} : memref<16x512xf32, #tpu.memory_space<vmem>>, vector<16x512xf32>,
    return
  }
  func.func @transform_0(%arg0: i32) -> (i32, i32) {
    %c0_i32 = arith.constant 0 : i32
    %c0_i32_0 = arith.constant 0 : i32
    %c0_i32_1 = arith.constant 0 : i32
    return %c0_i32, %c0_i32_0 : i32, i32
  }
  func.func @transform_1(%arg0: i32) -> (i32, i32) {
    %c0_i32 = arith.constant 0 : i32
    %c0_i32_0 = arith.constant 0 : i32
    return %c0_i32, %arg0 : i32, i32
  }
  func.func @transform_2(%arg0: i32) -> (i32, i32) {
    %c0_i32 = arith.constant 0 : i32
    %c0_i32_0 = arith.constant 0 : i32
    %c0_i32_1 = arith.constant 0 : i32
    return %c0_i32, %c0_i32_0 : i32, i32
  }
  func.func @transform_3(%arg0: i32) -> (i32, i32) {
    %c0_i32 = arith.constant 0 : i32
    %c0_i32_0 = arith.constant 0 : i32
    return %c0_i32, %arg0 : i32, i32
  }
}

module attributes {stable_mosaic.version = 11 : i64} {
  func.func @_conv_mm_kernel(%arg0: i32, %arg1: memref<16x144xbf16, #tpu.memory_space<vmem>>, %arg2: memref<144x512xbf16, #tpu.memory_space<vmem>>, %arg3: memref<16x1xf32, #tpu.memory_space<vmem>>, %arg4: memref<16x512xf32, #tpu.memory_space<vmem>>) attributes {dimension_semantics = [#tpu.dimension_semantics<parallel>], iteration_bounds = array<i64: 1>, scalar_prefetch = 0 : i64, scratch_operands = 0 : i64, tpu.core_type = #tpu.core_type<tc>, window_params = [{pipeline_mode = #tpu.pipeline_mode<synchronous>, transform_indices = @transform_0, window_bounds = array<i64: 16, 144>}, {transform_indices = @transform_1, window_bounds = array<i64: 144, 512>}, {pipeline_mode = #tpu.pipeline_mode<synchronous>, transform_indices = @transform_2, window_bounds = array<i64: 16, 1>}, {transform_indices = @transform_3, window_bounds = array<i64: 16, 512>}]} {
    %c0 = arith.constant 0 : index
    %c0_0 = arith.constant 0 : index
    %0 = vector.load %arg2[%c0, %c0_0] : memref<144x512xbf16, #tpu.memory_space<vmem>>, vector<144x512xbf16>
    %c0_1 = arith.constant 0 : index
    %c0_2 = arith.constant 0 : index
    %1 = vector.load %arg1[%c0_1, %c0_2] : memref<16x144xbf16, #tpu.memory_space<vmem>>, vector<16x144xbf16>
    %cst = arith.constant dense<0.000000e+00> : vector<16x512xf32>
    %2 = tpu.matmul %1, %0, %cst {dimension_numbers = #tpu.dot_dimension_numbers<[1], [0], [0], [1], [0, 0, 1, 1], [], []>} : vector<16x144xbf16>, vector<144x512xbf16>, vector<16x512xf32> -> vector<16x512xf32>
    %c0_3 = arith.constant 0 : index
    %c0_4 = arith.constant 0 : index
    %3 = vector.load %arg3[%c0_3, %c0_4] : memref<16x1xf32, #tpu.memory_space<vmem>>, vector<16x1xf32>
    %4 = vector.broadcast %3 : vector<16x1xf32> to vector<16x512xf32>
    %5 = arith.addf %2, %4 : vector<16x512xf32>
    %cst_5 = arith.constant 0.000000e+00 : f32
    %6 = vector.broadcast %cst_5 : f32 to vector<16x512xf32>
    %7 = arith.maximumf %5, %6 : vector<16x512xf32>
    %c0_6 = arith.constant 0 : index
    %c0_7 = arith.constant 0 : index
    %8 = vector.load %arg4[%c0_6, %c0_7] : memref<16x512xf32, #tpu.memory_space<vmem>>, vector<16x512xf32>
    tpu.vector_store %arg4[%c0_6, %c0_7], %7 {strides = array<i32>} : memref<16x512xf32, #tpu.memory_space<vmem>>, vector<16x512xf32>,
    return
  }
  func.func @transform_0(%arg0: i32) -> (i32, i32) {
    %c0_i32 = arith.constant 0 : i32
    %c0_i32_0 = arith.constant 0 : i32
    %c0_i32_1 = arith.constant 0 : i32
    return %c0_i32, %c0_i32_0 : i32, i32
  }
  func.func @transform_1(%arg0: i32) -> (i32, i32) {
    %c0_i32 = arith.constant 0 : i32
    %c0_i32_0 = arith.constant 0 : i32
    return %c0_i32, %arg0 : i32, i32
  }
  func.func @transform_2(%arg0: i32) -> (i32, i32) {
    %c0_i32 = arith.constant 0 : i32
    %c0_i32_0 = arith.constant 0 : i32
    %c0_i32_1 = arith.constant 0 : i32
    return %c0_i32, %c0_i32_0 : i32, i32
  }
  func.func @transform_3(%arg0: i32) -> (i32, i32) {
    %c0_i32 = arith.constant 0 : i32
    %c0_i32_0 = arith.constant 0 : i32
    return %c0_i32, %arg0 : i32, i32
  }
}

module attributes {stable_mosaic.version = 11 : i64} {
  func.func @_mask_split_kernel(%arg0: i32, %arg1: memref<1x144xbf16, #tpu.memory_space<vmem>>, %arg2: memref<144x512xbf16, #tpu.memory_space<vmem>>, %arg3: memref<1x1xf32, #tpu.memory_space<vmem>>, %arg4: memref<1x512xf32, #tpu.memory_space<vmem>>, %arg5: memref<1x512xf32, #tpu.memory_space<vmem>>, %arg6: memref<1x512xf32, #tpu.memory_space<vmem>>, %arg7: memref<1x512xf32, #tpu.memory_space<vmem>>) attributes {dimension_semantics = [#tpu.dimension_semantics<parallel>], iteration_bounds = array<i64: 1>, scalar_prefetch = 0 : i64, scratch_operands = 0 : i64, tpu.core_type = #tpu.core_type<tc>, window_params = [{pipeline_mode = #tpu.pipeline_mode<synchronous>, transform_indices = @transform_0, window_bounds = array<i64: 1, 144>}, {transform_indices = @transform_1, window_bounds = array<i64: 144, 512>}, {pipeline_mode = #tpu.pipeline_mode<synchronous>, transform_indices = @transform_2, window_bounds = array<i64: 1, 1>}, {transform_indices = @transform_3, window_bounds = array<i64: 1, 512>}, {transform_indices = @transform_4, window_bounds = array<i64: 1, 512>}, {transform_indices = @transform_5, window_bounds = array<i64: 1, 512>}, {transform_indices = @transform_6, window_bounds = array<i64: 1, 512>}]} {
    %c0 = arith.constant 0 : index
    %c0_0 = arith.constant 0 : index
    %0 = vector.load %arg1[%c0, %c0_0] : memref<1x144xbf16, #tpu.memory_space<vmem>>, vector<1x144xbf16>
    %c0_1 = arith.constant 0 : index
    %c0_2 = arith.constant 0 : index
    %1 = vector.load %arg2[%c0_1, %c0_2] : memref<144x512xbf16, #tpu.memory_space<vmem>>, vector<144x512xbf16>
    %cst = arith.constant dense<0.000000e+00> : vector<1x512xf32>
    %2 = tpu.matmul %0, %1, %cst {dimension_numbers = #tpu.dot_dimension_numbers<[1], [0], [0], [1], [0, 0, 1, 1], [], []>} : vector<1x144xbf16>, vector<144x512xbf16>, vector<1x512xf32> -> vector<1x512xf32>
    %c0_3 = arith.constant 0 : index
    %c0_4 = arith.constant 0 : index
    %3 = vector.load %arg3[%c0_3, %c0_4] : memref<1x1xf32, #tpu.memory_space<vmem>>, vector<1x1xf32>
    %4 = vector.broadcast %3 : vector<1x1xf32> to vector<1x512xf32>
    %5 = arith.addf %2, %4 : vector<1x512xf32>
    %6 = arith.negf %5 : vector<1x512xf32>
    %7 = math.exp %6 : vector<1x512xf32>
    %cst_5 = arith.constant 1.000000e+00 : f32
    %8 = vector.broadcast %cst_5 : f32 to vector<1x512xf32>
    %9 = arith.addf %8, %7 : vector<1x512xf32>
    %10 = arith.divf %8, %9 : vector<1x512xf32>
    %c0_6 = arith.constant 0 : index
    %c0_7 = arith.constant 0 : index
    %11 = vector.load %arg4[%c0_6, %c0_7] : memref<1x512xf32, #tpu.memory_space<vmem>>, vector<1x512xf32>
    %c0_8 = arith.constant 0 : index
    %c0_9 = arith.constant 0 : index
    %12 = vector.load %arg5[%c0_8, %c0_9] : memref<1x512xf32, #tpu.memory_space<vmem>>, vector<1x512xf32>
    tpu.vector_store %arg5[%c0_8, %c0_9], %10 {strides = array<i32>} : memref<1x512xf32, #tpu.memory_space<vmem>>, vector<1x512xf32>,
    %13 = arith.mulf %10, %11 : vector<1x512xf32>
    %c0_10 = arith.constant 0 : index
    %c0_11 = arith.constant 0 : index
    %14 = vector.load %arg6[%c0_10, %c0_11] : memref<1x512xf32, #tpu.memory_space<vmem>>, vector<1x512xf32>
    tpu.vector_store %arg6[%c0_10, %c0_11], %13 {strides = array<i32>} : memref<1x512xf32, #tpu.memory_space<vmem>>, vector<1x512xf32>,
    %cst_12 = arith.constant 1.000000e+00 : f32
    %15 = vector.broadcast %cst_12 : f32 to vector<1x512xf32>
    %16 = arith.subf %15, %10 : vector<1x512xf32>
    %17 = arith.mulf %16, %11 : vector<1x512xf32>
    %c0_13 = arith.constant 0 : index
    %c0_14 = arith.constant 0 : index
    %18 = vector.load %arg7[%c0_13, %c0_14] : memref<1x512xf32, #tpu.memory_space<vmem>>, vector<1x512xf32>
    tpu.vector_store %arg7[%c0_13, %c0_14], %17 {strides = array<i32>} : memref<1x512xf32, #tpu.memory_space<vmem>>, vector<1x512xf32>,
    return
  }
  func.func @transform_0(%arg0: i32) -> (i32, i32) {
    %c0_i32 = arith.constant 0 : i32
    %c0_i32_0 = arith.constant 0 : i32
    %c0_i32_1 = arith.constant 0 : i32
    return %c0_i32, %c0_i32_0 : i32, i32
  }
  func.func @transform_1(%arg0: i32) -> (i32, i32) {
    %c0_i32 = arith.constant 0 : i32
    %c0_i32_0 = arith.constant 0 : i32
    return %c0_i32, %arg0 : i32, i32
  }
  func.func @transform_2(%arg0: i32) -> (i32, i32) {
    %c0_i32 = arith.constant 0 : i32
    %c0_i32_0 = arith.constant 0 : i32
    %c0_i32_1 = arith.constant 0 : i32
    return %c0_i32, %c0_i32_0 : i32, i32
  }
  func.func @transform_3(%arg0: i32) -> (i32, i32) {
    %c0_i32 = arith.constant 0 : i32
    %c0_i32_0 = arith.constant 0 : i32
    return %c0_i32, %arg0 : i32, i32
  }
  func.func @transform_4(%arg0: i32) -> (i32, i32) {
    %c0_i32 = arith.constant 0 : i32
    %c0_i32_0 = arith.constant 0 : i32
    return %c0_i32, %arg0 : i32, i32
  }
  func.func @transform_5(%arg0: i32) -> (i32, i32) {
    %c0_i32 = arith.constant 0 : i32
    %c0_i32_0 = arith.constant 0 : i32
    return %c0_i32, %arg0 : i32, i32
  }
  func.func @transform_6(%arg0: i32) -> (i32, i32) {
    %c0_i32 = arith.constant 0 : i32
    %c0_i32_0 = arith.constant 0 : i32
    return %c0_i32, %arg0 : i32, i32
  }
}

module attributes {stable_mosaic.version = 11 : i64} {
  func.func @_conv_mm_kernel(%arg0: i32, %arg1: memref<16x16xbf16, #tpu.memory_space<vmem>>, %arg2: memref<16x128xbf16, #tpu.memory_space<vmem>>, %arg3: memref<16x1xf32, #tpu.memory_space<vmem>>, %arg4: memref<16x128xf32, #tpu.memory_space<vmem>>) attributes {dimension_semantics = [#tpu.dimension_semantics<parallel>], iteration_bounds = array<i64: 1>, scalar_prefetch = 0 : i64, scratch_operands = 0 : i64, tpu.core_type = #tpu.core_type<tc>, window_params = [{pipeline_mode = #tpu.pipeline_mode<synchronous>, transform_indices = @transform_0, window_bounds = array<i64: 16, 16>}, {transform_indices = @transform_1, window_bounds = array<i64: 16, 128>}, {pipeline_mode = #tpu.pipeline_mode<synchronous>, transform_indices = @transform_2, window_bounds = array<i64: 16, 1>}, {transform_indices = @transform_3, window_bounds = array<i64: 16, 128>}]} {
    %c0 = arith.constant 0 : index
    %c0_0 = arith.constant 0 : index
    %0 = vector.load %arg2[%c0, %c0_0] : memref<16x128xbf16, #tpu.memory_space<vmem>>, vector<16x128xbf16>
    %c0_1 = arith.constant 0 : index
    %c0_2 = arith.constant 0 : index
    %1 = vector.load %arg1[%c0_1, %c0_2] : memref<16x16xbf16, #tpu.memory_space<vmem>>, vector<16x16xbf16>
    %cst = arith.constant dense<0.000000e+00> : vector<16x128xf32>
    %2 = tpu.matmul %1, %0, %cst {dimension_numbers = #tpu.dot_dimension_numbers<[1], [0], [0], [1], [0, 0, 1, 1], [], []>} : vector<16x16xbf16>, vector<16x128xbf16>, vector<16x128xf32> -> vector<16x128xf32>
    %c0_3 = arith.constant 0 : index
    %c0_4 = arith.constant 0 : index
    %3 = vector.load %arg3[%c0_3, %c0_4] : memref<16x1xf32, #tpu.memory_space<vmem>>, vector<16x1xf32>
    %4 = vector.broadcast %3 : vector<16x1xf32> to vector<16x128xf32>
    %5 = arith.addf %2, %4 : vector<16x128xf32>
    %cst_5 = arith.constant 0.000000e+00 : f32
    %6 = vector.broadcast %cst_5 : f32 to vector<16x128xf32>
    %7 = arith.maximumf %5, %6 : vector<16x128xf32>
    %c0_6 = arith.constant 0 : index
    %c0_7 = arith.constant 0 : index
    %8 = vector.load %arg4[%c0_6, %c0_7] : memref<16x128xf32, #tpu.memory_space<vmem>>, vector<16x128xf32>
    tpu.vector_store %arg4[%c0_6, %c0_7], %7 {strides = array<i32>} : memref<16x128xf32, #tpu.memory_space<vmem>>, vector<16x128xf32>,
    return
  }
  func.func @transform_0(%arg0: i32) -> (i32, i32) {
    %c0_i32 = arith.constant 0 : i32
    %c0_i32_0 = arith.constant 0 : i32
    %c0_i32_1 = arith.constant 0 : i32
    return %c0_i32, %c0_i32_0 : i32, i32
  }
  func.func @transform_1(%arg0: i32) -> (i32, i32) {
    %c0_i32 = arith.constant 0 : i32
    %c0_i32_0 = arith.constant 0 : i32
    return %c0_i32, %arg0 : i32, i32
  }
  func.func @transform_2(%arg0: i32) -> (i32, i32) {
    %c0_i32 = arith.constant 0 : i32
    %c0_i32_0 = arith.constant 0 : i32
    %c0_i32_1 = arith.constant 0 : i32
    return %c0_i32, %c0_i32_0 : i32, i32
  }
  func.func @transform_3(%arg0: i32) -> (i32, i32) {
    %c0_i32 = arith.constant 0 : i32
    %c0_i32_0 = arith.constant 0 : i32
    return %c0_i32, %arg0 : i32, i32
  }
}

module attributes {stable_mosaic.version = 11 : i64} {
  func.func @_conv_mm_kernel(%arg0: i32, %arg1: memref<32x256xbf16, #tpu.memory_space<vmem>>, %arg2: memref<256x128xbf16, #tpu.memory_space<vmem>>, %arg3: memref<32x1xf32, #tpu.memory_space<vmem>>, %arg4: memref<32x128xf32, #tpu.memory_space<vmem>>) attributes {dimension_semantics = [#tpu.dimension_semantics<parallel>], iteration_bounds = array<i64: 1>, scalar_prefetch = 0 : i64, scratch_operands = 0 : i64, tpu.core_type = #tpu.core_type<tc>, window_params = [{pipeline_mode = #tpu.pipeline_mode<synchronous>, transform_indices = @transform_0, window_bounds = array<i64: 32, 256>}, {transform_indices = @transform_1, window_bounds = array<i64: 256, 128>}, {pipeline_mode = #tpu.pipeline_mode<synchronous>, transform_indices = @transform_2, window_bounds = array<i64: 32, 1>}, {transform_indices = @transform_3, window_bounds = array<i64: 32, 128>}]} {
    %c0 = arith.constant 0 : index
    %c0_0 = arith.constant 0 : index
    %0 = vector.load %arg2[%c0, %c0_0] : memref<256x128xbf16, #tpu.memory_space<vmem>>, vector<256x128xbf16>
    %c0_1 = arith.constant 0 : index
    %c0_2 = arith.constant 0 : index
    %1 = vector.load %arg1[%c0_1, %c0_2] : memref<32x256xbf16, #tpu.memory_space<vmem>>, vector<32x256xbf16>
    %cst = arith.constant dense<0.000000e+00> : vector<32x128xf32>
    %2 = tpu.matmul %1, %0, %cst {dimension_numbers = #tpu.dot_dimension_numbers<[1], [0], [0], [1], [0, 0, 1, 1], [], []>} : vector<32x256xbf16>, vector<256x128xbf16>, vector<32x128xf32> -> vector<32x128xf32>
    %c0_3 = arith.constant 0 : index
    %c0_4 = arith.constant 0 : index
    %3 = vector.load %arg3[%c0_3, %c0_4] : memref<32x1xf32, #tpu.memory_space<vmem>>, vector<32x1xf32>
    %4 = vector.broadcast %3 : vector<32x1xf32> to vector<32x128xf32>
    %5 = arith.addf %2, %4 : vector<32x128xf32>
    %cst_5 = arith.constant 0.000000e+00 : f32
    %6 = vector.broadcast %cst_5 : f32 to vector<32x128xf32>
    %7 = arith.maximumf %5, %6 : vector<32x128xf32>
    %c0_6 = arith.constant 0 : index
    %c0_7 = arith.constant 0 : index
    %8 = vector.load %arg4[%c0_6, %c0_7] : memref<32x128xf32, #tpu.memory_space<vmem>>, vector<32x128xf32>
    tpu.vector_store %arg4[%c0_6, %c0_7], %7 {strides = array<i32>} : memref<32x128xf32, #tpu.memory_space<vmem>>, vector<32x128xf32>,
    return
  }
  func.func @transform_0(%arg0: i32) -> (i32, i32) {
    %c0_i32 = arith.constant 0 : i32
    %c0_i32_0 = arith.constant 0 : i32
    %c0_i32_1 = arith.constant 0 : i32
    return %c0_i32, %c0_i32_0 : i32, i32
  }
  func.func @transform_1(%arg0: i32) -> (i32, i32) {
    %c0_i32 = arith.constant 0 : i32
    %c0_i32_0 = arith.constant 0 : i32
    return %c0_i32, %arg0 : i32, i32
  }
  func.func @transform_2(%arg0: i32) -> (i32, i32) {
    %c0_i32 = arith.constant 0 : i32
    %c0_i32_0 = arith.constant 0 : i32
    %c0_i32_1 = arith.constant 0 : i32
    return %c0_i32, %c0_i32_0 : i32, i32
  }
  func.func @transform_3(%arg0: i32) -> (i32, i32) {
    %c0_i32 = arith.constant 0 : i32
    %c0_i32_0 = arith.constant 0 : i32
    return %c0_i32, %arg0 : i32, i32
  }
}

module attributes {stable_mosaic.version = 11 : i64} {
  func.func @_conv_mm_kernel(%arg0: i32, %arg1: memref<32x288xbf16, #tpu.memory_space<vmem>>, %arg2: memref<288x128xbf16, #tpu.memory_space<vmem>>, %arg3: memref<32x1xf32, #tpu.memory_space<vmem>>, %arg4: memref<32x128xf32, #tpu.memory_space<vmem>>) attributes {dimension_semantics = [#tpu.dimension_semantics<parallel>], iteration_bounds = array<i64: 1>, scalar_prefetch = 0 : i64, scratch_operands = 0 : i64, tpu.core_type = #tpu.core_type<tc>, window_params = [{pipeline_mode = #tpu.pipeline_mode<synchronous>, transform_indices = @transform_0, window_bounds = array<i64: 32, 288>}, {transform_indices = @transform_1, window_bounds = array<i64: 288, 128>}, {pipeline_mode = #tpu.pipeline_mode<synchronous>, transform_indices = @transform_2, window_bounds = array<i64: 32, 1>}, {transform_indices = @transform_3, window_bounds = array<i64: 32, 128>}]} {
    %c0 = arith.constant 0 : index
    %c0_0 = arith.constant 0 : index
    %0 = vector.load %arg2[%c0, %c0_0] : memref<288x128xbf16, #tpu.memory_space<vmem>>, vector<288x128xbf16>
    %c0_1 = arith.constant 0 : index
    %c0_2 = arith.constant 0 : index
    %1 = vector.load %arg1[%c0_1, %c0_2] : memref<32x288xbf16, #tpu.memory_space<vmem>>, vector<32x288xbf16>
    %cst = arith.constant dense<0.000000e+00> : vector<32x128xf32>
    %2 = tpu.matmul %1, %0, %cst {dimension_numbers = #tpu.dot_dimension_numbers<[1], [0], [0], [1], [0, 0, 1, 1], [], []>} : vector<32x288xbf16>, vector<288x128xbf16>, vector<32x128xf32> -> vector<32x128xf32>
    %c0_3 = arith.constant 0 : index
    %c0_4 = arith.constant 0 : index
    %3 = vector.load %arg3[%c0_3, %c0_4] : memref<32x1xf32, #tpu.memory_space<vmem>>, vector<32x1xf32>
    %4 = vector.broadcast %3 : vector<32x1xf32> to vector<32x128xf32>
    %5 = arith.addf %2, %4 : vector<32x128xf32>
    %c0_5 = arith.constant 0 : index
    %c0_6 = arith.constant 0 : index
    %6 = vector.load %arg4[%c0_5, %c0_6] : memref<32x128xf32, #tpu.memory_space<vmem>>, vector<32x128xf32>
    tpu.vector_store %arg4[%c0_5, %c0_6], %5 {strides = array<i32>} : memref<32x128xf32, #tpu.memory_space<vmem>>, vector<32x128xf32>,
    return
  }
  func.func @transform_0(%arg0: i32) -> (i32, i32) {
    %c0_i32 = arith.constant 0 : i32
    %c0_i32_0 = arith.constant 0 : i32
    %c0_i32_1 = arith.constant 0 : i32
    return %c0_i32, %c0_i32_0 : i32, i32
  }
  func.func @transform_1(%arg0: i32) -> (i32, i32) {
    %c0_i32 = arith.constant 0 : i32
    %c0_i32_0 = arith.constant 0 : i32
    return %c0_i32, %arg0 : i32, i32
  }
  func.func @transform_2(%arg0: i32) -> (i32, i32) {
    %c0_i32 = arith.constant 0 : i32
    %c0_i32_0 = arith.constant 0 : i32
    %c0_i32_1 = arith.constant 0 : i32
    return %c0_i32, %c0_i32_0 : i32, i32
  }
  func.func @transform_3(%arg0: i32) -> (i32, i32) {
    %c0_i32 = arith.constant 0 : i32
    %c0_i32_0 = arith.constant 0 : i32
    return %c0_i32, %arg0 : i32, i32
  }
}

module attributes {stable_mosaic.version = 11 : i64} {
  func.func @_conv_mm_kernel(%arg0: i32, %arg1: memref<16x288xbf16, #tpu.memory_space<vmem>>, %arg2: memref<288x128xbf16, #tpu.memory_space<vmem>>, %arg3: memref<16x1xf32, #tpu.memory_space<vmem>>, %arg4: memref<16x128xf32, #tpu.memory_space<vmem>>) attributes {dimension_semantics = [#tpu.dimension_semantics<parallel>], iteration_bounds = array<i64: 1>, scalar_prefetch = 0 : i64, scratch_operands = 0 : i64, tpu.core_type = #tpu.core_type<tc>, window_params = [{pipeline_mode = #tpu.pipeline_mode<synchronous>, transform_indices = @transform_0, window_bounds = array<i64: 16, 288>}, {transform_indices = @transform_1, window_bounds = array<i64: 288, 128>}, {pipeline_mode = #tpu.pipeline_mode<synchronous>, transform_indices = @transform_2, window_bounds = array<i64: 16, 1>}, {transform_indices = @transform_3, window_bounds = array<i64: 16, 128>}]} {
    %c0 = arith.constant 0 : index
    %c0_0 = arith.constant 0 : index
    %0 = vector.load %arg2[%c0, %c0_0] : memref<288x128xbf16, #tpu.memory_space<vmem>>, vector<288x128xbf16>
    %cst = arith.constant 0.000000e+00 : bf16
    %1 = vector.broadcast %cst : bf16 to vector<288x128xbf16>
    %2 = arith.maximumf %0, %1 : vector<288x128xbf16>
    %c0_1 = arith.constant 0 : index
    %c0_2 = arith.constant 0 : index
    %3 = vector.load %arg1[%c0_1, %c0_2] : memref<16x288xbf16, #tpu.memory_space<vmem>>, vector<16x288xbf16>
    %cst_3 = arith.constant dense<0.000000e+00> : vector<16x128xf32>
    %4 = tpu.matmul %3, %2, %cst_3 {dimension_numbers = #tpu.dot_dimension_numbers<[1], [0], [0], [1], [0, 0, 1, 1], [], []>} : vector<16x288xbf16>, vector<288x128xbf16>, vector<16x128xf32> -> vector<16x128xf32>
    %c0_4 = arith.constant 0 : index
    %c0_5 = arith.constant 0 : index
    %5 = vector.load %arg3[%c0_4, %c0_5] : memref<16x1xf32, #tpu.memory_space<vmem>>, vector<16x1xf32>
    %6 = vector.broadcast %5 : vector<16x1xf32> to vector<16x128xf32>
    %7 = arith.addf %4, %6 : vector<16x128xf32>
    %cst_6 = arith.constant 0.000000e+00 : f32
    %8 = vector.broadcast %cst_6 : f32 to vector<16x128xf32>
    %9 = arith.maximumf %7, %8 : vector<16x128xf32>
    %c0_7 = arith.constant 0 : index
    %c0_8 = arith.constant 0 : index
    %10 = vector.load %arg4[%c0_7, %c0_8] : memref<16x128xf32, #tpu.memory_space<vmem>>, vector<16x128xf32>
    tpu.vector_store %arg4[%c0_7, %c0_8], %9 {strides = array<i32>} : memref<16x128xf32, #tpu.memory_space<vmem>>, vector<16x128xf32>,
    return
  }
  func.func @transform_0(%arg0: i32) -> (i32, i32) {
    %c0_i32 = arith.constant 0 : i32
    %c0_i32_0 = arith.constant 0 : i32
    %c0_i32_1 = arith.constant 0 : i32
    return %c0_i32, %c0_i32_0 : i32, i32
  }
  func.func @transform_1(%arg0: i32) -> (i32, i32) {
    %c0_i32 = arith.constant 0 : i32
    %c0_i32_0 = arith.constant 0 : i32
    return %c0_i32, %arg0 : i32, i32
  }
  func.func @transform_2(%arg0: i32) -> (i32, i32) {
    %c0_i32 = arith.constant 0 : i32
    %c0_i32_0 = arith.constant 0 : i32
    %c0_i32_1 = arith.constant 0 : i32
    return %c0_i32, %c0_i32_0 : i32, i32
  }
  func.func @transform_3(%arg0: i32) -> (i32, i32) {
    %c0_i32 = arith.constant 0 : i32
    %c0_i32_0 = arith.constant 0 : i32
    return %c0_i32, %arg0 : i32, i32
  }
}

module attributes {stable_mosaic.version = 11 : i64} {
  func.func @_conv_mm_skip_kernel(%arg0: i32, %arg1: memref<32x16xbf16, #tpu.memory_space<vmem>>, %arg2: memref<16x128xbf16, #tpu.memory_space<vmem>>, %arg3: memref<32x1xf32, #tpu.memory_space<vmem>>, %arg4: memref<32x128xf32, #tpu.memory_space<vmem>>, %arg5: memref<32x128xf32, #tpu.memory_space<vmem>>) attributes {dimension_semantics = [#tpu.dimension_semantics<parallel>], iteration_bounds = array<i64: 1>, scalar_prefetch = 0 : i64, scratch_operands = 0 : i64, tpu.core_type = #tpu.core_type<tc>, window_params = [{pipeline_mode = #tpu.pipeline_mode<synchronous>, transform_indices = @transform_0, window_bounds = array<i64: 32, 16>}, {transform_indices = @transform_1, window_bounds = array<i64: 16, 128>}, {pipeline_mode = #tpu.pipeline_mode<synchronous>, transform_indices = @transform_2, window_bounds = array<i64: 32, 1>}, {transform_indices = @transform_3, window_bounds = array<i64: 32, 128>}, {transform_indices = @transform_4, window_bounds = array<i64: 32, 128>}]} {
    %c0 = arith.constant 0 : index
    %c0_0 = arith.constant 0 : index
    %0 = vector.load %arg2[%c0, %c0_0] : memref<16x128xbf16, #tpu.memory_space<vmem>>, vector<16x128xbf16>
    %c0_1 = arith.constant 0 : index
    %c0_2 = arith.constant 0 : index
    %1 = vector.load %arg1[%c0_1, %c0_2] : memref<32x16xbf16, #tpu.memory_space<vmem>>, vector<32x16xbf16>
    %cst = arith.constant dense<0.000000e+00> : vector<32x128xf32>
    %2 = tpu.matmul %1, %0, %cst {dimension_numbers = #tpu.dot_dimension_numbers<[1], [0], [0], [1], [0, 0, 1, 1], [], []>} : vector<32x16xbf16>, vector<16x128xbf16>, vector<32x128xf32> -> vector<32x128xf32>
    %c0_3 = arith.constant 0 : index
    %c0_4 = arith.constant 0 : index
    %3 = vector.load %arg3[%c0_3, %c0_4] : memref<32x1xf32, #tpu.memory_space<vmem>>, vector<32x1xf32>
    %4 = vector.broadcast %3 : vector<32x1xf32> to vector<32x128xf32>
    %5 = arith.addf %2, %4 : vector<32x128xf32>
    %c0_5 = arith.constant 0 : index
    %c0_6 = arith.constant 0 : index
    %6 = vector.load %arg4[%c0_5, %c0_6] : memref<32x128xf32, #tpu.memory_space<vmem>>, vector<32x128xf32>
    %7 = arith.addf %5, %6 : vector<32x128xf32>
    %c0_7 = arith.constant 0 : index
    %c0_8 = arith.constant 0 : index
    %8 = vector.load %arg5[%c0_7, %c0_8] : memref<32x128xf32, #tpu.memory_space<vmem>>, vector<32x128xf32>
    tpu.vector_store %arg5[%c0_7, %c0_8], %7 {strides = array<i32>} : memref<32x128xf32, #tpu.memory_space<vmem>>, vector<32x128xf32>,
    return
  }
  func.func @transform_0(%arg0: i32) -> (i32, i32) {
    %c0_i32 = arith.constant 0 : i32
    %c0_i32_0 = arith.constant 0 : i32
    %c0_i32_1 = arith.constant 0 : i32
    return %c0_i32, %c0_i32_0 : i32, i32
  }
  func.func @transform_1(%arg0: i32) -> (i32, i32) {
    %c0_i32 = arith.constant 0 : i32
    %c0_i32_0 = arith.constant 0 : i32
    return %c0_i32, %arg0 : i32, i32
  }
  func.func @transform_2(%arg0: i32) -> (i32, i32) {
    %c0_i32 = arith.constant 0 : i32
    %c0_i32_0 = arith.constant 0 : i32
    %c0_i32_1 = arith.constant 0 : i32
    return %c0_i32, %c0_i32_0 : i32, i32
  }
  func.func @transform_3(%arg0: i32) -> (i32, i32) {
    %c0_i32 = arith.constant 0 : i32
    %c0_i32_0 = arith.constant 0 : i32
    return %c0_i32, %arg0 : i32, i32
  }
  func.func @transform_4(%arg0: i32) -> (i32, i32) {
    %c0_i32 = arith.constant 0 : i32
    %c0_i32_0 = arith.constant 0 : i32
    return %c0_i32, %arg0 : i32, i32
  }
}

module attributes {stable_mosaic.version = 11 : i64} {
  func.func @_conv_mm_skip_kernel(%arg0: i32, %arg1: memref<32x16xbf16, #tpu.memory_space<vmem>>, %arg2: memref<16x128xbf16, #tpu.memory_space<vmem>>, %arg3: memref<32x1xf32, #tpu.memory_space<vmem>>, %arg4: memref<32x128xf32, #tpu.memory_space<vmem>>, %arg5: memref<32x128xf32, #tpu.memory_space<vmem>>) attributes {dimension_semantics = [#tpu.dimension_semantics<parallel>], iteration_bounds = array<i64: 1>, scalar_prefetch = 0 : i64, scratch_operands = 0 : i64, tpu.core_type = #tpu.core_type<tc>, window_params = [{pipeline_mode = #tpu.pipeline_mode<synchronous>, transform_indices = @transform_0, window_bounds = array<i64: 32, 16>}, {transform_indices = @transform_1, window_bounds = array<i64: 16, 128>}, {pipeline_mode = #tpu.pipeline_mode<synchronous>, transform_indices = @transform_2, window_bounds = array<i64: 32, 1>}, {transform_indices = @transform_3, window_bounds = array<i64: 32, 128>}, {transform_indices = @transform_4, window_bounds = array<i64: 32, 128>}]} {
    %c0 = arith.constant 0 : index
    %c0_0 = arith.constant 0 : index
    %0 = vector.load %arg2[%c0, %c0_0] : memref<16x128xbf16, #tpu.memory_space<vmem>>, vector<16x128xbf16>
    %c0_1 = arith.constant 0 : index
    %c0_2 = arith.constant 0 : index
    %1 = vector.load %arg1[%c0_1, %c0_2] : memref<32x16xbf16, #tpu.memory_space<vmem>>, vector<32x16xbf16>
    %cst = arith.constant dense<0.000000e+00> : vector<32x128xf32>
    %2 = tpu.matmul %1, %0, %cst {dimension_numbers = #tpu.dot_dimension_numbers<[1], [0], [0], [1], [0, 0, 1, 1], [], []>} : vector<32x16xbf16>, vector<16x128xbf16>, vector<32x128xf32> -> vector<32x128xf32>
    %c0_3 = arith.constant 0 : index
    %c0_4 = arith.constant 0 : index
    %3 = vector.load %arg3[%c0_3, %c0_4] : memref<32x1xf32, #tpu.memory_space<vmem>>, vector<32x1xf32>
    %4 = vector.broadcast %3 : vector<32x1xf32> to vector<32x128xf32>
    %5 = arith.addf %2, %4 : vector<32x128xf32>
    %c0_5 = arith.constant 0 : index
    %c0_6 = arith.constant 0 : index
    %6 = vector.load %arg4[%c0_5, %c0_6] : memref<32x128xf32, #tpu.memory_space<vmem>>, vector<32x128xf32>
    %7 = arith.addf %5, %6 : vector<32x128xf32>
    %cst_7 = arith.constant 0.000000e+00 : f32
    %8 = vector.broadcast %cst_7 : f32 to vector<32x128xf32>
    %9 = arith.maximumf %7, %8 : vector<32x128xf32>
    %c0_8 = arith.constant 0 : index
    %c0_9 = arith.constant 0 : index
    %10 = vector.load %arg5[%c0_8, %c0_9] : memref<32x128xf32, #tpu.memory_space<vmem>>, vector<32x128xf32>
    tpu.vector_store %arg5[%c0_8, %c0_9], %9 {strides = array<i32>} : memref<32x128xf32, #tpu.memory_space<vmem>>, vector<32x128xf32>,
    return
  }
  func.func @transform_0(%arg0: i32) -> (i32, i32) {
    %c0_i32 = arith.constant 0 : i32
    %c0_i32_0 = arith.constant 0 : i32
    %c0_i32_1 = arith.constant 0 : i32
    return %c0_i32, %c0_i32_0 : i32, i32
  }
  func.func @transform_1(%arg0: i32) -> (i32, i32) {
    %c0_i32 = arith.constant 0 : i32
    %c0_i32_0 = arith.constant 0 : i32
    return %c0_i32, %arg0 : i32, i32
  }
  func.func @transform_2(%arg0: i32) -> (i32, i32) {
    %c0_i32 = arith.constant 0 : i32
    %c0_i32_0 = arith.constant 0 : i32
    %c0_i32_1 = arith.constant 0 : i32
    return %c0_i32, %c0_i32_0 : i32, i32
  }
  func.func @transform_3(%arg0: i32) -> (i32, i32) {
    %c0_i32 = arith.constant 0 : i32
    %c0_i32_0 = arith.constant 0 : i32
    return %c0_i32, %arg0 : i32, i32
  }
  func.func @transform_4(%arg0: i32) -> (i32, i32) {
    %c0_i32 = arith.constant 0 : i32
    %c0_i32_0 = arith.constant 0 : i32
    return %c0_i32, %arg0 : i32, i32
  }
}

module attributes {stable_mosaic.version = 11 : i64} {
  func.func @_conv_mm_kernel(%arg0: i32, %arg1: memref<8x32xbf16, #tpu.memory_space<vmem>>, %arg2: memref<32x128xbf16, #tpu.memory_space<vmem>>, %arg3: memref<8x1xf32, #tpu.memory_space<vmem>>, %arg4: memref<8x128xf32, #tpu.memory_space<vmem>>) attributes {dimension_semantics = [#tpu.dimension_semantics<parallel>], iteration_bounds = array<i64: 1>, scalar_prefetch = 0 : i64, scratch_operands = 0 : i64, tpu.core_type = #tpu.core_type<tc>, window_params = [{pipeline_mode = #tpu.pipeline_mode<synchronous>, transform_indices = @transform_0, window_bounds = array<i64: 8, 32>}, {transform_indices = @transform_1, window_bounds = array<i64: 32, 128>}, {pipeline_mode = #tpu.pipeline_mode<synchronous>, transform_indices = @transform_2, window_bounds = array<i64: 8, 1>}, {transform_indices = @transform_3, window_bounds = array<i64: 8, 128>}]} {
    %c0 = arith.constant 0 : index
    %c0_0 = arith.constant 0 : index
    %0 = vector.load %arg2[%c0, %c0_0] : memref<32x128xbf16, #tpu.memory_space<vmem>>, vector<32x128xbf16>
    %c0_1 = arith.constant 0 : index
    %c0_2 = arith.constant 0 : index
    %1 = vector.load %arg1[%c0_1, %c0_2] : memref<8x32xbf16, #tpu.memory_space<vmem>>, vector<8x32xbf16>
    %cst = arith.constant dense<0.000000e+00> : vector<8x128xf32>
    %2 = tpu.matmul %1, %0, %cst {dimension_numbers = #tpu.dot_dimension_numbers<[1], [0], [0], [1], [0, 0, 1, 1], [], []>} : vector<8x32xbf16>, vector<32x128xbf16>, vector<8x128xf32> -> vector<8x128xf32>
    %c0_3 = arith.constant 0 : index
    %c0_4 = arith.constant 0 : index
    %3 = vector.load %arg3[%c0_3, %c0_4] : memref<8x1xf32, #tpu.memory_space<vmem>>, vector<8x1xf32>
    %4 = vector.broadcast %3 : vector<8x1xf32> to vector<8x128xf32>
    %5 = arith.addf %2, %4 : vector<8x128xf32>
    %c0_5 = arith.constant 0 : index
    %c0_6 = arith.constant 0 : index
    %6 = vector.load %arg4[%c0_5, %c0_6] : memref<8x128xf32, #tpu.memory_space<vmem>>, vector<8x128xf32>
    tpu.vector_store %arg4[%c0_5, %c0_6], %5 {strides = array<i32>} : memref<8x128xf32, #tpu.memory_space<vmem>>, vector<8x128xf32>,
    return
  }
  func.func @transform_0(%arg0: i32) -> (i32, i32) {
    %c0_i32 = arith.constant 0 : i32
    %c0_i32_0 = arith.constant 0 : i32
    %c0_i32_1 = arith.constant 0 : i32
    return %c0_i32, %c0_i32_0 : i32, i32
  }
  func.func @transform_1(%arg0: i32) -> (i32, i32) {
    %c0_i32 = arith.constant 0 : i32
    %c0_i32_0 = arith.constant 0 : i32
    return %c0_i32, %arg0 : i32, i32
  }
  func.func @transform_2(%arg0: i32) -> (i32, i32) {
    %c0_i32 = arith.constant 0 : i32
    %c0_i32_0 = arith.constant 0 : i32
    %c0_i32_1 = arith.constant 0 : i32
    return %c0_i32, %c0_i32_0 : i32, i32
  }
  func.func @transform_3(%arg0: i32) -> (i32, i32) {
    %c0_i32 = arith.constant 0 : i32
    %c0_i32_0 = arith.constant 0 : i32
    return %c0_i32, %arg0 : i32, i32
  }
}

module attributes {stable_mosaic.version = 11 : i64} {
  func.func @_vq_kernel(%arg0: i32, %arg1: memref<8x128xf32, #tpu.memory_space<vmem>>, %arg2: memref<64x8xf32, #tpu.memory_space<vmem>>, %arg3: memref<8x64xf32, #tpu.memory_space<vmem>>, %arg4: memref<8x128xf32, #tpu.memory_space<vmem>>, %arg5: memref<1x128xi32, #tpu.memory_space<vmem>>, %arg6: memref<1x1xf32, #tpu.memory_space<vmem>>, %arg7: memref<1x1xf32, #tpu.memory_space<vmem>>, %arg8: memref<1x1xf32, #tpu.memory_space<vmem>>, %arg9: memref<64x1xf32, #tpu.memory_space<vmem>>) attributes {dimension_semantics = [#tpu.dimension_semantics<arbitrary>], iteration_bounds = array<i64: 1>, scalar_prefetch = 0 : i64, scratch_operands = 2 : i64, tpu.core_type = #tpu.core_type<tc>, window_params = [{transform_indices = @transform_0, window_bounds = array<i64: 8, 128>}, {pipeline_mode = #tpu.pipeline_mode<synchronous>, transform_indices = @transform_1, window_bounds = array<i64: 64, 8>}, {pipeline_mode = #tpu.pipeline_mode<synchronous>, transform_indices = @transform_2, window_bounds = array<i64: 8, 64>}, {transform_indices = @transform_3, window_bounds = array<i64: 8, 128>}, {transform_indices = @transform_4, window_bounds = array<i64: 1, 128>}, {pipeline_mode = #tpu.pipeline_mode<synchronous>, transform_indices = @transform_5, window_bounds = array<i64: 1, 1>}, {pipeline_mode = #tpu.pipeline_mode<synchronous>, transform_indices = @transform_6, window_bounds = array<i64: 1, 1>}]} {
    %c0_i32 = arith.constant 0 : i32
    %0 = arith.cmpi eq, %arg0, %c0_i32 : i32
    %1 = arith.extui %0 : i1 to i32
    %c0_i32_0 = arith.constant 0 : i32
    %2 = arith.cmpi ne, %1, %c0_i32_0 : i32
    scf.if %2 {
      %cst_42 = arith.constant 0.000000e+00 : f32
      %79 = vector.broadcast %cst_42 : f32 to vector<1x1xf32>
      %c0_43 = arith.constant 0 : index
      %c0_44 = arith.constant 0 : index
      %80 = vector.load %arg8[%c0_43, %c0_44] : memref<1x1xf32, #tpu.memory_space<vmem>>, vector<1x1xf32>
      tpu.vector_store %arg8[%c0_43, %c0_44], %79 {strides = array<i32>} : memref<1x1xf32, #tpu.memory_space<vmem>>, vector<1x1xf32>,
      %cst_45 = arith.constant 0.000000e+00 : f32
      %81 = vector.broadcast %cst_45 : f32 to vector<64x1xf32>
      %c0_46 = arith.constant 0 : index
      %c0_47 = arith.constant 0 : index
      %82 = vector.load %arg9[%c0_46, %c0_47] : memref<64x1xf32, #tpu.memory_space<vmem>>, vector<64x1xf32>
      tpu.vector_store %arg9[%c0_46, %c0_47], %81 {strides = array<i32>} : memref<64x1xf32, #tpu.memory_space<vmem>>, vector<64x1xf32>,
    } else {
    }
    %c0 = arith.constant 0 : index
    %c0_1 = arith.constant 0 : index
    %3 = vector.load %arg1[%c0, %c0_1] : memref<8x128xf32, #tpu.memory_space<vmem>>, vector<8x128xf32>
    %c0_2 = arith.constant 0 : index
    %c0_3 = arith.constant 0 : index
    %4 = vector.load %arg2[%c0_2, %c0_3] : memref<64x8xf32, #tpu.memory_space<vmem>>, vector<64x8xf32>
    %c0_4 = arith.constant 0 : index
    %c0_5 = arith.constant 0 : index
    %5 = vector.load %arg3[%c0_4, %c0_5] : memref<8x64xf32, #tpu.memory_space<vmem>>, vector<8x64xf32>
    %6 = arith.mulf %3, %3 : vector<8x128xf32>
    %cst = arith.constant dense<0.000000e+00> : vector<128xf32>
    %7 = vector.multi_reduction <add>, %6, %cst [0] : vector<8x128xf32> to vector<128xf32>
    %8 = vector.shape_cast %7 : vector<128xf32> to vector<1x128xf32>
    %9 = arith.mulf %4, %4 : vector<64x8xf32>
    %cst_6 = arith.constant dense<0.000000e+00> : vector<64xf32>
    %10 = vector.multi_reduction <add>, %9, %cst_6 [1] : vector<64x8xf32> to vector<64xf32>
    %11 = vector.shape_cast %10 : vector<64xf32> to vector<64x1xf32>
    %cst_7 = arith.constant dense<0.000000e+00> : vector<64x128xf32>
    %12 = tpu.matmul %4, %3, %cst_7 {dimension_numbers = #tpu.dot_dimension_numbers<[1], [0], [0], [1], [0, 0, 1, 1], [], []>} : vector<64x8xf32>, vector<8x128xf32>, vector<64x128xf32> -> vector<64x128xf32>
    %13 = vector.broadcast %8 : vector<1x128xf32> to vector<64x128xf32>
    %14 = vector.broadcast %11 : vector<64x1xf32> to vector<64x128xf32>
    %15 = arith.addf %13, %14 : vector<64x128xf32>
    %cst_8 = arith.constant 2.000000e+00 : f32
    %16 = vector.broadcast %cst_8 : f32 to vector<64x128xf32>
    %17 = arith.mulf %16, %12 : vector<64x128xf32>
    %18 = arith.subf %15, %17 : vector<64x128xf32>
    %19 = tpu.iota {dimensions = array<i32: 0>} : vector<64x128xi32>
    %cst_9 = arith.constant dense<0x7F800000> : vector<128xf32>
    %20 = vector.multi_reduction <minimumf>, %18, %cst_9 [0] : vector<64x128xf32> to vector<128xf32>
    %21 = vector.shape_cast %20 : vector<128xf32> to vector<1x128xf32>
    %22 = vector.broadcast %21 : vector<1x128xf32> to vector<64x128xf32>
    %23 = arith.cmpf oeq, %18, %22 : vector<64x128xf32>
    %c64_i32 = arith.constant 64 : i32
    %24 = vector.broadcast %c64_i32 : i32 to vector<64x128xi32>
    %25 = arith.select %23, %19, %24 : vector<64x128xi1>, vector<64x128xi32>
    %cst_10 = arith.constant dense<2147483647> : vector<128xi32>
    %26 = vector.multi_reduction <minsi>, %25, %cst_10 [0] : vector<64x128xi32> to vector<128xi32>
    %27 = vector.shape_cast %26 : vector<128xi32> to vector<1x128xi32>
    %28 = tpu.iota {dimensions = array<i32: 1>} : vector<64x128xi32>
    %c128_i32 = arith.constant 128 : i32
    %29 = arith.muli %arg0, %c128_i32 : i32
    %30 = vector.broadcast %29 : i32 to vector<64x128xi32>
    %31 = arith.addi %28, %30 : vector<64x128xi32>
    %c32_i32 = arith.constant 32 : i32
    %32 = vector.broadcast %c32_i32 : i32 to vector<64x128xi32>
    %33 = arith.cmpi slt, %31, %32 : vector<64x128xi32>
    %34 = arith.extui %33 : vector<64x128xi1> to vector<64x128xi32>
    %35 = arith.sitofp %34 : vector<64x128xi32> to vector<64x128xf32>
    %36 = vector.broadcast %27 : vector<1x128xi32> to vector<64x128xi32>
    %37 = arith.cmpi eq, %19, %36 : vector<64x128xi32>
    %cst_11 = arith.constant 1.000000e+00 : f32
    %cst_12 = arith.constant 0.000000e+00 : f32
    %38 = vector.broadcast %cst_11 : f32 to vector<64x128xf32>
    %39 = vector.broadcast %cst_12 : f32 to vector<64x128xf32>
    %40 = arith.select %37, %38, %39 : vector<64x128xi1>, vector<64x128xf32>
    %41 = arith.mulf %40, %35 : vector<64x128xf32>
    %cst_13 = arith.constant dense<0.000000e+00> : vector<8x128xf32>
    %42 = tpu.matmul %5, %41, %cst_13 {dimension_numbers = #tpu.dot_dimension_numbers<[1], [0], [0], [1], [0, 0, 1, 1], [], []>} : vector<8x64xf32>, vector<64x128xf32>, vector<8x128xf32> -> vector<8x128xf32>
    %43 = arith.subf %42, %3 : vector<8x128xf32>
    %44 = arith.mulf %43, %43 : vector<8x128xf32>
    %cst_14 = arith.constant dense<0.000000e+00> : vector<8xf32>
    %45 = vector.multi_reduction <add>, %44, %cst_14 [1] : vector<8x128xf32> to vector<8xf32>
    %46 = vector.shape_cast %45 : vector<8xf32> to vector<8x1xf32>
    %c0_15 = arith.constant 0 : index
    %c0_16 = arith.constant 0 : index
    %47 = vector.load %arg8[%c0_15, %c0_16] : memref<1x1xf32, #tpu.memory_space<vmem>>, vector<1x1xf32>
    %cst_17 = arith.constant dense<0.000000e+00> : vector<1xf32>
    %48 = vector.multi_reduction <add>, %46, %cst_17 [0] : vector<8x1xf32> to vector<1xf32>
    %49 = vector.shape_cast %48 : vector<1xf32> to vector<1x1xf32>
    %50 = arith.addf %47, %49 : vector<1x1xf32>
    %c0_18 = arith.constant 0 : index
    %c0_19 = arith.constant 0 : index
    %51 = vector.load %arg8[%c0_18, %c0_19] : memref<1x1xf32, #tpu.memory_space<vmem>>, vector<1x1xf32>
    tpu.vector_store %arg8[%c0_18, %c0_19], %50 {strides = array<i32>} : memref<1x1xf32, #tpu.memory_space<vmem>>, vector<1x1xf32>,
    %c0_20 = arith.constant 0 : index
    %c0_21 = arith.constant 0 : index
    %52 = vector.load %arg9[%c0_20, %c0_21] : memref<64x1xf32, #tpu.memory_space<vmem>>, vector<64x1xf32>
    %cst_22 = arith.constant dense<0.000000e+00> : vector<64xf32>
    %53 = vector.multi_reduction <add>, %41, %cst_22 [1] : vector<64x128xf32> to vector<64xf32>
    %54 = vector.shape_cast %53 : vector<64xf32> to vector<64x1xf32>
    %55 = arith.addf %52, %54 : vector<64x1xf32>
    %c0_23 = arith.constant 0 : index
    %c0_24 = arith.constant 0 : index
    %56 = vector.load %arg9[%c0_23, %c0_24] : memref<64x1xf32, #tpu.memory_space<vmem>>, vector<64x1xf32>
    tpu.vector_store %arg9[%c0_23, %c0_24], %55 {strides = array<i32>} : memref<64x1xf32, #tpu.memory_space<vmem>>, vector<64x1xf32>,
    %c0_25 = arith.constant 0 : index
    %c0_26 = arith.constant 0 : index
    %57 = vector.load %arg4[%c0_25, %c0_26] : memref<8x128xf32, #tpu.memory_space<vmem>>, vector<8x128xf32>
    tpu.vector_store %arg4[%c0_25, %c0_26], %42 {strides = array<i32>} : memref<8x128xf32, #tpu.memory_space<vmem>>, vector<8x128xf32>,
    %c0_27 = arith.constant 0 : index
    %c0_28 = arith.constant 0 : index
    %58 = vector.load %arg5[%c0_27, %c0_28] : memref<1x128xi32, #tpu.memory_space<vmem>>, vector<1x128xi32>
    tpu.vector_store %arg5[%c0_27, %c0_28], %27 {strides = array<i32>} : memref<1x128xi32, #tpu.memory_space<vmem>>, vector<1x128xi32>,
    %c0_29 = arith.constant 0 : index
    %c0_30 = arith.constant 0 : index
    %59 = vector.load %arg8[%c0_29, %c0_30] : memref<1x1xf32, #tpu.memory_space<vmem>>, vector<1x1xf32>
    %cst_31 = arith.constant 3.906250e-03 : f32
    %60 = vector.broadcast %cst_31 : f32 to vector<1x1xf32>
    %61 = arith.mulf %59, %60 : vector<1x1xf32>
    %c0_32 = arith.constant 0 : index
    %c0_33 = arith.constant 0 : index
    %62 = vector.load %arg6[%c0_32, %c0_33] : memref<1x1xf32, #tpu.memory_space<vmem>>, vector<1x1xf32>
    tpu.vector_store %arg6[%c0_32, %c0_33], %61 {strides = array<i32>} : memref<1x1xf32, #tpu.memory_space<vmem>>, vector<1x1xf32>,
    %c0_34 = arith.constant 0 : index
    %c0_35 = arith.constant 0 : index
    %63 = vector.load %arg9[%c0_34, %c0_35] : memref<64x1xf32, #tpu.memory_space<vmem>>, vector<64x1xf32>
    %cst_36 = arith.constant 3.125000e-02 : f32
    %64 = vector.broadcast %cst_36 : f32 to vector<64x1xf32>
    %65 = arith.mulf %63, %64 : vector<64x1xf32>
    %cst_37 = arith.constant 1.000000e-10 : f32
    %66 = vector.broadcast %cst_37 : f32 to vector<64x1xf32>
    %67 = arith.addf %65, %66 : vector<64x1xf32>
    %68 = math.log %67 : vector<64x1xf32>
    %69 = arith.mulf %65, %68 : vector<64x1xf32>
    %70 = vector.shape_cast %69 : vector<64x1xf32> to vector<1x64x1xf32>
    %cst_38 = arith.constant dense<0.000000e+00> : vector<1xf32>
    %71 = vector.multi_reduction <add>, %70, %cst_38 [1, 2] : vector<1x64x1xf32> to vector<1xf32>
    %72 = vector.shape_cast %71 : vector<1xf32> to vector<1x1x1xf32>
    %73 = vector.extract %72[0, 0, 0] : f32 from vector<1x1x1xf32>
    %74 = vector.broadcast %73 : f32 to vector<1x1xf32>
    %cst_39 = arith.constant 0.000000e+00 : f32
    %75 = vector.broadcast %cst_39 : f32 to vector<1x1xf32>
    %76 = arith.subf %75, %74 : vector<1x1xf32>
    %77 = math.exp %76 : vector<1x1xf32>
    %c0_40 = arith.constant 0 : index
    %c0_41 = arith.constant 0 : index
    %78 = vector.load %arg7[%c0_40, %c0_41] : memref<1x1xf32, #tpu.memory_space<vmem>>, vector<1x1xf32>
    tpu.vector_store %arg7[%c0_40, %c0_41], %77 {strides = array<i32>} : memref<1x1xf32, #tpu.memory_space<vmem>>, vector<1x1xf32>,
    return
  }
  func.func @transform_0(%arg0: i32) -> (i32, i32) {
    %c0_i32 = arith.constant 0 : i32
    %c0_i32_0 = arith.constant 0 : i32
    return %c0_i32, %arg0 : i32, i32
  }
  func.func @transform_1(%arg0: i32) -> (i32, i32) {
    %c0_i32 = arith.constant 0 : i32
    %c0_i32_0 = arith.constant 0 : i32
    %c0_i32_1 = arith.constant 0 : i32
    return %c0_i32, %c0_i32_0 : i32, i32
  }
  func.func @transform_2(%arg0: i32) -> (i32, i32) {
    %c0_i32 = arith.constant 0 : i32
    %c0_i32_0 = arith.constant 0 : i32
    %c0_i32_1 = arith.constant 0 : i32
    return %c0_i32, %c0_i32_0 : i32, i32
  }
  func.func @transform_3(%arg0: i32) -> (i32, i32) {
    %c0_i32 = arith.constant 0 : i32
    %c0_i32_0 = arith.constant 0 : i32
    return %c0_i32, %arg0 : i32, i32
  }
  func.func @transform_4(%arg0: i32) -> (i32, i32) {
    %c0_i32 = arith.constant 0 : i32
    %c0_i32_0 = arith.constant 0 : i32
    return %c0_i32, %arg0 : i32, i32
  }
  func.func @transform_5(%arg0: i32) -> (i32, i32) {
    %c0_i32 = arith.constant 0 : i32
    %c0_i32_0 = arith.constant 0 : i32
    %c0_i32_1 = arith.constant 0 : i32
    return %c0_i32, %c0_i32_0 : i32, i32
  }
  func.func @transform_6(%arg0: i32) -> (i32, i32) {
    %c0_i32 = arith.constant 0 : i32
    %c0_i32_0 = arith.constant 0 : i32
    %c0_i32_1 = arith.constant 0 : i32
    return %c0_i32, %c0_i32_0 : i32, i32
  }
}

module attributes {stable_mosaic.version = 11 : i64} {
  func.func @_conv_mm_kernel(%arg0: i32, %arg1: memref<32x72xbf16, #tpu.memory_space<vmem>>, %arg2: memref<72x128xbf16, #tpu.memory_space<vmem>>, %arg3: memref<32x1xf32, #tpu.memory_space<vmem>>, %arg4: memref<32x128xf32, #tpu.memory_space<vmem>>) attributes {dimension_semantics = [#tpu.dimension_semantics<parallel>], iteration_bounds = array<i64: 1>, scalar_prefetch = 0 : i64, scratch_operands = 0 : i64, tpu.core_type = #tpu.core_type<tc>, window_params = [{pipeline_mode = #tpu.pipeline_mode<synchronous>, transform_indices = @transform_0, window_bounds = array<i64: 32, 72>}, {transform_indices = @transform_1, window_bounds = array<i64: 72, 128>}, {pipeline_mode = #tpu.pipeline_mode<synchronous>, transform_indices = @transform_2, window_bounds = array<i64: 32, 1>}, {transform_indices = @transform_3, window_bounds = array<i64: 32, 128>}]} {
    %c0 = arith.constant 0 : index
    %c0_0 = arith.constant 0 : index
    %0 = vector.load %arg2[%c0, %c0_0] : memref<72x128xbf16, #tpu.memory_space<vmem>>, vector<72x128xbf16>
    %c0_1 = arith.constant 0 : index
    %c0_2 = arith.constant 0 : index
    %1 = vector.load %arg1[%c0_1, %c0_2] : memref<32x72xbf16, #tpu.memory_space<vmem>>, vector<32x72xbf16>
    %cst = arith.constant dense<0.000000e+00> : vector<32x128xf32>
    %2 = tpu.matmul %1, %0, %cst {dimension_numbers = #tpu.dot_dimension_numbers<[1], [0], [0], [1], [0, 0, 1, 1], [], []>} : vector<32x72xbf16>, vector<72x128xbf16>, vector<32x128xf32> -> vector<32x128xf32>
    %c0_3 = arith.constant 0 : index
    %c0_4 = arith.constant 0 : index
    %3 = vector.load %arg3[%c0_3, %c0_4] : memref<32x1xf32, #tpu.memory_space<vmem>>, vector<32x1xf32>
    %4 = vector.broadcast %3 : vector<32x1xf32> to vector<32x128xf32>
    %5 = arith.addf %2, %4 : vector<32x128xf32>
    %c0_5 = arith.constant 0 : index
    %c0_6 = arith.constant 0 : index
    %6 = vector.load %arg4[%c0_5, %c0_6] : memref<32x128xf32, #tpu.memory_space<vmem>>, vector<32x128xf32>
    tpu.vector_store %arg4[%c0_5, %c0_6], %5 {strides = array<i32>} : memref<32x128xf32, #tpu.memory_space<vmem>>, vector<32x128xf32>,
    return
  }
  func.func @transform_0(%arg0: i32) -> (i32, i32) {
    %c0_i32 = arith.constant 0 : i32
    %c0_i32_0 = arith.constant 0 : i32
    %c0_i32_1 = arith.constant 0 : i32
    return %c0_i32, %c0_i32_0 : i32, i32
  }
  func.func @transform_1(%arg0: i32) -> (i32, i32) {
    %c0_i32 = arith.constant 0 : i32
    %c0_i32_0 = arith.constant 0 : i32
    return %c0_i32, %arg0 : i32, i32
  }
  func.func @transform_2(%arg0: i32) -> (i32, i32) {
    %c0_i32 = arith.constant 0 : i32
    %c0_i32_0 = arith.constant 0 : i32
    %c0_i32_1 = arith.constant 0 : i32
    return %c0_i32, %c0_i32_0 : i32, i32
  }
  func.func @transform_3(%arg0: i32) -> (i32, i32) {
    %c0_i32 = arith.constant 0 : i32
    %c0_i32_0 = arith.constant 0 : i32
    return %c0_i32, %arg0 : i32, i32
  }
}

module attributes {stable_mosaic.version = 11 : i64} {
  func.func @_conv_mm_kernel(%arg0: i32, %arg1: memref<16x512xbf16, #tpu.memory_space<vmem>>, %arg2: memref<512x128xbf16, #tpu.memory_space<vmem>>, %arg3: memref<16x1xf32, #tpu.memory_space<vmem>>, %arg4: memref<16x128xf32, #tpu.memory_space<vmem>>) attributes {dimension_semantics = [#tpu.dimension_semantics<parallel>], iteration_bounds = array<i64: 1>, scalar_prefetch = 0 : i64, scratch_operands = 0 : i64, tpu.core_type = #tpu.core_type<tc>, window_params = [{pipeline_mode = #tpu.pipeline_mode<synchronous>, transform_indices = @transform_0, window_bounds = array<i64: 16, 512>}, {transform_indices = @transform_1, window_bounds = array<i64: 512, 128>}, {pipeline_mode = #tpu.pipeline_mode<synchronous>, transform_indices = @transform_2, window_bounds = array<i64: 16, 1>}, {transform_indices = @transform_3, window_bounds = array<i64: 16, 128>}]} {
    %c0 = arith.constant 0 : index
    %c0_0 = arith.constant 0 : index
    %0 = vector.load %arg2[%c0, %c0_0] : memref<512x128xbf16, #tpu.memory_space<vmem>>, vector<512x128xbf16>
    %c0_1 = arith.constant 0 : index
    %c0_2 = arith.constant 0 : index
    %1 = vector.load %arg1[%c0_1, %c0_2] : memref<16x512xbf16, #tpu.memory_space<vmem>>, vector<16x512xbf16>
    %cst = arith.constant dense<0.000000e+00> : vector<16x128xf32>
    %2 = tpu.matmul %1, %0, %cst {dimension_numbers = #tpu.dot_dimension_numbers<[1], [0], [0], [1], [0, 0, 1, 1], [], []>} : vector<16x512xbf16>, vector<512x128xbf16>, vector<16x128xf32> -> vector<16x128xf32>
    %c0_3 = arith.constant 0 : index
    %c0_4 = arith.constant 0 : index
    %3 = vector.load %arg3[%c0_3, %c0_4] : memref<16x1xf32, #tpu.memory_space<vmem>>, vector<16x1xf32>
    %4 = vector.broadcast %3 : vector<16x1xf32> to vector<16x128xf32>
    %5 = arith.addf %2, %4 : vector<16x128xf32>
    %cst_5 = arith.constant 0.000000e+00 : f32
    %6 = vector.broadcast %cst_5 : f32 to vector<16x128xf32>
    %7 = arith.maximumf %5, %6 : vector<16x128xf32>
    %c0_6 = arith.constant 0 : index
    %c0_7 = arith.constant 0 : index
    %8 = vector.load %arg4[%c0_6, %c0_7] : memref<16x128xf32, #tpu.memory_space<vmem>>, vector<16x128xf32>
    tpu.vector_store %arg4[%c0_6, %c0_7], %7 {strides = array<i32>} : memref<16x128xf32, #tpu.memory_space<vmem>>, vector<16x128xf32>,
    return
  }
  func.func @transform_0(%arg0: i32) -> (i32, i32) {
    %c0_i32 = arith.constant 0 : i32
    %c0_i32_0 = arith.constant 0 : i32
    %c0_i32_1 = arith.constant 0 : i32
    return %c0_i32, %c0_i32_0 : i32, i32
  }
  func.func @transform_1(%arg0: i32) -> (i32, i32) {
    %c0_i32 = arith.constant 0 : i32
    %c0_i32_0 = arith.constant 0 : i32
    return %c0_i32, %arg0 : i32, i32
  }
  func.func @transform_2(%arg0: i32) -> (i32, i32) {
    %c0_i32 = arith.constant 0 : i32
    %c0_i32_0 = arith.constant 0 : i32
    %c0_i32_1 = arith.constant 0 : i32
    return %c0_i32, %c0_i32_0 : i32, i32
  }
  func.func @transform_3(%arg0: i32) -> (i32, i32) {
    %c0_i32 = arith.constant 0 : i32
    %c0_i32_0 = arith.constant 0 : i32
    return %c0_i32, %arg0 : i32, i32
  }
}

module attributes {stable_mosaic.version = 11 : i64} {
  func.func @_conv_mm_kernel(%arg0: i32, %arg1: memref<1x256xbf16, #tpu.memory_space<vmem>>, %arg2: memref<256x512xbf16, #tpu.memory_space<vmem>>, %arg3: memref<1x1xf32, #tpu.memory_space<vmem>>, %arg4: memref<1x512xf32, #tpu.memory_space<vmem>>) attributes {dimension_semantics = [#tpu.dimension_semantics<parallel>], iteration_bounds = array<i64: 1>, scalar_prefetch = 0 : i64, scratch_operands = 0 : i64, tpu.core_type = #tpu.core_type<tc>, window_params = [{pipeline_mode = #tpu.pipeline_mode<synchronous>, transform_indices = @transform_0, window_bounds = array<i64: 1, 256>}, {transform_indices = @transform_1, window_bounds = array<i64: 256, 512>}, {pipeline_mode = #tpu.pipeline_mode<synchronous>, transform_indices = @transform_2, window_bounds = array<i64: 1, 1>}, {transform_indices = @transform_3, window_bounds = array<i64: 1, 512>}]} {
    %c0 = arith.constant 0 : index
    %c0_0 = arith.constant 0 : index
    %0 = vector.load %arg2[%c0, %c0_0] : memref<256x512xbf16, #tpu.memory_space<vmem>>, vector<256x512xbf16>
    %c0_1 = arith.constant 0 : index
    %c0_2 = arith.constant 0 : index
    %1 = vector.load %arg1[%c0_1, %c0_2] : memref<1x256xbf16, #tpu.memory_space<vmem>>, vector<1x256xbf16>
    %cst = arith.constant dense<0.000000e+00> : vector<1x512xf32>
    %2 = tpu.matmul %1, %0, %cst {dimension_numbers = #tpu.dot_dimension_numbers<[1], [0], [0], [1], [0, 0, 1, 1], [], []>} : vector<1x256xbf16>, vector<256x512xbf16>, vector<1x512xf32> -> vector<1x512xf32>
    %c0_3 = arith.constant 0 : index
    %c0_4 = arith.constant 0 : index
    %3 = vector.load %arg3[%c0_3, %c0_4] : memref<1x1xf32, #tpu.memory_space<vmem>>, vector<1x1xf32>
    %4 = vector.broadcast %3 : vector<1x1xf32> to vector<1x512xf32>
    %5 = arith.addf %2, %4 : vector<1x512xf32>
    %c0_5 = arith.constant 0 : index
    %c0_6 = arith.constant 0 : index
    %6 = vector.load %arg4[%c0_5, %c0_6] : memref<1x512xf32, #tpu.memory_space<vmem>>, vector<1x512xf32>
    tpu.vector_store %arg4[%c0_5, %c0_6], %5 {strides = array<i32>} : memref<1x512xf32, #tpu.memory_space<vmem>>, vector<1x512xf32>,
    return
  }
  func.func @transform_0(%arg0: i32) -> (i32, i32) {
    %c0_i32 = arith.constant 0 : i32
    %c0_i32_0 = arith.constant 0 : i32
    %c0_i32_1 = arith.constant 0 : i32
    return %c0_i32, %c0_i32_0 : i32, i32
  }
  func.func @transform_1(%arg0: i32) -> (i32, i32) {
    %c0_i32 = arith.constant 0 : i32
    %c0_i32_0 = arith.constant 0 : i32
    return %c0_i32, %arg0 : i32, i32
  }
  func.func @transform_2(%arg0: i32) -> (i32, i32) {
    %c0_i32 = arith.constant 0 : i32
    %c0_i32_0 = arith.constant 0 : i32
    %c0_i32_1 = arith.constant 0 : i32
    return %c0_i32, %c0_i32_0 : i32, i32
  }
  func.func @transform_3(%arg0: i32) -> (i32, i32) {
    %c0_i32 = arith.constant 0 : i32
    %c0_i32_0 = arith.constant 0 : i32
    return %c0_i32, %arg0 : i32, i32
  }
}

module attributes {stable_mosaic.version = 11 : i64} {
  func.func @_neg_add_kernel(%arg0: i32, %arg1: memref<1x512xf32, #tpu.memory_space<vmem>>, %arg2: memref<1x512xf32, #tpu.memory_space<vmem>>, %arg3: memref<1x512xf32, #tpu.memory_space<vmem>>) attributes {dimension_semantics = [#tpu.dimension_semantics<parallel>], iteration_bounds = array<i64: 1>, scalar_prefetch = 0 : i64, scratch_operands = 0 : i64, tpu.core_type = #tpu.core_type<tc>, window_params = [{transform_indices = @transform_0, window_bounds = array<i64: 1, 512>}, {transform_indices = @transform_1, window_bounds = array<i64: 1, 512>}, {transform_indices = @transform_2, window_bounds = array<i64: 1, 512>}]} {
    %c0 = arith.constant 0 : index
    %c0_0 = arith.constant 0 : index
    %0 = vector.load %arg1[%c0, %c0_0] : memref<1x512xf32, #tpu.memory_space<vmem>>, vector<1x512xf32>
    %c0_1 = arith.constant 0 : index
    %c0_2 = arith.constant 0 : index
    %1 = vector.load %arg2[%c0_1, %c0_2] : memref<1x512xf32, #tpu.memory_space<vmem>>, vector<1x512xf32>
    %2 = arith.addf %0, %1 : vector<1x512xf32>
    %cst = arith.constant 0.000000e+00 : f32
    %3 = vector.broadcast %cst : f32 to vector<1x512xf32>
    %4 = arith.subf %3, %2 : vector<1x512xf32>
    %c0_3 = arith.constant 0 : index
    %c0_4 = arith.constant 0 : index
    %5 = vector.load %arg3[%c0_3, %c0_4] : memref<1x512xf32, #tpu.memory_space<vmem>>, vector<1x512xf32>
    tpu.vector_store %arg3[%c0_3, %c0_4], %4 {strides = array<i32>} : memref<1x512xf32, #tpu.memory_space<vmem>>, vector<1x512xf32>,
    return
  }
  func.func @transform_0(%arg0: i32) -> (i32, i32) {
    %c0_i32 = arith.constant 0 : i32
    %c0_i32_0 = arith.constant 0 : i32
    return %c0_i32, %arg0 : i32, i32
  }
  func.func @transform_1(%arg0: i32) -> (i32, i32) {
    %c0_i32 = arith.constant 0 : i32
    %c0_i32_0 = arith.constant 0 : i32
    return %c0_i32, %arg0 : i32, i32
  }
  func.func @transform_2(%arg0: i32) -> (i32, i32) {
    %c0_i32 = arith.constant 0 : i32
    %c0_i32_0 = arith.constant 0 : i32
    return %c0_i32, %arg0 : i32, i32
  }
}

module attributes {stable_mosaic.version = 11 : i64} {
  func.func @_ssim_kernel(%arg0: i32, %arg1: memref<2x26x26xf32, #tpu.memory_space<vmem>>, %arg2: memref<2x26x26xf32, #tpu.memory_space<vmem>>, %arg3: memref<1x1xf32, #tpu.memory_space<vmem>>) attributes {dimension_semantics = [#tpu.dimension_semantics<arbitrary>], iteration_bounds = array<i64: 1>, scalar_prefetch = 0 : i64, scratch_operands = 0 : i64, tpu.core_type = #tpu.core_type<tc>, window_params = [{pipeline_mode = #tpu.pipeline_mode<synchronous>, transform_indices = @transform_0, window_bounds = array<i64: 2, 26, 26>}, {pipeline_mode = #tpu.pipeline_mode<synchronous>, transform_indices = @transform_1, window_bounds = array<i64: 2, 26, 26>}, {pipeline_mode = #tpu.pipeline_mode<synchronous>, transform_indices = @transform_2, window_bounds = array<i64: 1, 1>}]} {
    %cst = arith.constant 0.000000e+00 : f32
    %0 = vector.broadcast %cst : f32 to vector<1x1xf32>
    %c0 = arith.constant 0 : index
    %c0_0 = arith.constant 0 : index
    %c0_1 = arith.constant 0 : index
    %1 = vector.load %arg1[%c0, %c0_0, %c0_1] : memref<2x26x26xf32, #tpu.memory_space<vmem>>, vector<1x26x26xf32>
    %2 = vector.shape_cast %1 : vector<1x26x26xf32> to vector<26x26xf32>
    %c0_2 = arith.constant 0 : index
    %c0_3 = arith.constant 0 : index
    %c0_4 = arith.constant 0 : index
    %3 = vector.load %arg2[%c0_2, %c0_3, %c0_4] : memref<2x26x26xf32, #tpu.memory_space<vmem>>, vector<1x26x26xf32>
    %4 = vector.shape_cast %3 : vector<1x26x26xf32> to vector<26x26xf32>
    %5 = vector.extract_strided_slice %2 {offsets = [0, 0], sizes = [26, 16], strides = [1, 1]} : vector<26x26xf32> to vector<26x16xf32>
    %6 = vector.extract_strided_slice %2 {offsets = [0, 1], sizes = [26, 16], strides = [1, 1]} : vector<26x26xf32> to vector<26x16xf32>
    %7 = arith.addf %5, %6 : vector<26x16xf32>
    %8 = vector.extract_strided_slice %2 {offsets = [0, 2], sizes = [26, 16], strides = [1, 1]} : vector<26x26xf32> to vector<26x16xf32>
    %9 = arith.addf %7, %8 : vector<26x16xf32>
    %10 = vector.extract_strided_slice %2 {offsets = [0, 3], sizes = [26, 16], strides = [1, 1]} : vector<26x26xf32> to vector<26x16xf32>
    %11 = arith.addf %9, %10 : vector<26x16xf32>
    %12 = vector.extract_strided_slice %2 {offsets = [0, 4], sizes = [26, 16], strides = [1, 1]} : vector<26x26xf32> to vector<26x16xf32>
    %13 = arith.addf %11, %12 : vector<26x16xf32>
    %14 = vector.extract_strided_slice %2 {offsets = [0, 5], sizes = [26, 16], strides = [1, 1]} : vector<26x26xf32> to vector<26x16xf32>
    %15 = arith.addf %13, %14 : vector<26x16xf32>
    %16 = vector.extract_strided_slice %2 {offsets = [0, 6], sizes = [26, 16], strides = [1, 1]} : vector<26x26xf32> to vector<26x16xf32>
    %17 = arith.addf %15, %16 : vector<26x16xf32>
    %18 = vector.extract_strided_slice %2 {offsets = [0, 7], sizes = [26, 16], strides = [1, 1]} : vector<26x26xf32> to vector<26x16xf32>
    %19 = arith.addf %17, %18 : vector<26x16xf32>
    %20 = vector.extract_strided_slice %2 {offsets = [0, 8], sizes = [26, 16], strides = [1, 1]} : vector<26x26xf32> to vector<26x16xf32>
    %21 = arith.addf %19, %20 : vector<26x16xf32>
    %22 = vector.extract_strided_slice %2 {offsets = [0, 9], sizes = [26, 16], strides = [1, 1]} : vector<26x26xf32> to vector<26x16xf32>
    %23 = arith.addf %21, %22 : vector<26x16xf32>
    %24 = vector.extract_strided_slice %2 {offsets = [0, 10], sizes = [26, 16], strides = [1, 1]} : vector<26x26xf32> to vector<26x16xf32>
    %25 = arith.addf %23, %24 : vector<26x16xf32>
    %26 = vector.extract_strided_slice %25 {offsets = [0, 0], sizes = [16, 16], strides = [1, 1]} : vector<26x16xf32> to vector<16x16xf32>
    %27 = vector.extract_strided_slice %25 {offsets = [1, 0], sizes = [16, 16], strides = [1, 1]} : vector<26x16xf32> to vector<16x16xf32>
    %28 = arith.addf %26, %27 : vector<16x16xf32>
    %29 = vector.extract_strided_slice %25 {offsets = [2, 0], sizes = [16, 16], strides = [1, 1]} : vector<26x16xf32> to vector<16x16xf32>
    %30 = arith.addf %28, %29 : vector<16x16xf32>
    %31 = vector.extract_strided_slice %25 {offsets = [3, 0], sizes = [16, 16], strides = [1, 1]} : vector<26x16xf32> to vector<16x16xf32>
    %32 = arith.addf %30, %31 : vector<16x16xf32>
    %33 = vector.extract_strided_slice %25 {offsets = [4, 0], sizes = [16, 16], strides = [1, 1]} : vector<26x16xf32> to vector<16x16xf32>
    %34 = arith.addf %32, %33 : vector<16x16xf32>
    %35 = vector.extract_strided_slice %25 {offsets = [5, 0], sizes = [16, 16], strides = [1, 1]} : vector<26x16xf32> to vector<16x16xf32>
    %36 = arith.addf %34, %35 : vector<16x16xf32>
    %37 = vector.extract_strided_slice %25 {offsets = [6, 0], sizes = [16, 16], strides = [1, 1]} : vector<26x16xf32> to vector<16x16xf32>
    %38 = arith.addf %36, %37 : vector<16x16xf32>
    %39 = vector.extract_strided_slice %25 {offsets = [7, 0], sizes = [16, 16], strides = [1, 1]} : vector<26x16xf32> to vector<16x16xf32>
    %40 = arith.addf %38, %39 : vector<16x16xf32>
    %41 = vector.extract_strided_slice %25 {offsets = [8, 0], sizes = [16, 16], strides = [1, 1]} : vector<26x16xf32> to vector<16x16xf32>
    %42 = arith.addf %40, %41 : vector<16x16xf32>
    %43 = vector.extract_strided_slice %25 {offsets = [9, 0], sizes = [16, 16], strides = [1, 1]} : vector<26x16xf32> to vector<16x16xf32>
    %44 = arith.addf %42, %43 : vector<16x16xf32>
    %45 = vector.extract_strided_slice %25 {offsets = [10, 0], sizes = [16, 16], strides = [1, 1]} : vector<26x16xf32> to vector<16x16xf32>
    %46 = arith.addf %44, %45 : vector<16x16xf32>
    %cst_5 = arith.constant 0.00826446246 : f32
    %47 = vector.broadcast %cst_5 : f32 to vector<16x16xf32>
    %48 = arith.mulf %46, %47 : vector<16x16xf32>
    %49 = vector.extract_strided_slice %4 {offsets = [0, 0], sizes = [26, 16], strides = [1, 1]} : vector<26x26xf32> to vector<26x16xf32>
    %50 = vector.extract_strided_slice %4 {offsets = [0, 1], sizes = [26, 16], strides = [1, 1]} : vector<26x26xf32> to vector<26x16xf32>
    %51 = arith.addf %49, %50 : vector<26x16xf32>
    %52 = vector.extract_strided_slice %4 {offsets = [0, 2], sizes = [26, 16], strides = [1, 1]} : vector<26x26xf32> to vector<26x16xf32>
    %53 = arith.addf %51, %52 : vector<26x16xf32>
    %54 = vector.extract_strided_slice %4 {offsets = [0, 3], sizes = [26, 16], strides = [1, 1]} : vector<26x26xf32> to vector<26x16xf32>
    %55 = arith.addf %53, %54 : vector<26x16xf32>
    %56 = vector.extract_strided_slice %4 {offsets = [0, 4], sizes = [26, 16], strides = [1, 1]} : vector<26x26xf32> to vector<26x16xf32>
    %57 = arith.addf %55, %56 : vector<26x16xf32>
    %58 = vector.extract_strided_slice %4 {offsets = [0, 5], sizes = [26, 16], strides = [1, 1]} : vector<26x26xf32> to vector<26x16xf32>
    %59 = arith.addf %57, %58 : vector<26x16xf32>
    %60 = vector.extract_strided_slice %4 {offsets = [0, 6], sizes = [26, 16], strides = [1, 1]} : vector<26x26xf32> to vector<26x16xf32>
    %61 = arith.addf %59, %60 : vector<26x16xf32>
    %62 = vector.extract_strided_slice %4 {offsets = [0, 7], sizes = [26, 16], strides = [1, 1]} : vector<26x26xf32> to vector<26x16xf32>
    %63 = arith.addf %61, %62 : vector<26x16xf32>
    %64 = vector.extract_strided_slice %4 {offsets = [0, 8], sizes = [26, 16], strides = [1, 1]} : vector<26x26xf32> to vector<26x16xf32>
    %65 = arith.addf %63, %64 : vector<26x16xf32>
    %66 = vector.extract_strided_slice %4 {offsets = [0, 9], sizes = [26, 16], strides = [1, 1]} : vector<26x26xf32> to vector<26x16xf32>
    %67 = arith.addf %65, %66 : vector<26x16xf32>
    %68 = vector.extract_strided_slice %4 {offsets = [0, 10], sizes = [26, 16], strides = [1, 1]} : vector<26x26xf32> to vector<26x16xf32>
    %69 = arith.addf %67, %68 : vector<26x16xf32>
    %70 = vector.extract_strided_slice %69 {offsets = [0, 0], sizes = [16, 16], strides = [1, 1]} : vector<26x16xf32> to vector<16x16xf32>
    %71 = vector.extract_strided_slice %69 {offsets = [1, 0], sizes = [16, 16], strides = [1, 1]} : vector<26x16xf32> to vector<16x16xf32>
    %72 = arith.addf %70, %71 : vector<16x16xf32>
    %73 = vector.extract_strided_slice %69 {offsets = [2, 0], sizes = [16, 16], strides = [1, 1]} : vector<26x16xf32> to vector<16x16xf32>
    %74 = arith.addf %72, %73 : vector<16x16xf32>
    %75 = vector.extract_strided_slice %69 {offsets = [3, 0], sizes = [16, 16], strides = [1, 1]} : vector<26x16xf32> to vector<16x16xf32>
    %76 = arith.addf %74, %75 : vector<16x16xf32>
    %77 = vector.extract_strided_slice %69 {offsets = [4, 0], sizes = [16, 16], strides = [1, 1]} : vector<26x16xf32> to vector<16x16xf32>
    %78 = arith.addf %76, %77 : vector<16x16xf32>
    %79 = vector.extract_strided_slice %69 {offsets = [5, 0], sizes = [16, 16], strides = [1, 1]} : vector<26x16xf32> to vector<16x16xf32>
    %80 = arith.addf %78, %79 : vector<16x16xf32>
    %81 = vector.extract_strided_slice %69 {offsets = [6, 0], sizes = [16, 16], strides = [1, 1]} : vector<26x16xf32> to vector<16x16xf32>
    %82 = arith.addf %80, %81 : vector<16x16xf32>
    %83 = vector.extract_strided_slice %69 {offsets = [7, 0], sizes = [16, 16], strides = [1, 1]} : vector<26x16xf32> to vector<16x16xf32>
    %84 = arith.addf %82, %83 : vector<16x16xf32>
    %85 = vector.extract_strided_slice %69 {offsets = [8, 0], sizes = [16, 16], strides = [1, 1]} : vector<26x16xf32> to vector<16x16xf32>
    %86 = arith.addf %84, %85 : vector<16x16xf32>
    %87 = vector.extract_strided_slice %69 {offsets = [9, 0], sizes = [16, 16], strides = [1, 1]} : vector<26x16xf32> to vector<16x16xf32>
    %88 = arith.addf %86, %87 : vector<16x16xf32>
    %89 = vector.extract_strided_slice %69 {offsets = [10, 0], sizes = [16, 16], strides = [1, 1]} : vector<26x16xf32> to vector<16x16xf32>
    %90 = arith.addf %88, %89 : vector<16x16xf32>
    %cst_6 = arith.constant 0.00826446246 : f32
    %91 = vector.broadcast %cst_6 : f32 to vector<16x16xf32>
    %92 = arith.mulf %90, %91 : vector<16x16xf32>
    %93 = arith.mulf %2, %2 : vector<26x26xf32>
    %94 = vector.extract_strided_slice %93 {offsets = [0, 0], sizes = [26, 16], strides = [1, 1]} : vector<26x26xf32> to vector<26x16xf32>
    %95 = vector.extract_strided_slice %93 {offsets = [0, 1], sizes = [26, 16], strides = [1, 1]} : vector<26x26xf32> to vector<26x16xf32>
    %96 = arith.addf %94, %95 : vector<26x16xf32>
    %97 = vector.extract_strided_slice %93 {offsets = [0, 2], sizes = [26, 16], strides = [1, 1]} : vector<26x26xf32> to vector<26x16xf32>
    %98 = arith.addf %96, %97 : vector<26x16xf32>
    %99 = vector.extract_strided_slice %93 {offsets = [0, 3], sizes = [26, 16], strides = [1, 1]} : vector<26x26xf32> to vector<26x16xf32>
    %100 = arith.addf %98, %99 : vector<26x16xf32>
    %101 = vector.extract_strided_slice %93 {offsets = [0, 4], sizes = [26, 16], strides = [1, 1]} : vector<26x26xf32> to vector<26x16xf32>
    %102 = arith.addf %100, %101 : vector<26x16xf32>
    %103 = vector.extract_strided_slice %93 {offsets = [0, 5], sizes = [26, 16], strides = [1, 1]} : vector<26x26xf32> to vector<26x16xf32>
    %104 = arith.addf %102, %103 : vector<26x16xf32>
    %105 = vector.extract_strided_slice %93 {offsets = [0, 6], sizes = [26, 16], strides = [1, 1]} : vector<26x26xf32> to vector<26x16xf32>
    %106 = arith.addf %104, %105 : vector<26x16xf32>
    %107 = vector.extract_strided_slice %93 {offsets = [0, 7], sizes = [26, 16], strides = [1, 1]} : vector<26x26xf32> to vector<26x16xf32>
    %108 = arith.addf %106, %107 : vector<26x16xf32>
    %109 = vector.extract_strided_slice %93 {offsets = [0, 8], sizes = [26, 16], strides = [1, 1]} : vector<26x26xf32> to vector<26x16xf32>
    %110 = arith.addf %108, %109 : vector<26x16xf32>
    %111 = vector.extract_strided_slice %93 {offsets = [0, 9], sizes = [26, 16], strides = [1, 1]} : vector<26x26xf32> to vector<26x16xf32>
    %112 = arith.addf %110, %111 : vector<26x16xf32>
    %113 = vector.extract_strided_slice %93 {offsets = [0, 10], sizes = [26, 16], strides = [1, 1]} : vector<26x26xf32> to vector<26x16xf32>
    %114 = arith.addf %112, %113 : vector<26x16xf32>
    %115 = vector.extract_strided_slice %114 {offsets = [0, 0], sizes = [16, 16], strides = [1, 1]} : vector<26x16xf32> to vector<16x16xf32>
    %116 = vector.extract_strided_slice %114 {offsets = [1, 0], sizes = [16, 16], strides = [1, 1]} : vector<26x16xf32> to vector<16x16xf32>
    %117 = arith.addf %115, %116 : vector<16x16xf32>
    %118 = vector.extract_strided_slice %114 {offsets = [2, 0], sizes = [16, 16], strides = [1, 1]} : vector<26x16xf32> to vector<16x16xf32>
    %119 = arith.addf %117, %118 : vector<16x16xf32>
    %120 = vector.extract_strided_slice %114 {offsets = [3, 0], sizes = [16, 16], strides = [1, 1]} : vector<26x16xf32> to vector<16x16xf32>
    %121 = arith.addf %119, %120 : vector<16x16xf32>
    %122 = vector.extract_strided_slice %114 {offsets = [4, 0], sizes = [16, 16], strides = [1, 1]} : vector<26x16xf32> to vector<16x16xf32>
    %123 = arith.addf %121, %122 : vector<16x16xf32>
    %124 = vector.extract_strided_slice %114 {offsets = [5, 0], sizes = [16, 16], strides = [1, 1]} : vector<26x16xf32> to vector<16x16xf32>
    %125 = arith.addf %123, %124 : vector<16x16xf32>
    %126 = vector.extract_strided_slice %114 {offsets = [6, 0], sizes = [16, 16], strides = [1, 1]} : vector<26x16xf32> to vector<16x16xf32>
    %127 = arith.addf %125, %126 : vector<16x16xf32>
    %128 = vector.extract_strided_slice %114 {offsets = [7, 0], sizes = [16, 16], strides = [1, 1]} : vector<26x16xf32> to vector<16x16xf32>
    %129 = arith.addf %127, %128 : vector<16x16xf32>
    %130 = vector.extract_strided_slice %114 {offsets = [8, 0], sizes = [16, 16], strides = [1, 1]} : vector<26x16xf32> to vector<16x16xf32>
    %131 = arith.addf %129, %130 : vector<16x16xf32>
    %132 = vector.extract_strided_slice %114 {offsets = [9, 0], sizes = [16, 16], strides = [1, 1]} : vector<26x16xf32> to vector<16x16xf32>
    %133 = arith.addf %131, %132 : vector<16x16xf32>
    %134 = vector.extract_strided_slice %114 {offsets = [10, 0], sizes = [16, 16], strides = [1, 1]} : vector<26x16xf32> to vector<16x16xf32>
    %135 = arith.addf %133, %134 : vector<16x16xf32>
    %cst_7 = arith.constant 0.00826446246 : f32
    %136 = vector.broadcast %cst_7 : f32 to vector<16x16xf32>
    %137 = arith.mulf %135, %136 : vector<16x16xf32>
    %138 = arith.mulf %4, %4 : vector<26x26xf32>
    %139 = vector.extract_strided_slice %138 {offsets = [0, 0], sizes = [26, 16], strides = [1, 1]} : vector<26x26xf32> to vector<26x16xf32>
    %140 = vector.extract_strided_slice %138 {offsets = [0, 1], sizes = [26, 16], strides = [1, 1]} : vector<26x26xf32> to vector<26x16xf32>
    %141 = arith.addf %139, %140 : vector<26x16xf32>
    %142 = vector.extract_strided_slice %138 {offsets = [0, 2], sizes = [26, 16], strides = [1, 1]} : vector<26x26xf32> to vector<26x16xf32>
    %143 = arith.addf %141, %142 : vector<26x16xf32>
    %144 = vector.extract_strided_slice %138 {offsets = [0, 3], sizes = [26, 16], strides = [1, 1]} : vector<26x26xf32> to vector<26x16xf32>
    %145 = arith.addf %143, %144 : vector<26x16xf32>
    %146 = vector.extract_strided_slice %138 {offsets = [0, 4], sizes = [26, 16], strides = [1, 1]} : vector<26x26xf32> to vector<26x16xf32>
    %147 = arith.addf %145, %146 : vector<26x16xf32>
    %148 = vector.extract_strided_slice %138 {offsets = [0, 5], sizes = [26, 16], strides = [1, 1]} : vector<26x26xf32> to vector<26x16xf32>
    %149 = arith.addf %147, %148 : vector<26x16xf32>
    %150 = vector.extract_strided_slice %138 {offsets = [0, 6], sizes = [26, 16], strides = [1, 1]} : vector<26x26xf32> to vector<26x16xf32>
    %151 = arith.addf %149, %150 : vector<26x16xf32>
    %152 = vector.extract_strided_slice %138 {offsets = [0, 7], sizes = [26, 16], strides = [1, 1]} : vector<26x26xf32> to vector<26x16xf32>
    %153 = arith.addf %151, %152 : vector<26x16xf32>
    %154 = vector.extract_strided_slice %138 {offsets = [0, 8], sizes = [26, 16], strides = [1, 1]} : vector<26x26xf32> to vector<26x16xf32>
    %155 = arith.addf %153, %154 : vector<26x16xf32>
    %156 = vector.extract_strided_slice %138 {offsets = [0, 9], sizes = [26, 16], strides = [1, 1]} : vector<26x26xf32> to vector<26x16xf32>
    %157 = arith.addf %155, %156 : vector<26x16xf32>
    %158 = vector.extract_strided_slice %138 {offsets = [0, 10], sizes = [26, 16], strides = [1, 1]} : vector<26x26xf32> to vector<26x16xf32>
    %159 = arith.addf %157, %158 : vector<26x16xf32>
    %160 = vector.extract_strided_slice %159 {offsets = [0, 0], sizes = [16, 16], strides = [1, 1]} : vector<26x16xf32> to vector<16x16xf32>
    %161 = vector.extract_strided_slice %159 {offsets = [1, 0], sizes = [16, 16], strides = [1, 1]} : vector<26x16xf32> to vector<16x16xf32>
    %162 = arith.addf %160, %161 : vector<16x16xf32>
    %163 = vector.extract_strided_slice %159 {offsets = [2, 0], sizes = [16, 16], strides = [1, 1]} : vector<26x16xf32> to vector<16x16xf32>
    %164 = arith.addf %162, %163 : vector<16x16xf32>
    %165 = vector.extract_strided_slice %159 {offsets = [3, 0], sizes = [16, 16], strides = [1, 1]} : vector<26x16xf32> to vector<16x16xf32>
    %166 = arith.addf %164, %165 : vector<16x16xf32>
    %167 = vector.extract_strided_slice %159 {offsets = [4, 0], sizes = [16, 16], strides = [1, 1]} : vector<26x16xf32> to vector<16x16xf32>
    %168 = arith.addf %166, %167 : vector<16x16xf32>
    %169 = vector.extract_strided_slice %159 {offsets = [5, 0], sizes = [16, 16], strides = [1, 1]} : vector<26x16xf32> to vector<16x16xf32>
    %170 = arith.addf %168, %169 : vector<16x16xf32>
    %171 = vector.extract_strided_slice %159 {offsets = [6, 0], sizes = [16, 16], strides = [1, 1]} : vector<26x16xf32> to vector<16x16xf32>
    %172 = arith.addf %170, %171 : vector<16x16xf32>
    %173 = vector.extract_strided_slice %159 {offsets = [7, 0], sizes = [16, 16], strides = [1, 1]} : vector<26x16xf32> to vector<16x16xf32>
    %174 = arith.addf %172, %173 : vector<16x16xf32>
    %175 = vector.extract_strided_slice %159 {offsets = [8, 0], sizes = [16, 16], strides = [1, 1]} : vector<26x16xf32> to vector<16x16xf32>
    %176 = arith.addf %174, %175 : vector<16x16xf32>
    %177 = vector.extract_strided_slice %159 {offsets = [9, 0], sizes = [16, 16], strides = [1, 1]} : vector<26x16xf32> to vector<16x16xf32>
    %178 = arith.addf %176, %177 : vector<16x16xf32>
    %179 = vector.extract_strided_slice %159 {offsets = [10, 0], sizes = [16, 16], strides = [1, 1]} : vector<26x16xf32> to vector<16x16xf32>
    %180 = arith.addf %178, %179 : vector<16x16xf32>
    %cst_8 = arith.constant 0.00826446246 : f32
    %181 = vector.broadcast %cst_8 : f32 to vector<16x16xf32>
    %182 = arith.mulf %180, %181 : vector<16x16xf32>
    %183 = arith.mulf %2, %4 : vector<26x26xf32>
    %184 = vector.extract_strided_slice %183 {offsets = [0, 0], sizes = [26, 16], strides = [1, 1]} : vector<26x26xf32> to vector<26x16xf32>
    %185 = vector.extract_strided_slice %183 {offsets = [0, 1], sizes = [26, 16], strides = [1, 1]} : vector<26x26xf32> to vector<26x16xf32>
    %186 = arith.addf %184, %185 : vector<26x16xf32>
    %187 = vector.extract_strided_slice %183 {offsets = [0, 2], sizes = [26, 16], strides = [1, 1]} : vector<26x26xf32> to vector<26x16xf32>
    %188 = arith.addf %186, %187 : vector<26x16xf32>
    %189 = vector.extract_strided_slice %183 {offsets = [0, 3], sizes = [26, 16], strides = [1, 1]} : vector<26x26xf32> to vector<26x16xf32>
    %190 = arith.addf %188, %189 : vector<26x16xf32>
    %191 = vector.extract_strided_slice %183 {offsets = [0, 4], sizes = [26, 16], strides = [1, 1]} : vector<26x26xf32> to vector<26x16xf32>
    %192 = arith.addf %190, %191 : vector<26x16xf32>
    %193 = vector.extract_strided_slice %183 {offsets = [0, 5], sizes = [26, 16], strides = [1, 1]} : vector<26x26xf32> to vector<26x16xf32>
    %194 = arith.addf %192, %193 : vector<26x16xf32>
    %195 = vector.extract_strided_slice %183 {offsets = [0, 6], sizes = [26, 16], strides = [1, 1]} : vector<26x26xf32> to vector<26x16xf32>
    %196 = arith.addf %194, %195 : vector<26x16xf32>
    %197 = vector.extract_strided_slice %183 {offsets = [0, 7], sizes = [26, 16], strides = [1, 1]} : vector<26x26xf32> to vector<26x16xf32>
    %198 = arith.addf %196, %197 : vector<26x16xf32>
    %199 = vector.extract_strided_slice %183 {offsets = [0, 8], sizes = [26, 16], strides = [1, 1]} : vector<26x26xf32> to vector<26x16xf32>
    %200 = arith.addf %198, %199 : vector<26x16xf32>
    %201 = vector.extract_strided_slice %183 {offsets = [0, 9], sizes = [26, 16], strides = [1, 1]} : vector<26x26xf32> to vector<26x16xf32>
    %202 = arith.addf %200, %201 : vector<26x16xf32>
    %203 = vector.extract_strided_slice %183 {offsets = [0, 10], sizes = [26, 16], strides = [1, 1]} : vector<26x26xf32> to vector<26x16xf32>
    %204 = arith.addf %202, %203 : vector<26x16xf32>
    %205 = vector.extract_strided_slice %204 {offsets = [0, 0], sizes = [16, 16], strides = [1, 1]} : vector<26x16xf32> to vector<16x16xf32>
    %206 = vector.extract_strided_slice %204 {offsets = [1, 0], sizes = [16, 16], strides = [1, 1]} : vector<26x16xf32> to vector<16x16xf32>
    %207 = arith.addf %205, %206 : vector<16x16xf32>
    %208 = vector.extract_strided_slice %204 {offsets = [2, 0], sizes = [16, 16], strides = [1, 1]} : vector<26x16xf32> to vector<16x16xf32>
    %209 = arith.addf %207, %208 : vector<16x16xf32>
    %210 = vector.extract_strided_slice %204 {offsets = [3, 0], sizes = [16, 16], strides = [1, 1]} : vector<26x16xf32> to vector<16x16xf32>
    %211 = arith.addf %209, %210 : vector<16x16xf32>
    %212 = vector.extract_strided_slice %204 {offsets = [4, 0], sizes = [16, 16], strides = [1, 1]} : vector<26x16xf32> to vector<16x16xf32>
    %213 = arith.addf %211, %212 : vector<16x16xf32>
    %214 = vector.extract_strided_slice %204 {offsets = [5, 0], sizes = [16, 16], strides = [1, 1]} : vector<26x16xf32> to vector<16x16xf32>
    %215 = arith.addf %213, %214 : vector<16x16xf32>
    %216 = vector.extract_strided_slice %204 {offsets = [6, 0], sizes = [16, 16], strides = [1, 1]} : vector<26x16xf32> to vector<16x16xf32>
    %217 = arith.addf %215, %216 : vector<16x16xf32>
    %218 = vector.extract_strided_slice %204 {offsets = [7, 0], sizes = [16, 16], strides = [1, 1]} : vector<26x16xf32> to vector<16x16xf32>
    %219 = arith.addf %217, %218 : vector<16x16xf32>
    %220 = vector.extract_strided_slice %204 {offsets = [8, 0], sizes = [16, 16], strides = [1, 1]} : vector<26x16xf32> to vector<16x16xf32>
    %221 = arith.addf %219, %220 : vector<16x16xf32>
    %222 = vector.extract_strided_slice %204 {offsets = [9, 0], sizes = [16, 16], strides = [1, 1]} : vector<26x16xf32> to vector<16x16xf32>
    %223 = arith.addf %221, %222 : vector<16x16xf32>
    %224 = vector.extract_strided_slice %204 {offsets = [10, 0], sizes = [16, 16], strides = [1, 1]} : vector<26x16xf32> to vector<16x16xf32>
    %225 = arith.addf %223, %224 : vector<16x16xf32>
    %cst_9 = arith.constant 0.00826446246 : f32
    %226 = vector.broadcast %cst_9 : f32 to vector<16x16xf32>
    %227 = arith.mulf %225, %226 : vector<16x16xf32>
    %228 = arith.mulf %48, %48 : vector<16x16xf32>
    %229 = arith.subf %137, %228 : vector<16x16xf32>
    %230 = arith.mulf %92, %92 : vector<16x16xf32>
    %231 = arith.subf %182, %230 : vector<16x16xf32>
    %232 = arith.mulf %48, %92 : vector<16x16xf32>
    %233 = arith.subf %227, %232 : vector<16x16xf32>
    %cst_10 = arith.constant 2.000000e+00 : f32
    %234 = vector.broadcast %cst_10 : f32 to vector<16x16xf32>
    %235 = arith.mulf %234, %48 : vector<16x16xf32>
    %236 = arith.mulf %235, %92 : vector<16x16xf32>
    %cst_11 = arith.constant 9.99999974E-5 : f32
    %237 = vector.broadcast %cst_11 : f32 to vector<16x16xf32>
    %238 = arith.addf %236, %237 : vector<16x16xf32>
    %cst_12 = arith.constant 2.000000e+00 : f32
    %239 = vector.broadcast %cst_12 : f32 to vector<16x16xf32>
    %240 = arith.mulf %239, %233 : vector<16x16xf32>
    %cst_13 = arith.constant 8.99999984E-4 : f32
    %241 = vector.broadcast %cst_13 : f32 to vector<16x16xf32>
    %242 = arith.addf %240, %241 : vector<16x16xf32>
    %243 = arith.mulf %238, %242 : vector<16x16xf32>
    %244 = arith.mulf %48, %48 : vector<16x16xf32>
    %245 = arith.mulf %92, %92 : vector<16x16xf32>
    %246 = arith.addf %244, %245 : vector<16x16xf32>
    %cst_14 = arith.constant 9.99999974E-5 : f32
    %247 = vector.broadcast %cst_14 : f32 to vector<16x16xf32>
    %248 = arith.addf %246, %247 : vector<16x16xf32>
    %249 = arith.addf %229, %231 : vector<16x16xf32>
    %cst_15 = arith.constant 8.99999984E-4 : f32
    %250 = vector.broadcast %cst_15 : f32 to vector<16x16xf32>
    %251 = arith.addf %249, %250 : vector<16x16xf32>
    %252 = arith.mulf %248, %251 : vector<16x16xf32>
    %253 = arith.divf %243, %252 : vector<16x16xf32>
    %254 = vector.shape_cast %253 : vector<16x16xf32> to vector<1x16x16xf32>
    %cst_16 = arith.constant dense<0.000000e+00> : vector<1xf32>
    %255 = vector.multi_reduction <add>, %254, %cst_16 [1, 2] : vector<1x16x16xf32> to vector<1xf32>
    %256 = vector.shape_cast %255 : vector<1xf32> to vector<1x1x1xf32>
    %257 = vector.extract %256[0, 0, 0] : f32 from vector<1x1x1xf32>
    %258 = vector.broadcast %257 : f32 to vector<1x1xf32>
    %259 = arith.addf %0, %258 : vector<1x1xf32>
    %c1 = arith.constant 1 : index
    %c0_17 = arith.constant 0 : index
    %c0_18 = arith.constant 0 : index
    %260 = vector.load %arg1[%c1, %c0_17, %c0_18] : memref<2x26x26xf32, #tpu.memory_space<vmem>>, vector<1x26x26xf32>
    %261 = vector.shape_cast %260 : vector<1x26x26xf32> to vector<26x26xf32>
    %c1_19 = arith.constant 1 : index
    %c0_20 = arith.constant 0 : index
    %c0_21 = arith.constant 0 : index
    %262 = vector.load %arg2[%c1_19, %c0_20, %c0_21] : memref<2x26x26xf32, #tpu.memory_space<vmem>>, vector<1x26x26xf32>
    %263 = vector.shape_cast %262 : vector<1x26x26xf32> to vector<26x26xf32>
    %264 = vector.extract_strided_slice %261 {offsets = [0, 0], sizes = [26, 16], strides = [1, 1]} : vector<26x26xf32> to vector<26x16xf32>
    %265 = vector.extract_strided_slice %261 {offsets = [0, 1], sizes = [26, 16], strides = [1, 1]} : vector<26x26xf32> to vector<26x16xf32>
    %266 = arith.addf %264, %265 : vector<26x16xf32>
    %267 = vector.extract_strided_slice %261 {offsets = [0, 2], sizes = [26, 16], strides = [1, 1]} : vector<26x26xf32> to vector<26x16xf32>
    %268 = arith.addf %266, %267 : vector<26x16xf32>
    %269 = vector.extract_strided_slice %261 {offsets = [0, 3], sizes = [26, 16], strides = [1, 1]} : vector<26x26xf32> to vector<26x16xf32>
    %270 = arith.addf %268, %269 : vector<26x16xf32>
    %271 = vector.extract_strided_slice %261 {offsets = [0, 4], sizes = [26, 16], strides = [1, 1]} : vector<26x26xf32> to vector<26x16xf32>
    %272 = arith.addf %270, %271 : vector<26x16xf32>
    %273 = vector.extract_strided_slice %261 {offsets = [0, 5], sizes = [26, 16], strides = [1, 1]} : vector<26x26xf32> to vector<26x16xf32>
    %274 = arith.addf %272, %273 : vector<26x16xf32>
    %275 = vector.extract_strided_slice %261 {offsets = [0, 6], sizes = [26, 16], strides = [1, 1]} : vector<26x26xf32> to vector<26x16xf32>
    %276 = arith.addf %274, %275 : vector<26x16xf32>
    %277 = vector.extract_strided_slice %261 {offsets = [0, 7], sizes = [26, 16], strides = [1, 1]} : vector<26x26xf32> to vector<26x16xf32>
    %278 = arith.addf %276, %277 : vector<26x16xf32>
    %279 = vector.extract_strided_slice %261 {offsets = [0, 8], sizes = [26, 16], strides = [1, 1]} : vector<26x26xf32> to vector<26x16xf32>
    %280 = arith.addf %278, %279 : vector<26x16xf32>
    %281 = vector.extract_strided_slice %261 {offsets = [0, 9], sizes = [26, 16], strides = [1, 1]} : vector<26x26xf32> to vector<26x16xf32>
    %282 = arith.addf %280, %281 : vector<26x16xf32>
    %283 = vector.extract_strided_slice %261 {offsets = [0, 10], sizes = [26, 16], strides = [1, 1]} : vector<26x26xf32> to vector<26x16xf32>
    %284 = arith.addf %282, %283 : vector<26x16xf32>
    %285 = vector.extract_strided_slice %284 {offsets = [0, 0], sizes = [16, 16], strides = [1, 1]} : vector<26x16xf32> to vector<16x16xf32>
    %286 = vector.extract_strided_slice %284 {offsets = [1, 0], sizes = [16, 16], strides = [1, 1]} : vector<26x16xf32> to vector<16x16xf32>
    %287 = arith.addf %285, %286 : vector<16x16xf32>
    %288 = vector.extract_strided_slice %284 {offsets = [2, 0], sizes = [16, 16], strides = [1, 1]} : vector<26x16xf32> to vector<16x16xf32>
    %289 = arith.addf %287, %288 : vector<16x16xf32>
    %290 = vector.extract_strided_slice %284 {offsets = [3, 0], sizes = [16, 16], strides = [1, 1]} : vector<26x16xf32> to vector<16x16xf32>
    %291 = arith.addf %289, %290 : vector<16x16xf32>
    %292 = vector.extract_strided_slice %284 {offsets = [4, 0], sizes = [16, 16], strides = [1, 1]} : vector<26x16xf32> to vector<16x16xf32>
    %293 = arith.addf %291, %292 : vector<16x16xf32>
    %294 = vector.extract_strided_slice %284 {offsets = [5, 0], sizes = [16, 16], strides = [1, 1]} : vector<26x16xf32> to vector<16x16xf32>
    %295 = arith.addf %293, %294 : vector<16x16xf32>
    %296 = vector.extract_strided_slice %284 {offsets = [6, 0], sizes = [16, 16], strides = [1, 1]} : vector<26x16xf32> to vector<16x16xf32>
    %297 = arith.addf %295, %296 : vector<16x16xf32>
    %298 = vector.extract_strided_slice %284 {offsets = [7, 0], sizes = [16, 16], strides = [1, 1]} : vector<26x16xf32> to vector<16x16xf32>
    %299 = arith.addf %297, %298 : vector<16x16xf32>
    %300 = vector.extract_strided_slice %284 {offsets = [8, 0], sizes = [16, 16], strides = [1, 1]} : vector<26x16xf32> to vector<16x16xf32>
    %301 = arith.addf %299, %300 : vector<16x16xf32>
    %302 = vector.extract_strided_slice %284 {offsets = [9, 0], sizes = [16, 16], strides = [1, 1]} : vector<26x16xf32> to vector<16x16xf32>
    %303 = arith.addf %301, %302 : vector<16x16xf32>
    %304 = vector.extract_strided_slice %284 {offsets = [10, 0], sizes = [16, 16], strides = [1, 1]} : vector<26x16xf32> to vector<16x16xf32>
    %305 = arith.addf %303, %304 : vector<16x16xf32>
    %cst_22 = arith.constant 0.00826446246 : f32
    %306 = vector.broadcast %cst_22 : f32 to vector<16x16xf32>
    %307 = arith.mulf %305, %306 : vector<16x16xf32>
    %308 = vector.extract_strided_slice %263 {offsets = [0, 0], sizes = [26, 16], strides = [1, 1]} : vector<26x26xf32> to vector<26x16xf32>
    %309 = vector.extract_strided_slice %263 {offsets = [0, 1], sizes = [26, 16], strides = [1, 1]} : vector<26x26xf32> to vector<26x16xf32>
    %310 = arith.addf %308, %309 : vector<26x16xf32>
    %311 = vector.extract_strided_slice %263 {offsets = [0, 2], sizes = [26, 16], strides = [1, 1]} : vector<26x26xf32> to vector<26x16xf32>
    %312 = arith.addf %310, %311 : vector<26x16xf32>
    %313 = vector.extract_strided_slice %263 {offsets = [0, 3], sizes = [26, 16], strides = [1, 1]} : vector<26x26xf32> to vector<26x16xf32>
    %314 = arith.addf %312, %313 : vector<26x16xf32>
    %315 = vector.extract_strided_slice %263 {offsets = [0, 4], sizes = [26, 16], strides = [1, 1]} : vector<26x26xf32> to vector<26x16xf32>
    %316 = arith.addf %314, %315 : vector<26x16xf32>
    %317 = vector.extract_strided_slice %263 {offsets = [0, 5], sizes = [26, 16], strides = [1, 1]} : vector<26x26xf32> to vector<26x16xf32>
    %318 = arith.addf %316, %317 : vector<26x16xf32>
    %319 = vector.extract_strided_slice %263 {offsets = [0, 6], sizes = [26, 16], strides = [1, 1]} : vector<26x26xf32> to vector<26x16xf32>
    %320 = arith.addf %318, %319 : vector<26x16xf32>
    %321 = vector.extract_strided_slice %263 {offsets = [0, 7], sizes = [26, 16], strides = [1, 1]} : vector<26x26xf32> to vector<26x16xf32>
    %322 = arith.addf %320, %321 : vector<26x16xf32>
    %323 = vector.extract_strided_slice %263 {offsets = [0, 8], sizes = [26, 16], strides = [1, 1]} : vector<26x26xf32> to vector<26x16xf32>
    %324 = arith.addf %322, %323 : vector<26x16xf32>
    %325 = vector.extract_strided_slice %263 {offsets = [0, 9], sizes = [26, 16], strides = [1, 1]} : vector<26x26xf32> to vector<26x16xf32>
    %326 = arith.addf %324, %325 : vector<26x16xf32>
    %327 = vector.extract_strided_slice %263 {offsets = [0, 10], sizes = [26, 16], strides = [1, 1]} : vector<26x26xf32> to vector<26x16xf32>
    %328 = arith.addf %326, %327 : vector<26x16xf32>
    %329 = vector.extract_strided_slice %328 {offsets = [0, 0], sizes = [16, 16], strides = [1, 1]} : vector<26x16xf32> to vector<16x16xf32>
    %330 = vector.extract_strided_slice %328 {offsets = [1, 0], sizes = [16, 16], strides = [1, 1]} : vector<26x16xf32> to vector<16x16xf32>
    %331 = arith.addf %329, %330 : vector<16x16xf32>
    %332 = vector.extract_strided_slice %328 {offsets = [2, 0], sizes = [16, 16], strides = [1, 1]} : vector<26x16xf32> to vector<16x16xf32>
    %333 = arith.addf %331, %332 : vector<16x16xf32>
    %334 = vector.extract_strided_slice %328 {offsets = [3, 0], sizes = [16, 16], strides = [1, 1]} : vector<26x16xf32> to vector<16x16xf32>
    %335 = arith.addf %333, %334 : vector<16x16xf32>
    %336 = vector.extract_strided_slice %328 {offsets = [4, 0], sizes = [16, 16], strides = [1, 1]} : vector<26x16xf32> to vector<16x16xf32>
    %337 = arith.addf %335, %336 : vector<16x16xf32>
    %338 = vector.extract_strided_slice %328 {offsets = [5, 0], sizes = [16, 16], strides = [1, 1]} : vector<26x16xf32> to vector<16x16xf32>
    %339 = arith.addf %337, %338 : vector<16x16xf32>
    %340 = vector.extract_strided_slice %328 {offsets = [6, 0], sizes = [16, 16], strides = [1, 1]} : vector<26x16xf32> to vector<16x16xf32>
    %341 = arith.addf %339, %340 : vector<16x16xf32>
    %342 = vector.extract_strided_slice %328 {offsets = [7, 0], sizes = [16, 16], strides = [1, 1]} : vector<26x16xf32> to vector<16x16xf32>
    %343 = arith.addf %341, %342 : vector<16x16xf32>
    %344 = vector.extract_strided_slice %328 {offsets = [8, 0], sizes = [16, 16], strides = [1, 1]} : vector<26x16xf32> to vector<16x16xf32>
    %345 = arith.addf %343, %344 : vector<16x16xf32>
    %346 = vector.extract_strided_slice %328 {offsets = [9, 0], sizes = [16, 16], strides = [1, 1]} : vector<26x16xf32> to vector<16x16xf32>
    %347 = arith.addf %345, %346 : vector<16x16xf32>
    %348 = vector.extract_strided_slice %328 {offsets = [10, 0], sizes = [16, 16], strides = [1, 1]} : vector<26x16xf32> to vector<16x16xf32>
    %349 = arith.addf %347, %348 : vector<16x16xf32>
    %cst_23 = arith.constant 0.00826446246 : f32
    %350 = vector.broadcast %cst_23 : f32 to vector<16x16xf32>
    %351 = arith.mulf %349, %350 : vector<16x16xf32>
    %352 = arith.mulf %261, %261 : vector<26x26xf32>
    %353 = vector.extract_strided_slice %352 {offsets = [0, 0], sizes = [26, 16], strides = [1, 1]} : vector<26x26xf32> to vector<26x16xf32>
    %354 = vector.extract_strided_slice %352 {offsets = [0, 1], sizes = [26, 16], strides = [1, 1]} : vector<26x26xf32> to vector<26x16xf32>
    %355 = arith.addf %353, %354 : vector<26x16xf32>
    %356 = vector.extract_strided_slice %352 {offsets = [0, 2], sizes = [26, 16], strides = [1, 1]} : vector<26x26xf32> to vector<26x16xf32>
    %357 = arith.addf %355, %356 : vector<26x16xf32>
    %358 = vector.extract_strided_slice %352 {offsets = [0, 3], sizes = [26, 16], strides = [1, 1]} : vector<26x26xf32> to vector<26x16xf32>
    %359 = arith.addf %357, %358 : vector<26x16xf32>
    %360 = vector.extract_strided_slice %352 {offsets = [0, 4], sizes = [26, 16], strides = [1, 1]} : vector<26x26xf32> to vector<26x16xf32>
    %361 = arith.addf %359, %360 : vector<26x16xf32>
    %362 = vector.extract_strided_slice %352 {offsets = [0, 5], sizes = [26, 16], strides = [1, 1]} : vector<26x26xf32> to vector<26x16xf32>
    %363 = arith.addf %361, %362 : vector<26x16xf32>
    %364 = vector.extract_strided_slice %352 {offsets = [0, 6], sizes = [26, 16], strides = [1, 1]} : vector<26x26xf32> to vector<26x16xf32>
    %365 = arith.addf %363, %364 : vector<26x16xf32>
    %366 = vector.extract_strided_slice %352 {offsets = [0, 7], sizes = [26, 16], strides = [1, 1]} : vector<26x26xf32> to vector<26x16xf32>
    %367 = arith.addf %365, %366 : vector<26x16xf32>
    %368 = vector.extract_strided_slice %352 {offsets = [0, 8], sizes = [26, 16], strides = [1, 1]} : vector<26x26xf32> to vector<26x16xf32>
    %369 = arith.addf %367, %368 : vector<26x16xf32>
    %370 = vector.extract_strided_slice %352 {offsets = [0, 9], sizes = [26, 16], strides = [1, 1]} : vector<26x26xf32> to vector<26x16xf32>
    %371 = arith.addf %369, %370 : vector<26x16xf32>
    %372 = vector.extract_strided_slice %352 {offsets = [0, 10], sizes = [26, 16], strides = [1, 1]} : vector<26x26xf32> to vector<26x16xf32>
    %373 = arith.addf %371, %372 : vector<26x16xf32>
    %374 = vector.extract_strided_slice %373 {offsets = [0, 0], sizes = [16, 16], strides = [1, 1]} : vector<26x16xf32> to vector<16x16xf32>
    %375 = vector.extract_strided_slice %373 {offsets = [1, 0], sizes = [16, 16], strides = [1, 1]} : vector<26x16xf32> to vector<16x16xf32>
    %376 = arith.addf %374, %375 : vector<16x16xf32>
    %377 = vector.extract_strided_slice %373 {offsets = [2, 0], sizes = [16, 16], strides = [1, 1]} : vector<26x16xf32> to vector<16x16xf32>
    %378 = arith.addf %376, %377 : vector<16x16xf32>
    %379 = vector.extract_strided_slice %373 {offsets = [3, 0], sizes = [16, 16], strides = [1, 1]} : vector<26x16xf32> to vector<16x16xf32>
    %380 = arith.addf %378, %379 : vector<16x16xf32>
    %381 = vector.extract_strided_slice %373 {offsets = [4, 0], sizes = [16, 16], strides = [1, 1]} : vector<26x16xf32> to vector<16x16xf32>
    %382 = arith.addf %380, %381 : vector<16x16xf32>
    %383 = vector.extract_strided_slice %373 {offsets = [5, 0], sizes = [16, 16], strides = [1, 1]} : vector<26x16xf32> to vector<16x16xf32>
    %384 = arith.addf %382, %383 : vector<16x16xf32>
    %385 = vector.extract_strided_slice %373 {offsets = [6, 0], sizes = [16, 16], strides = [1, 1]} : vector<26x16xf32> to vector<16x16xf32>
    %386 = arith.addf %384, %385 : vector<16x16xf32>
    %387 = vector.extract_strided_slice %373 {offsets = [7, 0], sizes = [16, 16], strides = [1, 1]} : vector<26x16xf32> to vector<16x16xf32>
    %388 = arith.addf %386, %387 : vector<16x16xf32>
    %389 = vector.extract_strided_slice %373 {offsets = [8, 0], sizes = [16, 16], strides = [1, 1]} : vector<26x16xf32> to vector<16x16xf32>
    %390 = arith.addf %388, %389 : vector<16x16xf32>
    %391 = vector.extract_strided_slice %373 {offsets = [9, 0], sizes = [16, 16], strides = [1, 1]} : vector<26x16xf32> to vector<16x16xf32>
    %392 = arith.addf %390, %391 : vector<16x16xf32>
    %393 = vector.extract_strided_slice %373 {offsets = [10, 0], sizes = [16, 16], strides = [1, 1]} : vector<26x16xf32> to vector<16x16xf32>
    %394 = arith.addf %392, %393 : vector<16x16xf32>
    %cst_24 = arith.constant 0.00826446246 : f32
    %395 = vector.broadcast %cst_24 : f32 to vector<16x16xf32>
    %396 = arith.mulf %394, %395 : vector<16x16xf32>
    %397 = arith.mulf %263, %263 : vector<26x26xf32>
    %398 = vector.extract_strided_slice %397 {offsets = [0, 0], sizes = [26, 16], strides = [1, 1]} : vector<26x26xf32> to vector<26x16xf32>
    %399 = vector.extract_strided_slice %397 {offsets = [0, 1], sizes = [26, 16], strides = [1, 1]} : vector<26x26xf32> to vector<26x16xf32>
    %400 = arith.addf %398, %399 : vector<26x16xf32>
    %401 = vector.extract_strided_slice %397 {offsets = [0, 2], sizes = [26, 16], strides = [1, 1]} : vector<26x26xf32> to vector<26x16xf32>
    %402 = arith.addf %400, %401 : vector<26x16xf32>
    %403 = vector.extract_strided_slice %397 {offsets = [0, 3], sizes = [26, 16], strides = [1, 1]} : vector<26x26xf32> to vector<26x16xf32>
    %404 = arith.addf %402, %403 : vector<26x16xf32>
    %405 = vector.extract_strided_slice %397 {offsets = [0, 4], sizes = [26, 16], strides = [1, 1]} : vector<26x26xf32> to vector<26x16xf32>
    %406 = arith.addf %404, %405 : vector<26x16xf32>
    %407 = vector.extract_strided_slice %397 {offsets = [0, 5], sizes = [26, 16], strides = [1, 1]} : vector<26x26xf32> to vector<26x16xf32>
    %408 = arith.addf %406, %407 : vector<26x16xf32>
    %409 = vector.extract_strided_slice %397 {offsets = [0, 6], sizes = [26, 16], strides = [1, 1]} : vector<26x26xf32> to vector<26x16xf32>
    %410 = arith.addf %408, %409 : vector<26x16xf32>
    %411 = vector.extract_strided_slice %397 {offsets = [0, 7], sizes = [26, 16], strides = [1, 1]} : vector<26x26xf32> to vector<26x16xf32>
    %412 = arith.addf %410, %411 : vector<26x16xf32>
    %413 = vector.extract_strided_slice %397 {offsets = [0, 8], sizes = [26, 16], strides = [1, 1]} : vector<26x26xf32> to vector<26x16xf32>
    %414 = arith.addf %412, %413 : vector<26x16xf32>
    %415 = vector.extract_strided_slice %397 {offsets = [0, 9], sizes = [26, 16], strides = [1, 1]} : vector<26x26xf32> to vector<26x16xf32>
    %416 = arith.addf %414, %415 : vector<26x16xf32>
    %417 = vector.extract_strided_slice %397 {offsets = [0, 10], sizes = [26, 16], strides = [1, 1]} : vector<26x26xf32> to vector<26x16xf32>
    %418 = arith.addf %416, %417 : vector<26x16xf32>
    %419 = vector.extract_strided_slice %418 {offsets = [0, 0], sizes = [16, 16], strides = [1, 1]} : vector<26x16xf32> to vector<16x16xf32>
    %420 = vector.extract_strided_slice %418 {offsets = [1, 0], sizes = [16, 16], strides = [1, 1]} : vector<26x16xf32> to vector<16x16xf32>
    %421 = arith.addf %419, %420 : vector<16x16xf32>
    %422 = vector.extract_strided_slice %418 {offsets = [2, 0], sizes = [16, 16], strides = [1, 1]} : vector<26x16xf32> to vector<16x16xf32>
    %423 = arith.addf %421, %422 : vector<16x16xf32>
    %424 = vector.extract_strided_slice %418 {offsets = [3, 0], sizes = [16, 16], strides = [1, 1]} : vector<26x16xf32> to vector<16x16xf32>
    %425 = arith.addf %423, %424 : vector<16x16xf32>
    %426 = vector.extract_strided_slice %418 {offsets = [4, 0], sizes = [16, 16], strides = [1, 1]} : vector<26x16xf32> to vector<16x16xf32>
    %427 = arith.addf %425, %426 : vector<16x16xf32>
    %428 = vector.extract_strided_slice %418 {offsets = [5, 0], sizes = [16, 16], strides = [1, 1]} : vector<26x16xf32> to vector<16x16xf32>
    %429 = arith.addf %427, %428 : vector<16x16xf32>
    %430 = vector.extract_strided_slice %418 {offsets = [6, 0], sizes = [16, 16], strides = [1, 1]} : vector<26x16xf32> to vector<16x16xf32>
    %431 = arith.addf %429, %430 : vector<16x16xf32>
    %432 = vector.extract_strided_slice %418 {offsets = [7, 0], sizes = [16, 16], strides = [1, 1]} : vector<26x16xf32> to vector<16x16xf32>
    %433 = arith.addf %431, %432 : vector<16x16xf32>
    %434 = vector.extract_strided_slice %418 {offsets = [8, 0], sizes = [16, 16], strides = [1, 1]} : vector<26x16xf32> to vector<16x16xf32>
    %435 = arith.addf %433, %434 : vector<16x16xf32>
    %436 = vector.extract_strided_slice %418 {offsets = [9, 0], sizes = [16, 16], strides = [1, 1]} : vector<26x16xf32> to vector<16x16xf32>
    %437 = arith.addf %435, %436 : vector<16x16xf32>
    %438 = vector.extract_strided_slice %418 {offsets = [10, 0], sizes = [16, 16], strides = [1, 1]} : vector<26x16xf32> to vector<16x16xf32>
    %439 = arith.addf %437, %438 : vector<16x16xf32>
    %cst_25 = arith.constant 0.00826446246 : f32
    %440 = vector.broadcast %cst_25 : f32 to vector<16x16xf32>
    %441 = arith.mulf %439, %440 : vector<16x16xf32>
    %442 = arith.mulf %261, %263 : vector<26x26xf32>
    %443 = vector.extract_strided_slice %442 {offsets = [0, 0], sizes = [26, 16], strides = [1, 1]} : vector<26x26xf32> to vector<26x16xf32>
    %444 = vector.extract_strided_slice %442 {offsets = [0, 1], sizes = [26, 16], strides = [1, 1]} : vector<26x26xf32> to vector<26x16xf32>
    %445 = arith.addf %443, %444 : vector<26x16xf32>
    %446 = vector.extract_strided_slice %442 {offsets = [0, 2], sizes = [26, 16], strides = [1, 1]} : vector<26x26xf32> to vector<26x16xf32>
    %447 = arith.addf %445, %446 : vector<26x16xf32>
    %448 = vector.extract_strided_slice %442 {offsets = [0, 3], sizes = [26, 16], strides = [1, 1]} : vector<26x26xf32> to vector<26x16xf32>
    %449 = arith.addf %447, %448 : vector<26x16xf32>
    %450 = vector.extract_strided_slice %442 {offsets = [0, 4], sizes = [26, 16], strides = [1, 1]} : vector<26x26xf32> to vector<26x16xf32>
    %451 = arith.addf %449, %450 : vector<26x16xf32>
    %452 = vector.extract_strided_slice %442 {offsets = [0, 5], sizes = [26, 16], strides = [1, 1]} : vector<26x26xf32> to vector<26x16xf32>
    %453 = arith.addf %451, %452 : vector<26x16xf32>
    %454 = vector.extract_strided_slice %442 {offsets = [0, 6], sizes = [26, 16], strides = [1, 1]} : vector<26x26xf32> to vector<26x16xf32>
    %455 = arith.addf %453, %454 : vector<26x16xf32>
    %456 = vector.extract_strided_slice %442 {offsets = [0, 7], sizes = [26, 16], strides = [1, 1]} : vector<26x26xf32> to vector<26x16xf32>
    %457 = arith.addf %455, %456 : vector<26x16xf32>
    %458 = vector.extract_strided_slice %442 {offsets = [0, 8], sizes = [26, 16], strides = [1, 1]} : vector<26x26xf32> to vector<26x16xf32>
    %459 = arith.addf %457, %458 : vector<26x16xf32>
    %460 = vector.extract_strided_slice %442 {offsets = [0, 9], sizes = [26, 16], strides = [1, 1]} : vector<26x26xf32> to vector<26x16xf32>
    %461 = arith.addf %459, %460 : vector<26x16xf32>
    %462 = vector.extract_strided_slice %442 {offsets = [0, 10], sizes = [26, 16], strides = [1, 1]} : vector<26x26xf32> to vector<26x16xf32>
    %463 = arith.addf %461, %462 : vector<26x16xf32>
    %464 = vector.extract_strided_slice %463 {offsets = [0, 0], sizes = [16, 16], strides = [1, 1]} : vector<26x16xf32> to vector<16x16xf32>
    %465 = vector.extract_strided_slice %463 {offsets = [1, 0], sizes = [16, 16], strides = [1, 1]} : vector<26x16xf32> to vector<16x16xf32>
    %466 = arith.addf %464, %465 : vector<16x16xf32>
    %467 = vector.extract_strided_slice %463 {offsets = [2, 0], sizes = [16, 16], strides = [1, 1]} : vector<26x16xf32> to vector<16x16xf32>
    %468 = arith.addf %466, %467 : vector<16x16xf32>
    %469 = vector.extract_strided_slice %463 {offsets = [3, 0], sizes = [16, 16], strides = [1, 1]} : vector<26x16xf32> to vector<16x16xf32>
    %470 = arith.addf %468, %469 : vector<16x16xf32>
    %471 = vector.extract_strided_slice %463 {offsets = [4, 0], sizes = [16, 16], strides = [1, 1]} : vector<26x16xf32> to vector<16x16xf32>
    %472 = arith.addf %470, %471 : vector<16x16xf32>
    %473 = vector.extract_strided_slice %463 {offsets = [5, 0], sizes = [16, 16], strides = [1, 1]} : vector<26x16xf32> to vector<16x16xf32>
    %474 = arith.addf %472, %473 : vector<16x16xf32>
    %475 = vector.extract_strided_slice %463 {offsets = [6, 0], sizes = [16, 16], strides = [1, 1]} : vector<26x16xf32> to vector<16x16xf32>
    %476 = arith.addf %474, %475 : vector<16x16xf32>
    %477 = vector.extract_strided_slice %463 {offsets = [7, 0], sizes = [16, 16], strides = [1, 1]} : vector<26x16xf32> to vector<16x16xf32>
    %478 = arith.addf %476, %477 : vector<16x16xf32>
    %479 = vector.extract_strided_slice %463 {offsets = [8, 0], sizes = [16, 16], strides = [1, 1]} : vector<26x16xf32> to vector<16x16xf32>
    %480 = arith.addf %478, %479 : vector<16x16xf32>
    %481 = vector.extract_strided_slice %463 {offsets = [9, 0], sizes = [16, 16], strides = [1, 1]} : vector<26x16xf32> to vector<16x16xf32>
    %482 = arith.addf %480, %481 : vector<16x16xf32>
    %483 = vector.extract_strided_slice %463 {offsets = [10, 0], sizes = [16, 16], strides = [1, 1]} : vector<26x16xf32> to vector<16x16xf32>
    %484 = arith.addf %482, %483 : vector<16x16xf32>
    %cst_26 = arith.constant 0.00826446246 : f32
    %485 = vector.broadcast %cst_26 : f32 to vector<16x16xf32>
    %486 = arith.mulf %484, %485 : vector<16x16xf32>
    %487 = arith.mulf %307, %307 : vector<16x16xf32>
    %488 = arith.subf %396, %487 : vector<16x16xf32>
    %489 = arith.mulf %351, %351 : vector<16x16xf32>
    %490 = arith.subf %441, %489 : vector<16x16xf32>
    %491 = arith.mulf %307, %351 : vector<16x16xf32>
    %492 = arith.subf %486, %491 : vector<16x16xf32>
    %cst_27 = arith.constant 2.000000e+00 : f32
    %493 = vector.broadcast %cst_27 : f32 to vector<16x16xf32>
    %494 = arith.mulf %493, %307 : vector<16x16xf32>
    %495 = arith.mulf %494, %351 : vector<16x16xf32>
    %cst_28 = arith.constant 9.99999974E-5 : f32
    %496 = vector.broadcast %cst_28 : f32 to vector<16x16xf32>
    %497 = arith.addf %495, %496 : vector<16x16xf32>
    %cst_29 = arith.constant 2.000000e+00 : f32
    %498 = vector.broadcast %cst_29 : f32 to vector<16x16xf32>
    %499 = arith.mulf %498, %492 : vector<16x16xf32>
    %cst_30 = arith.constant 8.99999984E-4 : f32
    %500 = vector.broadcast %cst_30 : f32 to vector<16x16xf32>
    %501 = arith.addf %499, %500 : vector<16x16xf32>
    %502 = arith.mulf %497, %501 : vector<16x16xf32>
    %503 = arith.mulf %307, %307 : vector<16x16xf32>
    %504 = arith.mulf %351, %351 : vector<16x16xf32>
    %505 = arith.addf %503, %504 : vector<16x16xf32>
    %cst_31 = arith.constant 9.99999974E-5 : f32
    %506 = vector.broadcast %cst_31 : f32 to vector<16x16xf32>
    %507 = arith.addf %505, %506 : vector<16x16xf32>
    %508 = arith.addf %488, %490 : vector<16x16xf32>
    %cst_32 = arith.constant 8.99999984E-4 : f32
    %509 = vector.broadcast %cst_32 : f32 to vector<16x16xf32>
    %510 = arith.addf %508, %509 : vector<16x16xf32>
    %511 = arith.mulf %507, %510 : vector<16x16xf32>
    %512 = arith.divf %502, %511 : vector<16x16xf32>
    %513 = vector.shape_cast %512 : vector<16x16xf32> to vector<1x16x16xf32>
    %cst_33 = arith.constant dense<0.000000e+00> : vector<1xf32>
    %514 = vector.multi_reduction <add>, %513, %cst_33 [1, 2] : vector<1x16x16xf32> to vector<1xf32>
    %515 = vector.shape_cast %514 : vector<1xf32> to vector<1x1x1xf32>
    %516 = vector.extract %515[0, 0, 0] : f32 from vector<1x1x1xf32>
    %517 = vector.broadcast %516 : f32 to vector<1x1xf32>
    %518 = arith.addf %259, %517 : vector<1x1xf32>
    %cst_34 = arith.constant 0.001953125 : f32
    %519 = vector.broadcast %cst_34 : f32 to vector<1x1xf32>
    %520 = arith.mulf %518, %519 : vector<1x1xf32>
    %c0_35 = arith.constant 0 : index
    %c0_36 = arith.constant 0 : index
    %521 = vector.load %arg3[%c0_35, %c0_36] : memref<1x1xf32, #tpu.memory_space<vmem>>, vector<1x1xf32>
    tpu.vector_store %arg3[%c0_35, %c0_36], %520 {strides = array<i32>} : memref<1x1xf32, #tpu.memory_space<vmem>>, vector<1x1xf32>,
    return
  }
  func.func @transform_0(%arg0: i32) -> (i32, i32, i32) {
    %c0_i32 = arith.constant 0 : i32
    %c0_i32_0 = arith.constant 0 : i32
    %c0_i32_1 = arith.constant 0 : i32
    %c0_i32_2 = arith.constant 0 : i32
    return %c0_i32, %c0_i32_0, %c0_i32_1 : i32, i32, i32
  }
  func.func @transform_1(%arg0: i32) -> (i32, i32, i32) {
    %c0_i32 = arith.constant 0 : i32
    %c0_i32_0 = arith.constant 0 : i32
    %c0_i32_1 = arith.constant 0 : i32
    %c0_i32_2 = arith.constant 0 : i32
    return %c0_i32, %c0_i32_0, %c0_i32_1 : i32, i32, i32
  }
  func.func @transform_2(%arg0: i32) -> (i32, i32) {
    %c0_i32 = arith.constant 0 : i32
    %c0_i32_0 = arith.constant 0 : i32
    %c0_i32_1 = arith.constant 0 : i32
    return %c0_i32, %c0_i32_0 : i32, i32
  }
}

</mosaic_0001>

<llo_original>
// kernel: mmslim_forward.38
$region0: #{mmslim_forward.38}
  #allocation0 [shape = 'u32[]', space=smem, size = 0x4, offset = 0x4, fixed_abs, tag = 'smem constant byte address 0x4 - core index']
  #allocation1 [shape = 'u32[144,128]{1,0:T(1,128)}', space=vmem, size = 0x12000, scoped, tag = 'internal scratch']
  %s0 = inlined_call_operand.vmem [shape: bf16[16,9], index: 0, kind: input, shape index: {}]
  %s1 = inlined_call_operand.vmem [shape: bf16[9,512], index: 1, kind: input, shape index: {}]
  %s2 = inlined_call_operand.vmem [shape: f32[16,1], index: 2, kind: input, shape index: {}]
  %s3 = inlined_call_operand.vmem [shape: f32[16,512], index: 3, kind: output, shape index: {}]
  %s4 = sld [smem:[#allocation0]]
  $region22: #{mmslim_forward.38} parent=0
    _
  %s6 = ssub.s32 1, %s4
  %s7 = scalar_select 0, %s6, %s4
  // Predicated region
  $region2: #{mmslim_forward.38} parent=0 // pred_check
    _
  $region3: #{mmslim_forward.38} parent=0 // pred_check_branch
    %9 = sbr.rel (0) target = $region5
  $region4: #{mmslim_forward.38} parent=0 // pred_region
    _
  $region5: #{mmslim_forward.38} parent=0 // pred_fallthru
    _
  // Predicated region
  $region6: #{mmslim_forward.38} parent=0 // pred_check
    _
  $region7: #{mmslim_forward.38} parent=0 // pred_check_branch
    %11 = sbr.rel (0) target = $region9
  $region8: #{mmslim_forward.38} parent=0 // pred_region
    _
  $region9: #{mmslim_forward.38} parent=0 // pred_fallthru
    _
  // Predicated region
  $region10: #{mmslim_forward.38} parent=0 // pred_check
    _
  $region11: #{mmslim_forward.38} parent=0 // pred_check_branch
    %13 = sbr.rel (0) target = $region13
  $region12: #{mmslim_forward.38} parent=0 // pred_region
    _
  $region13: #{mmslim_forward.38} parent=0 // pred_fallthru
    _
  %v15 = vld [vmem:[%s1] sm:$0xff]
  %v16 = vld [vmem:[%s1 + $0x8] sm:$0xff]
  %v17 = vld [vmem:[%s1 + $0x10] sm:$0x11]
  %v18 = vld [vmem:[%s1 + $0x18] sm:$0x11]
  %v19 = vld [vmem:[%s0] sm:$0xf]
  %v20 = vld [vmem:[%s0 + $0x4] sm:$0xf]
  %v21 = vld [vmem:[%s2] sm:$0xff]
  %v22 = vld [vmem:[%s2 + $0x8] sm:$0xff]
  %24 = vset.pattern.permute.xlu0 0
  %25 = vperm.xlu0 %24, %v21
  %v26 = vpop.permute.xlu0 %25
  %29 = vset.pattern.permute.xlu0 0
  %30 = vperm.xlu0 %29, %v22
  %v31 = vpop.permute.xlu0 %30
  %v35 = vunpack.c.l.b16 %v19
  %v36 = vunpack.c.l.b16 %v20
  %v37 = vpack.c.b16 %v36, %v35
  %v42 = vunpack.c.l.b16 %v15
  %v43 = vunpack.c.h.b16 %v15
  %v44 = vunpack.c.l.b16 %v16
  %v45 = vunpack.c.h.b16 %v16
  %v46 = vunpack.c.l.b16 %v17
  %v47 = vunpack.c.h.b16 %v17
  %v48 = vunpack.c.l.b16 %v18
  %v49 = vunpack.c.h.b16 %v18
  %v50 = vpack.c.b16 %v46, %v42
  %v51 = vpack.c.b16 %v47, %v43
  %v52 = vpack.c.b16 %v48, %v44
  %v53 = vpack.c.b16 %v49, %v45
  %vm54 = vcmask 72704
  %v56 = vsel %vm54, %v37, 0
  %vm58 = vcmask 1043456
  %vm59 = vcmask 1044480
  %v60 = vsel %vm58, 4294967295, 65535
  %v61 = vsel %vm59, %v60, 0
  %v63 = vand.u32 %v50, %v61
  %v66 = vand.u32 %v51, %v61
  %v69 = vand.u32 %v52, %v61
  %v72 = vand.u32 %v53, %v61
  %74 = vmatprep.subr.bf16.mxu0 0
  %75 = vmatpush1.bf16.msra.mxu0 0
  %76 = vmatprep.subr.bf16.mxu0 0
  %77 = vmatpush1.bf16.msra.mxu0 0
  %78 = vmatprep.subr.bf16.mxu0 0
  %79 = vmatpush1.bf16.msra.mxu0 0
  %80 = vmatprep.subr.bf16.mxu0 0
  %81 = vmatpush1.bf16.msra.mxu0 0
  %82 = vmatprep.subr.bf16.mxu0 0
  %83 = vmatpush1.bf16.msra.mxu0 0
  %84 = vmatprep.subr.bf16.mxu0 0
  %85 = vmatpush1.bf16.msra.mxu0 0
  %86 = vmatprep.subr.bf16.mxu0 0
  %87 = vmatpush1.bf16.msra.mxu0 0
  %88 = vmatprep.subr.bf16.mxu0 %v66
  %89 = vmatpush1.bf16.msra.mxu0 %v63
  %90 = vmatprep.subr.bf16.mxu0 0
  %91 = vmatpush2.bf16.msra.mxu0 0
  %92 = vmatprep.subr.bf16.mxu0 0
  %93 = vmatpush2.bf16.msra.mxu0 0
  %94 = vmatprep.subr.bf16.mxu0 0
  %95 = vmatpush2.bf16.msra.mxu0 0
  %96 = vmatprep.subr.bf16.mxu0 0
  %97 = vmatpush2.bf16.msra.mxu0 0
  %98 = vmatprep.subr.bf16.mxu0 0
  %99 = vmatpush2.bf16.msra.mxu0 0
  %100 = vmatprep.subr.bf16.mxu0 0
  %101 = vmatpush2.bf16.msra.mxu0 0
  %102 = vmatprep.subr.bf16.mxu0 0
  %103 = vmatpush2.bf16.msra.mxu0 0
  %104 = vmatprep.subr.bf16.mxu0 0
  %105 = vmatpush2.bf16.msra.mxu0 0
  %106 = vmatprep.mubr.bf16.mxu0 0
  %107 = vmatmul.mubr.bf16.gmra.mxu0 %v56
  %v108 = vpop.f32.mrf.mxu0
  %v109 = vadd.f32 %v26, %v108
  %v110 = vpop.f32.mrf.mxu0
  %v111 = vadd.f32 %v26, %v110
  %v112 = vpop.f32.mrf.mxu0
  %v113 = vadd.f32 %v31, %v112
  %v114 = vpop.f32.mrf.mxu0
  %v115 = vadd.f32 %v31, %v114
  %116 = vdwg.mxu0
  %117 = vmatprep.subr.bf16.mxu0 0
  %118 = vmatpush1.bf16.msra.mxu0 0
  %119 = vmatprep.subr.bf16.mxu0 0
  %120 = vmatpush1.bf16.msra.mxu0 0
  %121 = vmatprep.subr.bf16.mxu0 0
  %122 = vmatpush1.bf16.msra.mxu0 0
  %123 = vmatprep.subr.bf16.mxu0 0
  %124 = vmatpush1.bf16.msra.mxu0 0
  %125 = vmatprep.subr.bf16.mxu0 0
  %126 = vmatpush1.bf16.msra.mxu0 0
  %127 = vmatprep.subr.bf16.mxu0 0
  %128 = vmatpush1.bf16.msra.mxu0 0
  %129 = vmatprep.subr.bf16.mxu0 0
  %130 = vmatpush1.bf16.msra.mxu0 0
  %131 = vmatprep.subr.bf16.mxu0 %v72
  %132 = vmatpush1.bf16.msra.mxu0 %v69
  %133 = vmatprep.subr.bf16.mxu0 0
  %134 = vmatpush2.bf16.msra.mxu0 0
  %135 = vmatprep.subr.bf16.mxu0 0
  %136 = vmatpush2.bf16.msra.mxu0 0
  %137 = vmatprep.subr.bf16.mxu0 0
  %138 = vmatpush2.bf16.msra.mxu0 0
  %139 = vmatprep.subr.bf16.mxu0 0
  %140 = vmatpush2.bf16.msra.mxu0 0
  %141 = vmatprep.subr.bf16.mxu0 0
  %142 = vmatpush2.bf16.msra.mxu0 0
  %143 = vmatprep.subr.bf16.mxu0 0
  %144 = vmatpush2.bf16.msra.mxu0 0
  %145 = vmatprep.subr.bf16.mxu0 0
  %146 = vmatpush2.bf16.msra.mxu0 0
  %147 = vmatprep.subr.bf16.mxu0 0
  %148 = vmatpush2.bf16.msra.mxu0 0
  %149 = vmatprep.mubr.bf16.mxu0 0
  %150 = vmatmul.mubr.bf16.gmra.mxu0 %v56
  %v151 = vpop.f32.mrf.mxu0
  %v152 = vadd.f32 %v26, %v151
  %v153 = vpop.f32.mrf.mxu0
  %v154 = vadd.f32 %v26, %v153
  %v155 = vpop.f32.mrf.mxu0
  %v156 = vadd.f32 %v31, %v155
  %v157 = vpop.f32.mrf.mxu0
  %v158 = vadd.f32 %v31, %v157
  %159 = vdwg.mxu0
  %v160 = vmax.f32 %v109, 0.0
  %v161 = vmax.f32 %v111, 0.0
  %v162 = vmax.f32 %v152, 0.0
  %v163 = vmax.f32 %v154, 0.0
  %v164 = vmax.f32 %v113, 0.0
  %v165 = vmax.f32 %v115, 0.0
  %v166 = vmax.f32 %v156, 0.0
  %v167 = vmax.f32 %v158, 0.0
  %168 = vst [vmem:[%s3] sm:$0xff] %v160
  %169 = vst [vmem:[%s3 + $0x8] sm:$0xff] %v161
  %170 = vst [vmem:[%s3 + $0x10] sm:$0xff] %v162
  %171 = vst [vmem:[%s3 + $0x18] sm:$0xff] %v163
  %172 = vst [vmem:[%s3 + $0x20] sm:$0xff] %v164
  %173 = vst [vmem:[%s3 + $0x28] sm:$0xff] %v165
  %174 = vst [vmem:[%s3 + $0x30] sm:$0xff] %v166
  %175 = vst [vmem:[%s3 + $0x38] sm:$0xff] %v167
  // Predicated region
  $region14: #{mmslim_forward.38} parent=0 // pred_check
    _
  $region15: #{mmslim_forward.38} parent=0 // pred_check_branch
    %177 = sbr.rel (0) target = $region17
  $region16: #{mmslim_forward.38} parent=0 // pred_region
    _
  $region17: #{mmslim_forward.38} parent=0 // pred_fallthru
    _
  // Predicated region
  $region18: #{mmslim_forward.38} parent=0 // pred_check
    _
  $region19: #{mmslim_forward.38} parent=0 // pred_check_branch
    %179 = sbr.rel (0) target = $region21
  $region20: #{mmslim_forward.38} parent=0 // pred_region
    _
  $region21: #{mmslim_forward.38} parent=0 // pred_fallthru
    _

// kernel: mmslim_forward.39
$region0: #{mmslim_forward.39}
  #allocation0 [shape = 'u32[]', space=smem, size = 0x4, offset = 0x4, fixed_abs, tag = 'smem constant byte address 0x4 - core index']
  #allocation1 [shape = 'u32[144,128]{1,0:T(1,128)}', space=vmem, size = 0x12000, scoped, tag = 'internal scratch']
  %s0 = inlined_call_operand.vmem [shape: bf16[16,144], index: 0, kind: input, shape index: {}]
  %s1 = inlined_call_operand.vmem [shape: bf16[144,512], index: 1, kind: input, shape index: {}]
  %s2 = inlined_call_operand.vmem [shape: f32[16,1], index: 2, kind: input, shape index: {}]
  %s3 = inlined_call_operand.vmem [shape: f32[16,512], index: 3, kind: output, shape index: {}]
  %s4 = sld [smem:[#allocation0]]
  $region22: #{mmslim_forward.39} parent=0
    _
  %s6 = ssub.s32 1, %s4
  %s7 = scalar_select 0, %s6, %s4
  // Predicated region
  $region2: #{mmslim_forward.39} parent=0 // pred_check
    _
  $region3: #{mmslim_forward.39} parent=0 // pred_check_branch
    %9 = sbr.rel (0) target = $region5
  $region4: #{mmslim_forward.39} parent=0 // pred_region
    _
  $region5: #{mmslim_forward.39} parent=0 // pred_fallthru
    _
  // Predicated region
  $region6: #{mmslim_forward.39} parent=0 // pred_check
    _
  $region7: #{mmslim_forward.39} parent=0 // pred_check_branch
    %11 = sbr.rel (0) target = $region9
  $region8: #{mmslim_forward.39} parent=0 // pred_region
    _
  $region9: #{mmslim_forward.39} parent=0 // pred_fallthru
    _
  // Predicated region
  $region10: #{mmslim_forward.39} parent=0 // pred_check
    _
  $region11: #{mmslim_forward.39} parent=0 // pred_check_branch
    %13 = sbr.rel (0) target = $region13
  $region12: #{mmslim_forward.39} parent=0 // pred_region
    _
  $region13: #{mmslim_forward.39} parent=0 // pred_fallthru
    _
  %v15 = vld [vmem:[%s1] sm:$0xff]
  %v16 = vld [vmem:[%s1 + $0x8] sm:$0xff]
  %v17 = vld [vmem:[%s1 + $0x10] sm:$0xff]
  %v18 = vld [vmem:[%s1 + $0x18] sm:$0xff]
  %v19 = vld [vmem:[%s1 + $0x20] sm:$0xff]
  %v20 = vld [vmem:[%s1 + $0x28] sm:$0xff]
  %v21 = vld [vmem:[%s1 + $0x30] sm:$0xff]
  %v22 = vld [vmem:[%s1 + $0x38] sm:$0xff]
  %v23 = vld [vmem:[%s1 + $0x40] sm:$0xff]
  %v24 = vld [vmem:[%s1 + $0x48] sm:$0xff]
  %v25 = vld [vmem:[%s1 + $0x50] sm:$0xff]
  %v26 = vld [vmem:[%s1 + $0x58] sm:$0xff]
  %v27 = vld [vmem:[%s1 + $0x60] sm:$0xff]
  %v28 = vld [vmem:[%s1 + $0x68] sm:$0xff]
  %v29 = vld [vmem:[%s1 + $0x70] sm:$0xff]
  %v30 = vld [vmem:[%s1 + $0x78] sm:$0xff]
  %v31 = vld [vmem:[%s1 + $0x80] sm:$0xff]
  %v32 = vld [vmem:[%s1 + $0x88] sm:$0xff]
  %v33 = vld [vmem:[%s1 + $0x90] sm:$0xff]
  %v34 = vld [vmem:[%s1 + $0x98] sm:$0xff]
  %v35 = vld [vmem:[%s1 + $0xa0] sm:$0xff]
  %v36 = vld [vmem:[%s1 + $0xa8] sm:$0xff]
  %v37 = vld [vmem:[%s1 + $0xb0] sm:$0xff]
  %v38 = vld [vmem:[%s1 + $0xb8] sm:$0xff]
  %v39 = vld [vmem:[%s1 + $0xc0] sm:$0xff]
  %v40 = vld [vmem:[%s1 + $0xc8] sm:$0xff]
  %v41 = vld [vmem:[%s1 + $0xd0] sm:$0xff]
  %v42 = vld [vmem:[%s1 + $0xd8] sm:$0xff]
  %v43 = vld [vmem:[%s1 + $0xe0] sm:$0xff]
  %v44 = vld [vmem:[%s1 + $0xe8] sm:$0xff]
  %v45 = vld [vmem:[%s1 + $0xf0] sm:$0xff]
  %v46 = vld [vmem:[%s1 + $0xf8] sm:$0xff]
  %v47 = vld [vmem:[%s1 + $0x100] sm:$0xff]
  %v48 = vld [vmem:[%s1 + $0x108] sm:$0xff]
  %v49 = vld [vmem:[%s1 + $0x110] sm:$0xff]
  %v50 = vld [vmem:[%s1 + $0x118] sm:$0xff]
  %v51 = vld [vmem:[%s0] sm:$0xff]
  %v52 = vld [vmem:[%s0 + $0x8] sm:$0xff]
  %v53 = vld [vmem:[%s2] sm:$0xff]
  %v54 = vld [vmem:[%s2 + $0x8] sm:$0xff]
  %56 = vset.pattern.permute.xlu0 0
  %57 = vperm.xlu0 %56, %v53
  %v58 = vpop.permute.xlu0 %57
  %61 = vset.pattern.permute.xlu0 0
  %62 = vperm.xlu0 %61, %v54
  %v63 = vpop.permute.xlu0 %62
  %v67 = vunpack.c.l.b16 %v51
  %v68 = vunpack.c.h.b16 %v51
  %v69 = vunpack.c.l.b16 %v52
  %v70 = vunpack.c.h.b16 %v52
  %v71 = vpack.c.b16 %v69, %v67
  %v72 = vpack.c.b16 %v70, %v68
  %v110 = vunpack.c.l.b16 %v15
  %v111 = vunpack.c.h.b16 %v15
  %v112 = vunpack.c.l.b16 %v16
  %v113 = vunpack.c.h.b16 %v16
  %v114 = vunpack.c.l.b16 %v17
  %v115 = vunpack.c.h.b16 %v17
  %v116 = vunpack.c.l.b16 %v18
  %v117 = vunpack.c.h.b16 %v18
  %v118 = vunpack.c.l.b16 %v19
  %v119 = vunpack.c.h.b16 %v19
  %v120 = vunpack.c.l.b16 %v20
  %v121 = vunpack.c.h.b16 %v20
  %v122 = vunpack.c.l.b16 %v21
  %v123 = vunpack.c.h.b16 %v21
  %v124 = vunpack.c.l.b16 %v22
  %v125 = vunpack.c.h.b16 %v22
  %v126 = vunpack.c.l.b16 %v23
  %v127 = vunpack.c.h.b16 %v23
  %v128 = vunpack.c.l.b16 %v24
  %v129 = vunpack.c.h.b16 %v24
  %v130 = vunpack.c.l.b16 %v25
  %v131 = vunpack.c.h.b16 %v25
  %v132 = vunpack.c.l.b16 %v26
  %v133 = vunpack.c.h.b16 %v26
  %v134 = vunpack.c.l.b16 %v27
  %v135 = vunpack.c.h.b16 %v27
  %v136 = vunpack.c.l.b16 %v28
  %v137 = vunpack.c.h.b16 %v28
  %v138 = vunpack.c.l.b16 %v29
  %v139 = vunpack.c.h.b16 %v29
  %v140 = vunpack.c.l.b16 %v30
  %v141 = vunpack.c.h.b16 %v30
  %v142 = vunpack.c.l.b16 %v31
  %v143 = vunpack.c.h.b16 %v31
  %v144 = vunpack.c.l.b16 %v32
  %v145 = vunpack.c.h.b16 %v32
  %v146 = vunpack.c.l.b16 %v33
  %v147 = vunpack.c.h.b16 %v33
  %v148 = vunpack.c.l.b16 %v34
  %v149 = vunpack.c.h.b16 %v34
  %v150 = vunpack.c.l.b16 %v35
  %v151 = vunpack.c.h.b16 %v35
  %v152 = vunpack.c.l.b16 %v36
  %v153 = vunpack.c.h.b16 %v36
  %v154 = vunpack.c.l.b16 %v37
  %v155 = vunpack.c.h.b16 %v37
  %v156 = vunpack.c.l.b16 %v38
  %v157 = vunpack.c.h.b16 %v38
  %v158 = vunpack.c.l.b16 %v39
  %v159 = vunpack.c.h.b16 %v39
  %v160 = vunpack.c.l.b16 %v40
  %v161 = vunpack.c.h.b16 %v40
  %v162 = vunpack.c.l.b16 %v41
  %v163 = vunpack.c.h.b16 %v41
  %v164 = vunpack.c.l.b16 %v42
  %v165 = vunpack.c.h.b16 %v42
  %v166 = vunpack.c.l.b16 %v43
  %v167 = vunpack.c.h.b16 %v43
  %v168 = vunpack.c.l.b16 %v44
  %v169 = vunpack.c.h.b16 %v44
  %v170 = vunpack.c.l.b16 %v45
  %v171 = vunpack.c.h.b16 %v45
  %v172 = vunpack.c.l.b16 %v46
  %v173 = vunpack.c.h.b16 %v46
  %v174 = vunpack.c.l.b16 %v47
  %v175 = vunpack.c.h.b16 %v47
  %v176 = vunpack.c.l.b16 %v48
  %v177 = vunpack.c.h.b16 %v48
  %v178 = vunpack.c.l.b16 %v49
  %v179 = vunpack.c.h.b16 %v49
  %v180 = vunpack.c.l.b16 %v50
  %v181 = vunpack.c.h.b16 %v50
  %v182 = vpack.c.b16 %v114, %v110
  %v183 = vpack.c.b16 %v115, %v111
  %v184 = vpack.c.b16 %v116, %v112
  %v185 = vpack.c.b16 %v117, %v113
  %v186 = vpack.c.b16 %v122, %v118
  %v187 = vpack.c.b16 %v123, %v119
  %v188 = vpack.c.b16 %v124, %v120
  %v189 = vpack.c.b16 %v125, %v121
  %v190 = vpack.c.b16 %v130, %v126
  %v191 = vpack.c.b16 %v131, %v127
  %v192 = vpack.c.b16 %v132, %v128
  %v193 = vpack.c.b16 %v133, %v129
  %v194 = vpack.c.b16 %v138, %v134
  %v195 = vpack.c.b16 %v139, %v135
  %v196 = vpack.c.b16 %v140, %v136
  %v197 = vpack.c.b16 %v141, %v137
  %v198 = vpack.c.b16 %v146, %v142
  %v199 = vpack.c.b16 %v147, %v143
  %v200 = vpack.c.b16 %v148, %v144
  %v201 = vpack.c.b16 %v149, %v145
  %v202 = vpack.c.b16 %v154, %v150
  %v203 = vpack.c.b16 %v155, %v151
  %v204 = vpack.c.b16 %v156, %v152
  %v205 = vpack.c.b16 %v157, %v153
  %v206 = vpack.c.b16 %v162, %v158
  %v207 = vpack.c.b16 %v163, %v159
  %v208 = vpack.c.b16 %v164, %v160
  %v209 = vpack.c.b16 %v165, %v161
  %v210 = vpack.c.b16 %v170, %v166
  %v211 = vpack.c.b16 %v171, %v167
  %v212 = vpack.c.b16 %v172, %v168
  %v213 = vpack.c.b16 %v173, %v169
  %v214 = vpack.c.b16 %v178, %v174
  %v215 = vpack.c.b16 %v179, %v175
  %v216 = vpack.c.b16 %v180, %v176
  %v217 = vpack.c.b16 %v181, %v177
  %vm254 = vcmask 130048
  %v256 = vsel %vm254, %v72, 0
  %258 = vmatprep.subr.bf16.mxu0 %v211
  %259 = vmatpush1.bf16.msra.mxu0 %v210
  %260 = vmatprep.subr.bf16.mxu0 %v207
  %261 = vmatpush1.bf16.msra.mxu0 %v206
  %262 = vmatprep.subr.bf16.mxu0 %v203
  %263 = vmatpush1.bf16.msra.mxu0 %v202
  %264 = vmatprep.subr.bf16.mxu0 %v199
  %265 = vmatpush1.bf16.msra.mxu0 %v198
  %266 = vmatprep.subr.bf16.mxu0 %v195
  %267 = vmatpush1.bf16.msra.mxu0 %v194
  %268 = vmatprep.subr.bf16.mxu0 %v191
  %269 = vmatpush1.bf16.msra.mxu0 %v190
  %270 = vmatprep.subr.bf16.mxu0 %v187
  %271 = vmatpush1.bf16.msra.mxu0 %v186
  %272 = vmatprep.subr.bf16.mxu0 %v183
  %273 = vmatpush1.bf16.msra.mxu0 %v182
  %274 = vmatprep.subr.bf16.mxu0 0
  %275 = vmatpush2.bf16.msra.mxu0 0
  %276 = vmatprep.subr.bf16.mxu0 0
  %277 = vmatpush2.bf16.msra.mxu0 0
  %278 = vmatprep.subr.bf16.mxu0 0
  %279 = vmatpush2.bf16.msra.mxu0 0
  %280 = vmatprep.subr.bf16.mxu0 0
  %281 = vmatpush2.bf16.msra.mxu0 0
  %282 = vmatprep.subr.bf16.mxu0 0
  %283 = vmatpush2.bf16.msra.mxu0 0
  %284 = vmatprep.subr.bf16.mxu0 0
  %285 = vmatpush2.bf16.msra.mxu0 0
  %286 = vmatprep.subr.bf16.mxu0 0
  %287 = vmatpush2.bf16.msra.mxu0 0
  %288 = vmatprep.subr.bf16.mxu0 %v215
  %289 = vmatpush2.bf16.msra.mxu0 %v214
  %290 = vmatprep.mubr.bf16.mxu0 %v256
  %291 = vmatmul.mubr.bf16.gmra.mxu0 %v71
  %v292 = vpop.f32.mrf.mxu0
  %v293 = vadd.f32 %v58, %v292
  %v294 = vpop.f32.mrf.mxu0
  %v295 = vadd.f32 %v58, %v294
  %v296 = vpop.f32.mrf.mxu0
  %v297 = vadd.f32 %v63, %v296
  %v298 = vpop.f32.mrf.mxu0
  %v299 = vadd.f32 %v63, %v298
  %300 = vdwg.mxu0
  %301 = vmatprep.subr.bf16.mxu0 %v213
  %302 = vmatpush1.bf16.msra.mxu0 %v212
  %303 = vmatprep.subr.bf16.mxu0 %v209
  %304 = vmatpush1.bf16.msra.mxu0 %v208
  %305 = vmatprep.subr.bf16.mxu0 %v205
  %306 = vmatpush1.bf16.msra.mxu0 %v204
  %307 = vmatprep.subr.bf16.mxu0 %v201
  %308 = vmatpush1.bf16.msra.mxu0 %v200
  %309 = vmatprep.subr.bf16.mxu0 %v197
  %310 = vmatpush1.bf16.msra.mxu0 %v196
  %311 = vmatprep.subr.bf16.mxu0 %v193
  %312 = vmatpush1.bf16.msra.mxu0 %v192
  %313 = vmatprep.subr.bf16.mxu0 %v189
  %314 = vmatpush1.bf16.msra.mxu0 %v188
  %315 = vmatprep.subr.bf16.mxu0 %v185
  %316 = vmatpush1.bf16.msra.mxu0 %v184
  %317 = vmatprep.subr.bf16.mxu0 0
  %318 = vmatpush2.bf16.msra.mxu0 0
  %319 = vmatprep.subr.bf16.mxu0 0
  %320 = vmatpush2.bf16.msra.mxu0 0
  %321 = vmatprep.subr.bf16.mxu0 0
  %322 = vmatpush2.bf16.msra.mxu0 0
  %323 = vmatprep.subr.bf16.mxu0 0
  %324 = vmatpush2.bf16.msra.mxu0 0
  %325 = vmatprep.subr.bf16.mxu0 0
  %326 = vmatpush2.bf16.msra.mxu0 0
  %327 = vmatprep.subr.bf16.mxu0 0
  %328 = vmatpush2.bf16.msra.mxu0 0
  %329 = vmatprep.subr.bf16.mxu0 0
  %330 = vmatpush2.bf16.msra.mxu0 0
  %331 = vmatprep.subr.bf16.mxu0 %v217
  %332 = vmatpush2.bf16.msra.mxu0 %v216
  %333 = vmatprep.mubr.bf16.mxu0 %v256
  %334 = vmatmul.mubr.bf16.gmra.mxu0 %v71
  %v335 = vpop.f32.mrf.mxu0
  %v336 = vadd.f32 %v58, %v335
  %v337 = vpop.f32.mrf.mxu0
  %v338 = vadd.f32 %v58, %v337
  %v339 = vpop.f32.mrf.mxu0
  %v340 = vadd.f32 %v63, %v339
  %v341 = vpop.f32.mrf.mxu0
  %v342 = vadd.f32 %v63, %v341
  %343 = vdwg.mxu0
  %v344 = vmax.f32 %v293, 0.0
  %v345 = vmax.f32 %v295, 0.0
  %v346 = vmax.f32 %v336, 0.0
  %v347 = vmax.f32 %v338, 0.0
  %v348 = vmax.f32 %v297, 0.0
  %v349 = vmax.f32 %v299, 0.0
  %v350 = vmax.f32 %v340, 0.0
  %v351 = vmax.f32 %v342, 0.0
  %352 = vst [vmem:[%s3] sm:$0xff] %v344
  %353 = vst [vmem:[%s3 + $0x8] sm:$0xff] %v345
  %354 = vst [vmem:[%s3 + $0x10] sm:$0xff] %v346
  %355 = vst [vmem:[%s3 + $0x18] sm:$0xff] %v347
  %356 = vst [vmem:[%s3 + $0x20] sm:$0xff] %v348
  %357 = vst [vmem:[%s3 + $0x28] sm:$0xff] %v349
  %358 = vst [vmem:[%s3 + $0x30] sm:$0xff] %v350
  %359 = vst [vmem:[%s3 + $0x38] sm:$0xff] %v351
  // Predicated region
  $region14: #{mmslim_forward.39} parent=0 // pred_check
    _
  $region15: #{mmslim_forward.39} parent=0 // pred_check_branch
    %361 = sbr.rel (0) target = $region17
  $region16: #{mmslim_forward.39} parent=0 // pred_region
    _
  $region17: #{mmslim_forward.39} parent=0 // pred_fallthru
    _
  // Predicated region
  $region18: #{mmslim_forward.39} parent=0 // pred_check
    _
  $region19: #{mmslim_forward.39} parent=0 // pred_check_branch
    %363 = sbr.rel (0) target = $region21
  $region20: #{mmslim_forward.39} parent=0 // pred_region
    _
  $region21: #{mmslim_forward.39} parent=0 // pred_fallthru
    _

// kernel: mmslim_forward.40
$region0: #{mmslim_forward.40}
  #allocation0 [shape = 'u32[]', space=smem, size = 0x4, offset = 0x4, fixed_abs, tag = 'smem constant byte address 0x4 - core index']
  #allocation1 [shape = 'u32[144,128]{1,0:T(1,128)}', space=vmem, size = 0x12000, scoped, tag = 'internal scratch']
  #allocation2 [shape = 'f32[1,1]{1,0:T(1,128)S(1)}', space=vmem, size = 0x200, scoped, tag = 'scoped memory for mmslim_forward.40']
  %s0 = inlined_call_operand.vmem [shape: bf16[1,144], index: 0, kind: input, shape index: {}]
  %s1 = inlined_call_operand.vmem [shape: bf16[144,512], index: 1, kind: input, shape index: {}]
  %s2 = inlined_call_operand.<no memory space> [shape: f32[1,1], index: 2, kind: input, shape index: {}]
  %s3 = inlined_call_operand.vmem [shape: f32[1,512], index: 3, kind: input, shape index: {}]
  %s4 = inlined_call_operand.vmem [shape: f32[1,512], index: 4, kind: output, shape index: {0}]
  %s5 = inlined_call_operand.vmem [shape: f32[1,512], index: 5, kind: output, shape index: {1}]
  %s6 = inlined_call_operand.vmem [shape: f32[1,512], index: 6, kind: output, shape index: {2}]
  %7 = xla_tuple %s4, %s5, %s6
  %s8 = sld [smem:[#allocation0]]
  $region42: #{mmslim_forward.40} parent=0
    _
  %s10 = ssub.s32 1, %s8
  %s11 = scalar_select 0, %s10, %s8
  %v12 = vstv %s2
  %13 = vst [vmem:[#allocation2] sm:$0x1] %v12
  // Predicated region
  $region2: #{mmslim_forward.40} parent=0 // pred_check
    _
  $region3: #{mmslim_forward.40} parent=0 // pred_check_branch
    %15 = sbr.rel (0) target = $region5
  $region4: #{mmslim_forward.40} parent=0 // pred_region
    _
  $region5: #{mmslim_forward.40} parent=0 // pred_fallthru
    _
  // Predicated region
  $region6: #{mmslim_forward.40} parent=0 // pred_check
    _
  $region7: #{mmslim_forward.40} parent=0 // pred_check_branch
    %17 = sbr.rel (0) target = $region9
  $region8: #{mmslim_forward.40} parent=0 // pred_region
    _
  $region9: #{mmslim_forward.40} parent=0 // pred_fallthru
    _
  // Predicated region
  $region10: #{mmslim_forward.40} parent=0 // pred_check
    _
  $region11: #{mmslim_forward.40} parent=0 // pred_check_branch
    %19 = sbr.rel (0) target = $region13
  $region12: #{mmslim_forward.40} parent=0 // pred_region
    _
  $region13: #{mmslim_forward.40} parent=0 // pred_fallthru
    _
  // Predicated region
  $region14: #{mmslim_forward.40} parent=0 // pred_check
    _
  $region15: #{mmslim_forward.40} parent=0 // pred_check_branch
    %21 = sbr.rel (0) target = $region17
  $region16: #{mmslim_forward.40} parent=0 // pred_region
    _
  $region17: #{mmslim_forward.40} parent=0 // pred_fallthru
    _
  %v23 = vld [vmem:[%s0] sm:$0x3]
  %v24 = vld [vmem:[%s1] sm:$0xff]
  %v25 = vld [vmem:[%s1 + $0x8] sm:$0xff]
  %v26 = vld [vmem:[%s1 + $0x10] sm:$0xff]
  %v27 = vld [vmem:[%s1 + $0x18] sm:$0xff]
  %v28 = vld [vmem:[%s1 + $0x20] sm:$0xff]
  %v29 = vld [vmem:[%s1 + $0x28] sm:$0xff]
  %v30 = vld [vmem:[%s1 + $0x30] sm:$0xff]
  %v31 = vld [vmem:[%s1 + $0x38] sm:$0xff]
  %v32 = vld [vmem:[%s1 + $0x40] sm:$0xff]
  %v33 = vld [vmem:[%s1 + $0x48] sm:$0xff]
  %v34 = vld [vmem:[%s1 + $0x50] sm:$0xff]
  %v35 = vld [vmem:[%s1 + $0x58] sm:$0xff]
  %v36 = vld [vmem:[%s1 + $0x60] sm:$0xff]
  %v37 = vld [vmem:[%s1 + $0x68] sm:$0xff]
  %v38 = vld [vmem:[%s1 + $0x70] sm:$0xff]
  %v39 = vld [vmem:[%s1 + $0x78] sm:$0xff]
  %v40 = vld [vmem:[%s1 + $0x80] sm:$0xff]
  %v41 = vld [vmem:[%s1 + $0x88] sm:$0xff]
  %v42 = vld [vmem:[%s1 + $0x90] sm:$0xff]
  %v43 = vld [vmem:[%s1 + $0x98] sm:$0xff]
  %v44 = vld [vmem:[%s1 + $0xa0] sm:$0xff]
  %v45 = vld [vmem:[%s1 + $0xa8] sm:$0xff]
  %v46 = vld [vmem:[%s1 + $0xb0] sm:$0xff]
  %v47 = vld [vmem:[%s1 + $0xb8] sm:$0xff]
  %v48 = vld [vmem:[%s1 + $0xc0] sm:$0xff]
  %v49 = vld [vmem:[%s1 + $0xc8] sm:$0xff]
  %v50 = vld [vmem:[%s1 + $0xd0] sm:$0xff]
  %v51 = vld [vmem:[%s1 + $0xd8] sm:$0xff]
  %v52 = vld [vmem:[%s1 + $0xe0] sm:$0xff]
  %v53 = vld [vmem:[%s1 + $0xe8] sm:$0xff]
  %v54 = vld [vmem:[%s1 + $0xf0] sm:$0xff]
  %v55 = vld [vmem:[%s1 + $0xf8] sm:$0xff]
  %v56 = vld [vmem:[%s1 + $0x100] sm:$0xff]
  %v57 = vld [vmem:[%s1 + $0x108] sm:$0xff]
  %v58 = vld [vmem:[%s1 + $0x110] sm:$0xff]
  %v59 = vld [vmem:[%s1 + $0x118] sm:$0xff]
  %v60 = vld [vmem:[#allocation2] sm:$0x1]
  %62 = vset.pattern.permute.xlu0 0
  %63 = vperm.xlu0 %62, %v60
  %v64 = vpop.permute.xlu0 %63
  %v66 = vlaneseq
  %v67 = vshrl.u32 %v66, 7
  %v68 = vsub.s32 0, %v67
  %v69 = vrot.slane %v64, %v68
  %v72 = vunpack.c.l.s4 1966171168
  %v73 = vunpack.c.0.s8 %v72
  %v74 = vlaneseq
  %v75 = vshrl.u32 %v74, 7
  %v76 = vsub.s32 %v73, %v75
  %v77 = vrot.slane %v23, %v76
  %v78 = vcombine.high %v77, %v77
  %v80 = vunpack.c.l.s4 1966171168
  %v81 = vunpack.c.0.s8 %v80
  %v82 = vlaneseq
  %v83 = vshrl.u32 %v82, 7
  %v84 = vsub.s32 %v81, %v83
  %v85 = vrot.slane %v77, %v84
  %v87 = vunpack.c.l.s4 1966171168
  %v88 = vunpack.c.0.s8 %v87
  %v89 = vlaneseq
  %v90 = vshrl.u32 %v89, 7
  %v91 = vsub.s32 %v88, %v90
  %v92 = vrot.slane %v78, %v91
  %v130 = vunpack.c.l.b16 %v24
  %v131 = vunpack.c.h.b16 %v24
  %v132 = vunpack.c.l.b16 %v25
  %v133 = vunpack.c.h.b16 %v25
  %v134 = vunpack.c.l.b16 %v26
  %v135 = vunpack.c.h.b16 %v26
  %v136 = vunpack.c.l.b16 %v27
  %v137 = vunpack.c.h.b16 %v27
  %v138 = vunpack.c.l.b16 %v28
  %v139 = vunpack.c.h.b16 %v28
  %v140 = vunpack.c.l.b16 %v29
  %v141 = vunpack.c.h.b16 %v29
  %v142 = vunpack.c.l.b16 %v30
  %v143 = vunpack.c.h.b16 %v30
  %v144 = vunpack.c.l.b16 %v31
  %v145 = vunpack.c.h.b16 %v31
  %v146 = vunpack.c.l.b16 %v32
  %v147 = vunpack.c.h.b16 %v32
  %v148 = vunpack.c.l.b16 %v33
  %v149 = vunpack.c.h.b16 %v33
  %v150 = vunpack.c.l.b16 %v34
  %v151 = vunpack.c.h.b16 %v34
  %v152 = vunpack.c.l.b16 %v35
  %v153 = vunpack.c.h.b16 %v35
  %v154 = vunpack.c.l.b16 %v36
  %v155 = vunpack.c.h.b16 %v36
  %v156 = vunpack.c.l.b16 %v37
  %v157 = vunpack.c.h.b16 %v37
  %v158 = vunpack.c.l.b16 %v38
  %v159 = vunpack.c.h.b16 %v38
  %v160 = vunpack.c.l.b16 %v39
  %v161 = vunpack.c.h.b16 %v39
  %v162 = vunpack.c.l.b16 %v40
  %v163 = vunpack.c.h.b16 %v40
  %v164 = vunpack.c.l.b16 %v41
  %v165 = vunpack.c.h.b16 %v41
  %v166 = vunpack.c.l.b16 %v42
  %v167 = vunpack.c.h.b16 %v42
  %v168 = vunpack.c.l.b16 %v43
  %v169 = vunpack.c.h.b16 %v43
  %v170 = vunpack.c.l.b16 %v44
  %v171 = vunpack.c.h.b16 %v44
  %v172 = vunpack.c.l.b16 %v45
  %v173 = vunpack.c.h.b16 %v45
  %v174 = vunpack.c.l.b16 %v46
  %v175 = vunpack.c.h.b16 %v46
  %v176 = vunpack.c.l.b16 %v47
  %v177 = vunpack.c.h.b16 %v47
  %v178 = vunpack.c.l.b16 %v48
  %v179 = vunpack.c.h.b16 %v48
  %v180 = vunpack.c.l.b16 %v49
  %v181 = vunpack.c.h.b16 %v49
  %v182 = vunpack.c.l.b16 %v50
  %v183 = vunpack.c.h.b16 %v50
  %v184 = vunpack.c.l.b16 %v51
  %v185 = vunpack.c.h.b16 %v51
  %v186 = vunpack.c.l.b16 %v52
  %v187 = vunpack.c.h.b16 %v52
  %v188 = vunpack.c.l.b16 %v53
  %v189 = vunpack.c.h.b16 %v53
  %v190 = vunpack.c.l.b16 %v54
  %v191 = vunpack.c.h.b16 %v54
  %v192 = vunpack.c.l.b16 %v55
  %v193 = vunpack.c.h.b16 %v55
  %v194 = vunpack.c.l.b16 %v56
  %v195 = vunpack.c.h.b16 %v56
  %v196 = vunpack.c.l.b16 %v57
  %v197 = vunpack.c.h.b16 %v57
  %v198 = vunpack.c.l.b16 %v58
  %v199 = vunpack.c.h.b16 %v58
  %v200 = vunpack.c.l.b16 %v59
  %v201 = vunpack.c.h.b16 %v59
  %v202 = vpack.c.b16 %v134, %v130
  %v203 = vpack.c.b16 %v135, %v131
  %v204 = vpack.c.b16 %v136, %v132
  %v205 = vpack.c.b16 %v137, %v133
  %v206 = vpack.c.b16 %v142, %v138
  %v207 = vpack.c.b16 %v143, %v139
  %v208 = vpack.c.b16 %v144, %v140
  %v209 = vpack.c.b16 %v145, %v141
  %v210 = vpack.c.b16 %v150, %v146
  %v211 = vpack.c.b16 %v151, %v147
  %v212 = vpack.c.b16 %v152, %v148
  %v213 = vpack.c.b16 %v153, %v149
  %v214 = vpack.c.b16 %v158, %v154
  %v215 = vpack.c.b16 %v159, %v155
  %v216 = vpack.c.b16 %v160, %v156
  %v217 = vpack.c.b16 %v161, %v157
  %v218 = vpack.c.b16 %v166, %v162
  %v219 = vpack.c.b16 %v167, %v163
  %v220 = vpack.c.b16 %v168, %v164
  %v221 = vpack.c.b16 %v169, %v165
  %v222 = vpack.c.b16 %v174, %v170
  %v223 = vpack.c.b16 %v175, %v171
  %v224 = vpack.c.b16 %v176, %v172
  %v225 = vpack.c.b16 %v177, %v173
  %v226 = vpack.c.b16 %v182, %v178
  %v227 = vpack.c.b16 %v183, %v179
  %v228 = vpack.c.b16 %v184, %v180
  %v229 = vpack.c.b16 %v185, %v181
  %v230 = vpack.c.b16 %v190, %v186
  %v231 = vpack.c.b16 %v191, %v187
  %v232 = vpack.c.b16 %v192, %v188
  %v233 = vpack.c.b16 %v193, %v189
  %v234 = vpack.c.b16 %v198, %v194
  %v235 = vpack.c.b16 %v199, %v195
  %v236 = vpack.c.b16 %v200, %v196
  %v237 = vpack.c.b16 %v201, %v197
  %vm274 = vcmask 130048
  %v276 = vsel %vm274, %v92, 0
  %278 = vmatprep.subr.bf16.mxu0 %v231
  %279 = vmatpush1.bf16.msra.mxu0 %v230
  %280 = vmatprep.subr.bf16.mxu0 %v227
  %281 = vmatpush1.bf16.msra.mxu0 %v226
  %282 = vmatprep.subr.bf16.mxu0 %v223
  %283 = vmatpush1.bf16.msra.mxu0 %v222
  %284 = vmatprep.subr.bf16.mxu0 %v219
  %285 = vmatpush1.bf16.msra.mxu0 %v218
  %286 = vmatprep.subr.bf16.mxu0 %v215
  %287 = vmatpush1.bf16.msra.mxu0 %v214
  %288 = vmatprep.subr.bf16.mxu0 %v211
  %289 = vmatpush1.bf16.msra.mxu0 %v210
  %290 = vmatprep.subr.bf16.mxu0 %v207
  %291 = vmatpush1.bf16.msra.mxu0 %v206
  %292 = vmatprep.subr.bf16.mxu0 %v203
  %293 = vmatpush1.bf16.msra.mxu0 %v202
  %294 = vmatprep.subr.bf16.mxu0 0
  %295 = vmatpush2.bf16.msra.mxu0 0
  %296 = vmatprep.subr.bf16.mxu0 0
  %297 = vmatpush2.bf16.msra.mxu0 0
  %298 = vmatprep.subr.bf16.mxu0 0
  %299 = vmatpush2.bf16.msra.mxu0 0
  %300 = vmatprep.subr.bf16.mxu0 0
  %301 = vmatpush2.bf16.msra.mxu0 0
  %302 = vmatprep.subr.bf16.mxu0 0
  %303 = vmatpush2.bf16.msra.mxu0 0
  %304 = vmatprep.subr.bf16.mxu0 0
  %305 = vmatpush2.bf16.msra.mxu0 0
  %306 = vmatprep.subr.bf16.mxu0 0
  %307 = vmatpush2.bf16.msra.mxu0 0
  %308 = vmatprep.subr.bf16.mxu0 %v235
  %309 = vmatpush2.bf16.msra.mxu0 %v234
  %310 = vmatprep.mubr.bf16.mxu0 %v276
  %311 = vmatmul.mubr.bf16.gmra.mxu0 %v85
  %v312 = vpop.f32.mrf.mxu0
  %v313 = vadd.f32 %v69, %v312
  %v314 = vpop.f32.mrf.mxu0
  %v315 = vadd.f32 %v69, %v314
  %v316 = vpop.f32.mrf.mxu0
  %v317 = vpop.f32.mrf.mxu0
  %318 = vdwg.mxu0
  %319 = vmatprep.subr.bf16.mxu0 %v233
  %320 = vmatpush1.bf16.msra.mxu0 %v232
  %321 = vmatprep.subr.bf16.mxu0 %v229
  %322 = vmatpush1.bf16.msra.mxu0 %v228
  %323 = vmatprep.subr.bf16.mxu0 %v225
  %324 = vmatpush1.bf16.msra.mxu0 %v224
  %325 = vmatprep.subr.bf16.mxu0 %v221
  %326 = vmatpush1.bf16.msra.mxu0 %v220
  %327 = vmatprep.subr.bf16.mxu0 %v217
  %328 = vmatpush1.bf16.msra.mxu0 %v216
  %329 = vmatprep.subr.bf16.mxu0 %v213
  %330 = vmatpush1.bf16.msra.mxu0 %v212
  %331 = vmatprep.subr.bf16.mxu0 %v209
  %332 = vmatpush1.bf16.msra.mxu0 %v208
  %333 = vmatprep.subr.bf16.mxu0 %v205
  %334 = vmatpush1.bf16.msra.mxu0 %v204
  %335 = vmatprep.subr.bf16.mxu0 0
  %336 = vmatpush2.bf16.msra.mxu0 0
  %337 = vmatprep.subr.bf16.mxu0 0
  %338 = vmatpush2.bf16.msra.mxu0 0
  %339 = vmatprep.subr.bf16.mxu0 0
  %340 = vmatpush2.bf16.msra.mxu0 0
  %341 = vmatprep.subr.bf16.mxu0 0
  %342 = vmatpush2.bf16.msra.mxu0 0
  %343 = vmatprep.subr.bf16.mxu0 0
  %344 = vmatpush2.bf16.msra.mxu0 0
  %345 = vmatprep.subr.bf16.mxu0 0
  %346 = vmatpush2.bf16.msra.mxu0 0
  %347 = vmatprep.subr.bf16.mxu0 0
  %348 = vmatpush2.bf16.msra.mxu0 0
  %349 = vmatprep.subr.bf16.mxu0 %v237
  %350 = vmatpush2.bf16.msra.mxu0 %v236
  %351 = vmatprep.mubr.bf16.mxu0 %v276
  %352 = vmatmul.mubr.bf16.gmra.mxu0 %v85
  %v353 = vpop.f32.mrf.mxu0
  %v354 = vadd.f32 %v69, %v353
  %v355 = vpop.f32.mrf.mxu0
  %v356 = vadd.f32 %v69, %v355
  %v357 = vpop.f32.mrf.mxu0
  %v358 = vpop.f32.mrf.mxu0
  %359 = vdwg.mxu0
  %v360 = vxor.u32 %v313, 2147483648
  %v361 = vxor.u32 %v315, 2147483648
  %v362 = vxor.u32 %v354, 2147483648
  %v363 = vxor.u32 %v356, 2147483648
  %v364 = vmul.f32 %v360, 1.442695
  %v365 = vpow.pop %v364
  %v366 = vmul.f32 %v361, 1.442695
  %v367 = vpow.pop %v366
  %v368 = vmul.f32 %v362, 1.442695
  %v369 = vpow.pop %v368
  %v370 = vmul.f32 %v363, 1.442695
  %v371 = vpow.pop %v370
  %v372 = vadd.f32 %v365, 1.0
  %v373 = vadd.f32 %v367, 1.0
  %v374 = vadd.f32 %v369, 1.0
  %v375 = vadd.f32 %v371, 1.0
  %v376 = vrcp.pop %v372
  %v377 = vmul.f32 1.0, %v376
  %v378 = vrcp.pop %v373
  %v379 = vmul.f32 1.0, %v378
  %v380 = vrcp.pop %v374
  %v381 = vmul.f32 1.0, %v380
  %v382 = vrcp.pop %v375
  %v383 = vmul.f32 1.0, %v382
  %v384 = vld [vmem:[%s3] sm:$0xf]
  %v389 = vcombine.low %v377, %v379
  %v390 = vcombine.low %v381, %v383
  %v392 = vunpack.c.l.s4 1966171168
  %v393 = vunpack.c.0.s8 %v392
  %v394 = vlaneseq
  %v395 = vshrl.u32 %v394, 7
  %v396 = vsub.s32 %v393, %v395
  %v397 = vrot.slane %v389, %v396
  %v399 = vunpack.c.l.s4 1966171168
  %v400 = vunpack.c.0.s8 %v399
  %v401 = vlaneseq
  %v402 = vshrl.u32 %v401, 7
  %v403 = vsub.s32 %v400, %v402
  %v404 = vrot.slane %v390, %v403
  %v405 = vcombine.low %v397, %v404
  %v407 = vunpack.c.l.s4 1966171168
  %v408 = vunpack.c.0.s8 %v407
  %v409 = vlaneseq
  %v410 = vshrl.u32 %v409, 7
  %v411 = vsub.s32 %v408, %v410
  %v412 = vrot.slane %v405, %v411
  %v414 = vlaneseq
  %vm415 = vcmp.ge.s32.totalorder %v414, 0
  %vm416 = vcmp.lt.s32.totalorder %v414, 512
  %vm417 = vmand %vm415, %vm416
  %418 = vst.msk [vmem:[%s4] sm:$0xf] %vm417, %v412
  %v420 = vlaneseq
  %v421 = vshrl.u32 %v420, 7
  %v422 = vsub.s32 0, %v421
  %v423 = vrot.slane %v384, %v422
  %v424 = vlaneseq
  %v425 = vshrl.u32 %v424, 7
  %v426 = vsub.s32 1, %v425
  %v427 = vrot.slane %v384, %v426
  %v428 = vlaneseq
  %v429 = vshrl.u32 %v428, 7
  %v430 = vsub.s32 2, %v429
  %v431 = vrot.slane %v384, %v430
  %v432 = vlaneseq
  %v433 = vshrl.u32 %v432, 7
  %v434 = vsub.s32 3, %v433
  %v435 = vrot.slane %v384, %v434
  %v440 = vmul.f32 %v377, %v423
  %v441 = vmul.f32 %v379, %v427
  %v442 = vmul.f32 %v381, %v431
  %v443 = vmul.f32 %v383, %v435
  %v448 = vcombine.low %v440, %v441
  %v449 = vcombine.low %v442, %v443
  %v451 = vunpack.c.l.s4 1966171168
  %v452 = vunpack.c.0.s8 %v451
  %v453 = vlaneseq
  %v454 = vshrl.u32 %v453, 7
  %v455 = vsub.s32 %v452, %v454
  %v456 = vrot.slane %v448, %v455
  %v458 = vunpack.c.l.s4 1966171168
  %v459 = vunpack.c.0.s8 %v458
  %v460 = vlaneseq
  %v461 = vshrl.u32 %v460, 7
  %v462 = vsub.s32 %v459, %v461
  %v463 = vrot.slane %v449, %v462
  %v464 = vcombine.low %v456, %v463
  %v466 = vunpack.c.l.s4 1966171168
  %v467 = vunpack.c.0.s8 %v466
  %v468 = vlaneseq
  %v469 = vshrl.u32 %v468, 7
  %v470 = vsub.s32 %v467, %v469
  %v471 = vrot.slane %v464, %v470
  %473 = vst.msk [vmem:[%s5] sm:$0xf] %vm417, %v471
  %v474 = vsub.f32 1.0, %v377
  %v475 = vsub.f32 1.0, %v379
  %v476 = vsub.f32 1.0, %v381
  %v477 = vsub.f32 1.0, %v383
  %v478 = vmul.f32 %v474, %v423
  %v479 = vmul.f32 %v475, %v427
  %v480 = vmul.f32 %v476, %v431
  %v481 = vmul.f32 %v477, %v435
  %v486 = vcombine.low %v478, %v479
  %v487 = vcombine.low %v480, %v481
  %v489 = vunpack.c.l.s4 1966171168
  %v490 = vunpack.c.0.s8 %v489
  %v491 = vlaneseq
  %v492 = vshrl.u32 %v491, 7
  %v493 = vsub.s32 %v490, %v492
  %v494 = vrot.slane %v486, %v493
  %v496 = vunpack.c.l.s4 1966171168
  %v497 = vunpack.c.0.s8 %v496
  %v498 = vlaneseq
  %v499 = vshrl.u32 %v498, 7
  %v500 = vsub.s32 %v497, %v499
  %v501 = vrot.slane %v487, %v500
  %v502 = vcombine.low %v494, %v501
  %v504 = vunpack.c.l.s4 1966171168
  %v505 = vunpack.c.0.s8 %v504
  %v506 = vlaneseq
  %v507 = vshrl.u32 %v506, 7
  %v508 = vsub.s32 %v505, %v507
  %v509 = vrot.slane %v502, %v508
  %511 = vst.msk [vmem:[%s6] sm:$0xf] %vm417, %v509
  // Predicated region
  $region18: #{mmslim_forward.40} parent=0 // pred_check
    _
  $region19: #{mmslim_forward.40} parent=0 // pred_check_branch
    %513 = sbr.rel (0) target = $region21
  $region20: #{mmslim_forward.40} parent=0 // pred_region
    _
  $region21: #{mmslim_forward.40} parent=0 // pred_fallthru
    _
  // Predicated region
  $region22: #{mmslim_forward.40} parent=0 // pred_check
    _
  $region23: #{mmslim_forward.40} parent=0 // pred_check_branch
    %515 = sbr.rel (0) target = $region25
  $region24: #{mmslim_forward.40} parent=0 // pred_region
    _
  $region25: #{mmslim_forward.40} parent=0 // pred_fallthru
    _
  // Predicated region
  $region26: #{mmslim_forward.40} parent=0 // pred_check
    _
  $region27: #{mmslim_forward.40} parent=0 // pred_check_branch
    %517 = sbr.rel (0) target = $region29
  $region28: #{mmslim_forward.40} parent=0 // pred_region
    _
  $region29: #{mmslim_forward.40} parent=0 // pred_fallthru
    _
  // Predicated region
  $region30: #{mmslim_forward.40} parent=0 // pred_check
    _
  $region31: #{mmslim_forward.40} parent=0 // pred_check_branch
    %519 = sbr.rel (0) target = $region33
  $region32: #{mmslim_forward.40} parent=0 // pred_region
    _
  $region33: #{mmslim_forward.40} parent=0 // pred_fallthru
    _
  // Predicated region
  $region34: #{mmslim_forward.40} parent=0 // pred_check
    _
  $region35: #{mmslim_forward.40} parent=0 // pred_check_branch
    %521 = sbr.rel (0) target = $region37
  $region36: #{mmslim_forward.40} parent=0 // pred_region
    _
  $region37: #{mmslim_forward.40} parent=0 // pred_fallthru
    _
  // Predicated region
  $region38: #{mmslim_forward.40} parent=0 // pred_check
    _
  $region39: #{mmslim_forward.40} parent=0 // pred_check_branch
    %523 = sbr.rel (0) target = $region41
  $region40: #{mmslim_forward.40} parent=0 // pred_region
    _
  $region41: #{mmslim_forward.40} parent=0 // pred_fallthru
    _

// kernel: mmslim_forward.41
$region0: #{mmslim_forward.41}
  #allocation0 [shape = 'u32[]', space=smem, size = 0x4, offset = 0x4, fixed_abs, tag = 'smem constant byte address 0x4 - core index']
  #allocation1 [shape = 'u32[144,128]{1,0:T(1,128)}', space=vmem, size = 0x12000, scoped, tag = 'internal scratch']
  %s0 = inlined_call_operand.vmem [shape: bf16[16,16], index: 0, kind: input, shape index: {}]
  %s1 = inlined_call_operand.vmem [shape: bf16[16,128], index: 1, kind: input, shape index: {}]
  %s2 = inlined_call_operand.vmem [shape: f32[16,1], index: 2, kind: input, shape index: {}]
  %s3 = inlined_call_operand.vmem [shape: f32[16,128], index: 3, kind: output, shape index: {}]
  %s4 = sld [smem:[#allocation0]]
  $region22: #{mmslim_forward.41} parent=0
    _
  %s6 = ssub.s32 1, %s4
  %s7 = scalar_select 0, %s6, %s4
  // Predicated region
  $region2: #{mmslim_forward.41} parent=0 // pred_check
    _
  $region3: #{mmslim_forward.41} parent=0 // pred_check_branch
    %9 = sbr.rel (0) target = $region5
  $region4: #{mmslim_forward.41} parent=0 // pred_region
    _
  $region5: #{mmslim_forward.41} parent=0 // pred_fallthru
    _
  // Predicated region
  $region6: #{mmslim_forward.41} parent=0 // pred_check
    _
  $region7: #{mmslim_forward.41} parent=0 // pred_check_branch
    %11 = sbr.rel (0) target = $region9
  $region8: #{mmslim_forward.41} parent=0 // pred_region
    _
  $region9: #{mmslim_forward.41} parent=0 // pred_fallthru
    _
  // Predicated region
  $region10: #{mmslim_forward.41} parent=0 // pred_check
    _
  $region11: #{mmslim_forward.41} parent=0 // pred_check_branch
    %13 = sbr.rel (0) target = $region13
  $region12: #{mmslim_forward.41} parent=0 // pred_region
    _
  $region13: #{mmslim_forward.41} parent=0 // pred_fallthru
    _
  %v15 = vld [vmem:[%s1] sm:$0xf]
  %v16 = vld [vmem:[%s1 + $0x4] sm:$0xf]
  %v17 = vld [vmem:[%s0] sm:$0xf]
  %v18 = vld [vmem:[%s0 + $0x4] sm:$0xf]
  %v19 = vld [vmem:[%s2] sm:$0xff]
  %v20 = vld [vmem:[%s2 + $0x8] sm:$0xff]
  %22 = vset.pattern.permute.xlu0 0
  %23 = vperm.xlu0 %22, %v19
  %v24 = vpop.permute.xlu0 %23
  %27 = vset.pattern.permute.xlu0 0
  %28 = vperm.xlu0 %27, %v20
  %v29 = vpop.permute.xlu0 %28
  %v33 = vunpack.c.l.b16 %v17
  %v34 = vunpack.c.l.b16 %v18
  %v35 = vpack.c.b16 %v34, %v33
  %v38 = vunpack.c.l.b16 %v15
  %v39 = vunpack.c.l.b16 %v16
  %v40 = vpack.c.b16 %v39, %v38
  %vm42 = vcmask 130048
  %v44 = vsel %vm42, %v35, 0
  %46 = vmatprep.subr.bf16.mxu0 0
  %47 = vmatpush1.bf16.msra.mxu0 0
  %48 = vmatprep.subr.bf16.mxu0 0
  %49 = vmatpush1.bf16.msra.mxu0 0
  %50 = vmatprep.subr.bf16.mxu0 0
  %51 = vmatpush1.bf16.msra.mxu0 0
  %52 = vmatprep.subr.bf16.mxu0 0
  %53 = vmatpush1.bf16.msra.mxu0 0
  %54 = vmatprep.subr.bf16.mxu0 0
  %55 = vmatpush1.bf16.msra.mxu0 0
  %56 = vmatprep.subr.bf16.mxu0 0
  %57 = vmatpush1.bf16.msra.mxu0 0
  %58 = vmatprep.subr.bf16.mxu0 0
  %59 = vmatpush1.bf16.msra.mxu0 0
  %60 = vmatprep.subr.bf16.mxu0 0
  %61 = vmatpush1.bf16.msra.mxu0 %v40
  %62 = vmatprep.subr.bf16.mxu0 0
  %63 = vmatpush2.bf16.msra.mxu0 0
  %64 = vmatprep.subr.bf16.mxu0 0
  %65 = vmatpush2.bf16.msra.mxu0 0
  %66 = vmatprep.subr.bf16.mxu0 0
  %67 = vmatpush2.bf16.msra.mxu0 0
  %68 = vmatprep.subr.bf16.mxu0 0
  %69 = vmatpush2.bf16.msra.mxu0 0
  %70 = vmatprep.subr.bf16.mxu0 0
  %71 = vmatpush2.bf16.msra.mxu0 0
  %72 = vmatprep.subr.bf16.mxu0 0
  %73 = vmatpush2.bf16.msra.mxu0 0
  %74 = vmatprep.subr.bf16.mxu0 0
  %75 = vmatpush2.bf16.msra.mxu0 0
  %76 = vmatprep.subr.bf16.mxu0 0
  %77 = vmatpush2.bf16.msra.mxu0 0
  %78 = vmatprep.mubr.bf16.mxu0 0
  %79 = vmatmul.mubr.bf16.gmra.mxu0 %v44
  %v80 = vpop.f32.mrf.mxu0
  %v81 = vadd.f32 %v24, %v80
  %v82 = vpop.f32.mrf.mxu0
  %v83 = vpop.f32.mrf.mxu0
  %v84 = vadd.f32 %v29, %v83
  %v85 = vpop.f32.mrf.mxu0
  %86 = vdwg.mxu0
  %v87 = vmax.f32 %v81, 0.0
  %v88 = vmax.f32 %v84, 0.0
  %89 = vst [vmem:[%s3] sm:$0xff] %v87
  %90 = vst [vmem:[%s3 + $0x8] sm:$0xff] %v88
  // Predicated region
  $region14: #{mmslim_forward.41} parent=0 // pred_check
    _
  $region15: #{mmslim_forward.41} parent=0 // pred_check_branch
    %92 = sbr.rel (0) target = $region17
  $region16: #{mmslim_forward.41} parent=0 // pred_region
    _
  $region17: #{mmslim_forward.41} parent=0 // pred_fallthru
    _
  // Predicated region
  $region18: #{mmslim_forward.41} parent=0 // pred_check
    _
  $region19: #{mmslim_forward.41} parent=0 // pred_check_branch
    %94 = sbr.rel (0) target = $region21
  $region20: #{mmslim_forward.41} parent=0 // pred_region
    _
  $region21: #{mmslim_forward.41} parent=0 // pred_fallthru
    _

// kernel: mmslim_forward.42
$region0: #{mmslim_forward.42}
  #allocation0 [shape = 'u32[]', space=smem, size = 0x4, offset = 0x4, fixed_abs, tag = 'smem constant byte address 0x4 - core index']
  #allocation1 [shape = 'u32[144,128]{1,0:T(1,128)}', space=vmem, size = 0x12000, scoped, tag = 'internal scratch']
  %s0 = inlined_call_operand.vmem [shape: bf16[32,256], index: 0, kind: input, shape index: {}]
  %s1 = inlined_call_operand.vmem [shape: bf16[256,128], index: 1, kind: input, shape index: {}]
  %s2 = inlined_call_operand.vmem [shape: f32[32,1], index: 2, kind: input, shape index: {}]
  %s3 = inlined_call_operand.vmem [shape: f32[32,128], index: 3, kind: output, shape index: {}]
  %s4 = sld [smem:[#allocation0]]
  $region22: #{mmslim_forward.42} parent=0
    _
  %s6 = ssub.s32 1, %s4
  %s7 = scalar_select 0, %s6, %s4
  // Predicated region
  $region2: #{mmslim_forward.42} parent=0 // pred_check
    _
  $region3: #{mmslim_forward.42} parent=0 // pred_check_branch
    %9 = sbr.rel (0) target = $region5
  $region4: #{mmslim_forward.42} parent=0 // pred_region
    _
  $region5: #{mmslim_forward.42} parent=0 // pred_fallthru
    _
  // Predicated region
  $region6: #{mmslim_forward.42} parent=0 // pred_check
    _
  $region7: #{mmslim_forward.42} parent=0 // pred_check_branch
    %11 = sbr.rel (0) target = $region9
  $region8: #{mmslim_forward.42} parent=0 // pred_region
    _
  $region9: #{mmslim_forward.42} parent=0 // pred_fallthru
    _
  // Predicated region
  $region10: #{mmslim_forward.42} parent=0 // pred_check
    _
  $region11: #{mmslim_forward.42} parent=0 // pred_check_branch
    %13 = sbr.rel (0) target = $region13
  $region12: #{mmslim_forward.42} parent=0 // pred_region
    _
  $region13: #{mmslim_forward.42} parent=0 // pred_fallthru
    _
  %v15 = vld [vmem:[%s1] sm:$0xf]
  %v16 = vld [vmem:[%s1 + $0x4] sm:$0xf]
  %v17 = vld [vmem:[%s1 + $0x8] sm:$0xf]
  %v18 = vld [vmem:[%s1 + $0xc] sm:$0xf]
  %v19 = vld [vmem:[%s1 + $0x10] sm:$0xf]
  %v20 = vld [vmem:[%s1 + $0x14] sm:$0xf]
  %v21 = vld [vmem:[%s1 + $0x18] sm:$0xf]
  %v22 = vld [vmem:[%s1 + $0x1c] sm:$0xf]
  %v23 = vld [vmem:[%s1 + $0x20] sm:$0xf]
  %v24 = vld [vmem:[%s1 + $0x24] sm:$0xf]
  %v25 = vld [vmem:[%s1 + $0x28] sm:$0xf]
  %v26 = vld [vmem:[%s1 + $0x2c] sm:$0xf]
  %v27 = vld [vmem:[%s1 + $0x30] sm:$0xf]
  %v28 = vld [vmem:[%s1 + $0x34] sm:$0xf]
  %v29 = vld [vmem:[%s1 + $0x38] sm:$0xf]
  %v30 = vld [vmem:[%s1 + $0x3c] sm:$0xf]
  %v31 = vld [vmem:[%s1 + $0x40] sm:$0xf]
  %v32 = vld [vmem:[%s1 + $0x44] sm:$0xf]
  %v33 = vld [vmem:[%s1 + $0x48] sm:$0xf]
  %v34 = vld [vmem:[%s1 + $0x4c] sm:$0xf]
  %v35 = vld [vmem:[%s1 + $0x50] sm:$0xf]
  %v36 = vld [vmem:[%s1 + $0x54] sm:$0xf]
  %v37 = vld [vmem:[%s1 + $0x58] sm:$0xf]
  %v38 = vld [vmem:[%s1 + $0x5c] sm:$0xf]
  %v39 = vld [vmem:[%s1 + $0x60] sm:$0xf]
  %v40 = vld [vmem:[%s1 + $0x64] sm:$0xf]
  %v41 = vld [vmem:[%s1 + $0x68] sm:$0xf]
  %v42 = vld [vmem:[%s1 + $0x6c] sm:$0xf]
  %v43 = vld [vmem:[%s1 + $0x70] sm:$0xf]
  %v44 = vld [vmem:[%s1 + $0x74] sm:$0xf]
  %v45 = vld [vmem:[%s1 + $0x78] sm:$0xf]
  %v46 = vld [vmem:[%s1 + $0x7c] sm:$0xf]
  %v47 = vld [vmem:[%s0] sm:$0xff]
  %v48 = vld [vmem:[%s0 + $0x8] sm:$0xff]
  %v49 = vld [vmem:[%s0 + $0x10] sm:$0xff]
  %v50 = vld [vmem:[%s0 + $0x18] sm:$0xff]
  %v51 = vld [vmem:[%s2] sm:$0xff]
  %v52 = vld [vmem:[%s2 + $0x8] sm:$0xff]
  %v53 = vld [vmem:[%s2 + $0x10] sm:$0xff]
  %v54 = vld [vmem:[%s2 + $0x18] sm:$0xff]
  %56 = vset.pattern.permute.xlu0 0
  %57 = vperm.xlu0 %56, %v51
  %v58 = vpop.permute.xlu0 %57
  %61 = vset.pattern.permute.xlu0 0
  %62 = vperm.xlu0 %61, %v52
  %v63 = vpop.permute.xlu0 %62
  %66 = vset.pattern.permute.xlu0 0
  %67 = vperm.xlu0 %66, %v53
  %v68 = vpop.permute.xlu0 %67
  %71 = vset.pattern.permute.xlu0 0
  %72 = vperm.xlu0 %71, %v54
  %v73 = vpop.permute.xlu0 %72
  %v79 = vunpack.c.l.b16 %v47
  %v80 = vunpack.c.h.b16 %v47
  %v81 = vunpack.c.l.b16 %v48
  %v82 = vunpack.c.h.b16 %v48
  %v83 = vunpack.c.l.b16 %v49
  %v84 = vunpack.c.h.b16 %v49
  %v85 = vunpack.c.l.b16 %v50
  %v86 = vunpack.c.h.b16 %v50
  %v87 = vpack.c.b16 %v81, %v79
  %v88 = vpack.c.b16 %v82, %v80
  %v89 = vpack.c.b16 %v85, %v83
  %v90 = vpack.c.b16 %v86, %v84
  %v127 = vunpack.c.l.b16 %v15
  %v128 = vunpack.c.l.b16 %v16
  %v129 = vunpack.c.l.b16 %v17
  %v130 = vunpack.c.l.b16 %v18
  %v131 = vunpack.c.l.b16 %v19
  %v132 = vunpack.c.l.b16 %v20
  %v133 = vunpack.c.l.b16 %v21
  %v134 = vunpack.c.l.b16 %v22
  %v135 = vunpack.c.l.b16 %v23
  %v136 = vunpack.c.l.b16 %v24
  %v137 = vunpack.c.l.b16 %v25
  %v138 = vunpack.c.l.b16 %v26
  %v139 = vunpack.c.l.b16 %v27
  %v140 = vunpack.c.l.b16 %v28
  %v141 = vunpack.c.l.b16 %v29
  %v142 = vunpack.c.l.b16 %v30
  %v143 = vunpack.c.l.b16 %v31
  %v144 = vunpack.c.l.b16 %v32
  %v145 = vunpack.c.l.b16 %v33
  %v146 = vunpack.c.l.b16 %v34
  %v147 = vunpack.c.l.b16 %v35
  %v148 = vunpack.c.l.b16 %v36
  %v149 = vunpack.c.l.b16 %v37
  %v150 = vunpack.c.l.b16 %v38
  %v151 = vunpack.c.l.b16 %v39
  %v152 = vunpack.c.l.b16 %v40
  %v153 = vunpack.c.l.b16 %v41
  %v154 = vunpack.c.l.b16 %v42
  %v155 = vunpack.c.l.b16 %v43
  %v156 = vunpack.c.l.b16 %v44
  %v157 = vunpack.c.l.b16 %v45
  %v158 = vunpack.c.l.b16 %v46
  %v159 = vpack.c.b16 %v128, %v127
  %v160 = vpack.c.b16 %v130, %v129
  %v161 = vpack.c.b16 %v132, %v131
  %v162 = vpack.c.b16 %v134, %v133
  %v163 = vpack.c.b16 %v136, %v135
  %v164 = vpack.c.b16 %v138, %v137
  %v165 = vpack.c.b16 %v140, %v139
  %v166 = vpack.c.b16 %v142, %v141
  %v167 = vpack.c.b16 %v144, %v143
  %v168 = vpack.c.b16 %v146, %v145
  %v169 = vpack.c.b16 %v148, %v147
  %v170 = vpack.c.b16 %v150, %v149
  %v171 = vpack.c.b16 %v152, %v151
  %v172 = vpack.c.b16 %v154, %v153
  %v173 = vpack.c.b16 %v156, %v155
  %v174 = vpack.c.b16 %v158, %v157
  %191 = vmatprep.subr.bf16.mxu0 0
  %192 = vmatpush1.bf16.msra.mxu0 %v166
  %193 = vmatprep.subr.bf16.mxu0 0
  %194 = vmatpush1.bf16.msra.mxu0 %v165
  %195 = vmatprep.subr.bf16.mxu0 0
  %196 = vmatpush1.bf16.msra.mxu0 %v164
  %197 = vmatprep.subr.bf16.mxu0 0
  %198 = vmatpush1.bf16.msra.mxu0 %v163
  %199 = vmatprep.subr.bf16.mxu0 0
  %200 = vmatpush1.bf16.msra.mxu0 %v162
  %201 = vmatprep.subr.bf16.mxu0 0
  %202 = vmatpush1.bf16.msra.mxu0 %v161
  %203 = vmatprep.subr.bf16.mxu0 0
  %204 = vmatpush1.bf16.msra.mxu0 %v160
  %205 = vmatprep.subr.bf16.mxu0 0
  %206 = vmatpush1.bf16.msra.mxu0 %v159
  %207 = vmatprep.subr.bf16.mxu0 0
  %208 = vmatpush2.bf16.msra.mxu0 %v174
  %209 = vmatprep.subr.bf16.mxu0 0
  %210 = vmatpush2.bf16.msra.mxu0 %v173
  %211 = vmatprep.subr.bf16.mxu0 0
  %212 = vmatpush2.bf16.msra.mxu0 %v172
  %213 = vmatprep.subr.bf16.mxu0 0
  %214 = vmatpush2.bf16.msra.mxu0 %v171
  %215 = vmatprep.subr.bf16.mxu0 0
  %216 = vmatpush2.bf16.msra.mxu0 %v170
  %217 = vmatprep.subr.bf16.mxu0 0
  %218 = vmatpush2.bf16.msra.mxu0 %v169
  %219 = vmatprep.subr.bf16.mxu0 0
  %220 = vmatpush2.bf16.msra.mxu0 %v168
  %221 = vmatprep.subr.bf16.mxu0 0
  %222 = vmatpush2.bf16.msra.mxu0 %v167
  %223 = vmatprep.mubr.bf16.mxu0 %v88
  %224 = vmatmul.mubr.bf16.gmra.mxu0 %v87
  %v225 = vpop.f32.mrf.mxu0
  %v226 = vadd.f32 %v58, %v225
  %v227 = vpop.f32.mrf.mxu0
  %v228 = vpop.f32.mrf.mxu0
  %v229 = vadd.f32 %v63, %v228
  %v230 = vpop.f32.mrf.mxu0
  %231 = vmatprep.mubr.bf16.mxu0 %v90
  %232 = vmatmul.mubr.bf16.gmra.mxu0 %v89
  %v233 = vpop.f32.mrf.mxu0
  %v234 = vadd.f32 %v68, %v233
  %v235 = vpop.f32.mrf.mxu0
  %v236 = vpop.f32.mrf.mxu0
  %v237 = vadd.f32 %v73, %v236
  %v238 = vpop.f32.mrf.mxu0
  %239 = vdwg.mxu0
  %v240 = vmax.f32 %v226, 0.0
  %v241 = vmax.f32 %v229, 0.0
  %v242 = vmax.f32 %v234, 0.0
  %v243 = vmax.f32 %v237, 0.0
  %244 = vst [vmem:[%s3] sm:$0xff] %v240
  %245 = vst [vmem:[%s3 + $0x8] sm:$0xff] %v241
  %246 = vst [vmem:[%s3 + $0x10] sm:$0xff] %v242
  %247 = vst [vmem:[%s3 + $0x18] sm:$0xff] %v243
  // Predicated region
  $region14: #{mmslim_forward.42} parent=0 // pred_check
    _
  $region15: #{mmslim_forward.42} parent=0 // pred_check_branch
    %249 = sbr.rel (0) target = $region17
  $region16: #{mmslim_forward.42} parent=0 // pred_region
    _
  $region17: #{mmslim_forward.42} parent=0 // pred_fallthru
    _
  // Predicated region
  $region18: #{mmslim_forward.42} parent=0 // pred_check
    _
  $region19: #{mmslim_forward.42} parent=0 // pred_check_branch
    %251 = sbr.rel (0) target = $region21
  $region20: #{mmslim_forward.42} parent=0 // pred_region
    _
  $region21: #{mmslim_forward.42} parent=0 // pred_fallthru
    _

// kernel: mmslim_forward.43
$region0: #{mmslim_forward.43}
  #allocation0 [shape = 'u32[]', space=smem, size = 0x4, offset = 0x4, fixed_abs, tag = 'smem constant byte address 0x4 - core index']
  #allocation1 [shape = 'u32[144,128]{1,0:T(1,128)}', space=vmem, size = 0x12000, scoped, tag = 'internal scratch']
  %s0 = inlined_call_operand.vmem [shape: bf16[32,288], index: 0, kind: input, shape index: {}]
  %s1 = inlined_call_operand.vmem [shape: bf16[288,128], index: 1, kind: input, shape index: {}]
  %s2 = inlined_call_operand.vmem [shape: f32[32,1], index: 2, kind: input, shape index: {}]
  %s3 = inlined_call_operand.vmem [shape: f32[32,128], index: 3, kind: output, shape index: {}]
  %s4 = sld [smem:[#allocation0]]
  $region22: #{mmslim_forward.43} parent=0
    _
  %s6 = ssub.s32 1, %s4
  %s7 = scalar_select 0, %s6, %s4
  // Predicated region
  $region2: #{mmslim_forward.43} parent=0 // pred_check
    _
  $region3: #{mmslim_forward.43} parent=0 // pred_check_branch
    %9 = sbr.rel (0) target = $region5
  $region4: #{mmslim_forward.43} parent=0 // pred_region
    _
  $region5: #{mmslim_forward.43} parent=0 // pred_fallthru
    _
  // Predicated region
  $region6: #{mmslim_forward.43} parent=0 // pred_check
    _
  $region7: #{mmslim_forward.43} parent=0 // pred_check_branch
    %11 = sbr.rel (0) target = $region9
  $region8: #{mmslim_forward.43} parent=0 // pred_region
    _
  $region9: #{mmslim_forward.43} parent=0 // pred_fallthru
    _
  // Predicated region
  $region10: #{mmslim_forward.43} parent=0 // pred_check
    _
  $region11: #{mmslim_forward.43} parent=0 // pred_check_branch
    %13 = sbr.rel (0) target = $region13
  $region12: #{mmslim_forward.43} parent=0 // pred_region
    _
  $region13: #{mmslim_forward.43} parent=0 // pred_fallthru
    _
  %v15 = vld [vmem:[%s1] sm:$0xf]
  %v16 = vld [vmem:[%s1 + $0x4] sm:$0xf]
  %v17 = vld [vmem:[%s1 + $0x8] sm:$0xf]
  %v18 = vld [vmem:[%s1 + $0xc] sm:$0xf]
  %v19 = vld [vmem:[%s1 + $0x10] sm:$0xf]
  %v20 = vld [vmem:[%s1 + $0x14] sm:$0xf]
  %v21 = vld [vmem:[%s1 + $0x18] sm:$0xf]
  %v22 = vld [vmem:[%s1 + $0x1c] sm:$0xf]
  %v23 = vld [vmem:[%s1 + $0x20] sm:$0xf]
  %v24 = vld [vmem:[%s1 + $0x24] sm:$0xf]
  %v25 = vld [vmem:[%s1 + $0x28] sm:$0xf]
  %v26 = vld [vmem:[%s1 + $0x2c] sm:$0xf]
  %v27 = vld [vmem:[%s1 + $0x30] sm:$0xf]
  %v28 = vld [vmem:[%s1 + $0x34] sm:$0xf]
  %v29 = vld [vmem:[%s1 + $0x38] sm:$0xf]
  %v30 = vld [vmem:[%s1 + $0x3c] sm:$0xf]
  %v31 = vld [vmem:[%s1 + $0x40] sm:$0xf]
  %v32 = vld [vmem:[%s1 + $0x44] sm:$0xf]
  %v33 = vld [vmem:[%s1 + $0x48] sm:$0xf]
  %v34 = vld [vmem:[%s1 + $0x4c] sm:$0xf]
  %v35 = vld [vmem:[%s1 + $0x50] sm:$0xf]
  %v36 = vld [vmem:[%s1 + $0x54] sm:$0xf]
  %v37 = vld [vmem:[%s1 + $0x58] sm:$0xf]
  %v38 = vld [vmem:[%s1 + $0x5c] sm:$0xf]
  %v39 = vld [vmem:[%s1 + $0x60] sm:$0xf]
  %v40 = vld [vmem:[%s1 + $0x64] sm:$0xf]
  %v41 = vld [vmem:[%s1 + $0x68] sm:$0xf]
  %v42 = vld [vmem:[%s1 + $0x6c] sm:$0xf]
  %v43 = vld [vmem:[%s1 + $0x70] sm:$0xf]
  %v44 = vld [vmem:[%s1 + $0x74] sm:$0xf]
  %v45 = vld [vmem:[%s1 + $0x78] sm:$0xf]
  %v46 = vld [vmem:[%s1 + $0x7c] sm:$0xf]
  %v47 = vld [vmem:[%s1 + $0x80] sm:$0xf]
  %v48 = vld [vmem:[%s1 + $0x84] sm:$0xf]
  %v49 = vld [vmem:[%s1 + $0x88] sm:$0xf]
  %v50 = vld [vmem:[%s1 + $0x8c] sm:$0xf]
  %v51 = vld [vmem:[%s0] sm:$0xff]
  %v52 = vld [vmem:[%s0 + $0x8] sm:$0xf]
  %v53 = vld [vmem:[%s0 + $0xc] sm:$0xff]
  %v54 = vld [vmem:[%s0 + $0x14] sm:$0xf]
  %v55 = vld [vmem:[%s0 + $0x18] sm:$0xff]
  %v56 = vld [vmem:[%s0 + $0x20] sm:$0xf]
  %v57 = vld [vmem:[%s0 + $0x24] sm:$0xff]
  %v58 = vld [vmem:[%s0 + $0x2c] sm:$0xf]
  %v59 = vld [vmem:[%s2] sm:$0xff]
  %v60 = vld [vmem:[%s2 + $0x8] sm:$0xff]
  %v61 = vld [vmem:[%s2 + $0x10] sm:$0xff]
  %v62 = vld [vmem:[%s2 + $0x18] sm:$0xff]
  %64 = vset.pattern.permute.xlu0 0
  %65 = vperm.xlu0 %64, %v59
  %v66 = vpop.permute.xlu0 %65
  %69 = vset.pattern.permute.xlu0 0
  %70 = vperm.xlu0 %69, %v60
  %v71 = vpop.permute.xlu0 %70
  %74 = vset.pattern.permute.xlu0 0
  %75 = vperm.xlu0 %74, %v61
  %v76 = vpop.permute.xlu0 %75
  %79 = vset.pattern.permute.xlu0 0
  %80 = vperm.xlu0 %79, %v62
  %v81 = vpop.permute.xlu0 %80
  %v91 = vunpack.c.l.b16 %v51
  %v92 = vunpack.c.h.b16 %v51
  %v93 = vunpack.c.l.b16 %v52
  %v94 = vunpack.c.l.b16 %v53
  %v95 = vunpack.c.h.b16 %v53
  %v96 = vunpack.c.l.b16 %v54
  %v97 = vunpack.c.l.b16 %v55
  %v98 = vunpack.c.h.b16 %v55
  %v99 = vunpack.c.l.b16 %v56
  %v100 = vunpack.c.l.b16 %v57
  %v101 = vunpack.c.h.b16 %v57
  %v102 = vunpack.c.l.b16 %v58
  %v103 = vpack.c.b16 %v94, %v91
  %v104 = vpack.c.b16 %v95, %v92
  %v105 = vpack.c.b16 %v96, %v93
  %v106 = vpack.c.b16 %v100, %v97
  %v107 = vpack.c.b16 %v101, %v98
  %v108 = vpack.c.b16 %v102, %v99
  %v149 = vunpack.c.l.b16 %v15
  %v150 = vunpack.c.l.b16 %v16
  %v151 = vunpack.c.l.b16 %v17
  %v152 = vunpack.c.l.b16 %v18
  %v153 = vunpack.c.l.b16 %v19
  %v154 = vunpack.c.l.b16 %v20
  %v155 = vunpack.c.l.b16 %v21
  %v156 = vunpack.c.l.b16 %v22
  %v157 = vunpack.c.l.b16 %v23
  %v158 = vunpack.c.l.b16 %v24
  %v159 = vunpack.c.l.b16 %v25
  %v160 = vunpack.c.l.b16 %v26
  %v161 = vunpack.c.l.b16 %v27
  %v162 = vunpack.c.l.b16 %v28
  %v163 = vunpack.c.l.b16 %v29
  %v164 = vunpack.c.l.b16 %v30
  %v165 = vunpack.c.l.b16 %v31
  %v166 = vunpack.c.l.b16 %v32
  %v167 = vunpack.c.l.b16 %v33
  %v168 = vunpack.c.l.b16 %v34
  %v169 = vunpack.c.l.b16 %v35
  %v170 = vunpack.c.l.b16 %v36
  %v171 = vunpack.c.l.b16 %v37
  %v172 = vunpack.c.l.b16 %v38
  %v173 = vunpack.c.l.b16 %v39
  %v174 = vunpack.c.l.b16 %v40
  %v175 = vunpack.c.l.b16 %v41
  %v176 = vunpack.c.l.b16 %v42
  %v177 = vunpack.c.l.b16 %v43
  %v178 = vunpack.c.l.b16 %v44
  %v179 = vunpack.c.l.b16 %v45
  %v180 = vunpack.c.l.b16 %v46
  %v181 = vunpack.c.l.b16 %v47
  %v182 = vunpack.c.l.b16 %v48
  %v183 = vunpack.c.l.b16 %v49
  %v184 = vunpack.c.l.b16 %v50
  %v185 = vpack.c.b16 %v150, %v149
  %v186 = vpack.c.b16 %v152, %v151
  %v187 = vpack.c.b16 %v154, %v153
  %v188 = vpack.c.b16 %v156, %v155
  %v189 = vpack.c.b16 %v158, %v157
  %v190 = vpack.c.b16 %v160, %v159
  %v191 = vpack.c.b16 %v162, %v161
  %v192 = vpack.c.b16 %v164, %v163
  %v193 = vpack.c.b16 %v166, %v165
  %v194 = vpack.c.b16 %v168, %v167
  %v195 = vpack.c.b16 %v170, %v169
  %v196 = vpack.c.b16 %v172, %v171
  %v197 = vpack.c.b16 %v174, %v173
  %v198 = vpack.c.b16 %v176, %v175
  %v199 = vpack.c.b16 %v178, %v177
  %v200 = vpack.c.b16 %v180, %v179
  %v201 = vpack.c.b16 %v182, %v181
  %v202 = vpack.c.b16 %v184, %v183
  %vm221 = vcmask 261120
  %v223 = vsel %vm221, %v105, 0
  %v226 = vsel %vm221, %v108, 0
  %228 = vmatprep.subr.bf16.mxu0 0
  %229 = vmatpush1.bf16.msra.mxu0 %v192
  %230 = vmatprep.subr.bf16.mxu0 0
  %231 = vmatpush1.bf16.msra.mxu0 %v191
  %232 = vmatprep.subr.bf16.mxu0 0
  %233 = vmatpush1.bf16.msra.mxu0 %v190
  %234 = vmatprep.subr.bf16.mxu0 0
  %235 = vmatpush1.bf16.msra.mxu0 %v189
  %236 = vmatprep.subr.bf16.mxu0 0
  %237 = vmatpush1.bf16.msra.mxu0 %v188
  %238 = vmatprep.subr.bf16.mxu0 0
  %239 = vmatpush1.bf16.msra.mxu0 %v187
  %240 = vmatprep.subr.bf16.mxu0 0
  %241 = vmatpush1.bf16.msra.mxu0 %v186
  %242 = vmatprep.subr.bf16.mxu0 0
  %243 = vmatpush1.bf16.msra.mxu0 %v185
  %244 = vmatprep.subr.bf16.mxu0 0
  %245 = vmatpush2.bf16.msra.mxu0 %v200
  %246 = vmatprep.subr.bf16.mxu0 0
  %247 = vmatpush2.bf16.msra.mxu0 %v199
  %248 = vmatprep.subr.bf16.mxu0 0
  %249 = vmatpush2.bf16.msra.mxu0 %v198
  %250 = vmatprep.subr.bf16.mxu0 0
  %251 = vmatpush2.bf16.msra.mxu0 %v197
  %252 = vmatprep.subr.bf16.mxu0 0
  %253 = vmatpush2.bf16.msra.mxu0 %v196
  %254 = vmatprep.subr.bf16.mxu0 0
  %255 = vmatpush2.bf16.msra.mxu0 %v195
  %256 = vmatprep.subr.bf16.mxu0 0
  %257 = vmatpush2.bf16.msra.mxu0 %v194
  %258 = vmatprep.subr.bf16.mxu0 0
  %259 = vmatpush2.bf16.msra.mxu0 %v193
  %260 = vmatprep.mubr.bf16.mxu0 %v104
  %261 = vmatmul.mubr.bf16.gmra.mxu0 %v103
  %v262 = vpop.f32.mrf.mxu0
  %v263 = vadd.f32 %v66, %v262
  %v264 = vpop.f32.mrf.mxu0
  %v265 = vpop.f32.mrf.mxu0
  %v266 = vadd.f32 %v71, %v265
  %v267 = vpop.f32.mrf.mxu0
  %268 = vmatprep.mubr.bf16.mxu0 %v107
  %269 = vmatmul.mubr.bf16.gmra.mxu0 %v106
  %v270 = vpop.f32.mrf.mxu0
  %v271 = vadd.f32 %v76, %v270
  %v272 = vpop.f32.mrf.mxu0
  %v273 = vpop.f32.mrf.mxu0
  %v274 = vadd.f32 %v81, %v273
  %v275 = vpop.f32.mrf.mxu0
  %276 = vdwg.mxu0
  %277 = vmatprep.subr.bf16.mxu0 0
  %278 = vmatpush1.bf16.msra.mxu0 0
  %279 = vmatprep.subr.bf16.mxu0 0
  %280 = vmatpush1.bf16.msra.mxu0 0
  %281 = vmatprep.subr.bf16.mxu0 0
  %282 = vmatpush1.bf16.msra.mxu0 0
  %283 = vmatprep.subr.bf16.mxu0 0
  %284 = vmatpush1.bf16.msra.mxu0 0
  %285 = vmatprep.subr.bf16.mxu0 0
  %286 = vmatpush1.bf16.msra.mxu0 0
  %287 = vmatprep.subr.bf16.mxu0 0
  %288 = vmatpush1.bf16.msra.mxu0 0
  %289 = vmatprep.subr.bf16.mxu0 0
  %290 = vmatpush1.bf16.msra.mxu0 %v202
  %291 = vmatprep.subr.bf16.mxu0 0
  %292 = vmatpush1.bf16.msra.mxu0 %v201
  %293 = vmatprep.subr.bf16.mxu0 0
  %294 = vmatpush2.bf16.msra.mxu0 0
  %295 = vmatprep.subr.bf16.mxu0 0
  %296 = vmatpush2.bf16.msra.mxu0 0
  %297 = vmatprep.subr.bf16.mxu0 0
  %298 = vmatpush2.bf16.msra.mxu0 0
  %299 = vmatprep.subr.bf16.mxu0 0
  %300 = vmatpush2.bf16.msra.mxu0 0
  %301 = vmatprep.subr.bf16.mxu0 0
  %302 = vmatpush2.bf16.msra.mxu0 0
  %303 = vmatprep.subr.bf16.mxu0 0
  %304 = vmatpush2.bf16.msra.mxu0 0
  %305 = vmatprep.subr.bf16.mxu0 0
  %306 = vmatpush2.bf16.msra.mxu0 0
  %307 = vmatprep.subr.bf16.mxu0 0
  %308 = vmatpush2.bf16.msra.mxu0 0
  %309 = vmatprep.mubr.bf16.mxu0 0
  %310 = vmatmul.mubr.bf16.gmra.mxu0 %v223
  %v311 = vpop.f32.mrf.mxu0
  %v312 = vadd.f32 %v263, %v311
  %v313 = vpop.f32.mrf.mxu0
  %v314 = vpop.f32.mrf.mxu0
  %v315 = vadd.f32 %v266, %v314
  %v316 = vpop.f32.mrf.mxu0
  %317 = vmatprep.mubr.bf16.mxu0 0
  %318 = vmatmul.mubr.bf16.gmra.mxu0 %v226
  %v319 = vpop.f32.mrf.mxu0
  %v320 = vadd.f32 %v271, %v319
  %v321 = vpop.f32.mrf.mxu0
  %v322 = vpop.f32.mrf.mxu0
  %v323 = vadd.f32 %v274, %v322
  %v324 = vpop.f32.mrf.mxu0
  %325 = vdwg.mxu0
  %326 = vst [vmem:[%s3] sm:$0xff] %v312
  %327 = vst [vmem:[%s3 + $0x8] sm:$0xff] %v315
  %328 = vst [vmem:[%s3 + $0x10] sm:$0xff] %v320
  %329 = vst [vmem:[%s3 + $0x18] sm:$0xff] %v323
  // Predicated region
  $region14: #{mmslim_forward.43} parent=0 // pred_check
    _
  $region15: #{mmslim_forward.43} parent=0 // pred_check_branch
    %331 = sbr.rel (0) target = $region17
  $region16: #{mmslim_forward.43} parent=0 // pred_region
    _
  $region17: #{mmslim_forward.43} parent=0 // pred_fallthru
    _
  // Predicated region
  $region18: #{mmslim_forward.43} parent=0 // pred_check
    _
  $region19: #{mmslim_forward.43} parent=0 // pred_check_branch
    %333 = sbr.rel (0) target = $region21
  $region20: #{mmslim_forward.43} parent=0 // pred_region
    _
  $region21: #{mmslim_forward.43} parent=0 // pred_fallthru
    _

// kernel: mmslim_forward.44
$region0: #{mmslim_forward.44}
  #allocation0 [shape = 'u32[]', space=smem, size = 0x4, offset = 0x4, fixed_abs, tag = 'smem constant byte address 0x4 - core index']
  #allocation1 [shape = 'u32[144,128]{1,0:T(1,128)}', space=vmem, size = 0x12000, scoped, tag = 'internal scratch']
  %s0 = inlined_call_operand.vmem [shape: bf16[16,288], index: 0, kind: input, shape index: {}]
  %s1 = inlined_call_operand.vmem [shape: bf16[288,128], index: 1, kind: input, shape index: {}]
  %s2 = inlined_call_operand.vmem [shape: f32[16,1], index: 2, kind: input, shape index: {}]
  %s3 = inlined_call_operand.vmem [shape: f32[16,128], index: 3, kind: output, shape index: {}]
  %s4 = sld [smem:[#allocation0]]
  $region22: #{mmslim_forward.44} parent=0
    _
  %s6 = ssub.s32 1, %s4
  %s7 = scalar_select 0, %s6, %s4
  // Predicated region
  $region2: #{mmslim_forward.44} parent=0 // pred_check
    _
  $region3: #{mmslim_forward.44} parent=0 // pred_check_branch
    %9 = sbr.rel (0) target = $region5
  $region4: #{mmslim_forward.44} parent=0 // pred_region
    _
  $region5: #{mmslim_forward.44} parent=0 // pred_fallthru
    _
  // Predicated region
  $region6: #{mmslim_forward.44} parent=0 // pred_check
    _
  $region7: #{mmslim_forward.44} parent=0 // pred_check_branch
    %11 = sbr.rel (0) target = $region9
  $region8: #{mmslim_forward.44} parent=0 // pred_region
    _
  $region9: #{mmslim_forward.44} parent=0 // pred_fallthru
    _
  // Predicated region
  $region10: #{mmslim_forward.44} parent=0 // pred_check
    _
  $region11: #{mmslim_forward.44} parent=0 // pred_check_branch
    %13 = sbr.rel (0) target = $region13
  $region12: #{mmslim_forward.44} parent=0 // pred_region
    _
  $region13: #{mmslim_forward.44} parent=0 // pred_fallthru
    _
  %v15 = vld [vmem:[%s1] sm:$0xf]
  %v16 = vld [vmem:[%s1 + $0x4] sm:$0xf]
  %v17 = vld [vmem:[%s1 + $0x8] sm:$0xf]
  %v18 = vld [vmem:[%s1 + $0xc] sm:$0xf]
  %v19 = vld [vmem:[%s1 + $0x10] sm:$0xf]
  %v20 = vld [vmem:[%s1 + $0x14] sm:$0xf]
  %v21 = vld [vmem:[%s1 + $0x18] sm:$0xf]
  %v22 = vld [vmem:[%s1 + $0x1c] sm:$0xf]
  %v23 = vld [vmem:[%s1 + $0x20] sm:$0xf]
  %v24 = vld [vmem:[%s1 + $0x24] sm:$0xf]
  %v25 = vld [vmem:[%s1 + $0x28] sm:$0xf]
  %v26 = vld [vmem:[%s1 + $0x2c] sm:$0xf]
  %v27 = vld [vmem:[%s1 + $0x30] sm:$0xf]
  %v28 = vld [vmem:[%s1 + $0x34] sm:$0xf]
  %v29 = vld [vmem:[%s1 + $0x38] sm:$0xf]
  %v30 = vld [vmem:[%s1 + $0x3c] sm:$0xf]
  %v31 = vld [vmem:[%s1 + $0x40] sm:$0xf]
  %v32 = vld [vmem:[%s1 + $0x44] sm:$0xf]
  %v33 = vld [vmem:[%s1 + $0x48] sm:$0xf]
  %v34 = vld [vmem:[%s1 + $0x4c] sm:$0xf]
  %v35 = vld [vmem:[%s1 + $0x50] sm:$0xf]
  %v36 = vld [vmem:[%s1 + $0x54] sm:$0xf]
  %v37 = vld [vmem:[%s1 + $0x58] sm:$0xf]
  %v38 = vld [vmem:[%s1 + $0x5c] sm:$0xf]
  %v39 = vld [vmem:[%s1 + $0x60] sm:$0xf]
  %v40 = vld [vmem:[%s1 + $0x64] sm:$0xf]
  %v41 = vld [vmem:[%s1 + $0x68] sm:$0xf]
  %v42 = vld [vmem:[%s1 + $0x6c] sm:$0xf]
  %v43 = vld [vmem:[%s1 + $0x70] sm:$0xf]
  %v44 = vld [vmem:[%s1 + $0x74] sm:$0xf]
  %v45 = vld [vmem:[%s1 + $0x78] sm:$0xf]
  %v46 = vld [vmem:[%s1 + $0x7c] sm:$0xf]
  %v47 = vld [vmem:[%s1 + $0x80] sm:$0xf]
  %v48 = vld [vmem:[%s1 + $0x84] sm:$0xf]
  %v49 = vld [vmem:[%s1 + $0x88] sm:$0xf]
  %v50 = vld [vmem:[%s1 + $0x8c] sm:$0xf]
  %v51 = vmax.bf16 %v15, 0
  %v52 = vmax.bf16 %v16, 0
  %v53 = vmax.bf16 %v17, 0
  %v54 = vmax.bf16 %v18, 0
  %v55 = vmax.bf16 %v19, 0
  %v56 = vmax.bf16 %v20, 0
  %v57 = vmax.bf16 %v21, 0
  %v58 = vmax.bf16 %v22, 0
  %v59 = vmax.bf16 %v23, 0
  %v60 = vmax.bf16 %v24, 0
  %v61 = vmax.bf16 %v25, 0
  %v62 = vmax.bf16 %v26, 0
  %v63 = vmax.bf16 %v27, 0
  %v64 = vmax.bf16 %v28, 0
  %v65 = vmax.bf16 %v29, 0
  %v66 = vmax.bf16 %v30, 0
  %v67 = vmax.bf16 %v31, 0
  %v68 = vmax.bf16 %v32, 0
  %v69 = vmax.bf16 %v33, 0
  %v70 = vmax.bf16 %v34, 0
  %v71 = vmax.bf16 %v35, 0
  %v72 = vmax.bf16 %v36, 0
  %v73 = vmax.bf16 %v37, 0
  %v74 = vmax.bf16 %v38, 0
  %v75 = vmax.bf16 %v39, 0
  %v76 = vmax.bf16 %v40, 0
  %v77 = vmax.bf16 %v41, 0
  %v78 = vmax.bf16 %v42, 0
  %v79 = vmax.bf16 %v43, 0
  %v80 = vmax.bf16 %v44, 0
  %v81 = vmax.bf16 %v45, 0
  %v82 = vmax.bf16 %v46, 0
  %v83 = vmax.bf16 %v47, 0
  %v84 = vmax.bf16 %v48, 0
  %v85 = vmax.bf16 %v49, 0
  %v86 = vmax.bf16 %v50, 0
  %v87 = vld [vmem:[%s0] sm:$0xff]
  %v88 = vld [vmem:[%s0 + $0x8] sm:$0xf]
  %v89 = vld [vmem:[%s0 + $0xc] sm:$0xff]
  %v90 = vld [vmem:[%s0 + $0x14] sm:$0xf]
  %v91 = vld [vmem:[%s2] sm:$0xff]
  %v92 = vld [vmem:[%s2 + $0x8] sm:$0xff]
  %94 = vset.pattern.permute.xlu0 0
  %95 = vperm.xlu0 %94, %v91
  %v96 = vpop.permute.xlu0 %95
  %99 = vset.pattern.permute.xlu0 0
  %100 = vperm.xlu0 %99, %v92
  %v101 = vpop.permute.xlu0 %100
  %v107 = vunpack.c.l.b16 %v87
  %v108 = vunpack.c.h.b16 %v87
  %v109 = vunpack.c.l.b16 %v88
  %v110 = vunpack.c.l.b16 %v89
  %v111 = vunpack.c.h.b16 %v89
  %v112 = vunpack.c.l.b16 %v90
  %v113 = vpack.c.b16 %v110, %v107
  %v114 = vpack.c.b16 %v111, %v108
  %v115 = vpack.c.b16 %v112, %v109
  %v154 = vunpack.c.l.b16 %v51
  %v155 = vunpack.c.l.b16 %v52
  %v156 = vunpack.c.l.b16 %v53
  %v157 = vunpack.c.l.b16 %v54
  %v158 = vunpack.c.l.b16 %v55
  %v159 = vunpack.c.l.b16 %v56
  %v160 = vunpack.c.l.b16 %v57
  %v161 = vunpack.c.l.b16 %v58
  %v162 = vunpack.c.l.b16 %v59
  %v163 = vunpack.c.l.b16 %v60
  %v164 = vunpack.c.l.b16 %v61
  %v165 = vunpack.c.l.b16 %v62
  %v166 = vunpack.c.l.b16 %v63
  %v167 = vunpack.c.l.b16 %v64
  %v168 = vunpack.c.l.b16 %v65
  %v169 = vunpack.c.l.b16 %v66
  %v170 = vunpack.c.l.b16 %v67
  %v171 = vunpack.c.l.b16 %v68
  %v172 = vunpack.c.l.b16 %v69
  %v173 = vunpack.c.l.b16 %v70
  %v174 = vunpack.c.l.b16 %v71
  %v175 = vunpack.c.l.b16 %v72
  %v176 = vunpack.c.l.b16 %v73
  %v177 = vunpack.c.l.b16 %v74
  %v178 = vunpack.c.l.b16 %v75
  %v179 = vunpack.c.l.b16 %v76
  %v180 = vunpack.c.l.b16 %v77
  %v181 = vunpack.c.l.b16 %v78
  %v182 = vunpack.c.l.b16 %v79
  %v183 = vunpack.c.l.b16 %v80
  %v184 = vunpack.c.l.b16 %v81
  %v185 = vunpack.c.l.b16 %v82
  %v186 = vunpack.c.l.b16 %v83
  %v187 = vunpack.c.l.b16 %v84
  %v188 = vunpack.c.l.b16 %v85
  %v189 = vunpack.c.l.b16 %v86
  %v190 = vpack.c.b16 %v155, %v154
  %v191 = vpack.c.b16 %v157, %v156
  %v192 = vpack.c.b16 %v159, %v158
  %v193 = vpack.c.b16 %v161, %v160
  %v194 = vpack.c.b16 %v163, %v162
  %v195 = vpack.c.b16 %v165, %v164
  %v196 = vpack.c.b16 %v167, %v166
  %v197 = vpack.c.b16 %v169, %v168
  %v198 = vpack.c.b16 %v171, %v170
  %v199 = vpack.c.b16 %v173, %v172
  %v200 = vpack.c.b16 %v175, %v174
  %v201 = vpack.c.b16 %v177, %v176
  %v202 = vpack.c.b16 %v179, %v178
  %v203 = vpack.c.b16 %v181, %v180
  %v204 = vpack.c.b16 %v183, %v182
  %v205 = vpack.c.b16 %v185, %v184
  %v206 = vpack.c.b16 %v187, %v186
  %v207 = vpack.c.b16 %v189, %v188
  %vm226 = vcmask 261120
  %v228 = vsel %vm226, %v115, 0
  %230 = vmatprep.subr.bf16.mxu0 0
  %231 = vmatpush1.bf16.msra.mxu0 %v197
  %232 = vmatprep.subr.bf16.mxu0 0
  %233 = vmatpush1.bf16.msra.mxu0 %v196
  %234 = vmatprep.subr.bf16.mxu0 0
  %235 = vmatpush1.bf16.msra.mxu0 %v195
  %236 = vmatprep.subr.bf16.mxu0 0
  %237 = vmatpush1.bf16.msra.mxu0 %v194
  %238 = vmatprep.subr.bf16.mxu0 0
  %239 = vmatpush1.bf16.msra.mxu0 %v193
  %240 = vmatprep.subr.bf16.mxu0 0
  %241 = vmatpush1.bf16.msra.mxu0 %v192
  %242 = vmatprep.subr.bf16.mxu0 0
  %243 = vmatpush1.bf16.msra.mxu0 %v191
  %244 = vmatprep.subr.bf16.mxu0 0
  %245 = vmatpush1.bf16.msra.mxu0 %v190
  %246 = vmatprep.subr.bf16.mxu0 0
  %247 = vmatpush2.bf16.msra.mxu0 %v205
  %248 = vmatprep.subr.bf16.mxu0 0
  %249 = vmatpush2.bf16.msra.mxu0 %v204
  %250 = vmatprep.subr.bf16.mxu0 0
  %251 = vmatpush2.bf16.msra.mxu0 %v203
  %252 = vmatprep.subr.bf16.mxu0 0
  %253 = vmatpush2.bf16.msra.mxu0 %v202
  %254 = vmatprep.subr.bf16.mxu0 0
  %255 = vmatpush2.bf16.msra.mxu0 %v201
  %256 = vmatprep.subr.bf16.mxu0 0
  %257 = vmatpush2.bf16.msra.mxu0 %v200
  %258 = vmatprep.subr.bf16.mxu0 0
  %259 = vmatpush2.bf16.msra.mxu0 %v199
  %260 = vmatprep.subr.bf16.mxu0 0
  %261 = vmatpush2.bf16.msra.mxu0 %v198
  %262 = vmatprep.mubr.bf16.mxu0 %v114
  %263 = vmatmul.mubr.bf16.gmra.mxu0 %v113
  %v264 = vpop.f32.mrf.mxu0
  %v265 = vadd.f32 %v96, %v264
  %v266 = vpop.f32.mrf.mxu0
  %v267 = vpop.f32.mrf.mxu0
  %v268 = vadd.f32 %v101, %v267
  %v269 = vpop.f32.mrf.mxu0
  %270 = vdwg.mxu0
  %271 = vmatprep.subr.bf16.mxu0 0
  %272 = vmatpush1.bf16.msra.mxu0 0
  %273 = vmatprep.subr.bf16.mxu0 0
  %274 = vmatpush1.bf16.msra.mxu0 0
  %275 = vmatprep.subr.bf16.mxu0 0
  %276 = vmatpush1.bf16.msra.mxu0 0
  %277 = vmatprep.subr.bf16.mxu0 0
  %278 = vmatpush1.bf16.msra.mxu0 0
  %279 = vmatprep.subr.bf16.mxu0 0
  %280 = vmatpush1.bf16.msra.mxu0 0
  %281 = vmatprep.subr.bf16.mxu0 0
  %282 = vmatpush1.bf16.msra.mxu0 0
  %283 = vmatprep.subr.bf16.mxu0 0
  %284 = vmatpush1.bf16.msra.mxu0 %v207
  %285 = vmatprep.subr.bf16.mxu0 0
  %286 = vmatpush1.bf16.msra.mxu0 %v206
  %287 = vmatprep.subr.bf16.mxu0 0
  %288 = vmatpush2.bf16.msra.mxu0 0
  %289 = vmatprep.subr.bf16.mxu0 0
  %290 = vmatpush2.bf16.msra.mxu0 0
  %291 = vmatprep.subr.bf16.mxu0 0
  %292 = vmatpush2.bf16.msra.mxu0 0
  %293 = vmatprep.subr.bf16.mxu0 0
  %294 = vmatpush2.bf16.msra.mxu0 0
  %295 = vmatprep.subr.bf16.mxu0 0
  %296 = vmatpush2.bf16.msra.mxu0 0
  %297 = vmatprep.subr.bf16.mxu0 0
  %298 = vmatpush2.bf16.msra.mxu0 0
  %299 = vmatprep.subr.bf16.mxu0 0
  %300 = vmatpush2.bf16.msra.mxu0 0
  %301 = vmatprep.subr.bf16.mxu0 0
  %302 = vmatpush2.bf16.msra.mxu0 0
  %303 = vmatprep.mubr.bf16.mxu0 0
  %304 = vmatmul.mubr.bf16.gmra.mxu0 %v228
  %v305 = vpop.f32.mrf.mxu0
  %v306 = vadd.f32 %v265, %v305
  %v307 = vpop.f32.mrf.mxu0
  %v308 = vpop.f32.mrf.mxu0
  %v309 = vadd.f32 %v268, %v308
  %v310 = vpop.f32.mrf.mxu0
  %311 = vdwg.mxu0
  %v312 = vmax.f32 %v306, 0.0
  %v313 = vmax.f32 %v309, 0.0
  %314 = vst [vmem:[%s3] sm:$0xff] %v312
  %315 = vst [vmem:[%s3 + $0x8] sm:$0xff] %v313
  // Predicated region
  $region14: #{mmslim_forward.44} parent=0 // pred_check
    _
  $region15: #{mmslim_forward.44} parent=0 // pred_check_branch
    %317 = sbr.rel (0) target = $region17
  $region16: #{mmslim_forward.44} parent=0 // pred_region
    _
  $region17: #{mmslim_forward.44} parent=0 // pred_fallthru
    _
  // Predicated region
  $region18: #{mmslim_forward.44} parent=0 // pred_check
    _
  $region19: #{mmslim_forward.44} parent=0 // pred_check_branch
    %319 = sbr.rel (0) target = $region21
  $region20: #{mmslim_forward.44} parent=0 // pred_region
    _
  $region21: #{mmslim_forward.44} parent=0 // pred_fallthru
    _

// kernel: mmslim_forward.61
$region0: #{mmslim_forward.61}
  #allocation0 [shape = 'u32[]', space=smem, size = 0x4, offset = 0x4, fixed_abs, tag = 'smem constant byte address 0x4 - core index']
  #allocation1 [shape = 'u32[144,128]{1,0:T(1,128)}', space=vmem, size = 0x12000, scoped, tag = 'internal scratch']
  %s0 = inlined_call_operand.vmem [shape: bf16[32,16], index: 0, kind: input, shape index: {}]
  %s1 = inlined_call_operand.vmem [shape: bf16[16,128], index: 1, kind: input, shape index: {}]
  %s2 = inlined_call_operand.vmem [shape: f32[32,1], index: 2, kind: input, shape index: {}]
  %s3 = inlined_call_operand.vmem [shape: f32[32,128], index: 3, kind: input, shape index: {}]
  %s4 = inlined_call_operand.vmem [shape: f32[32,128], index: 4, kind: output, shape index: {}]
  %s5 = sld [smem:[#allocation0]]
  $region26: #{mmslim_forward.61} parent=0
    _
  %s7 = ssub.s32 1, %s5
  %s8 = scalar_select 0, %s7, %s5
  // Predicated region
  $region2: #{mmslim_forward.61} parent=0 // pred_check
    _
  $region3: #{mmslim_forward.61} parent=0 // pred_check_branch
    %10 = sbr.rel (0) target = $region5
  $region4: #{mmslim_forward.61} parent=0 // pred_region
    _
  $region5: #{mmslim_forward.61} parent=0 // pred_fallthru
    _
  // Predicated region
  $region6: #{mmslim_forward.61} parent=0 // pred_check
    _
  $region7: #{mmslim_forward.61} parent=0 // pred_check_branch
    %12 = sbr.rel (0) target = $region9
  $region8: #{mmslim_forward.61} parent=0 // pred_region
    _
  $region9: #{mmslim_forward.61} parent=0 // pred_fallthru
    _
  // Predicated region
  $region10: #{mmslim_forward.61} parent=0 // pred_check
    _
  $region11: #{mmslim_forward.61} parent=0 // pred_check_branch
    %14 = sbr.rel (0) target = $region13
  $region12: #{mmslim_forward.61} parent=0 // pred_region
    _
  $region13: #{mmslim_forward.61} parent=0 // pred_fallthru
    _
  // Predicated region
  $region14: #{mmslim_forward.61} parent=0 // pred_check
    _
  $region15: #{mmslim_forward.61} parent=0 // pred_check_branch
    %16 = sbr.rel (0) target = $region17
  $region16: #{mmslim_forward.61} parent=0 // pred_region
    _
  $region17: #{mmslim_forward.61} parent=0 // pred_fallthru
    _
  %v18 = vld [vmem:[%s1] sm:$0xf]
  %v19 = vld [vmem:[%s1 + $0x4] sm:$0xf]
  %v20 = vld [vmem:[%s0] sm:$0xf]
  %v21 = vld [vmem:[%s0 + $0x4] sm:$0xf]
  %v22 = vld [vmem:[%s0 + $0x8] sm:$0xf]
  %v23 = vld [vmem:[%s0 + $0xc] sm:$0xf]
  %v24 = vld [vmem:[%s2] sm:$0xff]
  %v25 = vld [vmem:[%s2 + $0x8] sm:$0xff]
  %v26 = vld [vmem:[%s2 + $0x10] sm:$0xff]
  %v27 = vld [vmem:[%s2 + $0x18] sm:$0xff]
  %29 = vset.pattern.permute.xlu0 0
  %30 = vperm.xlu0 %29, %v24
  %v31 = vpop.permute.xlu0 %30
  %34 = vset.pattern.permute.xlu0 0
  %35 = vperm.xlu0 %34, %v25
  %v36 = vpop.permute.xlu0 %35
  %39 = vset.pattern.permute.xlu0 0
  %40 = vperm.xlu0 %39, %v26
  %v41 = vpop.permute.xlu0 %40
  %44 = vset.pattern.permute.xlu0 0
  %45 = vperm.xlu0 %44, %v27
  %v46 = vpop.permute.xlu0 %45
  %v52 = vunpack.c.l.b16 %v20
  %v53 = vunpack.c.l.b16 %v21
  %v54 = vunpack.c.l.b16 %v22
  %v55 = vunpack.c.l.b16 %v23
  %v56 = vpack.c.b16 %v53, %v52
  %v57 = vpack.c.b16 %v55, %v54
  %v60 = vunpack.c.l.b16 %v18
  %v61 = vunpack.c.l.b16 %v19
  %v62 = vpack.c.b16 %v61, %v60
  %vm64 = vcmask 130048
  %v66 = vsel %vm64, %v56, 0
  %v69 = vsel %vm64, %v57, 0
  %71 = vmatprep.subr.bf16.mxu0 0
  %72 = vmatpush1.bf16.msra.mxu0 0
  %73 = vmatprep.subr.bf16.mxu0 0
  %74 = vmatpush1.bf16.msra.mxu0 0
  %75 = vmatprep.subr.bf16.mxu0 0
  %76 = vmatpush1.bf16.msra.mxu0 0
  %77 = vmatprep.subr.bf16.mxu0 0
  %78 = vmatpush1.bf16.msra.mxu0 0
  %79 = vmatprep.subr.bf16.mxu0 0
  %80 = vmatpush1.bf16.msra.mxu0 0
  %81 = vmatprep.subr.bf16.mxu0 0
  %82 = vmatpush1.bf16.msra.mxu0 0
  %83 = vmatprep.subr.bf16.mxu0 0
  %84 = vmatpush1.bf16.msra.mxu0 0
  %85 = vmatprep.subr.bf16.mxu0 0
  %86 = vmatpush1.bf16.msra.mxu0 %v62
  %87 = vmatprep.subr.bf16.mxu0 0
  %88 = vmatpush2.bf16.msra.mxu0 0
  %89 = vmatprep.subr.bf16.mxu0 0
  %90 = vmatpush2.bf16.msra.mxu0 0
  %91 = vmatprep.subr.bf16.mxu0 0
  %92 = vmatpush2.bf16.msra.mxu0 0
  %93 = vmatprep.subr.bf16.mxu0 0
  %94 = vmatpush2.bf16.msra.mxu0 0
  %95 = vmatprep.subr.bf16.mxu0 0
  %96 = vmatpush2.bf16.msra.mxu0 0
  %97 = vmatprep.subr.bf16.mxu0 0
  %98 = vmatpush2.bf16.msra.mxu0 0
  %99 = vmatprep.subr.bf16.mxu0 0
  %100 = vmatpush2.bf16.msra.mxu0 0
  %101 = vmatprep.subr.bf16.mxu0 0
  %102 = vmatpush2.bf16.msra.mxu0 0
  %103 = vmatprep.mubr.bf16.mxu0 0
  %104 = vmatmul.mubr.bf16.gmra.mxu0 %v66
  %v105 = vpop.f32.mrf.mxu0
  %v106 = vadd.f32 %v31, %v105
  %v107 = vpop.f32.mrf.mxu0
  %v108 = vpop.f32.mrf.mxu0
  %v109 = vadd.f32 %v36, %v108
  %v110 = vpop.f32.mrf.mxu0
  %111 = vmatprep.mubr.bf16.mxu0 0
  %112 = vmatmul.mubr.bf16.gmra.mxu0 %v69
  %v113 = vpop.f32.mrf.mxu0
  %v114 = vadd.f32 %v41, %v113
  %v115 = vpop.f32.mrf.mxu0
  %v116 = vpop.f32.mrf.mxu0
  %v117 = vadd.f32 %v46, %v116
  %v118 = vpop.f32.mrf.mxu0
  %119 = vdwg.mxu0
  %v120 = vld [vmem:[%s3] sm:$0xff]
  %v121 = vld [vmem:[%s3 + $0x8] sm:$0xff]
  %v122 = vld [vmem:[%s3 + $0x10] sm:$0xff]
  %v123 = vld [vmem:[%s3 + $0x18] sm:$0xff]
  %v124 = vadd.f32 %v106, %v120
  %v125 = vadd.f32 %v109, %v121
  %v126 = vadd.f32 %v114, %v122
  %v127 = vadd.f32 %v117, %v123
  %128 = vst [vmem:[%s4] sm:$0xff] %v124
  %129 = vst [vmem:[%s4 + $0x8] sm:$0xff] %v125
  %130 = vst [vmem:[%s4 + $0x10] sm:$0xff] %v126
  %131 = vst [vmem:[%s4 + $0x18] sm:$0xff] %v127
  // Predicated region
  $region18: #{mmslim_forward.61} parent=0 // pred_check
    _
  $region19: #{mmslim_forward.61} parent=0 // pred_check_branch
    %133 = sbr.rel (0) target = $region21
  $region20: #{mmslim_forward.61} parent=0 // pred_region
    _
  $region21: #{mmslim_forward.61} parent=0 // pred_fallthru
    _
  // Predicated region
  $region22: #{mmslim_forward.61} parent=0 // pred_check
    _
  $region23: #{mmslim_forward.61} parent=0 // pred_check_branch
    %135 = sbr.rel (0) target = $region25
  $region24: #{mmslim_forward.61} parent=0 // pred_region
    _
  $region25: #{mmslim_forward.61} parent=0 // pred_fallthru
    _

// kernel: mmslim_forward.63
$region0: #{mmslim_forward.63}
  #allocation0 [shape = 'u32[]', space=smem, size = 0x4, offset = 0x4, fixed_abs, tag = 'smem constant byte address 0x4 - core index']
  #allocation1 [shape = 'u32[144,128]{1,0:T(1,128)}', space=vmem, size = 0x12000, scoped, tag = 'internal scratch']
  %s0 = inlined_call_operand.vmem [shape: bf16[32,16], index: 0, kind: input, shape index: {}]
  %s1 = inlined_call_operand.vmem [shape: bf16[16,128], index: 1, kind: input, shape index: {}]
  %s2 = inlined_call_operand.vmem [shape: f32[32,1], index: 2, kind: input, shape index: {}]
  %s3 = inlined_call_operand.vmem [shape: f32[32,128], index: 3, kind: input, shape index: {}]
  %s4 = inlined_call_operand.vmem [shape: f32[32,128], index: 4, kind: output, shape index: {}]
  %s5 = sld [smem:[#allocation0]]
  $region26: #{mmslim_forward.63} parent=0
    _
  %s7 = ssub.s32 1, %s5
  %s8 = scalar_select 0, %s7, %s5
  // Predicated region
  $region2: #{mmslim_forward.63} parent=0 // pred_check
    _
  $region3: #{mmslim_forward.63} parent=0 // pred_check_branch
    %10 = sbr.rel (0) target = $region5
  $region4: #{mmslim_forward.63} parent=0 // pred_region
    _
  $region5: #{mmslim_forward.63} parent=0 // pred_fallthru
    _
  // Predicated region
  $region6: #{mmslim_forward.63} parent=0 // pred_check
    _
  $region7: #{mmslim_forward.63} parent=0 // pred_check_branch
    %12 = sbr.rel (0) target = $region9
  $region8: #{mmslim_forward.63} parent=0 // pred_region
    _
  $region9: #{mmslim_forward.63} parent=0 // pred_fallthru
    _
  // Predicated region
  $region10: #{mmslim_forward.63} parent=0 // pred_check
    _
  $region11: #{mmslim_forward.63} parent=0 // pred_check_branch
    %14 = sbr.rel (0) target = $region13
  $region12: #{mmslim_forward.63} parent=0 // pred_region
    _
  $region13: #{mmslim_forward.63} parent=0 // pred_fallthru
    _
  // Predicated region
  $region14: #{mmslim_forward.63} parent=0 // pred_check
    _
  $region15: #{mmslim_forward.63} parent=0 // pred_check_branch
    %16 = sbr.rel (0) target = $region17
  $region16: #{mmslim_forward.63} parent=0 // pred_region
    _
  $region17: #{mmslim_forward.63} parent=0 // pred_fallthru
    _
  %v18 = vld [vmem:[%s1] sm:$0xf]
  %v19 = vld [vmem:[%s1 + $0x4] sm:$0xf]
  %v20 = vld [vmem:[%s0] sm:$0xf]
  %v21 = vld [vmem:[%s0 + $0x4] sm:$0xf]
  %v22 = vld [vmem:[%s0 + $0x8] sm:$0xf]
  %v23 = vld [vmem:[%s0 + $0xc] sm:$0xf]
  %v24 = vld [vmem:[%s2] sm:$0xff]
  %v25 = vld [vmem:[%s2 + $0x8] sm:$0xff]
  %v26 = vld [vmem:[%s2 + $0x10] sm:$0xff]
  %v27 = vld [vmem:[%s2 + $0x18] sm:$0xff]
  %29 = vset.pattern.permute.xlu0 0
  %30 = vperm.xlu0 %29, %v24
  %v31 = vpop.permute.xlu0 %30
  %34 = vset.pattern.permute.xlu0 0
  %35 = vperm.xlu0 %34, %v25
  %v36 = vpop.permute.xlu0 %35
  %39 = vset.pattern.permute.xlu0 0
  %40 = vperm.xlu0 %39, %v26
  %v41 = vpop.permute.xlu0 %40
  %44 = vset.pattern.permute.xlu0 0
  %45 = vperm.xlu0 %44, %v27
  %v46 = vpop.permute.xlu0 %45
  %v52 = vunpack.c.l.b16 %v20
  %v53 = vunpack.c.l.b16 %v21
  %v54 = vunpack.c.l.b16 %v22
  %v55 = vunpack.c.l.b16 %v23
  %v56 = vpack.c.b16 %v53, %v52
  %v57 = vpack.c.b16 %v55, %v54
  %v60 = vunpack.c.l.b16 %v18
  %v61 = vunpack.c.l.b16 %v19
  %v62 = vpack.c.b16 %v61, %v60
  %vm64 = vcmask 130048
  %v66 = vsel %vm64, %v56, 0
  %v69 = vsel %vm64, %v57, 0
  %71 = vmatprep.subr.bf16.mxu0 0
  %72 = vmatpush1.bf16.msra.mxu0 0
  %73 = vmatprep.subr.bf16.mxu0 0
  %74 = vmatpush1.bf16.msra.mxu0 0
  %75 = vmatprep.subr.bf16.mxu0 0
  %76 = vmatpush1.bf16.msra.mxu0 0
  %77 = vmatprep.subr.bf16.mxu0 0
  %78 = vmatpush1.bf16.msra.mxu0 0
  %79 = vmatprep.subr.bf16.mxu0 0
  %80 = vmatpush1.bf16.msra.mxu0 0
  %81 = vmatprep.subr.bf16.mxu0 0
  %82 = vmatpush1.bf16.msra.mxu0 0
  %83 = vmatprep.subr.bf16.mxu0 0
  %84 = vmatpush1.bf16.msra.mxu0 0
  %85 = vmatprep.subr.bf16.mxu0 0
  %86 = vmatpush1.bf16.msra.mxu0 %v62
  %87 = vmatprep.subr.bf16.mxu0 0
  %88 = vmatpush2.bf16.msra.mxu0 0
  %89 = vmatprep.subr.bf16.mxu0 0
  %90 = vmatpush2.bf16.msra.mxu0 0
  %91 = vmatprep.subr.bf16.mxu0 0
  %92 = vmatpush2.bf16.msra.mxu0 0
  %93 = vmatprep.subr.bf16.mxu0 0
  %94 = vmatpush2.bf16.msra.mxu0 0
  %95 = vmatprep.subr.bf16.mxu0 0
  %96 = vmatpush2.bf16.msra.mxu0 0
  %97 = vmatprep.subr.bf16.mxu0 0
  %98 = vmatpush2.bf16.msra.mxu0 0
  %99 = vmatprep.subr.bf16.mxu0 0
  %100 = vmatpush2.bf16.msra.mxu0 0
  %101 = vmatprep.subr.bf16.mxu0 0
  %102 = vmatpush2.bf16.msra.mxu0 0
  %103 = vmatprep.mubr.bf16.mxu0 0
  %104 = vmatmul.mubr.bf16.gmra.mxu0 %v66
  %v105 = vpop.f32.mrf.mxu0
  %v106 = vadd.f32 %v31, %v105
  %v107 = vpop.f32.mrf.mxu0
  %v108 = vpop.f32.mrf.mxu0
  %v109 = vadd.f32 %v36, %v108
  %v110 = vpop.f32.mrf.mxu0
  %111 = vmatprep.mubr.bf16.mxu0 0
  %112 = vmatmul.mubr.bf16.gmra.mxu0 %v69
  %v113 = vpop.f32.mrf.mxu0
  %v114 = vadd.f32 %v41, %v113
  %v115 = vpop.f32.mrf.mxu0
  %v116 = vpop.f32.mrf.mxu0
  %v117 = vadd.f32 %v46, %v116
  %v118 = vpop.f32.mrf.mxu0
  %119 = vdwg.mxu0
  %v120 = vld [vmem:[%s3] sm:$0xff]
  %v121 = vld [vmem:[%s3 + $0x8] sm:$0xff]
  %v122 = vld [vmem:[%s3 + $0x10] sm:$0xff]
  %v123 = vld [vmem:[%s3 + $0x18] sm:$0xff]
  %v124 = vadd.f32 %v106, %v120
  %v125 = vadd.f32 %v109, %v121
  %v126 = vadd.f32 %v114, %v122
  %v127 = vadd.f32 %v117, %v123
  %v128 = vmax.f32 %v124, 0.0
  %v129 = vmax.f32 %v125, 0.0
  %v130 = vmax.f32 %v126, 0.0
  %v131 = vmax.f32 %v127, 0.0
  %132 = vst [vmem:[%s4] sm:$0xff] %v128
  %133 = vst [vmem:[%s4 + $0x8] sm:$0xff] %v129
  %134 = vst [vmem:[%s4 + $0x10] sm:$0xff] %v130
  %135 = vst [vmem:[%s4 + $0x18] sm:$0xff] %v131
  // Predicated region
  $region18: #{mmslim_forward.63} parent=0 // pred_check
    _
  $region19: #{mmslim_forward.63} parent=0 // pred_check_branch
    %137 = sbr.rel (0) target = $region21
  $region20: #{mmslim_forward.63} parent=0 // pred_region
    _
  $region21: #{mmslim_forward.63} parent=0 // pred_fallthru
    _
  // Predicated region
  $region22: #{mmslim_forward.63} parent=0 // pred_check
    _
  $region23: #{mmslim_forward.63} parent=0 // pred_check_branch
    %139 = sbr.rel (0) target = $region25
  $region24: #{mmslim_forward.63} parent=0 // pred_region
    _
  $region25: #{mmslim_forward.63} parent=0 // pred_fallthru
    _

// kernel: mmslim_forward.64
$region0: #{mmslim_forward.64}
  #allocation0 [shape = 'u32[]', space=smem, size = 0x4, offset = 0x4, fixed_abs, tag = 'smem constant byte address 0x4 - core index']
  #allocation1 [shape = 'u32[144,128]{1,0:T(1,128)}', space=vmem, size = 0x12000, scoped, tag = 'internal scratch']
  %s0 = inlined_call_operand.vmem [shape: bf16[8,32], index: 0, kind: input, shape index: {}]
  %s1 = inlined_call_operand.vmem [shape: bf16[32,128], index: 1, kind: input, shape index: {}]
  %s2 = inlined_call_operand.vmem [shape: f32[8,1], index: 2, kind: input, shape index: {}]
  %s3 = inlined_call_operand.vmem [shape: f32[8,128], index: 3, kind: output, shape index: {}]
  %s4 = sld [smem:[#allocation0]]
  $region22: #{mmslim_forward.64} parent=0
    _
  %s6 = ssub.s32 1, %s4
  %s7 = scalar_select 0, %s6, %s4
  // Predicated region
  $region2: #{mmslim_forward.64} parent=0 // pred_check
    _
  $region3: #{mmslim_forward.64} parent=0 // pred_check_branch
    %9 = sbr.rel (0) target = $region5
  $region4: #{mmslim_forward.64} parent=0 // pred_region
    _
  $region5: #{mmslim_forward.64} parent=0 // pred_fallthru
    _
  // Predicated region
  $region6: #{mmslim_forward.64} parent=0 // pred_check
    _
  $region7: #{mmslim_forward.64} parent=0 // pred_check_branch
    %11 = sbr.rel (0) target = $region9
  $region8: #{mmslim_forward.64} parent=0 // pred_region
    _
  $region9: #{mmslim_forward.64} parent=0 // pred_fallthru
    _
  // Predicated region
  $region10: #{mmslim_forward.64} parent=0 // pred_check
    _
  $region11: #{mmslim_forward.64} parent=0 // pred_check_branch
    %13 = sbr.rel (0) target = $region13
  $region12: #{mmslim_forward.64} parent=0 // pred_region
    _
  $region13: #{mmslim_forward.64} parent=0 // pred_fallthru
    _
  %v15 = vld [vmem:[%s1] sm:$0xf]
  %v16 = vld [vmem:[%s1 + $0x4] sm:$0xf]
  %v17 = vld [vmem:[%s1 + $0x8] sm:$0xf]
  %v18 = vld [vmem:[%s1 + $0xc] sm:$0xf]
  %v19 = vld [vmem:[%s0] sm:$0xf]
  %v20 = vld [vmem:[%s2] sm:$0xff]
  %22 = vset.pattern.permute.xlu0 0
  %23 = vperm.xlu0 %22, %v20
  %v24 = vpop.permute.xlu0 %23
  %v30 = vunpack.c.l.b16 %v15
  %v31 = vunpack.c.l.b16 %v16
  %v32 = vunpack.c.l.b16 %v17
  %v33 = vunpack.c.l.b16 %v18
  %v34 = vpack.c.b16 %v31, %v30
  %v35 = vpack.c.b16 %v33, %v32
  %vm38 = vcmask 261120
  %v40 = vsel %vm38, %v19, 0
  %42 = vmatprep.subr.bf16.mxu0 0
  %43 = vmatpush1.bf16.msra.mxu0 0
  %44 = vmatprep.subr.bf16.mxu0 0
  %45 = vmatpush1.bf16.msra.mxu0 0
  %46 = vmatprep.subr.bf16.mxu0 0
  %47 = vmatpush1.bf16.msra.mxu0 0
  %48 = vmatprep.subr.bf16.mxu0 0
  %49 = vmatpush1.bf16.msra.mxu0 0
  %50 = vmatprep.subr.bf16.mxu0 0
  %51 = vmatpush1.bf16.msra.mxu0 0
  %52 = vmatprep.subr.bf16.mxu0 0
  %53 = vmatpush1.bf16.msra.mxu0 0
  %54 = vmatprep.subr.bf16.mxu0 0
  %55 = vmatpush1.bf16.msra.mxu0 %v35
  %56 = vmatprep.subr.bf16.mxu0 0
  %57 = vmatpush1.bf16.msra.mxu0 %v34
  %58 = vmatprep.subr.bf16.mxu0 0
  %59 = vmatpush2.bf16.msra.mxu0 0
  %60 = vmatprep.subr.bf16.mxu0 0
  %61 = vmatpush2.bf16.msra.mxu0 0
  %62 = vmatprep.subr.bf16.mxu0 0
  %63 = vmatpush2.bf16.msra.mxu0 0
  %64 = vmatprep.subr.bf16.mxu0 0
  %65 = vmatpush2.bf16.msra.mxu0 0
  %66 = vmatprep.subr.bf16.mxu0 0
  %67 = vmatpush2.bf16.msra.mxu0 0
  %68 = vmatprep.subr.bf16.mxu0 0
  %69 = vmatpush2.bf16.msra.mxu0 0
  %70 = vmatprep.subr.bf16.mxu0 0
  %71 = vmatpush2.bf16.msra.mxu0 0
  %72 = vmatprep.subr.bf16.mxu0 0
  %73 = vmatpush2.bf16.msra.mxu0 0
  %74 = vmatprep.mubr.bf16.mxu0 0
  %75 = vmatmul.mubr.bf16.gmra.mxu0 %v40
  %v76 = vpop.f32.mrf.mxu0
  %v77 = vadd.f32 %v24, %v76
  %v78 = vpop.f32.mrf.mxu0
  %v79 = vpop.f32.mrf.mxu0
  %v80 = vpop.f32.mrf.mxu0
  %81 = vdwg.mxu0
  %82 = vst [vmem:[%s3] sm:$0xff] %v77
  // Predicated region
  $region14: #{mmslim_forward.64} parent=0 // pred_check
    _
  $region15: #{mmslim_forward.64} parent=0 // pred_check_branch
    %84 = sbr.rel (0) target = $region17
  $region16: #{mmslim_forward.64} parent=0 // pred_region
    _
  $region17: #{mmslim_forward.64} parent=0 // pred_fallthru
    _
  // Predicated region
  $region18: #{mmslim_forward.64} parent=0 // pred_check
    _
  $region19: #{mmslim_forward.64} parent=0 // pred_check_branch
    %86 = sbr.rel (0) target = $region21
  $region20: #{mmslim_forward.64} parent=0 // pred_region
    _
  $region21: #{mmslim_forward.64} parent=0 // pred_fallthru
    _

// kernel: mmslim_forward.65
$region0: #{mmslim_forward.65}
  #allocation0 [shape = 'u32[]', space=smem, size = 0x4, offset = 0x4, fixed_abs, tag = 'smem constant byte address 0x4 - core index']
  #allocation1 [shape = 'u32[144,128]{1,0:T(1,128)}', space=vmem, size = 0x12000, scoped, tag = 'internal scratch']
  #allocation2 [shape = 'f32[1,1]{1,0:T(1,128)}', space=vmem, size = 0x200, scoped, tag = 'scratch operand']
  #allocation3 [shape = 'f32[64,1]{1,0:T(8,128)}', space=vmem, size = 0x8000, scoped, tag = 'scratch operand']
  %s0 = inlined_call_operand.vmem [shape: f32[8,128], index: 0, kind: input, shape index: {}]
  %s1 = inlined_call_operand.vmem [shape: f32[64,8], index: 1, kind: input, shape index: {}]
  %s2 = inlined_call_operand.vmem [shape: f32[8,64], index: 2, kind: input, shape index: {}]
  %s3 = inlined_call_operand.vmem [shape: f32[8,128], index: 3, kind: output, shape index: {0}]
  %s4 = inlined_call_operand.hbm [shape: s32[1,128], index: 4, kind: output, shape index: {1}]
  %s5 = inlined_call_operand.hbm [shape: f32[1,1], index: 5, kind: output, shape index: {2}]
  %s6 = inlined_call_operand.hbm [shape: f32[1,1], index: 6, kind: output, shape index: {3}]
  %7 = xla_tuple %s3, %s4, %s5, %s6
  %s8 = sld [smem:[#allocation0]]
  $region50: #{mmslim_forward.65} parent=0
    _
  %s10 = ssub.s32 1, %s8
  %s11 = scalar_select 0, %s10, %s8
  $region1: #{mmslim_forward.65} parent=0
    #allocation4 [shape = 'u8[512]{0}', space=vmem, size = 0x400, scoped, tag = 'output window, operand 1, single buffered']
    #allocation5 [shape = 's32[1]{0}', space=sflag, size = 0x4, scoped, tag = 'scoped memory for mmslim_forward.65']
    #allocation6 [shape = 'u8[512]{0}', space=vmem, size = 0x400, scoped, tag = 'output window, operand 2, single buffered']
    #allocation7 [shape = 's32[1]{0}', space=sflag, size = 0x4, scoped, tag = 'scoped memory for mmslim_forward.65']
    #allocation8 [shape = 'u8[512]{0}', space=vmem, size = 0x400, scoped, tag = 'output window, operand 3, single buffered']
    %12 = vsyncpa [#allocation5], 0
    %13 = vsyncpa [#allocation7], 0
    // Predicated region
    $region2: #{mmslim_forward.65} parent=1 // pred_check
      _
    $region3: #{mmslim_forward.65} parent=1 // pred_check_branch
      %15 = sbr.rel (0) target = $region5
    $region4: #{mmslim_forward.65} parent=1 // pred_region
      _
    $region5: #{mmslim_forward.65} parent=1 // pred_fallthru
      _
    // Predicated region
    $region6: #{mmslim_forward.65} parent=1 // pred_check
      _
    $region7: #{mmslim_forward.65} parent=1 // pred_check_branch
      %17 = sbr.rel (0) target = $region9
    $region8: #{mmslim_forward.65} parent=1 // pred_region
      _
    $region9: #{mmslim_forward.65} parent=1 // pred_fallthru
      _
    // Predicated region
    $region10: #{mmslim_forward.65} parent=1 // pred_check
      _
    $region11: #{mmslim_forward.65} parent=1 // pred_check_branch
      %19 = sbr.rel (0) target = $region13
    $region12: #{mmslim_forward.65} parent=1 // pred_region
      _
    $region13: #{mmslim_forward.65} parent=1 // pred_fallthru
      _
    %p20 = scmp.eq.s32.totalorder 0, 0
    // Predicated region
    $region14: #{mmslim_forward.65} parent=1 // pred_check
      %p21 = pneg %p20
    $region15: #{mmslim_forward.65} parent=1 // pred_check_branch
      %23 = sbr.rel (%p21) target = $region17
    $region16: #{mmslim_forward.65} parent=1 // pred_region
      %vm24 = vcmask 0
      %25 = vst.msk [vmem:[#allocation2] sm:$0x1] %vm24, 0.0
      %vm26 = vcmask 7168
      %27 = vst.msk [vmem:[#allocation3] sm:$0xff] %vm26, 0.0
      %28 = vst.msk [vmem:[#allocation3 + $0x8] sm:$0xff] %vm26, 0.0
      %29 = vst.msk [vmem:[#allocation3 + $0x10] sm:$0xff] %vm26, 0.0
      %30 = vst.msk [vmem:[#allocation3 + $0x18] sm:$0xff] %vm26, 0.0
      %31 = vst.msk [vmem:[#allocation3 + $0x20] sm:$0xff] %vm26, 0.0
      %32 = vst.msk [vmem:[#allocation3 + $0x28] sm:$0xff] %vm26, 0.0
      %33 = vst.msk [vmem:[#allocation3 + $0x30] sm:$0xff] %vm26, 0.0
      %34 = vst.msk [vmem:[#allocation3 + $0x38] sm:$0xff] %vm26, 0.0
    $region17: #{mmslim_forward.65} parent=1 // pred_fallthru
      _
    %v35 = vld [vmem:[%s0] sm:$0xff]
    %v36 = vld [vmem:[%s1] sm:$0xff]
    %v37 = vld [vmem:[%s1 + $0x8] sm:$0xff]
    %v38 = vld [vmem:[%s1 + $0x10] sm:$0xff]
    %v39 = vld [vmem:[%s1 + $0x18] sm:$0xff]
    %v40 = vld [vmem:[%s1 + $0x20] sm:$0xff]
    %v41 = vld [vmem:[%s1 + $0x28] sm:$0xff]
    %v42 = vld [vmem:[%s1 + $0x30] sm:$0xff]
    %v43 = vld [vmem:[%s1 + $0x38] sm:$0xff]
    %v44 = vld [vmem:[%s2] sm:$0xff]
    %v45 = vmul.f32 %v35, %v35
    %v46 = vrot.slane %v45, 4
    %v47 = vadd.f32 %v45, %v46
    %v48 = vrot.slane %v47, 2
    %v49 = vadd.f32 %v47, %v48
    %v50 = vrot.slane %v49, 1
    %v51 = vadd.f32 %v49, %v50
    %v52 = vmul.f32 %v36, %v36
    %v53 = vmul.f32 %v37, %v37
    %v54 = vmul.f32 %v38, %v38
    %v55 = vmul.f32 %v39, %v39
    %v56 = vmul.f32 %v40, %v40
    %v57 = vmul.f32 %v41, %v41
    %v58 = vmul.f32 %v42, %v42
    %v59 = vmul.f32 %v43, %v43
    %vm60 = vcmask 64512
    %v61 = vsel %vm60, %v52, 0.0
    %62 = vadd.xlane.f32.xlu0 %v61
    %v63 = vpop.xlane.xlu0 %62
    %v64 = vsel %vm60, %v53, 0.0
    %65 = vadd.xlane.f32.xlu0 %v64
    %v66 = vpop.xlane.xlu0 %65
    %v67 = vsel %vm60, %v54, 0.0
    %68 = vadd.xlane.f32.xlu0 %v67
    %v69 = vpop.xlane.xlu0 %68
    %v70 = vsel %vm60, %v55, 0.0
    %71 = vadd.xlane.f32.xlu0 %v70
    %v72 = vpop.xlane.xlu0 %71
    %v73 = vsel %vm60, %v56, 0.0
    %74 = vadd.xlane.f32.xlu0 %v73
    %v75 = vpop.xlane.xlu0 %74
    %v76 = vsel %vm60, %v57, 0.0
    %77 = vadd.xlane.f32.xlu0 %v76
    %v78 = vpop.xlane.xlu0 %77
    %v79 = vsel %vm60, %v58, 0.0
    %80 = vadd.xlane.f32.xlu0 %v79
    %v81 = vpop.xlane.xlu0 %80
    %v82 = vsel %vm60, %v59, 0.0
    %83 = vadd.xlane.f32.xlu0 %v82
    %v84 = vpop.xlane.xlu0 %83
    %v86 = vsel %vm60, %v36, 0
    %v89 = vsel %vm60, %v37, 0
    %v92 = vsel %vm60, %v38, 0
    %v95 = vsel %vm60, %v39, 0
    %v98 = vsel %vm60, %v40, 0
    %v101 = vsel %vm60, %v41, 0
    %v104 = vsel %vm60, %v42, 0
    %v107 = vsel %vm60, %v43, 0
    %109 = vmatprep.subr.mxu0 0.0
    %110 = vmatpush1.msra.mxu0 0.0
    %111 = vmatprep.subr.mxu0 0.0
    %112 = vmatpush1.msra.mxu0 0.0
    %113 = vmatprep.subr.mxu0 0.0
    %114 = vmatpush1.msra.mxu0 0.0
    %115 = vmatprep.subr.mxu0 0.0
    %116 = vmatpush1.msra.mxu0 0.0
    %117 = vmatprep.subr.mxu0 0.0
    %118 = vmatpush1.msra.mxu0 0.0
    %119 = vmatprep.subr.mxu0 0.0
    %120 = vmatpush1.msra.mxu0 0.0
    %121 = vmatprep.subr.mxu0 0.0
    %122 = vmatpush1.msra.mxu0 0.0
    %123 = vmatprep.subr.mxu0 0.0
    %124 = vmatpush1.msra.mxu0 0.0
    %125 = vmatprep.subr.mxu0 0.0
    %126 = vmatpush1.msra.mxu0 0.0
    %127 = vmatprep.subr.mxu0 0.0
    %128 = vmatpush1.msra.mxu0 0.0
    %129 = vmatprep.subr.mxu0 0.0
    %130 = vmatpush1.msra.mxu0 0.0
    %131 = vmatprep.subr.mxu0 0.0
    %132 = vmatpush1.msra.mxu0 0.0
    %133 = vmatprep.subr.mxu0 0.0
    %134 = vmatpush1.msra.mxu0 0.0
    %135 = vmatprep.subr.mxu0 0.0
    %136 = vmatpush1.msra.mxu0 0.0
    %137 = vmatprep.subr.mxu0 0.0
    %138 = vmatpush1.msra.mxu0 0.0
    %139 = vmatprep.subr.mxu0 0.0
    %140 = vmatpush1.msra.mxu0 %v35
    %141 = vmatprep.subr.mxu0 0.0
    %142 = vmatpush2.msra.mxu0 0.0
    %143 = vmatprep.subr.mxu0 0.0
    %144 = vmatpush2.msra.mxu0 0.0
    %145 = vmatprep.subr.mxu0 0.0
    %146 = vmatpush2.msra.mxu0 0.0
    %147 = vmatprep.subr.mxu0 0.0
    %148 = vmatpush2.msra.mxu0 0.0
    %149 = vmatprep.subr.mxu0 0.0
    %150 = vmatpush2.msra.mxu0 0.0
    %151 = vmatprep.subr.mxu0 0.0
    %152 = vmatpush2.msra.mxu0 0.0
    %153 = vmatprep.subr.mxu0 0.0
    %154 = vmatpush2.msra.mxu0 0.0
    %155 = vmatprep.subr.mxu0 0.0
    %156 = vmatpush2.msra.mxu0 0.0
    %157 = vmatprep.subr.mxu0 0.0
    %158 = vmatpush2.msra.mxu0 0.0
    %159 = vmatprep.subr.mxu0 0.0
    %160 = vmatpush2.msra.mxu0 0.0
    %161 = vmatprep.subr.mxu0 0.0
    %162 = vmatpush2.msra.mxu0 0.0
    %163 = vmatprep.subr.mxu0 0.0
    %164 = vmatpush2.msra.mxu0 0.0
    %165 = vmatprep.subr.mxu0 0.0
    %166 = vmatpush2.msra.mxu0 0.0
    %167 = vmatprep.subr.mxu0 0.0
    %168 = vmatpush2.msra.mxu0 0.0
    %169 = vmatprep.subr.mxu0 0.0
    %170 = vmatpush2.msra.mxu0 0.0
    %171 = vmatprep.subr.mxu0 0.0
    %172 = vmatpush2.msra.mxu0 0.0
    %173 = vmatprep.mubr.f32.mxu0 0.0
    %174 = vmatmul.mubr.f32.gmra.mxu0 %v86
    %v175 = vpop.f32.mrf.mxu0
    %v176 = vadd.f32 0.0, %v175
    %v177 = vpop.f32.mrf.mxu0
    %178 = vmatprep.mubr.f32.mxu0 0.0
    %179 = vmatmul.mubr.f32.gmra.mxu0 %v89
    %v180 = vpop.f32.mrf.mxu0
    %v181 = vadd.f32 0.0, %v180
    %v182 = vpop.f32.mrf.mxu0
    %183 = vmatprep.mubr.f32.mxu0 0.0
    %184 = vmatmul.mubr.f32.gmra.mxu0 %v92
    %v185 = vpop.f32.mrf.mxu0
    %v186 = vadd.f32 0.0, %v185
    %v187 = vpop.f32.mrf.mxu0
    %188 = vmatprep.mubr.f32.mxu0 0.0
    %189 = vmatmul.mubr.f32.gmra.mxu0 %v95
    %v190 = vpop.f32.mrf.mxu0
    %v191 = vadd.f32 0.0, %v190
    %v192 = vpop.f32.mrf.mxu0
    %193 = vmatprep.mubr.f32.mxu0 0.0
    %194 = vmatmul.mubr.f32.gmra.mxu0 %v98
    %v195 = vpop.f32.mrf.mxu0
    %v196 = vadd.f32 0.0, %v195
    %v197 = vpop.f32.mrf.mxu0
    %198 = vmatprep.mubr.f32.mxu0 0.0
    %199 = vmatmul.mubr.f32.gmra.mxu0 %v101
    %v200 = vpop.f32.mrf.mxu0
    %v201 = vadd.f32 0.0, %v200
    %v202 = vpop.f32.mrf.mxu0
    %203 = vmatprep.mubr.f32.mxu0 0.0
    %204 = vmatmul.mubr.f32.gmra.mxu0 %v104
    %v205 = vpop.f32.mrf.mxu0
    %v206 = vadd.f32 0.0, %v205
    %v207 = vpop.f32.mrf.mxu0
    %208 = vmatprep.mubr.f32.mxu0 0.0
    %209 = vmatmul.mubr.f32.gmra.mxu0 %v107
    %v210 = vpop.f32.mrf.mxu0
    %v211 = vadd.f32 0.0, %v210
    %v212 = vpop.f32.mrf.mxu0
    %213 = vdwg.mxu0
    %v214 = vadd.f32 %v51, %v63
    %v215 = vadd.f32 %v51, %v66
    %v216 = vadd.f32 %v51, %v69
    %v217 = vadd.f32 %v51, %v72
    %v218 = vadd.f32 %v51, %v75
    %v219 = vadd.f32 %v51, %v78
    %v220 = vadd.f32 %v51, %v81
    %v221 = vadd.f32 %v51, %v84
    %v222 = vmul.f32 %v176, 2.0
    %v223 = vmul.f32 %v181, 2.0
    %v224 = vmul.f32 %v186, 2.0
    %v225 = vmul.f32 %v191, 2.0
    %v226 = vmul.f32 %v196, 2.0
    %v227 = vmul.f32 %v201, 2.0
    %v228 = vmul.f32 %v206, 2.0
    %v229 = vmul.f32 %v211, 2.0
    %v230 = vsub.f32 %v214, %v222
    %v231 = vsub.f32 %v215, %v223
    %v232 = vsub.f32 %v216, %v224
    %v233 = vsub.f32 %v217, %v225
    %v234 = vsub.f32 %v218, %v226
    %v235 = vsub.f32 %v219, %v227
    %v236 = vsub.f32 %v220, %v228
    %v237 = vsub.f32 %v221, %v229
    %v238 = vlaneseq
    %v239 = vshrl.u32 %v238, 7
    %v240 = vadd.s32 %v239, 8
    %v241 = vadd.s32 %v239, 16
    %v242 = vadd.s32 %v239, 24
    %v243 = vadd.s32 %v239, 32
    %v244 = vadd.s32 %v239, 40
    %v245 = vadd.s32 %v239, 48
    %v246 = vadd.s32 %v239, 56
    %v247 = vmin.f32 %v230, %v234
    %v248 = vmin.f32 %v231, %v235
    %v249 = vmin.f32 %v232, %v236
    %v250 = vmin.f32 %v233, %v237
    %v251 = vmin.f32 %v247, %v248
    %v252 = vmin.f32 %v249, %v250
    %v253 = vmin.f32 %v251, %v252
    %v254 = vrot.slane %v253, 4
    %v255 = vmin.f32 %v253, %v254
    %v256 = vrot.slane %v255, 2
    %v257 = vmin.f32 %v255, %v256
    %v258 = vrot.slane %v257, 1
    %v259 = vmin.f32 %v257, %v258
    %vm260 = vcmp.eq.f32.partialorder %v230, %v259
    %vm261 = vcmp.eq.f32.partialorder %v231, %v259
    %vm262 = vcmp.eq.f32.partialorder %v232, %v259
    %vm263 = vcmp.eq.f32.partialorder %v233, %v259
    %vm264 = vcmp.eq.f32.partialorder %v234, %v259
    %vm265 = vcmp.eq.f32.partialorder %v235, %v259
    %vm266 = vcmp.eq.f32.partialorder %v236, %v259
    %vm267 = vcmp.eq.f32.partialorder %v237, %v259
    %v268 = vsel %vm260, %v239, 64
    %v269 = vsel %vm261, %v240, 64
    %v270 = vsel %vm262, %v241, 64
    %v271 = vsel %vm263, %v242, 64
    %v272 = vsel %vm264, %v243, 64
    %v273 = vsel %vm265, %v244, 64
    %v274 = vsel %vm266, %v245, 64
    %v275 = vsel %vm267, %v246, 64
    %vm276 = vcmp.lt.s32.totalorder %v268, %v272
    %v277 = vsel %vm276, %v268, %v272
    %vm278 = vcmp.lt.s32.totalorder %v269, %v273
    %v279 = vsel %vm278, %v269, %v273
    %vm280 = vcmp.lt.s32.totalorder %v270, %v274
    %v281 = vsel %vm280, %v270, %v274
    %vm282 = vcmp.lt.s32.totalorder %v271, %v275
    %v283 = vsel %vm282, %v271, %v275
    %vm284 = vcmp.lt.s32.totalorder %v277, %v279
    %v285 = vsel %vm284, %v277, %v279
    %vm286 = vcmp.lt.s32.totalorder %v281, %v283
    %v287 = vsel %vm286, %v281, %v283
    %vm288 = vcmp.lt.s32.totalorder %v285, %v287
    %v289 = vsel %vm288, %v285, %v287
    %v290 = vrot.slane %v289, 4
    %vm291 = vcmp.lt.s32.totalorder %v289, %v290
    %v292 = vsel %vm291, %v289, %v290
    %v293 = vrot.slane %v292, 2
    %vm294 = vcmp.lt.s32.totalorder %v292, %v293
    %v295 = vsel %vm294, %v292, %v293
    %v296 = vrot.slane %v295, 1
    %vm297 = vcmp.lt.s32.totalorder %v295, %v296
    %v298 = vsel %vm297, %v295, %v296
    %v299 = vlaneseq
    %v300 = vand.u32 %v299, 127
    %s301 = smul.u32 0, 128
    %v302 = vstv %s301
    %v303 = vadd.s32 %v300, %v302
    %vm304 = vcmp.lt.s32.totalorder %v303, 32
    %v305 = vsel %vm304, 1, 0
    %v306 = vcvt.s32.f32 %v305
    %vm307 = vcmp.eq.s32.totalorder %v239, %v298
    %vm308 = vcmp.eq.s32.totalorder %v240, %v298
    %vm309 = vcmp.eq.s32.totalorder %v241, %v298
    %vm310 = vcmp.eq.s32.totalorder %v242, %v298
    %vm311 = vcmp.eq.s32.totalorder %v243, %v298
    %vm312 = vcmp.eq.s32.totalorder %v244, %v298
    %vm313 = vcmp.eq.s32.totalorder %v245, %v298
    %vm314 = vcmp.eq.s32.totalorder %v246, %v298
    %v315 = vsel %vm307, 1.0, 0.0
    %v316 = vsel %vm308, 1.0, 0.0
    %v317 = vsel %vm309, 1.0, 0.0
    %v318 = vsel %vm310, 1.0, 0.0
    %v319 = vsel %vm311, 1.0, 0.0
    %v320 = vsel %vm312, 1.0, 0.0
    %v321 = vsel %vm313, 1.0, 0.0
    %v322 = vsel %vm314, 1.0, 0.0
    %v323 = vmul.f32 %v315, %v306
    %v324 = vmul.f32 %v316, %v306
    %v325 = vmul.f32 %v317, %v306
    %v326 = vmul.f32 %v318, %v306
    %v327 = vmul.f32 %v319, %v306
    %v328 = vmul.f32 %v320, %v306
    %v329 = vmul.f32 %v321, %v306
    %v330 = vmul.f32 %v322, %v306
    %vm331 = vcmask 523264
    %v333 = vsel %vm331, %v44, 0
    %335 = vmatprep.subr.mxu0 0.0
    %336 = vmatpush1.msra.mxu0 0.0
    %337 = vmatprep.subr.mxu0 0.0
    %338 = vmatpush1.msra.mxu0 0.0
    %339 = vmatprep.subr.mxu0 0.0
    %340 = vmatpush1.msra.mxu0 0.0
    %341 = vmatprep.subr.mxu0 0.0
    %342 = vmatpush1.msra.mxu0 0.0
    %343 = vmatprep.subr.mxu0 0.0
    %344 = vmatpush1.msra.mxu0 0.0
    %345 = vmatprep.subr.mxu0 0.0
    %346 = vmatpush1.msra.mxu0 0.0
    %347 = vmatprep.subr.mxu0 0.0
    %348 = vmatpush1.msra.mxu0 0.0
    %349 = vmatprep.subr.mxu0 0.0
    %350 = vmatpush1.msra.mxu0 0.0
    %351 = vmatprep.subr.mxu0 0.0
    %352 = vmatpush1.msra.mxu0 %v330
    %353 = vmatprep.subr.mxu0 0.0
    %354 = vmatpush1.msra.mxu0 %v329
    %355 = vmatprep.subr.mxu0 0.0
    %356 = vmatpush1.msra.mxu0 %v328
    %357 = vmatprep.subr.mxu0 0.0
    %358 = vmatpush1.msra.mxu0 %v327
    %359 = vmatprep.subr.mxu0 0.0
    %360 = vmatpush1.msra.mxu0 %v326
    %361 = vmatprep.subr.mxu0 0.0
    %362 = vmatpush1.msra.mxu0 %v325
    %363 = vmatprep.subr.mxu0 0.0
    %364 = vmatpush1.msra.mxu0 %v324
    %365 = vmatprep.subr.mxu0 0.0
    %366 = vmatpush1.msra.mxu0 %v323
    %367 = vmatprep.subr.mxu0 0.0
    %368 = vmatpush2.msra.mxu0 0.0
    %369 = vmatprep.subr.mxu0 0.0
    %370 = vmatpush2.msra.mxu0 0.0
    %371 = vmatprep.subr.mxu0 0.0
    %372 = vmatpush2.msra.mxu0 0.0
    %373 = vmatprep.subr.mxu0 0.0
    %374 = vmatpush2.msra.mxu0 0.0
    %375 = vmatprep.subr.mxu0 0.0
    %376 = vmatpush2.msra.mxu0 0.0
    %377 = vmatprep.subr.mxu0 0.0
    %378 = vmatpush2.msra.mxu0 0.0
    %379 = vmatprep.subr.mxu0 0.0
    %380 = vmatpush2.msra.mxu0 0.0
    %381 = vmatprep.subr.mxu0 0.0
    %382 = vmatpush2.msra.mxu0 0.0
    %383 = vmatprep.subr.mxu0 0.0
    %384 = vmatpush2.msra.mxu0 0.0
    %385 = vmatprep.subr.mxu0 0.0
    %386 = vmatpush2.msra.mxu0 0.0
    %387 = vmatprep.subr.mxu0 0.0
    %388 = vmatpush2.msra.mxu0 0.0
    %389 = vmatprep.subr.mxu0 0.0
    %390 = vmatpush2.msra.mxu0 0.0
    %391 = vmatprep.subr.mxu0 0.0
    %392 = vmatpush2.msra.mxu0 0.0
    %393 = vmatprep.subr.mxu0 0.0
    %394 = vmatpush2.msra.mxu0 0.0
    %395 = vmatprep.subr.mxu0 0.0
    %396 = vmatpush2.msra.mxu0 0.0
    %397 = vmatprep.subr.mxu0 0.0
    %398 = vmatpush2.msra.mxu0 0.0
    %399 = vmatprep.mubr.f32.mxu0 0.0
    %400 = vmatmul.mubr.f32.gmra.mxu0 %v333
    %v401 = vpop.f32.mrf.mxu0
    %v402 = vadd.f32 0.0, %v401
    %v403 = vpop.f32.mrf.mxu0
    %404 = vdwg.mxu0
    %v405 = vsub.f32 %v402, %v35
    %v406 = vmul.f32 %v405, %v405
    %407 = vadd.xlane.f32.xlu0 %v406
    %v408 = vpop.xlane.xlu0 %407
    %v409 = vld [vmem:[#allocation2] sm:$0x1]
    %v410 = vrot.slane %v408, 4
    %v411 = vadd.f32 %v408, %v410
    %v412 = vrot.slane %v411, 2
    %v413 = vadd.f32 %v411, %v412
    %v414 = vrot.slane %v413, 1
    %v415 = vadd.f32 %v413, %v414
    %v416 = vadd.f32 %v409, %v415
    %vm417 = vcmask 0
    %418 = vst.msk [vmem:[#allocation2] sm:$0x1] %vm417, %v416
    %v419 = vld [vmem:[#allocation3] sm:$0xff]
    %v420 = vld [vmem:[#allocation3 + $0x8] sm:$0xff]
    %v421 = vld [vmem:[#allocation3 + $0x10] sm:$0xff]
    %v422 = vld [vmem:[#allocation3 + $0x18] sm:$0xff]
    %v423 = vld [vmem:[#allocation3 + $0x20] sm:$0xff]
    %v424 = vld [vmem:[#allocation3 + $0x28] sm:$0xff]
    %v425 = vld [vmem:[#allocation3 + $0x30] sm:$0xff]
    %v426 = vld [vmem:[#allocation3 + $0x38] sm:$0xff]
    %427 = vadd.xlane.f32.xlu0 %v323
    %v428 = vpop.xlane.xlu0 %427
    %429 = vadd.xlane.f32.xlu0 %v324
    %v430 = vpop.xlane.xlu0 %429
    %431 = vadd.xlane.f32.xlu0 %v325
    %v432 = vpop.xlane.xlu0 %431
    %433 = vadd.xlane.f32.xlu0 %v326
    %v434 = vpop.xlane.xlu0 %433
    %435 = vadd.xlane.f32.xlu0 %v327
    %v436 = vpop.xlane.xlu0 %435
    %437 = vadd.xlane.f32.xlu0 %v328
    %v438 = vpop.xlane.xlu0 %437
    %439 = vadd.xlane.f32.xlu0 %v329
    %v440 = vpop.xlane.xlu0 %439
    %441 = vadd.xlane.f32.xlu0 %v330
    %v442 = vpop.xlane.xlu0 %441
    %v443 = vadd.f32 %v419, %v428
    %v444 = vadd.f32 %v420, %v430
    %v445 = vadd.f32 %v421, %v432
    %v446 = vadd.f32 %v422, %v434
    %v447 = vadd.f32 %v423, %v436
    %v448 = vadd.f32 %v424, %v438
    %v449 = vadd.f32 %v425, %v440
    %v450 = vadd.f32 %v426, %v442
    %vm451 = vcmask 7168
    %452 = vst.msk [vmem:[#allocation3] sm:$0xff] %vm451, %v443
    %453 = vst.msk [vmem:[#allocation3 + $0x8] sm:$0xff] %vm451, %v444
    %454 = vst.msk [vmem:[#allocation3 + $0x10] sm:$0xff] %vm451, %v445
    %455 = vst.msk [vmem:[#allocation3 + $0x18] sm:$0xff] %vm451, %v446
    %456 = vst.msk [vmem:[#allocation3 + $0x20] sm:$0xff] %vm451, %v447
    %457 = vst.msk [vmem:[#allocation3 + $0x28] sm:$0xff] %vm451, %v448
    %458 = vst.msk [vmem:[#allocation3 + $0x30] sm:$0xff] %vm451, %v449
    %459 = vst.msk [vmem:[#allocation3 + $0x38] sm:$0xff] %vm451, %v450
    %460 = vst [vmem:[%s3] sm:$0xff] %v402
    %461 = vst [vmem:[#allocation4] sm:$0x1] %v298
    %v462 = vld [vmem:[#allocation2] sm:$0x1]
    %v463 = vmul.f32 %v462, 0.00390625
    %464 = vst.msk [vmem:[#allocation6] sm:$0x1] %vm417, %v463
    %v465 = vld [vmem:[#allocation3] sm:$0xff]
    %v466 = vld [vmem:[#allocation3 + $0x8] sm:$0xff]
    %v467 = vld [vmem:[#allocation3 + $0x10] sm:$0xff]
    %v468 = vld [vmem:[#allocation3 + $0x18] sm:$0xff]
    %v469 = vld [vmem:[#allocation3 + $0x20] sm:$0xff]
    %v470 = vld [vmem:[#allocation3 + $0x28] sm:$0xff]
    %v471 = vld [vmem:[#allocation3 + $0x30] sm:$0xff]
    %v472 = vld [vmem:[#allocation3 + $0x38] sm:$0xff]
    %v473 = vmul.f32 %v465, 0.03125
    %v474 = vmul.f32 %v466, 0.03125
    %v475 = vmul.f32 %v467, 0.03125
    %v476 = vmul.f32 %v468, 0.03125
    %v477 = vmul.f32 %v469, 0.03125
    %v478 = vmul.f32 %v470, 0.03125
    %v479 = vmul.f32 %v471, 0.03125
    %v480 = vmul.f32 %v472, 0.03125
    %v481 = vadd.f32 %v473, 1e-10
    %v482 = vadd.f32 %v474, 1e-10
    %v483 = vadd.f32 %v475, 1e-10
    %v484 = vadd.f32 %v476, 1e-10
    %v485 = vadd.f32 %v477, 1e-10
    %v486 = vadd.f32 %v478, 1e-10
    %v487 = vadd.f32 %v479, 1e-10
    %v488 = vadd.f32 %v480, 1e-10
    %v489 = vlog2.pop %v481
    %v490 = vmul.f32 %v489, 0.6931472
    %v491 = vlog2.pop %v482
    %v492 = vmul.f32 %v491, 0.6931472
    %v493 = vlog2.pop %v483
    %v494 = vmul.f32 %v493, 0.6931472
    %v495 = vlog2.pop %v484
    %v496 = vmul.f32 %v495, 0.6931472
    %v497 = vlog2.pop %v485
    %v498 = vmul.f32 %v497, 0.6931472
    %v499 = vlog2.pop %v486
    %v500 = vmul.f32 %v499, 0.6931472
    %v501 = vlog2.pop %v487
    %v502 = vmul.f32 %v501, 0.6931472
    %v503 = vlog2.pop %v488
    %v504 = vmul.f32 %v503, 0.6931472
    %v505 = vmul.f32 %v473, %v490
    %v506 = vmul.f32 %v474, %v492
    %v507 = vmul.f32 %v475, %v494
    %v508 = vmul.f32 %v476, %v496
    %v509 = vmul.f32 %v477, %v498
    %v510 = vmul.f32 %v478, %v500
    %v511 = vmul.f32 %v479, %v502
    %v512 = vmul.f32 %v480, %v504
    %v513 = vsel %vm451, %v505, 0.0
    %v514 = vsel %vm451, %v506, 0.0
    %v515 = vadd.f32 %v513, %v514
    %v516 = vsel %vm451, %v507, 0.0
    %v517 = vadd.f32 %v515, %v516
    %v518 = vsel %vm451, %v508, 0.0
    %v519 = vadd.f32 %v517, %v518
    %v520 = vsel %vm451, %v509, 0.0
    %v521 = vadd.f32 %v519, %v520
    %v522 = vsel %vm451, %v510, 0.0
    %v523 = vadd.f32 %v521, %v522
    %v524 = vsel %vm451, %v511, 0.0
    %v525 = vadd.f32 %v523, %v524
    %v526 = vsel %vm451, %v512, 0.0
    %v527 = vadd.f32 %v525, %v526
    %528 = vadd.xlane.f32.xlu0 %v527
    %v529 = vpop.xlane.xlu0 %528
    %v530 = vrot.slane %v529, 4
    %v531 = vadd.f32 %v529, %v530
    %v532 = vrot.slane %v531, 2
    %v533 = vadd.f32 %v531, %v532
    %v534 = vrot.slane %v533, 1
    %v535 = vadd.f32 %v533, %v534
    %s536 = vtos %v535
    %v537 = vstv %s536
    %v538 = vsub.f32 0.0, %v537
    %v539 = vmul.f32 %v538, 1.442695
    %v540 = vpow.pop %v539
    %541 = vst.msk [vmem:[#allocation8] sm:$0x1] %vm417, %v540
    // Predicated region
    $region18: #{mmslim_forward.65} parent=1 // pred_check
      _
    $region19: #{mmslim_forward.65} parent=1 // pred_check_branch
      %543 = sbr.rel (0) target = $region21
    $region20: #{mmslim_forward.65} parent=1 // pred_region
      _
    $region21: #{mmslim_forward.65} parent=1 // pred_fallthru
      _
    // Predicated region
    $region22: #{mmslim_forward.65} parent=1 // pred_check
      _
    $region23: #{mmslim_forward.65} parent=1 // pred_check_branch
      %545 = sbr.rel (0) target = $region25
    $region24: #{mmslim_forward.65} parent=1 // pred_region
      %s547 = ssub.s32 16, 16
      %548 = vsyncadd [#allocation5], %s547
      %s550 = sshll.u32 [#allocation4], 4
      %s551 = int_to_ptr.vmem [resolvable:$true] %s550
      %553 = dma.vmem_to_hbm [thread:$0]  %s551, 16, %s4, [#allocation5]
    $region25: #{mmslim_forward.65} parent=1 // pred_fallthru
      _
    // Predicated region
    $region26: #{mmslim_forward.65} parent=1 // pred_check
      _
    $region27: #{mmslim_forward.65} parent=1 // pred_check_branch
      %555 = sbr.rel (0) target = $region29
    $region28: #{mmslim_forward.65} parent=1 // pred_region
      %s557 = ssub.s32 16, 16
      %558 = vsyncadd [#allocation7], %s557
      %s560 = sshll.u32 [#allocation6], 4
      %s561 = int_to_ptr.vmem [resolvable:$true] %s560
      %563 = dma.vmem_to_hbm [thread:$0]  %s561, 16, %s5, [#allocation7]
    $region29: #{mmslim_forward.65} parent=1 // pred_fallthru
      _
    // Predicated region
    $region30: #{mmslim_forward.65} parent=1 // pred_check
      _
    $region31: #{mmslim_forward.65} parent=1 // pred_check_branch
      %565 = sbr.rel (0) target = $region33
    $region32: #{mmslim_forward.65} parent=1 // pred_region
      %s567 = ssub.s32 16, 16
      %568 = vsyncadd [#allocation7], %s567
      %s570 = sshll.u32 [#allocation8], 4
      %s571 = int_to_ptr.vmem [resolvable:$true] %s570
      %573 = dma.vmem_to_hbm [thread:$0]  %s571, 16, %s6, [#allocation7]
    $region33: #{mmslim_forward.65} parent=1 // pred_fallthru
      _
    // Predicated region
    $region34: #{mmslim_forward.65} parent=1 // pred_check
      _
    $region35: #{mmslim_forward.65} parent=1 // pred_check_branch
      %575 = sbr.rel (0) target = $region37
    $region36: #{mmslim_forward.65} parent=1 // pred_region
      _
    $region37: #{mmslim_forward.65} parent=1 // pred_fallthru
      _
    // Predicated region
    $region38: #{mmslim_forward.65} parent=1 // pred_check
      _
    $region39: #{mmslim_forward.65} parent=1 // pred_check_branch
      %577 = sbr.rel (0) target = $region41
    $region40: #{mmslim_forward.65} parent=1 // pred_region
      %578 = dma.done [#allocation5], 16
    $region41: #{mmslim_forward.65} parent=1 // pred_fallthru
      _
    // Predicated region
    $region42: #{mmslim_forward.65} parent=1 // pred_check
      _
    $region43: #{mmslim_forward.65} parent=1 // pred_check_branch
      %580 = sbr.rel (0) target = $region45
    $region44: #{mmslim_forward.65} parent=1 // pred_region
      %581 = dma.done [#allocation7], 16
    $region45: #{mmslim_forward.65} parent=1 // pred_fallthru
      _
    // Predicated region
    $region46: #{mmslim_forward.65} parent=1 // pred_check
      _
    $region47: #{mmslim_forward.65} parent=1 // pred_check_branch
      %583 = sbr.rel (0) target = $region49
    $region48: #{mmslim_forward.65} parent=1 // pred_region
      %584 = dma.done [#allocation7], 16
    $region49: #{mmslim_forward.65} parent=1 // pred_fallthru
      _
    %585 = vsyncpa [#allocation5], 1
    %586 = vsyncpa [#allocation7], 1

// kernel: mmslim_forward.66
$region0: #{mmslim_forward.66}
  #allocation0 [shape = 'u32[]', space=smem, size = 0x4, offset = 0x4, fixed_abs, tag = 'smem constant byte address 0x4 - core index']
  #allocation1 [shape = 'u32[144,128]{1,0:T(1,128)}', space=vmem, size = 0x12000, scoped, tag = 'internal scratch']
  %s0 = inlined_call_operand.vmem [shape: bf16[32,72], index: 0, kind: input, shape index: {}]
  %s1 = inlined_call_operand.vmem [shape: bf16[72,128], index: 1, kind: input, shape index: {}]
  %s2 = inlined_call_operand.vmem [shape: f32[32,1], index: 2, kind: input, shape index: {}]
  %s3 = inlined_call_operand.vmem [shape: f32[32,128], index: 3, kind: output, shape index: {}]
  %s4 = sld [smem:[#allocation0]]
  $region22: #{mmslim_forward.66} parent=0
    _
  %s6 = ssub.s32 1, %s4
  %s7 = scalar_select 0, %s6, %s4
  // Predicated region
  $region2: #{mmslim_forward.66} parent=0 // pred_check
    _
  $region3: #{mmslim_forward.66} parent=0 // pred_check_branch
    %9 = sbr.rel (0) target = $region5
  $region4: #{mmslim_forward.66} parent=0 // pred_region
    _
  $region5: #{mmslim_forward.66} parent=0 // pred_fallthru
    _
  // Predicated region
  $region6: #{mmslim_forward.66} parent=0 // pred_check
    _
  $region7: #{mmslim_forward.66} parent=0 // pred_check_branch
    %11 = sbr.rel (0) target = $region9
  $region8: #{mmslim_forward.66} parent=0 // pred_region
    _
  $region9: #{mmslim_forward.66} parent=0 // pred_fallthru
    _
  // Predicated region
  $region10: #{mmslim_forward.66} parent=0 // pred_check
    _
  $region11: #{mmslim_forward.66} parent=0 // pred_check_branch
    %13 = sbr.rel (0) target = $region13
  $region12: #{mmslim_forward.66} parent=0 // pred_region
    _
  $region13: #{mmslim_forward.66} parent=0 // pred_fallthru
    _
  %v15 = vld [vmem:[%s1] sm:$0xf]
  %v16 = vld [vmem:[%s1 + $0x4] sm:$0xf]
  %v17 = vld [vmem:[%s1 + $0x8] sm:$0xf]
  %v18 = vld [vmem:[%s1 + $0xc] sm:$0xf]
  %v19 = vld [vmem:[%s1 + $0x10] sm:$0xf]
  %v20 = vld [vmem:[%s1 + $0x14] sm:$0xf]
  %v21 = vld [vmem:[%s1 + $0x18] sm:$0xf]
  %v22 = vld [vmem:[%s1 + $0x1c] sm:$0xf]
  %v23 = vld [vmem:[%s1 + $0x20] sm:$0xf]
  %v24 = vld [vmem:[%s0] sm:$0xf]
  %v25 = vld [vmem:[%s0 + $0x4] sm:$0xf]
  %v26 = vld [vmem:[%s0 + $0x8] sm:$0xf]
  %v27 = vld [vmem:[%s0 + $0xc] sm:$0xf]
  %v28 = vld [vmem:[%s2] sm:$0xff]
  %v29 = vld [vmem:[%s2 + $0x8] sm:$0xff]
  %v30 = vld [vmem:[%s2 + $0x10] sm:$0xff]
  %v31 = vld [vmem:[%s2 + $0x18] sm:$0xff]
  %33 = vset.pattern.permute.xlu0 0
  %34 = vperm.xlu0 %33, %v28
  %v35 = vpop.permute.xlu0 %34
  %38 = vset.pattern.permute.xlu0 0
  %39 = vperm.xlu0 %38, %v29
  %v40 = vpop.permute.xlu0 %39
  %43 = vset.pattern.permute.xlu0 0
  %44 = vperm.xlu0 %43, %v30
  %v45 = vpop.permute.xlu0 %44
  %48 = vset.pattern.permute.xlu0 0
  %49 = vperm.xlu0 %48, %v31
  %v50 = vpop.permute.xlu0 %49
  %v56 = vunpack.c.l.b16 %v24
  %v57 = vunpack.c.l.b16 %v25
  %v58 = vunpack.c.l.b16 %v26
  %v59 = vunpack.c.l.b16 %v27
  %v60 = vpack.c.b16 %v57, %v56
  %v61 = vpack.c.b16 %v59, %v58
  %v71 = vunpack.c.l.b16 %v15
  %v72 = vunpack.c.l.b16 %v16
  %v73 = vunpack.c.l.b16 %v17
  %v74 = vunpack.c.l.b16 %v18
  %v75 = vunpack.c.l.b16 %v19
  %v76 = vunpack.c.l.b16 %v20
  %v77 = vunpack.c.l.b16 %v21
  %v78 = vunpack.c.l.b16 %v22
  %v79 = vunpack.c.l.b16 %v23
  %v80 = vpack.c.b16 %v72, %v71
  %v81 = vpack.c.b16 %v74, %v73
  %v82 = vpack.c.b16 %v76, %v75
  %v83 = vpack.c.b16 %v78, %v77
  %v84 = vpack.c.b16 %v79, %v79
  %vm89 = vcmask 588800
  %v91 = vsel %vm89, %v60, 0
  %v94 = vsel %vm89, %v61, 0
  %vm96 = vcmask 1043456
  %v98 = vsel %vm96, %v84, 0
  %100 = vmatprep.subr.bf16.mxu0 0
  %101 = vmatpush1.bf16.msra.mxu0 0
  %102 = vmatprep.subr.bf16.mxu0 0
  %103 = vmatpush1.bf16.msra.mxu0 0
  %104 = vmatprep.subr.bf16.mxu0 0
  %105 = vmatpush1.bf16.msra.mxu0 0
  %106 = vmatprep.subr.bf16.mxu0 0
  %107 = vmatpush1.bf16.msra.mxu0 %v98
  %108 = vmatprep.subr.bf16.mxu0 0
  %109 = vmatpush1.bf16.msra.mxu0 %v83
  %110 = vmatprep.subr.bf16.mxu0 0
  %111 = vmatpush1.bf16.msra.mxu0 %v82
  %112 = vmatprep.subr.bf16.mxu0 0
  %113 = vmatpush1.bf16.msra.mxu0 %v81
  %114 = vmatprep.subr.bf16.mxu0 0
  %115 = vmatpush1.bf16.msra.mxu0 %v80
  %116 = vmatprep.subr.bf16.mxu0 0
  %117 = vmatpush2.bf16.msra.mxu0 0
  %118 = vmatprep.subr.bf16.mxu0 0
  %119 = vmatpush2.bf16.msra.mxu0 0
  %120 = vmatprep.subr.bf16.mxu0 0
  %121 = vmatpush2.bf16.msra.mxu0 0
  %122 = vmatprep.subr.bf16.mxu0 0
  %123 = vmatpush2.bf16.msra.mxu0 0
  %124 = vmatprep.subr.bf16.mxu0 0
  %125 = vmatpush2.bf16.msra.mxu0 0
  %126 = vmatprep.subr.bf16.mxu0 0
  %127 = vmatpush2.bf16.msra.mxu0 0
  %128 = vmatprep.subr.bf16.mxu0 0
  %129 = vmatpush2.bf16.msra.mxu0 0
  %130 = vmatprep.subr.bf16.mxu0 0
  %131 = vmatpush2.bf16.msra.mxu0 0
  %132 = vmatprep.mubr.bf16.mxu0 0
  %133 = vmatmul.mubr.bf16.gmra.mxu0 %v91
  %v134 = vpop.f32.mrf.mxu0
  %v135 = vadd.f32 %v35, %v134
  %v136 = vpop.f32.mrf.mxu0
  %v137 = vpop.f32.mrf.mxu0
  %v138 = vadd.f32 %v40, %v137
  %v139 = vpop.f32.mrf.mxu0
  %140 = vmatprep.mubr.bf16.mxu0 0
  %141 = vmatmul.mubr.bf16.gmra.mxu0 %v94
  %v142 = vpop.f32.mrf.mxu0
  %v143 = vadd.f32 %v45, %v142
  %v144 = vpop.f32.mrf.mxu0
  %v145 = vpop.f32.mrf.mxu0
  %v146 = vadd.f32 %v50, %v145
  %v147 = vpop.f32.mrf.mxu0
  %148 = vdwg.mxu0
  %149 = vst [vmem:[%s3] sm:$0xff] %v135
  %150 = vst [vmem:[%s3 + $0x8] sm:$0xff] %v138
  %151 = vst [vmem:[%s3 + $0x10] sm:$0xff] %v143
  %152 = vst [vmem:[%s3 + $0x18] sm:$0xff] %v146
  // Predicated region
  $region14: #{mmslim_forward.66} parent=0 // pred_check
    _
  $region15: #{mmslim_forward.66} parent=0 // pred_check_branch
    %154 = sbr.rel (0) target = $region17
  $region16: #{mmslim_forward.66} parent=0 // pred_region
    _
  $region17: #{mmslim_forward.66} parent=0 // pred_fallthru
    _
  // Predicated region
  $region18: #{mmslim_forward.66} parent=0 // pred_check
    _
  $region19: #{mmslim_forward.66} parent=0 // pred_check_branch
    %156 = sbr.rel (0) target = $region21
  $region20: #{mmslim_forward.66} parent=0 // pred_region
    _
  $region21: #{mmslim_forward.66} parent=0 // pred_fallthru
    _

// kernel: mmslim_forward.71
$region0: #{mmslim_forward.71}
  #allocation0 [shape = 'u32[]', space=smem, size = 0x4, offset = 0x4, fixed_abs, tag = 'smem constant byte address 0x4 - core index']
  #allocation1 [shape = 'u32[144,128]{1,0:T(1,128)}', space=vmem, size = 0x12000, scoped, tag = 'internal scratch']
  %s0 = inlined_call_operand.vmem [shape: bf16[16,512], index: 0, kind: input, shape index: {}]
  %s1 = inlined_call_operand.vmem [shape: bf16[512,128], index: 1, kind: input, shape index: {}]
  %s2 = inlined_call_operand.vmem [shape: f32[16,1], index: 2, kind: input, shape index: {}]
  %s3 = inlined_call_operand.vmem [shape: f32[16,128], index: 3, kind: output, shape index: {}]
  %s4 = sld [smem:[#allocation0]]
  $region22: #{mmslim_forward.71} parent=0
    _
  %s6 = ssub.s32 1, %s4
  %s7 = scalar_select 0, %s6, %s4
  // Predicated region
  $region2: #{mmslim_forward.71} parent=0 // pred_check
    _
  $region3: #{mmslim_forward.71} parent=0 // pred_check_branch
    %9 = sbr.rel (0) target = $region5
  $region4: #{mmslim_forward.71} parent=0 // pred_region
    _
  $region5: #{mmslim_forward.71} parent=0 // pred_fallthru
    _
  // Predicated region
  $region6: #{mmslim_forward.71} parent=0 // pred_check
    _
  $region7: #{mmslim_forward.71} parent=0 // pred_check_branch
    %11 = sbr.rel (0) target = $region9
  $region8: #{mmslim_forward.71} parent=0 // pred_region
    _
  $region9: #{mmslim_forward.71} parent=0 // pred_fallthru
    _
  // Predicated region
  $region10: #{mmslim_forward.71} parent=0 // pred_check
    _
  $region11: #{mmslim_forward.71} parent=0 // pred_check_branch
    %13 = sbr.rel (0) target = $region13
  $region12: #{mmslim_forward.71} parent=0 // pred_region
    _
  $region13: #{mmslim_forward.71} parent=0 // pred_fallthru
    _
  %v15 = vld [vmem:[%s1] sm:$0xf]
  %v16 = vld [vmem:[%s1 + $0x4] sm:$0xf]
  %v17 = vld [vmem:[%s1 + $0x8] sm:$0xf]
  %v18 = vld [vmem:[%s1 + $0xc] sm:$0xf]
  %v19 = vld [vmem:[%s1 + $0x10] sm:$0xf]
  %v20 = vld [vmem:[%s1 + $0x14] sm:$0xf]
  %v21 = vld [vmem:[%s1 + $0x18] sm:$0xf]
  %v22 = vld [vmem:[%s1 + $0x1c] sm:$0xf]
  %v23 = vld [vmem:[%s1 + $0x20] sm:$0xf]
  %v24 = vld [vmem:[%s1 + $0x24] sm:$0xf]
  %v25 = vld [vmem:[%s1 + $0x28] sm:$0xf]
  %v26 = vld [vmem:[%s1 + $0x2c] sm:$0xf]
  %v27 = vld [vmem:[%s1 + $0x30] sm:$0xf]
  %v28 = vld [vmem:[%s1 + $0x34] sm:$0xf]
  %v29 = vld [vmem:[%s1 + $0x38] sm:$0xf]
  %v30 = vld [vmem:[%s1 + $0x3c] sm:$0xf]
  %v31 = vld [vmem:[%s1 + $0x40] sm:$0xf]
  %v32 = vld [vmem:[%s1 + $0x44] sm:$0xf]
  %v33 = vld [vmem:[%s1 + $0x48] sm:$0xf]
  %v34 = vld [vmem:[%s1 + $0x4c] sm:$0xf]
  %v35 = vld [vmem:[%s1 + $0x50] sm:$0xf]
  %v36 = vld [vmem:[%s1 + $0x54] sm:$0xf]
  %v37 = vld [vmem:[%s1 + $0x58] sm:$0xf]
  %v38 = vld [vmem:[%s1 + $0x5c] sm:$0xf]
  %v39 = vld [vmem:[%s1 + $0x60] sm:$0xf]
  %v40 = vld [vmem:[%s1 + $0x64] sm:$0xf]
  %v41 = vld [vmem:[%s1 + $0x68] sm:$0xf]
  %v42 = vld [vmem:[%s1 + $0x6c] sm:$0xf]
  %v43 = vld [vmem:[%s1 + $0x70] sm:$0xf]
  %v44 = vld [vmem:[%s1 + $0x74] sm:$0xf]
  %v45 = vld [vmem:[%s1 + $0x78] sm:$0xf]
  %v46 = vld [vmem:[%s1 + $0x7c] sm:$0xf]
  %v47 = vld [vmem:[%s1 + $0x80] sm:$0xf]
  %v48 = vld [vmem:[%s1 + $0x84] sm:$0xf]
  %v49 = vld [vmem:[%s1 + $0x88] sm:$0xf]
  %v50 = vld [vmem:[%s1 + $0x8c] sm:$0xf]
  %v51 = vld [vmem:[%s1 + $0x90] sm:$0xf]
  %v52 = vld [vmem:[%s1 + $0x94] sm:$0xf]
  %v53 = vld [vmem:[%s1 + $0x98] sm:$0xf]
  %v54 = vld [vmem:[%s1 + $0x9c] sm:$0xf]
  %v55 = vld [vmem:[%s1 + $0xa0] sm:$0xf]
  %v56 = vld [vmem:[%s1 + $0xa4] sm:$0xf]
  %v57 = vld [vmem:[%s1 + $0xa8] sm:$0xf]
  %v58 = vld [vmem:[%s1 + $0xac] sm:$0xf]
  %v59 = vld [vmem:[%s1 + $0xb0] sm:$0xf]
  %v60 = vld [vmem:[%s1 + $0xb4] sm:$0xf]
  %v61 = vld [vmem:[%s1 + $0xb8] sm:$0xf]
  %v62 = vld [vmem:[%s1 + $0xbc] sm:$0xf]
  %v63 = vld [vmem:[%s1 + $0xc0] sm:$0xf]
  %v64 = vld [vmem:[%s1 + $0xc4] sm:$0xf]
  %v65 = vld [vmem:[%s1 + $0xc8] sm:$0xf]
  %v66 = vld [vmem:[%s1 + $0xcc] sm:$0xf]
  %v67 = vld [vmem:[%s1 + $0xd0] sm:$0xf]
  %v68 = vld [vmem:[%s1 + $0xd4] sm:$0xf]
  %v69 = vld [vmem:[%s1 + $0xd8] sm:$0xf]
  %v70 = vld [vmem:[%s1 + $0xdc] sm:$0xf]
  %v71 = vld [vmem:[%s1 + $0xe0] sm:$0xf]
  %v72 = vld [vmem:[%s1 + $0xe4] sm:$0xf]
  %v73 = vld [vmem:[%s1 + $0xe8] sm:$0xf]
  %v74 = vld [vmem:[%s1 + $0xec] sm:$0xf]
  %v75 = vld [vmem:[%s1 + $0xf0] sm:$0xf]
  %v76 = vld [vmem:[%s1 + $0xf4] sm:$0xf]
  %v77 = vld [vmem:[%s1 + $0xf8] sm:$0xf]
  %v78 = vld [vmem:[%s1 + $0xfc] sm:$0xf]
  %v79 = vld [vmem:[%s0] sm:$0xff]
  %v80 = vld [vmem:[%s0 + $0x8] sm:$0xff]
  %v81 = vld [vmem:[%s0 + $0x10] sm:$0xff]
  %v82 = vld [vmem:[%s0 + $0x18] sm:$0xff]
  %v83 = vld [vmem:[%s2] sm:$0xff]
  %v84 = vld [vmem:[%s2 + $0x8] sm:$0xff]
  %86 = vset.pattern.permute.xlu0 0
  %87 = vperm.xlu0 %86, %v83
  %v88 = vpop.permute.xlu0 %87
  %91 = vset.pattern.permute.xlu0 0
  %92 = vperm.xlu0 %91, %v84
  %v93 = vpop.permute.xlu0 %92
  %v99 = vunpack.c.l.b16 %v79
  %v100 = vunpack.c.h.b16 %v79
  %v101 = vunpack.c.l.b16 %v80
  %v102 = vunpack.c.h.b16 %v80
  %v103 = vunpack.c.l.b16 %v81
  %v104 = vunpack.c.h.b16 %v81
  %v105 = vunpack.c.l.b16 %v82
  %v106 = vunpack.c.h.b16 %v82
  %v107 = vpack.c.b16 %v103, %v99
  %v108 = vpack.c.b16 %v104, %v100
  %v109 = vpack.c.b16 %v105, %v101
  %v110 = vpack.c.b16 %v106, %v102
  %v179 = vunpack.c.l.b16 %v15
  %v180 = vunpack.c.l.b16 %v16
  %v181 = vunpack.c.l.b16 %v17
  %v182 = vunpack.c.l.b16 %v18
  %v183 = vunpack.c.l.b16 %v19
  %v184 = vunpack.c.l.b16 %v20
  %v185 = vunpack.c.l.b16 %v21
  %v186 = vunpack.c.l.b16 %v22
  %v187 = vunpack.c.l.b16 %v23
  %v188 = vunpack.c.l.b16 %v24
  %v189 = vunpack.c.l.b16 %v25
  %v190 = vunpack.c.l.b16 %v26
  %v191 = vunpack.c.l.b16 %v27
  %v192 = vunpack.c.l.b16 %v28
  %v193 = vunpack.c.l.b16 %v29
  %v194 = vunpack.c.l.b16 %v30
  %v195 = vunpack.c.l.b16 %v31
  %v196 = vunpack.c.l.b16 %v32
  %v197 = vunpack.c.l.b16 %v33
  %v198 = vunpack.c.l.b16 %v34
  %v199 = vunpack.c.l.b16 %v35
  %v200 = vunpack.c.l.b16 %v36
  %v201 = vunpack.c.l.b16 %v37
  %v202 = vunpack.c.l.b16 %v38
  %v203 = vunpack.c.l.b16 %v39
  %v204 = vunpack.c.l.b16 %v40
  %v205 = vunpack.c.l.b16 %v41
  %v206 = vunpack.c.l.b16 %v42
  %v207 = vunpack.c.l.b16 %v43
  %v208 = vunpack.c.l.b16 %v44
  %v209 = vunpack.c.l.b16 %v45
  %v210 = vunpack.c.l.b16 %v46
  %v211 = vunpack.c.l.b16 %v47
  %v212 = vunpack.c.l.b16 %v48
  %v213 = vunpack.c.l.b16 %v49
  %v214 = vunpack.c.l.b16 %v50
  %v215 = vunpack.c.l.b16 %v51
  %v216 = vunpack.c.l.b16 %v52
  %v217 = vunpack.c.l.b16 %v53
  %v218 = vunpack.c.l.b16 %v54
  %v219 = vunpack.c.l.b16 %v55
  %v220 = vunpack.c.l.b16 %v56
  %v221 = vunpack.c.l.b16 %v57
  %v222 = vunpack.c.l.b16 %v58
  %v223 = vunpack.c.l.b16 %v59
  %v224 = vunpack.c.l.b16 %v60
  %v225 = vunpack.c.l.b16 %v61
  %v226 = vunpack.c.l.b16 %v62
  %v227 = vunpack.c.l.b16 %v63
  %v228 = vunpack.c.l.b16 %v64
  %v229 = vunpack.c.l.b16 %v65
  %v230 = vunpack.c.l.b16 %v66
  %v231 = vunpack.c.l.b16 %v67
  %v232 = vunpack.c.l.b16 %v68
  %v233 = vunpack.c.l.b16 %v69
  %v234 = vunpack.c.l.b16 %v70
  %v235 = vunpack.c.l.b16 %v71
  %v236 = vunpack.c.l.b16 %v72
  %v237 = vunpack.c.l.b16 %v73
  %v238 = vunpack.c.l.b16 %v74
  %v239 = vunpack.c.l.b16 %v75
  %v240 = vunpack.c.l.b16 %v76
  %v241 = vunpack.c.l.b16 %v77
  %v242 = vunpack.c.l.b16 %v78
  %v243 = vpack.c.b16 %v180, %v179
  %v244 = vpack.c.b16 %v182, %v181
  %v245 = vpack.c.b16 %v184, %v183
  %v246 = vpack.c.b16 %v186, %v185
  %v247 = vpack.c.b16 %v188, %v187
  %v248 = vpack.c.b16 %v190, %v189
  %v249 = vpack.c.b16 %v192, %v191
  %v250 = vpack.c.b16 %v194, %v193
  %v251 = vpack.c.b16 %v196, %v195
  %v252 = vpack.c.b16 %v198, %v197
  %v253 = vpack.c.b16 %v200, %v199
  %v254 = vpack.c.b16 %v202, %v201
  %v255 = vpack.c.b16 %v204, %v203
  %v256 = vpack.c.b16 %v206, %v205
  %v257 = vpack.c.b16 %v208, %v207
  %v258 = vpack.c.b16 %v210, %v209
  %v259 = vpack.c.b16 %v212, %v211
  %v260 = vpack.c.b16 %v214, %v213
  %v261 = vpack.c.b16 %v216, %v215
  %v262 = vpack.c.b16 %v218, %v217
  %v263 = vpack.c.b16 %v220, %v219
  %v264 = vpack.c.b16 %v222, %v221
  %v265 = vpack.c.b16 %v224, %v223
  %v266 = vpack.c.b16 %v226, %v225
  %v267 = vpack.c.b16 %v228, %v227
  %v268 = vpack.c.b16 %v230, %v229
  %v269 = vpack.c.b16 %v232, %v231
  %v270 = vpack.c.b16 %v234, %v233
  %v271 = vpack.c.b16 %v236, %v235
  %v272 = vpack.c.b16 %v238, %v237
  %v273 = vpack.c.b16 %v240, %v239
  %v274 = vpack.c.b16 %v242, %v241
  %307 = vmatprep.subr.bf16.mxu0 0
  %308 = vmatpush1.bf16.msra.mxu0 %v250
  %309 = vmatprep.subr.bf16.mxu0 0
  %310 = vmatpush1.bf16.msra.mxu0 %v249
  %311 = vmatprep.subr.bf16.mxu0 0
  %312 = vmatpush1.bf16.msra.mxu0 %v248
  %313 = vmatprep.subr.bf16.mxu0 0
  %314 = vmatpush1.bf16.msra.mxu0 %v247
  %315 = vmatprep.subr.bf16.mxu0 0
  %316 = vmatpush1.bf16.msra.mxu0 %v246
  %317 = vmatprep.subr.bf16.mxu0 0
  %318 = vmatpush1.bf16.msra.mxu0 %v245
  %319 = vmatprep.subr.bf16.mxu0 0
  %320 = vmatpush1.bf16.msra.mxu0 %v244
  %321 = vmatprep.subr.bf16.mxu0 0
  %322 = vmatpush1.bf16.msra.mxu0 %v243
  %323 = vmatprep.subr.bf16.mxu0 0
  %324 = vmatpush2.bf16.msra.mxu0 %v258
  %325 = vmatprep.subr.bf16.mxu0 0
  %326 = vmatpush2.bf16.msra.mxu0 %v257
  %327 = vmatprep.subr.bf16.mxu0 0
  %328 = vmatpush2.bf16.msra.mxu0 %v256
  %329 = vmatprep.subr.bf16.mxu0 0
  %330 = vmatpush2.bf16.msra.mxu0 %v255
  %331 = vmatprep.subr.bf16.mxu0 0
  %332 = vmatpush2.bf16.msra.mxu0 %v254
  %333 = vmatprep.subr.bf16.mxu0 0
  %334 = vmatpush2.bf16.msra.mxu0 %v253
  %335 = vmatprep.subr.bf16.mxu0 0
  %336 = vmatpush2.bf16.msra.mxu0 %v252
  %337 = vmatprep.subr.bf16.mxu0 0
  %338 = vmatpush2.bf16.msra.mxu0 %v251
  %339 = vmatprep.mubr.bf16.mxu0 %v108
  %340 = vmatmul.mubr.bf16.gmra.mxu0 %v107
  %v341 = vpop.f32.mrf.mxu0
  %v342 = vadd.f32 %v88, %v341
  %v343 = vpop.f32.mrf.mxu0
  %v344 = vpop.f32.mrf.mxu0
  %v345 = vadd.f32 %v93, %v344
  %v346 = vpop.f32.mrf.mxu0
  %347 = vdwg.mxu0
  %348 = vmatprep.subr.bf16.mxu0 0
  %349 = vmatpush1.bf16.msra.mxu0 %v266
  %350 = vmatprep.subr.bf16.mxu0 0
  %351 = vmatpush1.bf16.msra.mxu0 %v265
  %352 = vmatprep.subr.bf16.mxu0 0
  %353 = vmatpush1.bf16.msra.mxu0 %v264
  %354 = vmatprep.subr.bf16.mxu0 0
  %355 = vmatpush1.bf16.msra.mxu0 %v263
  %356 = vmatprep.subr.bf16.mxu0 0
  %357 = vmatpush1.bf16.msra.mxu0 %v262
  %358 = vmatprep.subr.bf16.mxu0 0
  %359 = vmatpush1.bf16.msra.mxu0 %v261
  %360 = vmatprep.subr.bf16.mxu0 0
  %361 = vmatpush1.bf16.msra.mxu0 %v260
  %362 = vmatprep.subr.bf16.mxu0 0
  %363 = vmatpush1.bf16.msra.mxu0 %v259
  %364 = vmatprep.subr.bf16.mxu0 0
  %365 = vmatpush2.bf16.msra.mxu0 %v274
  %366 = vmatprep.subr.bf16.mxu0 0
  %367 = vmatpush2.bf16.msra.mxu0 %v273
  %368 = vmatprep.subr.bf16.mxu0 0
  %369 = vmatpush2.bf16.msra.mxu0 %v272
  %370 = vmatprep.subr.bf16.mxu0 0
  %371 = vmatpush2.bf16.msra.mxu0 %v271
  %372 = vmatprep.subr.bf16.mxu0 0
  %373 = vmatpush2.bf16.msra.mxu0 %v270
  %374 = vmatprep.subr.bf16.mxu0 0
  %375 = vmatpush2.bf16.msra.mxu0 %v269
  %376 = vmatprep.subr.bf16.mxu0 0
  %377 = vmatpush2.bf16.msra.mxu0 %v268
  %378 = vmatprep.subr.bf16.mxu0 0
  %379 = vmatpush2.bf16.msra.mxu0 %v267
  %380 = vmatprep.mubr.bf16.mxu0 %v110
  %381 = vmatmul.mubr.bf16.gmra.mxu0 %v109
  %v382 = vpop.f32.mrf.mxu0
  %v383 = vadd.f32 %v342, %v382
  %v384 = vpop.f32.mrf.mxu0
  %v385 = vpop.f32.mrf.mxu0
  %v386 = vadd.f32 %v345, %v385
  %v387 = vpop.f32.mrf.mxu0
  %388 = vdwg.mxu0
  %v389 = vmax.f32 %v383, 0.0
  %v390 = vmax.f32 %v386, 0.0
  %391 = vst [vmem:[%s3] sm:$0xff] %v389
  %392 = vst [vmem:[%s3 + $0x8] sm:$0xff] %v390
  // Predicated region
  $region14: #{mmslim_forward.71} parent=0 // pred_check
    _
  $region15: #{mmslim_forward.71} parent=0 // pred_check_branch
    %394 = sbr.rel (0) target = $region17
  $region16: #{mmslim_forward.71} parent=0 // pred_region
    _
  $region17: #{mmslim_forward.71} parent=0 // pred_fallthru
    _
  // Predicated region
  $region18: #{mmslim_forward.71} parent=0 // pred_check
    _
  $region19: #{mmslim_forward.71} parent=0 // pred_check_branch
    %396 = sbr.rel (0) target = $region21
  $region20: #{mmslim_forward.71} parent=0 // pred_region
    _
  $region21: #{mmslim_forward.71} parent=0 // pred_fallthru
    _

// kernel: mmslim_forward.72
$region0: #{mmslim_forward.72}
  #allocation0 [shape = 'u32[]', space=smem, size = 0x4, offset = 0x4, fixed_abs, tag = 'smem constant byte address 0x4 - core index']
  #allocation1 [shape = 'u32[144,128]{1,0:T(1,128)}', space=vmem, size = 0x12000, scoped, tag = 'internal scratch']
  #allocation2 [shape = 'f32[1,1]{1,0:T(1,128)S(1)}', space=vmem, size = 0x200, scoped, tag = 'scoped memory for mmslim_forward.72']
  %s0 = inlined_call_operand.vmem [shape: bf16[1,256], index: 0, kind: input, shape index: {}]
  %s1 = inlined_call_operand.vmem [shape: bf16[256,512], index: 1, kind: input, shape index: {}]
  %s2 = inlined_call_operand.<no memory space> [shape: f32[1,1], index: 2, kind: input, shape index: {}]
  %s3 = inlined_call_operand.vmem [shape: f32[1,512], index: 3, kind: output, shape index: {}]
  %s4 = sld [smem:[#allocation0]]
  $region22: #{mmslim_forward.72} parent=0
    _
  %s6 = ssub.s32 1, %s4
  %s7 = scalar_select 0, %s6, %s4
  %v8 = vstv %s2
  %9 = vst [vmem:[#allocation2] sm:$0x1] %v8
  // Predicated region
  $region2: #{mmslim_forward.72} parent=0 // pred_check
    _
  $region3: #{mmslim_forward.72} parent=0 // pred_check_branch
    %11 = sbr.rel (0) target = $region5
  $region4: #{mmslim_forward.72} parent=0 // pred_region
    _
  $region5: #{mmslim_forward.72} parent=0 // pred_fallthru
    _
  // Predicated region
  $region6: #{mmslim_forward.72} parent=0 // pred_check
    _
  $region7: #{mmslim_forward.72} parent=0 // pred_check_branch
    %13 = sbr.rel (0) target = $region9
  $region8: #{mmslim_forward.72} parent=0 // pred_region
    _
  $region9: #{mmslim_forward.72} parent=0 // pred_fallthru
    _
  // Predicated region
  $region10: #{mmslim_forward.72} parent=0 // pred_check
    _
  $region11: #{mmslim_forward.72} parent=0 // pred_check_branch
    %15 = sbr.rel (0) target = $region13
  $region12: #{mmslim_forward.72} parent=0 // pred_region
    _
  $region13: #{mmslim_forward.72} parent=0 // pred_fallthru
    _
  %v16 = vld [vmem:[%s1] sm:$0xff]
  %v17 = vld [vmem:[%s1 + $0x8] sm:$0xff]
  %v18 = vld [vmem:[%s1 + $0x10] sm:$0xff]
  %v19 = vld [vmem:[%s1 + $0x18] sm:$0xff]
  %v20 = vld [vmem:[%s1 + $0x20] sm:$0xff]
  %v21 = vld [vmem:[%s1 + $0x28] sm:$0xff]
  %v22 = vld [vmem:[%s1 + $0x30] sm:$0xff]
  %v23 = vld [vmem:[%s1 + $0x38] sm:$0xff]
  %v24 = vld [vmem:[%s1 + $0x40] sm:$0xff]
  %v25 = vld [vmem:[%s1 + $0x48] sm:$0xff]
  %v26 = vld [vmem:[%s1 + $0x50] sm:$0xff]
  %v27 = vld [vmem:[%s1 + $0x58] sm:$0xff]
  %v28 = vld [vmem:[%s1 + $0x60] sm:$0xff]
  %v29 = vld [vmem:[%s1 + $0x68] sm:$0xff]
  %v30 = vld [vmem:[%s1 + $0x70] sm:$0xff]
  %v31 = vld [vmem:[%s1 + $0x78] sm:$0xff]
  %v32 = vld [vmem:[%s1 + $0x80] sm:$0xff]
  %v33 = vld [vmem:[%s1 + $0x88] sm:$0xff]
  %v34 = vld [vmem:[%s1 + $0x90] sm:$0xff]
  %v35 = vld [vmem:[%s1 + $0x98] sm:$0xff]
  %v36 = vld [vmem:[%s1 + $0xa0] sm:$0xff]
  %v37 = vld [vmem:[%s1 + $0xa8] sm:$0xff]
  %v38 = vld [vmem:[%s1 + $0xb0] sm:$0xff]
  %v39 = vld [vmem:[%s1 + $0xb8] sm:$0xff]
  %v40 = vld [vmem:[%s1 + $0xc0] sm:$0xff]
  %v41 = vld [vmem:[%s1 + $0xc8] sm:$0xff]
  %v42 = vld [vmem:[%s1 + $0xd0] sm:$0xff]
  %v43 = vld [vmem:[%s1 + $0xd8] sm:$0xff]
  %v44 = vld [vmem:[%s1 + $0xe0] sm:$0xff]
  %v45 = vld [vmem:[%s1 + $0xe8] sm:$0xff]
  %v46 = vld [vmem:[%s1 + $0xf0] sm:$0xff]
  %v47 = vld [vmem:[%s1 + $0xf8] sm:$0xff]
  %v48 = vld [vmem:[%s1 + $0x100] sm:$0xff]
  %v49 = vld [vmem:[%s1 + $0x108] sm:$0xff]
  %v50 = vld [vmem:[%s1 + $0x110] sm:$0xff]
  %v51 = vld [vmem:[%s1 + $0x118] sm:$0xff]
  %v52 = vld [vmem:[%s1 + $0x120] sm:$0xff]
  %v53 = vld [vmem:[%s1 + $0x128] sm:$0xff]
  %v54 = vld [vmem:[%s1 + $0x130] sm:$0xff]
  %v55 = vld [vmem:[%s1 + $0x138] sm:$0xff]
  %v56 = vld [vmem:[%s1 + $0x140] sm:$0xff]
  %v57 = vld [vmem:[%s1 + $0x148] sm:$0xff]
  %v58 = vld [vmem:[%s1 + $0x150] sm:$0xff]
  %v59 = vld [vmem:[%s1 + $0x158] sm:$0xff]
  %v60 = vld [vmem:[%s1 + $0x160] sm:$0xff]
  %v61 = vld [vmem:[%s1 + $0x168] sm:$0xff]
  %v62 = vld [vmem:[%s1 + $0x170] sm:$0xff]
  %v63 = vld [vmem:[%s1 + $0x178] sm:$0xff]
  %v64 = vld [vmem:[%s1 + $0x180] sm:$0xff]
  %v65 = vld [vmem:[%s1 + $0x188] sm:$0xff]
  %v66 = vld [vmem:[%s1 + $0x190] sm:$0xff]
  %v67 = vld [vmem:[%s1 + $0x198] sm:$0xff]
  %v68 = vld [vmem:[%s1 + $0x1a0] sm:$0xff]
  %v69 = vld [vmem:[%s1 + $0x1a8] sm:$0xff]
  %v70 = vld [vmem:[%s1 + $0x1b0] sm:$0xff]
  %v71 = vld [vmem:[%s1 + $0x1b8] sm:$0xff]
  %v72 = vld [vmem:[%s1 + $0x1c0] sm:$0xff]
  %v73 = vld [vmem:[%s1 + $0x1c8] sm:$0xff]
  %v74 = vld [vmem:[%s1 + $0x1d0] sm:$0xff]
  %v75 = vld [vmem:[%s1 + $0x1d8] sm:$0xff]
  %v76 = vld [vmem:[%s1 + $0x1e0] sm:$0xff]
  %v77 = vld [vmem:[%s1 + $0x1e8] sm:$0xff]
  %v78 = vld [vmem:[%s1 + $0x1f0] sm:$0xff]
  %v79 = vld [vmem:[%s1 + $0x1f8] sm:$0xff]
  %v80 = vld [vmem:[%s0] sm:$0x3]
  %v81 = vld [vmem:[#allocation2] sm:$0x1]
  %83 = vset.pattern.permute.xlu0 0
  %84 = vperm.xlu0 %83, %v81
  %v85 = vpop.permute.xlu0 %84
  %v87 = vlaneseq
  %v88 = vshrl.u32 %v87, 7
  %v89 = vsub.s32 0, %v88
  %v90 = vrot.slane %v85, %v89
  %v93 = vunpack.c.l.s4 1966171168
  %v94 = vunpack.c.0.s8 %v93
  %v95 = vlaneseq
  %v96 = vshrl.u32 %v95, 7
  %v97 = vsub.s32 %v94, %v96
  %v98 = vrot.slane %v80, %v97
  %v99 = vcombine.high %v98, %v98
  %v101 = vunpack.c.l.s4 1966171168
  %v102 = vunpack.c.0.s8 %v101
  %v103 = vlaneseq
  %v104 = vshrl.u32 %v103, 7
  %v105 = vsub.s32 %v102, %v104
  %v106 = vrot.slane %v98, %v105
  %v108 = vunpack.c.l.s4 1966171168
  %v109 = vunpack.c.0.s8 %v108
  %v110 = vlaneseq
  %v111 = vshrl.u32 %v110, 7
  %v112 = vsub.s32 %v109, %v111
  %v113 = vrot.slane %v99, %v112
  %v180 = vunpack.c.l.b16 %v16
  %v181 = vunpack.c.h.b16 %v16
  %v182 = vunpack.c.l.b16 %v17
  %v183 = vunpack.c.h.b16 %v17
  %v184 = vunpack.c.l.b16 %v18
  %v185 = vunpack.c.h.b16 %v18
  %v186 = vunpack.c.l.b16 %v19
  %v187 = vunpack.c.h.b16 %v19
  %v188 = vunpack.c.l.b16 %v20
  %v189 = vunpack.c.h.b16 %v20
  %v190 = vunpack.c.l.b16 %v21
  %v191 = vunpack.c.h.b16 %v21
  %v192 = vunpack.c.l.b16 %v22
  %v193 = vunpack.c.h.b16 %v22
  %v194 = vunpack.c.l.b16 %v23
  %v195 = vunpack.c.h.b16 %v23
  %v196 = vunpack.c.l.b16 %v24
  %v197 = vunpack.c.h.b16 %v24
  %v198 = vunpack.c.l.b16 %v25
  %v199 = vunpack.c.h.b16 %v25
  %v200 = vunpack.c.l.b16 %v26
  %v201 = vunpack.c.h.b16 %v26
  %v202 = vunpack.c.l.b16 %v27
  %v203 = vunpack.c.h.b16 %v27
  %v204 = vunpack.c.l.b16 %v28
  %v205 = vunpack.c.h.b16 %v28
  %v206 = vunpack.c.l.b16 %v29
  %v207 = vunpack.c.h.b16 %v29
  %v208 = vunpack.c.l.b16 %v30
  %v209 = vunpack.c.h.b16 %v30
  %v210 = vunpack.c.l.b16 %v31
  %v211 = vunpack.c.h.b16 %v31
  %v212 = vunpack.c.l.b16 %v32
  %v213 = vunpack.c.h.b16 %v32
  %v214 = vunpack.c.l.b16 %v33
  %v215 = vunpack.c.h.b16 %v33
  %v216 = vunpack.c.l.b16 %v34
  %v217 = vunpack.c.h.b16 %v34
  %v218 = vunpack.c.l.b16 %v35
  %v219 = vunpack.c.h.b16 %v35
  %v220 = vunpack.c.l.b16 %v36
  %v221 = vunpack.c.h.b16 %v36
  %v222 = vunpack.c.l.b16 %v37
  %v223 = vunpack.c.h.b16 %v37
  %v224 = vunpack.c.l.b16 %v38
  %v225 = vunpack.c.h.b16 %v38
  %v226 = vunpack.c.l.b16 %v39
  %v227 = vunpack.c.h.b16 %v39
  %v228 = vunpack.c.l.b16 %v40
  %v229 = vunpack.c.h.b16 %v40
  %v230 = vunpack.c.l.b16 %v41
  %v231 = vunpack.c.h.b16 %v41
  %v232 = vunpack.c.l.b16 %v42
  %v233 = vunpack.c.h.b16 %v42
  %v234 = vunpack.c.l.b16 %v43
  %v235 = vunpack.c.h.b16 %v43
  %v236 = vunpack.c.l.b16 %v44
  %v237 = vunpack.c.h.b16 %v44
  %v238 = vunpack.c.l.b16 %v45
  %v239 = vunpack.c.h.b16 %v45
  %v240 = vunpack.c.l.b16 %v46
  %v241 = vunpack.c.h.b16 %v46
  %v242 = vunpack.c.l.b16 %v47
  %v243 = vunpack.c.h.b16 %v47
  %v244 = vunpack.c.l.b16 %v48
  %v245 = vunpack.c.h.b16 %v48
  %v246 = vunpack.c.l.b16 %v49
  %v247 = vunpack.c.h.b16 %v49
  %v248 = vunpack.c.l.b16 %v50
  %v249 = vunpack.c.h.b16 %v50
  %v250 = vunpack.c.l.b16 %v51
  %v251 = vunpack.c.h.b16 %v51
  %v252 = vunpack.c.l.b16 %v52
  %v253 = vunpack.c.h.b16 %v52
  %v254 = vunpack.c.l.b16 %v53
  %v255 = vunpack.c.h.b16 %v53
  %v256 = vunpack.c.l.b16 %v54
  %v257 = vunpack.c.h.b16 %v54
  %v258 = vunpack.c.l.b16 %v55
  %v259 = vunpack.c.h.b16 %v55
  %v260 = vunpack.c.l.b16 %v56
  %v261 = vunpack.c.h.b16 %v56
  %v262 = vunpack.c.l.b16 %v57
  %v263 = vunpack.c.h.b16 %v57
  %v264 = vunpack.c.l.b16 %v58
  %v265 = vunpack.c.h.b16 %v58
  %v266 = vunpack.c.l.b16 %v59
  %v267 = vunpack.c.h.b16 %v59
  %v268 = vunpack.c.l.b16 %v60
  %v269 = vunpack.c.h.b16 %v60
  %v270 = vunpack.c.l.b16 %v61
  %v271 = vunpack.c.h.b16 %v61
  %v272 = vunpack.c.l.b16 %v62
  %v273 = vunpack.c.h.b16 %v62
  %v274 = vunpack.c.l.b16 %v63
  %v275 = vunpack.c.h.b16 %v63
  %v276 = vunpack.c.l.b16 %v64
  %v277 = vunpack.c.h.b16 %v64
  %v278 = vunpack.c.l.b16 %v65
  %v279 = vunpack.c.h.b16 %v65
  %v280 = vunpack.c.l.b16 %v66
  %v281 = vunpack.c.h.b16 %v66
  %v282 = vunpack.c.l.b16 %v67
  %v283 = vunpack.c.h.b16 %v67
  %v284 = vunpack.c.l.b16 %v68
  %v285 = vunpack.c.h.b16 %v68
  %v286 = vunpack.c.l.b16 %v69
  %v287 = vunpack.c.h.b16 %v69
  %v288 = vunpack.c.l.b16 %v70
  %v289 = vunpack.c.h.b16 %v70
  %v290 = vunpack.c.l.b16 %v71
  %v291 = vunpack.c.h.b16 %v71
  %v292 = vunpack.c.l.b16 %v72
  %v293 = vunpack.c.h.b16 %v72
  %v294 = vunpack.c.l.b16 %v73
  %v295 = vunpack.c.h.b16 %v73
  %v296 = vunpack.c.l.b16 %v74
  %v297 = vunpack.c.h.b16 %v74
  %v298 = vunpack.c.l.b16 %v75
  %v299 = vunpack.c.h.b16 %v75
  %v300 = vunpack.c.l.b16 %v76
  %v301 = vunpack.c.h.b16 %v76
  %v302 = vunpack.c.l.b16 %v77
  %v303 = vunpack.c.h.b16 %v77
  %v304 = vunpack.c.l.b16 %v78
  %v305 = vunpack.c.h.b16 %v78
  %v306 = vunpack.c.l.b16 %v79
  %v307 = vunpack.c.h.b16 %v79
  %v308 = vpack.c.b16 %v184, %v180
  %v309 = vpack.c.b16 %v185, %v181
  %v310 = vpack.c.b16 %v186, %v182
  %v311 = vpack.c.b16 %v187, %v183
  %v312 = vpack.c.b16 %v192, %v188
  %v313 = vpack.c.b16 %v193, %v189
  %v314 = vpack.c.b16 %v194, %v190
  %v315 = vpack.c.b16 %v195, %v191
  %v316 = vpack.c.b16 %v200, %v196
  %v317 = vpack.c.b16 %v201, %v197
  %v318 = vpack.c.b16 %v202, %v198
  %v319 = vpack.c.b16 %v203, %v199
  %v320 = vpack.c.b16 %v208, %v204
  %v321 = vpack.c.b16 %v209, %v205
  %v322 = vpack.c.b16 %v210, %v206
  %v323 = vpack.c.b16 %v211, %v207
  %v324 = vpack.c.b16 %v216, %v212
  %v325 = vpack.c.b16 %v217, %v213
  %v326 = vpack.c.b16 %v218, %v214
  %v327 = vpack.c.b16 %v219, %v215
  %v328 = vpack.c.b16 %v224, %v220
  %v329 = vpack.c.b16 %v225, %v221
  %v330 = vpack.c.b16 %v226, %v222
  %v331 = vpack.c.b16 %v227, %v223
  %v332 = vpack.c.b16 %v232, %v228
  %v333 = vpack.c.b16 %v233, %v229
  %v334 = vpack.c.b16 %v234, %v230
  %v335 = vpack.c.b16 %v235, %v231
  %v336 = vpack.c.b16 %v240, %v236
  %v337 = vpack.c.b16 %v241, %v237
  %v338 = vpack.c.b16 %v242, %v238
  %v339 = vpack.c.b16 %v243, %v239
  %v340 = vpack.c.b16 %v248, %v244
  %v341 = vpack.c.b16 %v249, %v245
  %v342 = vpack.c.b16 %v250, %v246
  %v343 = vpack.c.b16 %v251, %v247
  %v344 = vpack.c.b16 %v256, %v252
  %v345 = vpack.c.b16 %v257, %v253
  %v346 = vpack.c.b16 %v258, %v254
  %v347 = vpack.c.b16 %v259, %v255
  %v348 = vpack.c.b16 %v264, %v260
  %v349 = vpack.c.b16 %v265, %v261
  %v350 = vpack.c.b16 %v266, %v262
  %v351 = vpack.c.b16 %v267, %v263
  %v352 = vpack.c.b16 %v272, %v268
  %v353 = vpack.c.b16 %v273, %v269
  %v354 = vpack.c.b16 %v274, %v270
  %v355 = vpack.c.b16 %v275, %v271
  %v356 = vpack.c.b16 %v280, %v276
  %v357 = vpack.c.b16 %v281, %v277
  %v358 = vpack.c.b16 %v282, %v278
  %v359 = vpack.c.b16 %v283, %v279
  %v360 = vpack.c.b16 %v288, %v284
  %v361 = vpack.c.b16 %v289, %v285
  %v362 = vpack.c.b16 %v290, %v286
  %v363 = vpack.c.b16 %v291, %v287
  %v364 = vpack.c.b16 %v296, %v292
  %v365 = vpack.c.b16 %v297, %v293
  %v366 = vpack.c.b16 %v298, %v294
  %v367 = vpack.c.b16 %v299, %v295
  %v368 = vpack.c.b16 %v304, %v300
  %v369 = vpack.c.b16 %v305, %v301
  %v370 = vpack.c.b16 %v306, %v302
  %v371 = vpack.c.b16 %v307, %v303
  %436 = vmatprep.subr.bf16.mxu0 %v337
  %437 = vmatpush1.bf16.msra.mxu0 %v336
  %438 = vmatprep.subr.bf16.mxu0 %v333
  %439 = vmatpush1.bf16.msra.mxu0 %v332
  %440 = vmatprep.subr.bf16.mxu0 %v329
  %441 = vmatpush1.bf16.msra.mxu0 %v328
  %442 = vmatprep.subr.bf16.mxu0 %v325
  %443 = vmatpush1.bf16.msra.mxu0 %v324
  %444 = vmatprep.subr.bf16.mxu0 %v321
  %445 = vmatpush1.bf16.msra.mxu0 %v320
  %446 = vmatprep.subr.bf16.mxu0 %v317
  %447 = vmatpush1.bf16.msra.mxu0 %v316
  %448 = vmatprep.subr.bf16.mxu0 %v313
  %449 = vmatpush1.bf16.msra.mxu0 %v312
  %450 = vmatprep.subr.bf16.mxu0 %v309
  %451 = vmatpush1.bf16.msra.mxu0 %v308
  %452 = vmatprep.subr.bf16.mxu0 %v369
  %453 = vmatpush2.bf16.msra.mxu0 %v368
  %454 = vmatprep.subr.bf16.mxu0 %v365
  %455 = vmatpush2.bf16.msra.mxu0 %v364
  %456 = vmatprep.subr.bf16.mxu0 %v361
  %457 = vmatpush2.bf16.msra.mxu0 %v360
  %458 = vmatprep.subr.bf16.mxu0 %v357
  %459 = vmatpush2.bf16.msra.mxu0 %v356
  %460 = vmatprep.subr.bf16.mxu0 %v353
  %461 = vmatpush2.bf16.msra.mxu0 %v352
  %462 = vmatprep.subr.bf16.mxu0 %v349
  %463 = vmatpush2.bf16.msra.mxu0 %v348
  %464 = vmatprep.subr.bf16.mxu0 %v345
  %465 = vmatpush2.bf16.msra.mxu0 %v344
  %466 = vmatprep.subr.bf16.mxu0 %v341
  %467 = vmatpush2.bf16.msra.mxu0 %v340
  %468 = vmatprep.mubr.bf16.mxu0 %v113
  %469 = vmatmul.mubr.bf16.gmra.mxu0 %v106
  %v470 = vpop.f32.mrf.mxu0
  %v471 = vadd.f32 %v90, %v470
  %v472 = vpop.f32.mrf.mxu0
  %v473 = vadd.f32 %v90, %v472
  %v474 = vpop.f32.mrf.mxu0
  %v475 = vpop.f32.mrf.mxu0
  %476 = vdwg.mxu0
  %477 = vmatprep.subr.bf16.mxu0 %v339
  %478 = vmatpush1.bf16.msra.mxu0 %v338
  %479 = vmatprep.subr.bf16.mxu0 %v335
  %480 = vmatpush1.bf16.msra.mxu0 %v334
  %481 = vmatprep.subr.bf16.mxu0 %v331
  %482 = vmatpush1.bf16.msra.mxu0 %v330
  %483 = vmatprep.subr.bf16.mxu0 %v327
  %484 = vmatpush1.bf16.msra.mxu0 %v326
  %485 = vmatprep.subr.bf16.mxu0 %v323
  %486 = vmatpush1.bf16.msra.mxu0 %v322
  %487 = vmatprep.subr.bf16.mxu0 %v319
  %488 = vmatpush1.bf16.msra.mxu0 %v318
  %489 = vmatprep.subr.bf16.mxu0 %v315
  %490 = vmatpush1.bf16.msra.mxu0 %v314
  %491 = vmatprep.subr.bf16.mxu0 %v311
  %492 = vmatpush1.bf16.msra.mxu0 %v310
  %493 = vmatprep.subr.bf16.mxu0 %v371
  %494 = vmatpush2.bf16.msra.mxu0 %v370
  %495 = vmatprep.subr.bf16.mxu0 %v367
  %496 = vmatpush2.bf16.msra.mxu0 %v366
  %497 = vmatprep.subr.bf16.mxu0 %v363
  %498 = vmatpush2.bf16.msra.mxu0 %v362
  %499 = vmatprep.subr.bf16.mxu0 %v359
  %500 = vmatpush2.bf16.msra.mxu0 %v358
  %501 = vmatprep.subr.bf16.mxu0 %v355
  %502 = vmatpush2.bf16.msra.mxu0 %v354
  %503 = vmatprep.subr.bf16.mxu0 %v351
  %504 = vmatpush2.bf16.msra.mxu0 %v350
  %505 = vmatprep.subr.bf16.mxu0 %v347
  %506 = vmatpush2.bf16.msra.mxu0 %v346
  %507 = vmatprep.subr.bf16.mxu0 %v343
  %508 = vmatpush2.bf16.msra.mxu0 %v342
  %509 = vmatprep.mubr.bf16.mxu0 %v113
  %510 = vmatmul.mubr.bf16.gmra.mxu0 %v106
  %v511 = vpop.f32.mrf.mxu0
  %v512 = vadd.f32 %v90, %v511
  %v513 = vpop.f32.mrf.mxu0
  %v514 = vadd.f32 %v90, %v513
  %v515 = vpop.f32.mrf.mxu0
  %v516 = vpop.f32.mrf.mxu0
  %517 = vdwg.mxu0
  %v522 = vcombine.low %v471, %v473
  %v523 = vcombine.low %v512, %v514
  %v525 = vunpack.c.l.s4 1966171168
  %v526 = vunpack.c.0.s8 %v525
  %v527 = vlaneseq
  %v528 = vshrl.u32 %v527, 7
  %v529 = vsub.s32 %v526, %v528
  %v530 = vrot.slane %v522, %v529
  %v532 = vunpack.c.l.s4 1966171168
  %v533 = vunpack.c.0.s8 %v532
  %v534 = vlaneseq
  %v535 = vshrl.u32 %v534, 7
  %v536 = vsub.s32 %v533, %v535
  %v537 = vrot.slane %v523, %v536
  %v538 = vcombine.low %v530, %v537
  %v540 = vunpack.c.l.s4 1966171168
  %v541 = vunpack.c.0.s8 %v540
  %v542 = vlaneseq
  %v543 = vshrl.u32 %v542, 7
  %v544 = vsub.s32 %v541, %v543
  %v545 = vrot.slane %v538, %v544
  %v547 = vlaneseq
  %vm548 = vcmp.ge.s32.totalorder %v547, 0
  %vm549 = vcmp.lt.s32.totalorder %v547, 512
  %vm550 = vmand %vm548, %vm549
  %551 = vst.msk [vmem:[%s3] sm:$0xf] %vm550, %v545
  // Predicated region
  $region14: #{mmslim_forward.72} parent=0 // pred_check
    _
  $region15: #{mmslim_forward.72} parent=0 // pred_check_branch
    %553 = sbr.rel (0) target = $region17
  $region16: #{mmslim_forward.72} parent=0 // pred_region
    _
  $region17: #{mmslim_forward.72} parent=0 // pred_fallthru
    _
  // Predicated region
  $region18: #{mmslim_forward.72} parent=0 // pred_check
    _
  $region19: #{mmslim_forward.72} parent=0 // pred_check_branch
    %555 = sbr.rel (0) target = $region21
  $region20: #{mmslim_forward.72} parent=0 // pred_region
    _
  $region21: #{mmslim_forward.72} parent=0 // pred_fallthru
    _

// kernel: mmslim_forward.73
$region0: #{mmslim_forward.73}
  #allocation0 [shape = 'u32[]', space=smem, size = 0x4, offset = 0x4, fixed_abs, tag = 'smem constant byte address 0x4 - core index']
  #allocation1 [shape = 'u32[144,128]{1,0:T(1,128)}', space=vmem, size = 0x12000, scoped, tag = 'internal scratch']
  %s0 = inlined_call_operand.vmem [shape: f32[1,512], index: 0, kind: input, shape index: {}]
  %s1 = inlined_call_operand.vmem [shape: f32[1,512], index: 1, kind: input, shape index: {}]
  %s2 = inlined_call_operand.vmem [shape: f32[1,512], index: 2, kind: output, shape index: {}]
  %s3 = sld [smem:[#allocation0]]
  $region18: #{mmslim_forward.73} parent=0
    _
  %s5 = ssub.s32 1, %s3
  %s6 = scalar_select 0, %s5, %s3
  // Predicated region
  $region2: #{mmslim_forward.73} parent=0 // pred_check
    _
  $region3: #{mmslim_forward.73} parent=0 // pred_check_branch
    %8 = sbr.rel (0) target = $region5
  $region4: #{mmslim_forward.73} parent=0 // pred_region
    _
  $region5: #{mmslim_forward.73} parent=0 // pred_fallthru
    _
  // Predicated region
  $region6: #{mmslim_forward.73} parent=0 // pred_check
    _
  $region7: #{mmslim_forward.73} parent=0 // pred_check_branch
    %10 = sbr.rel (0) target = $region9
  $region8: #{mmslim_forward.73} parent=0 // pred_region
    _
  $region9: #{mmslim_forward.73} parent=0 // pred_fallthru
    _
  %v11 = vld [vmem:[%s0] sm:$0xf]
  %v12 = vld [vmem:[%s1] sm:$0xf]
  %v13 = vadd.f32 %v11, %v12
  %v14 = vsub.f32 0.0, %v13
  %v15 = vlaneseq
  %vm16 = vcmp.ge.s32.totalorder %v15, 0
  %vm17 = vcmp.lt.s32.totalorder %v15, 512
  %vm18 = vmand %vm16, %vm17
  %19 = vst.msk [vmem:[%s2] sm:$0xf] %vm18, %v14
  // Predicated region
  $region10: #{mmslim_forward.73} parent=0 // pred_check
    _
  $region11: #{mmslim_forward.73} parent=0 // pred_check_branch
    %21 = sbr.rel (0) target = $region13
  $region12: #{mmslim_forward.73} parent=0 // pred_region
    _
  $region13: #{mmslim_forward.73} parent=0 // pred_fallthru
    _
  // Predicated region
  $region14: #{mmslim_forward.73} parent=0 // pred_check
    _
  $region15: #{mmslim_forward.73} parent=0 // pred_check_branch
    %23 = sbr.rel (0) target = $region17
  $region16: #{mmslim_forward.73} parent=0 // pred_region
    _
  $region17: #{mmslim_forward.73} parent=0 // pred_fallthru
    _

// kernel: mmslim_forward.75
$region0: #{mmslim_forward.75}
  #allocation0 [shape = 'u32[]', space=smem, size = 0x4, offset = 0x4, fixed_abs, tag = 'smem constant byte address 0x4 - core index']
  #allocation1 [shape = 'u32[144,128]{1,0:T(1,128)}', space=vmem, size = 0x12000, scoped, tag = 'internal scratch']
  %s0 = inlined_call_operand.vmem [shape: f32[2,26,26], index: 0, kind: input, shape index: {}]
  %s1 = inlined_call_operand.vmem [shape: f32[2,26,26], index: 1, kind: input, shape index: {}]
  %s2 = inlined_call_operand.hbm [shape: f32[1,1], index: 2, kind: output, shape index: {}]
  %s3 = sld [smem:[#allocation0]]
  $region18: #{mmslim_forward.75} parent=0
    _
  %s5 = ssub.s32 1, %s3
  %s6 = scalar_select 0, %s5, %s3
  $region1: #{mmslim_forward.75} parent=0
    #allocation2 [shape = 'u8[512]{0}', space=vmem, size = 0x400, scoped, tag = 'output window, operand 0, single buffered']
    #allocation3 [shape = 's32[1]{0}', space=sflag, size = 0x4, scoped, tag = 'scoped memory for mmslim_forward.75']
    %7 = vsyncpa [#allocation3], 0
    // Predicated region
    $region2: #{mmslim_forward.75} parent=1 // pred_check
      _
    $region3: #{mmslim_forward.75} parent=1 // pred_check_branch
      %9 = sbr.rel (0) target = $region5
    $region4: #{mmslim_forward.75} parent=1 // pred_region
      _
    $region5: #{mmslim_forward.75} parent=1 // pred_fallthru
      _
    // Predicated region
    $region6: #{mmslim_forward.75} parent=1 // pred_check
      _
    $region7: #{mmslim_forward.75} parent=1 // pred_check_branch
      %11 = sbr.rel (0) target = $region9
    $region8: #{mmslim_forward.75} parent=1 // pred_region
      _
    $region9: #{mmslim_forward.75} parent=1 // pred_fallthru
      _
    %v12 = vld [vmem:[%s0] sm:$0xff]
    %v13 = vld [vmem:[%s0 + $0x8] sm:$0xff]
    %v14 = vld [vmem:[%s0 + $0x10] sm:$0xff]
    %v15 = vld [vmem:[%s0 + $0x18] sm:$0x3]
    %v16 = vld [vmem:[%s1] sm:$0xff]
    %v17 = vld [vmem:[%s1 + $0x8] sm:$0xff]
    %v18 = vld [vmem:[%s1 + $0x10] sm:$0xff]
    %v19 = vld [vmem:[%s1 + $0x18] sm:$0x3]
    %24 = vrot.lane.b32.xlu0 %v12, 127
    %v25 = vpop.permute.xlu0 %24
    %26 = vrot.lane.b32.xlu0 %v13, 127
    %v27 = vpop.permute.xlu0 %26
    %28 = vrot.lane.b32.xlu0 %v14, 127
    %v29 = vpop.permute.xlu0 %28
    %30 = vrot.lane.b32.xlu0 %v15, 127
    %v31 = vpop.permute.xlu0 %30
    %v36 = vadd.f32 %v12, %v25
    %v37 = vadd.f32 %v13, %v27
    %v38 = vadd.f32 %v14, %v29
    %v39 = vadd.f32 %v15, %v31
    %40 = vrot.lane.b32.xlu0 %v12, 126
    %v41 = vpop.permute.xlu0 %40
    %42 = vrot.lane.b32.xlu0 %v13, 126
    %v43 = vpop.permute.xlu0 %42
    %44 = vrot.lane.b32.xlu0 %v14, 126
    %v45 = vpop.permute.xlu0 %44
    %46 = vrot.lane.b32.xlu0 %v15, 126
    %v47 = vpop.permute.xlu0 %46
    %v52 = vadd.f32 %v36, %v41
    %v53 = vadd.f32 %v37, %v43
    %v54 = vadd.f32 %v38, %v45
    %v55 = vadd.f32 %v39, %v47
    %56 = vrot.lane.b32.xlu0 %v12, 125
    %v57 = vpop.permute.xlu0 %56
    %58 = vrot.lane.b32.xlu0 %v13, 125
    %v59 = vpop.permute.xlu0 %58
    %60 = vrot.lane.b32.xlu0 %v14, 125
    %v61 = vpop.permute.xlu0 %60
    %62 = vrot.lane.b32.xlu0 %v15, 125
    %v63 = vpop.permute.xlu0 %62
    %v68 = vadd.f32 %v52, %v57
    %v69 = vadd.f32 %v53, %v59
    %v70 = vadd.f32 %v54, %v61
    %v71 = vadd.f32 %v55, %v63
    %72 = vrot.lane.b32.xlu0 %v12, 124
    %v73 = vpop.permute.xlu0 %72
    %74 = vrot.lane.b32.xlu0 %v13, 124
    %v75 = vpop.permute.xlu0 %74
    %76 = vrot.lane.b32.xlu0 %v14, 124
    %v77 = vpop.permute.xlu0 %76
    %78 = vrot.lane.b32.xlu0 %v15, 124
    %v79 = vpop.permute.xlu0 %78
    %v84 = vadd.f32 %v68, %v73
    %v85 = vadd.f32 %v69, %v75
    %v86 = vadd.f32 %v70, %v77
    %v87 = vadd.f32 %v71, %v79
    %88 = vrot.lane.b32.xlu0 %v12, 123
    %v89 = vpop.permute.xlu0 %88
    %90 = vrot.lane.b32.xlu0 %v13, 123
    %v91 = vpop.permute.xlu0 %90
    %92 = vrot.lane.b32.xlu0 %v14, 123
    %v93 = vpop.permute.xlu0 %92
    %94 = vrot.lane.b32.xlu0 %v15, 123
    %v95 = vpop.permute.xlu0 %94
    %v100 = vadd.f32 %v84, %v89
    %v101 = vadd.f32 %v85, %v91
    %v102 = vadd.f32 %v86, %v93
    %v103 = vadd.f32 %v87, %v95
    %104 = vrot.lane.b32.xlu0 %v12, 122
    %v105 = vpop.permute.xlu0 %104
    %106 = vrot.lane.b32.xlu0 %v13, 122
    %v107 = vpop.permute.xlu0 %106
    %108 = vrot.lane.b32.xlu0 %v14, 122
    %v109 = vpop.permute.xlu0 %108
    %110 = vrot.lane.b32.xlu0 %v15, 122
    %v111 = vpop.permute.xlu0 %110
    %v116 = vadd.f32 %v100, %v105
    %v117 = vadd.f32 %v101, %v107
    %v118 = vadd.f32 %v102, %v109
    %v119 = vadd.f32 %v103, %v111
    %120 = vrot.lane.b32.xlu0 %v12, 121
    %v121 = vpop.permute.xlu0 %120
    %122 = vrot.lane.b32.xlu0 %v13, 121
    %v123 = vpop.permute.xlu0 %122
    %124 = vrot.lane.b32.xlu0 %v14, 121
    %v125 = vpop.permute.xlu0 %124
    %126 = vrot.lane.b32.xlu0 %v15, 121
    %v127 = vpop.permute.xlu0 %126
    %v132 = vadd.f32 %v116, %v121
    %v133 = vadd.f32 %v117, %v123
    %v134 = vadd.f32 %v118, %v125
    %v135 = vadd.f32 %v119, %v127
    %136 = vrot.lane.b32.xlu0 %v12, 120
    %v137 = vpop.permute.xlu0 %136
    %138 = vrot.lane.b32.xlu0 %v13, 120
    %v139 = vpop.permute.xlu0 %138
    %140 = vrot.lane.b32.xlu0 %v14, 120
    %v141 = vpop.permute.xlu0 %140
    %142 = vrot.lane.b32.xlu0 %v15, 120
    %v143 = vpop.permute.xlu0 %142
    %v148 = vadd.f32 %v132, %v137
    %v149 = vadd.f32 %v133, %v139
    %v150 = vadd.f32 %v134, %v141
    %v151 = vadd.f32 %v135, %v143
    %152 = vrot.lane.b32.xlu0 %v12, 119
    %v153 = vpop.permute.xlu0 %152
    %154 = vrot.lane.b32.xlu0 %v13, 119
    %v155 = vpop.permute.xlu0 %154
    %156 = vrot.lane.b32.xlu0 %v14, 119
    %v157 = vpop.permute.xlu0 %156
    %158 = vrot.lane.b32.xlu0 %v15, 119
    %v159 = vpop.permute.xlu0 %158
    %v164 = vadd.f32 %v148, %v153
    %v165 = vadd.f32 %v149, %v155
    %v166 = vadd.f32 %v150, %v157
    %v167 = vadd.f32 %v151, %v159
    %168 = vrot.lane.b32.xlu0 %v12, 118
    %v169 = vpop.permute.xlu0 %168
    %170 = vrot.lane.b32.xlu0 %v13, 118
    %v171 = vpop.permute.xlu0 %170
    %172 = vrot.lane.b32.xlu0 %v14, 118
    %v173 = vpop.permute.xlu0 %172
    %174 = vrot.lane.b32.xlu0 %v15, 118
    %v175 = vpop.permute.xlu0 %174
    %v180 = vadd.f32 %v164, %v169
    %v181 = vadd.f32 %v165, %v171
    %v182 = vadd.f32 %v166, %v173
    %v183 = vadd.f32 %v167, %v175
    %vm187 = vcmask 1046528
    %v188 = vrot.slane %v180, 1
    %v189 = vrot.slane %v181, 1
    %v190 = vsel %vm187, %v188, %v189
    %v191 = vrot.slane %v182, 1
    %v192 = vsel %vm187, %v189, %v191
    %v195 = vadd.f32 %v180, %v190
    %v196 = vadd.f32 %v181, %v192
    %vm197 = vcmask 1045504
    %v198 = vrot.slane %v180, 2
    %v199 = vrot.slane %v181, 2
    %v200 = vsel %vm197, %v198, %v199
    %v201 = vrot.slane %v182, 2
    %v202 = vsel %vm197, %v199, %v201
    %v205 = vadd.f32 %v195, %v200
    %v206 = vadd.f32 %v196, %v202
    %vm207 = vcmask 1044480
    %v208 = vrot.slane %v180, 3
    %v209 = vrot.slane %v181, 3
    %v210 = vsel %vm207, %v208, %v209
    %v211 = vrot.slane %v182, 3
    %v212 = vsel %vm207, %v209, %v211
    %v215 = vadd.f32 %v205, %v210
    %v216 = vadd.f32 %v206, %v212
    %vm217 = vcmask 1043456
    %v218 = vrot.slane %v180, 4
    %v219 = vrot.slane %v181, 4
    %v220 = vsel %vm217, %v218, %v219
    %v221 = vrot.slane %v182, 4
    %v222 = vsel %vm217, %v219, %v221
    %v225 = vadd.f32 %v215, %v220
    %v226 = vadd.f32 %v216, %v222
    %vm227 = vcmask 1042432
    %v228 = vrot.slane %v180, 5
    %v229 = vrot.slane %v181, 5
    %v230 = vsel %vm227, %v228, %v229
    %v231 = vrot.slane %v182, 5
    %v232 = vsel %vm227, %v229, %v231
    %v235 = vadd.f32 %v225, %v230
    %v236 = vadd.f32 %v226, %v232
    %vm237 = vcmask 1041408
    %v238 = vrot.slane %v180, 6
    %v239 = vrot.slane %v181, 6
    %v240 = vsel %vm237, %v238, %v239
    %v241 = vrot.slane %v182, 6
    %v242 = vsel %vm237, %v239, %v241
    %v245 = vadd.f32 %v235, %v240
    %v246 = vadd.f32 %v236, %v242
    %vm247 = vcmask 1040384
    %v248 = vrot.slane %v180, 7
    %v249 = vrot.slane %v181, 7
    %v250 = vsel %vm247, %v248, %v249
    %v251 = vrot.slane %v182, 7
    %v252 = vsel %vm247, %v249, %v251
    %v255 = vadd.f32 %v245, %v250
    %v256 = vadd.f32 %v246, %v252
    %v257 = vadd.f32 %v255, %v181
    %v258 = vadd.f32 %v256, %v182
    %v260 = vrot.slane %v183, 1
    %v261 = vsel %vm187, %v191, %v260
    %v263 = vadd.f32 %v257, %v192
    %v264 = vadd.f32 %v258, %v261
    %v265 = vrot.slane %v183, 2
    %v266 = vsel %vm197, %v201, %v265
    %v268 = vadd.f32 %v263, %v202
    %v269 = vadd.f32 %v264, %v266
    %v270 = vmul.f32 %v268, 0.008264462
    %v271 = vmul.f32 %v269, 0.008264462
    %276 = vrot.lane.b32.xlu0 %v16, 127
    %v277 = vpop.permute.xlu0 %276
    %278 = vrot.lane.b32.xlu0 %v17, 127
    %v279 = vpop.permute.xlu0 %278
    %280 = vrot.lane.b32.xlu0 %v18, 127
    %v281 = vpop.permute.xlu0 %280
    %282 = vrot.lane.b32.xlu0 %v19, 127
    %v283 = vpop.permute.xlu0 %282
    %v288 = vadd.f32 %v16, %v277
    %v289 = vadd.f32 %v17, %v279
    %v290 = vadd.f32 %v18, %v281
    %v291 = vadd.f32 %v19, %v283
    %292 = vrot.lane.b32.xlu0 %v16, 126
    %v293 = vpop.permute.xlu0 %292
    %294 = vrot.lane.b32.xlu0 %v17, 126
    %v295 = vpop.permute.xlu0 %294
    %296 = vrot.lane.b32.xlu0 %v18, 126
    %v297 = vpop.permute.xlu0 %296
    %298 = vrot.lane.b32.xlu0 %v19, 126
    %v299 = vpop.permute.xlu0 %298
    %v304 = vadd.f32 %v288, %v293
    %v305 = vadd.f32 %v289, %v295
    %v306 = vadd.f32 %v290, %v297
    %v307 = vadd.f32 %v291, %v299
    %308 = vrot.lane.b32.xlu0 %v16, 125
    %v309 = vpop.permute.xlu0 %308
    %310 = vrot.lane.b32.xlu0 %v17, 125
    %v311 = vpop.permute.xlu0 %310
    %312 = vrot.lane.b32.xlu0 %v18, 125
    %v313 = vpop.permute.xlu0 %312
    %314 = vrot.lane.b32.xlu0 %v19, 125
    %v315 = vpop.permute.xlu0 %314
    %v320 = vadd.f32 %v304, %v309
    %v321 = vadd.f32 %v305, %v311
    %v322 = vadd.f32 %v306, %v313
    %v323 = vadd.f32 %v307, %v315
    %324 = vrot.lane.b32.xlu0 %v16, 124
    %v325 = vpop.permute.xlu0 %324
    %326 = vrot.lane.b32.xlu0 %v17, 124
    %v327 = vpop.permute.xlu0 %326
    %328 = vrot.lane.b32.xlu0 %v18, 124
    %v329 = vpop.permute.xlu0 %328
    %330 = vrot.lane.b32.xlu0 %v19, 124
    %v331 = vpop.permute.xlu0 %330
    %v336 = vadd.f32 %v320, %v325
    %v337 = vadd.f32 %v321, %v327
    %v338 = vadd.f32 %v322, %v329
    %v339 = vadd.f32 %v323, %v331
    %340 = vrot.lane.b32.xlu0 %v16, 123
    %v341 = vpop.permute.xlu0 %340
    %342 = vrot.lane.b32.xlu0 %v17, 123
    %v343 = vpop.permute.xlu0 %342
    %344 = vrot.lane.b32.xlu0 %v18, 123
    %v345 = vpop.permute.xlu0 %344
    %346 = vrot.lane.b32.xlu0 %v19, 123
    %v347 = vpop.permute.xlu0 %346
    %v352 = vadd.f32 %v336, %v341
    %v353 = vadd.f32 %v337, %v343
    %v354 = vadd.f32 %v338, %v345
    %v355 = vadd.f32 %v339, %v347
    %356 = vrot.lane.b32.xlu0 %v16, 122
    %v357 = vpop.permute.xlu0 %356
    %358 = vrot.lane.b32.xlu0 %v17, 122
    %v359 = vpop.permute.xlu0 %358
    %360 = vrot.lane.b32.xlu0 %v18, 122
    %v361 = vpop.permute.xlu0 %360
    %362 = vrot.lane.b32.xlu0 %v19, 122
    %v363 = vpop.permute.xlu0 %362
    %v368 = vadd.f32 %v352, %v357
    %v369 = vadd.f32 %v353, %v359
    %v370 = vadd.f32 %v354, %v361
    %v371 = vadd.f32 %v355, %v363
    %372 = vrot.lane.b32.xlu0 %v16, 121
    %v373 = vpop.permute.xlu0 %372
    %374 = vrot.lane.b32.xlu0 %v17, 121
    %v375 = vpop.permute.xlu0 %374
    %376 = vrot.lane.b32.xlu0 %v18, 121
    %v377 = vpop.permute.xlu0 %376
    %378 = vrot.lane.b32.xlu0 %v19, 121
    %v379 = vpop.permute.xlu0 %378
    %v384 = vadd.f32 %v368, %v373
    %v385 = vadd.f32 %v369, %v375
    %v386 = vadd.f32 %v370, %v377
    %v387 = vadd.f32 %v371, %v379
    %388 = vrot.lane.b32.xlu0 %v16, 120
    %v389 = vpop.permute.xlu0 %388
    %390 = vrot.lane.b32.xlu0 %v17, 120
    %v391 = vpop.permute.xlu0 %390
    %392 = vrot.lane.b32.xlu0 %v18, 120
    %v393 = vpop.permute.xlu0 %392
    %394 = vrot.lane.b32.xlu0 %v19, 120
    %v395 = vpop.permute.xlu0 %394
    %v400 = vadd.f32 %v384, %v389
    %v401 = vadd.f32 %v385, %v391
    %v402 = vadd.f32 %v386, %v393
    %v403 = vadd.f32 %v387, %v395
    %404 = vrot.lane.b32.xlu0 %v16, 119
    %v405 = vpop.permute.xlu0 %404
    %406 = vrot.lane.b32.xlu0 %v17, 119
    %v407 = vpop.permute.xlu0 %406
    %408 = vrot.lane.b32.xlu0 %v18, 119
    %v409 = vpop.permute.xlu0 %408
    %410 = vrot.lane.b32.xlu0 %v19, 119
    %v411 = vpop.permute.xlu0 %410
    %v416 = vadd.f32 %v400, %v405
    %v417 = vadd.f32 %v401, %v407
    %v418 = vadd.f32 %v402, %v409
    %v419 = vadd.f32 %v403, %v411
    %420 = vrot.lane.b32.xlu0 %v16, 118
    %v421 = vpop.permute.xlu0 %420
    %422 = vrot.lane.b32.xlu0 %v17, 118
    %v423 = vpop.permute.xlu0 %422
    %424 = vrot.lane.b32.xlu0 %v18, 118
    %v425 = vpop.permute.xlu0 %424
    %426 = vrot.lane.b32.xlu0 %v19, 118
    %v427 = vpop.permute.xlu0 %426
    %v432 = vadd.f32 %v416, %v421
    %v433 = vadd.f32 %v417, %v423
    %v434 = vadd.f32 %v418, %v425
    %v435 = vadd.f32 %v419, %v427
    %v439 = vrot.slane %v432, 1
    %v440 = vrot.slane %v433, 1
    %v441 = vsel %vm187, %v439, %v440
    %v442 = vrot.slane %v434, 1
    %v443 = vsel %vm187, %v440, %v442
    %v446 = vadd.f32 %v432, %v441
    %v447 = vadd.f32 %v433, %v443
    %v448 = vrot.slane %v432, 2
    %v449 = vrot.slane %v433, 2
    %v450 = vsel %vm197, %v448, %v449
    %v451 = vrot.slane %v434, 2
    %v452 = vsel %vm197, %v449, %v451
    %v455 = vadd.f32 %v446, %v450
    %v456 = vadd.f32 %v447, %v452
    %v457 = vrot.slane %v432, 3
    %v458 = vrot.slane %v433, 3
    %v459 = vsel %vm207, %v457, %v458
    %v460 = vrot.slane %v434, 3
    %v461 = vsel %vm207, %v458, %v460
    %v464 = vadd.f32 %v455, %v459
    %v465 = vadd.f32 %v456, %v461
    %v466 = vrot.slane %v432, 4
    %v467 = vrot.slane %v433, 4
    %v468 = vsel %vm217, %v466, %v467
    %v469 = vrot.slane %v434, 4
    %v470 = vsel %vm217, %v467, %v469
    %v473 = vadd.f32 %v464, %v468
    %v474 = vadd.f32 %v465, %v470
    %v475 = vrot.slane %v432, 5
    %v476 = vrot.slane %v433, 5
    %v477 = vsel %vm227, %v475, %v476
    %v478 = vrot.slane %v434, 5
    %v479 = vsel %vm227, %v476, %v478
    %v482 = vadd.f32 %v473, %v477
    %v483 = vadd.f32 %v474, %v479
    %v484 = vrot.slane %v432, 6
    %v485 = vrot.slane %v433, 6
    %v486 = vsel %vm237, %v484, %v485
    %v487 = vrot.slane %v434, 6
    %v488 = vsel %vm237, %v485, %v487
    %v491 = vadd.f32 %v482, %v486
    %v492 = vadd.f32 %v483, %v488
    %v493 = vrot.slane %v432, 7
    %v494 = vrot.slane %v433, 7
    %v495 = vsel %vm247, %v493, %v494
    %v496 = vrot.slane %v434, 7
    %v497 = vsel %vm247, %v494, %v496
    %v500 = vadd.f32 %v491, %v495
    %v501 = vadd.f32 %v492, %v497
    %v502 = vadd.f32 %v500, %v433
    %v503 = vadd.f32 %v501, %v434
    %v505 = vrot.slane %v435, 1
    %v506 = vsel %vm187, %v442, %v505
    %v508 = vadd.f32 %v502, %v443
    %v509 = vadd.f32 %v503, %v506
    %v510 = vrot.slane %v435, 2
    %v511 = vsel %vm197, %v451, %v510
    %v513 = vadd.f32 %v508, %v452
    %v514 = vadd.f32 %v509, %v511
    %v515 = vmul.f32 %v513, 0.008264462
    %v516 = vmul.f32 %v514, 0.008264462
    %v517 = vmul.f32 %v12, %v12
    %v518 = vmul.f32 %v13, %v13
    %v519 = vmul.f32 %v14, %v14
    %v520 = vmul.f32 %v15, %v15
    %525 = vrot.lane.b32.xlu0 %v517, 127
    %v526 = vpop.permute.xlu0 %525
    %527 = vrot.lane.b32.xlu0 %v518, 127
    %v528 = vpop.permute.xlu0 %527
    %529 = vrot.lane.b32.xlu0 %v519, 127
    %v530 = vpop.permute.xlu0 %529
    %531 = vrot.lane.b32.xlu0 %v520, 127
    %v532 = vpop.permute.xlu0 %531
    %v537 = vadd.f32 %v517, %v526
    %v538 = vadd.f32 %v518, %v528
    %v539 = vadd.f32 %v519, %v530
    %v540 = vadd.f32 %v520, %v532
    %541 = vrot.lane.b32.xlu0 %v517, 126
    %v542 = vpop.permute.xlu0 %541
    %543 = vrot.lane.b32.xlu0 %v518, 126
    %v544 = vpop.permute.xlu0 %543
    %545 = vrot.lane.b32.xlu0 %v519, 126
    %v546 = vpop.permute.xlu0 %545
    %547 = vrot.lane.b32.xlu0 %v520, 126
    %v548 = vpop.permute.xlu0 %547
    %v553 = vadd.f32 %v537, %v542
    %v554 = vadd.f32 %v538, %v544
    %v555 = vadd.f32 %v539, %v546
    %v556 = vadd.f32 %v540, %v548
    %557 = vrot.lane.b32.xlu0 %v517, 125
    %v558 = vpop.permute.xlu0 %557
    %559 = vrot.lane.b32.xlu0 %v518, 125
    %v560 = vpop.permute.xlu0 %559
    %561 = vrot.lane.b32.xlu0 %v519, 125
    %v562 = vpop.permute.xlu0 %561
    %563 = vrot.lane.b32.xlu0 %v520, 125
    %v564 = vpop.permute.xlu0 %563
    %v569 = vadd.f32 %v553, %v558
    %v570 = vadd.f32 %v554, %v560
    %v571 = vadd.f32 %v555, %v562
    %v572 = vadd.f32 %v556, %v564
    %573 = vrot.lane.b32.xlu0 %v517, 124
    %v574 = vpop.permute.xlu0 %573
    %575 = vrot.lane.b32.xlu0 %v518, 124
    %v576 = vpop.permute.xlu0 %575
    %577 = vrot.lane.b32.xlu0 %v519, 124
    %v578 = vpop.permute.xlu0 %577
    %579 = vrot.lane.b32.xlu0 %v520, 124
    %v580 = vpop.permute.xlu0 %579
    %v585 = vadd.f32 %v569, %v574
    %v586 = vadd.f32 %v570, %v576
    %v587 = vadd.f32 %v571, %v578
    %v588 = vadd.f32 %v572, %v580
    %589 = vrot.lane.b32.xlu0 %v517, 123
    %v590 = vpop.permute.xlu0 %589
    %591 = vrot.lane.b32.xlu0 %v518, 123
    %v592 = vpop.permute.xlu0 %591
    %593 = vrot.lane.b32.xlu0 %v519, 123
    %v594 = vpop.permute.xlu0 %593
    %595 = vrot.lane.b32.xlu0 %v520, 123
    %v596 = vpop.permute.xlu0 %595
    %v601 = vadd.f32 %v585, %v590
    %v602 = vadd.f32 %v586, %v592
    %v603 = vadd.f32 %v587, %v594
    %v604 = vadd.f32 %v588, %v596
    %605 = vrot.lane.b32.xlu0 %v517, 122
    %v606 = vpop.permute.xlu0 %605
    %607 = vrot.lane.b32.xlu0 %v518, 122
    %v608 = vpop.permute.xlu0 %607
    %609 = vrot.lane.b32.xlu0 %v519, 122
    %v610 = vpop.permute.xlu0 %609
    %611 = vrot.lane.b32.xlu0 %v520, 122
    %v612 = vpop.permute.xlu0 %611
    %v617 = vadd.f32 %v601, %v606
    %v618 = vadd.f32 %v602, %v608
    %v619 = vadd.f32 %v603, %v610
    %v620 = vadd.f32 %v604, %v612
    %621 = vrot.lane.b32.xlu0 %v517, 121
    %v622 = vpop.permute.xlu0 %621
    %623 = vrot.lane.b32.xlu0 %v518, 121
    %v624 = vpop.permute.xlu0 %623
    %625 = vrot.lane.b32.xlu0 %v519, 121
    %v626 = vpop.permute.xlu0 %625
    %627 = vrot.lane.b32.xlu0 %v520, 121
    %v628 = vpop.permute.xlu0 %627
    %v633 = vadd.f32 %v617, %v622
    %v634 = vadd.f32 %v618, %v624
    %v635 = vadd.f32 %v619, %v626
    %v636 = vadd.f32 %v620, %v628
    %637 = vrot.lane.b32.xlu0 %v517, 120
    %v638 = vpop.permute.xlu0 %637
    %639 = vrot.lane.b32.xlu0 %v518, 120
    %v640 = vpop.permute.xlu0 %639
    %641 = vrot.lane.b32.xlu0 %v519, 120
    %v642 = vpop.permute.xlu0 %641
    %643 = vrot.lane.b32.xlu0 %v520, 120
    %v644 = vpop.permute.xlu0 %643
    %v649 = vadd.f32 %v633, %v638
    %v650 = vadd.f32 %v634, %v640
    %v651 = vadd.f32 %v635, %v642
    %v652 = vadd.f32 %v636, %v644
    %653 = vrot.lane.b32.xlu0 %v517, 119
    %v654 = vpop.permute.xlu0 %653
    %655 = vrot.lane.b32.xlu0 %v518, 119
    %v656 = vpop.permute.xlu0 %655
    %657 = vrot.lane.b32.xlu0 %v519, 119
    %v658 = vpop.permute.xlu0 %657
    %659 = vrot.lane.b32.xlu0 %v520, 119
    %v660 = vpop.permute.xlu0 %659
    %v665 = vadd.f32 %v649, %v654
    %v666 = vadd.f32 %v650, %v656
    %v667 = vadd.f32 %v651, %v658
    %v668 = vadd.f32 %v652, %v660
    %669 = vrot.lane.b32.xlu0 %v517, 118
    %v670 = vpop.permute.xlu0 %669
    %671 = vrot.lane.b32.xlu0 %v518, 118
    %v672 = vpop.permute.xlu0 %671
    %673 = vrot.lane.b32.xlu0 %v519, 118
    %v674 = vpop.permute.xlu0 %673
    %675 = vrot.lane.b32.xlu0 %v520, 118
    %v676 = vpop.permute.xlu0 %675
    %v681 = vadd.f32 %v665, %v670
    %v682 = vadd.f32 %v666, %v672
    %v683 = vadd.f32 %v667, %v674
    %v684 = vadd.f32 %v668, %v676
    %v688 = vrot.slane %v681, 1
    %v689 = vrot.slane %v682, 1
    %v690 = vsel %vm187, %v688, %v689
    %v691 = vrot.slane %v683, 1
    %v692 = vsel %vm187, %v689, %v691
    %v695 = vadd.f32 %v681, %v690
    %v696 = vadd.f32 %v682, %v692
    %v697 = vrot.slane %v681, 2
    %v698 = vrot.slane %v682, 2
    %v699 = vsel %vm197, %v697, %v698
    %v700 = vrot.slane %v683, 2
    %v701 = vsel %vm197, %v698, %v700
    %v704 = vadd.f32 %v695, %v699
    %v705 = vadd.f32 %v696, %v701
    %v706 = vrot.slane %v681, 3
    %v707 = vrot.slane %v682, 3
    %v708 = vsel %vm207, %v706, %v707
    %v709 = vrot.slane %v683, 3
    %v710 = vsel %vm207, %v707, %v709
    %v713 = vadd.f32 %v704, %v708
    %v714 = vadd.f32 %v705, %v710
    %v715 = vrot.slane %v681, 4
    %v716 = vrot.slane %v682, 4
    %v717 = vsel %vm217, %v715, %v716
    %v718 = vrot.slane %v683, 4
    %v719 = vsel %vm217, %v716, %v718
    %v722 = vadd.f32 %v713, %v717
    %v723 = vadd.f32 %v714, %v719
    %v724 = vrot.slane %v681, 5
    %v725 = vrot.slane %v682, 5
    %v726 = vsel %vm227, %v724, %v725
    %v727 = vrot.slane %v683, 5
    %v728 = vsel %vm227, %v725, %v727
    %v731 = vadd.f32 %v722, %v726
    %v732 = vadd.f32 %v723, %v728
    %v733 = vrot.slane %v681, 6
    %v734 = vrot.slane %v682, 6
    %v735 = vsel %vm237, %v733, %v734
    %v736 = vrot.slane %v683, 6
    %v737 = vsel %vm237, %v734, %v736
    %v740 = vadd.f32 %v731, %v735
    %v741 = vadd.f32 %v732, %v737
    %v742 = vrot.slane %v681, 7
    %v743 = vrot.slane %v682, 7
    %v744 = vsel %vm247, %v742, %v743
    %v745 = vrot.slane %v683, 7
    %v746 = vsel %vm247, %v743, %v745
    %v749 = vadd.f32 %v740, %v744
    %v750 = vadd.f32 %v741, %v746
    %v751 = vadd.f32 %v749, %v682
    %v752 = vadd.f32 %v750, %v683
    %v754 = vrot.slane %v684, 1
    %v755 = vsel %vm187, %v691, %v754
    %v757 = vadd.f32 %v751, %v692
    %v758 = vadd.f32 %v752, %v755
    %v759 = vrot.slane %v684, 2
    %v760 = vsel %vm197, %v700, %v759
    %v762 = vadd.f32 %v757, %v701
    %v763 = vadd.f32 %v758, %v760
    %v764 = vmul.f32 %v762, 0.008264462
    %v765 = vmul.f32 %v763, 0.008264462
    %v766 = vmul.f32 %v16, %v16
    %v767 = vmul.f32 %v17, %v17
    %v768 = vmul.f32 %v18, %v18
    %v769 = vmul.f32 %v19, %v19
    %774 = vrot.lane.b32.xlu0 %v766, 127
    %v775 = vpop.permute.xlu0 %774
    %776 = vrot.lane.b32.xlu0 %v767, 127
    %v777 = vpop.permute.xlu0 %776
    %778 = vrot.lane.b32.xlu0 %v768, 127
    %v779 = vpop.permute.xlu0 %778
    %780 = vrot.lane.b32.xlu0 %v769, 127
    %v781 = vpop.permute.xlu0 %780
    %v786 = vadd.f32 %v766, %v775
    %v787 = vadd.f32 %v767, %v777
    %v788 = vadd.f32 %v768, %v779
    %v789 = vadd.f32 %v769, %v781
    %790 = vrot.lane.b32.xlu0 %v766, 126
    %v791 = vpop.permute.xlu0 %790
    %792 = vrot.lane.b32.xlu0 %v767, 126
    %v793 = vpop.permute.xlu0 %792
    %794 = vrot.lane.b32.xlu0 %v768, 126
    %v795 = vpop.permute.xlu0 %794
    %796 = vrot.lane.b32.xlu0 %v769, 126
    %v797 = vpop.permute.xlu0 %796
    %v802 = vadd.f32 %v786, %v791
    %v803 = vadd.f32 %v787, %v793
    %v804 = vadd.f32 %v788, %v795
    %v805 = vadd.f32 %v789, %v797
    %806 = vrot.lane.b32.xlu0 %v766, 125
    %v807 = vpop.permute.xlu0 %806
    %808 = vrot.lane.b32.xlu0 %v767, 125
    %v809 = vpop.permute.xlu0 %808
    %810 = vrot.lane.b32.xlu0 %v768, 125
    %v811 = vpop.permute.xlu0 %810
    %812 = vrot.lane.b32.xlu0 %v769, 125
    %v813 = vpop.permute.xlu0 %812
    %v818 = vadd.f32 %v802, %v807
    %v819 = vadd.f32 %v803, %v809
    %v820 = vadd.f32 %v804, %v811
    %v821 = vadd.f32 %v805, %v813
    %822 = vrot.lane.b32.xlu0 %v766, 124
    %v823 = vpop.permute.xlu0 %822
    %824 = vrot.lane.b32.xlu0 %v767, 124
    %v825 = vpop.permute.xlu0 %824
    %826 = vrot.lane.b32.xlu0 %v768, 124
    %v827 = vpop.permute.xlu0 %826
    %828 = vrot.lane.b32.xlu0 %v769, 124
    %v829 = vpop.permute.xlu0 %828
    %v834 = vadd.f32 %v818, %v823
    %v835 = vadd.f32 %v819, %v825
    %v836 = vadd.f32 %v820, %v827
    %v837 = vadd.f32 %v821, %v829
    %838 = vrot.lane.b32.xlu0 %v766, 123
    %v839 = vpop.permute.xlu0 %838
    %840 = vrot.lane.b32.xlu0 %v767, 123
    %v841 = vpop.permute.xlu0 %840
    %842 = vrot.lane.b32.xlu0 %v768, 123
    %v843 = vpop.permute.xlu0 %842
    %844 = vrot.lane.b32.xlu0 %v769, 123
    %v845 = vpop.permute.xlu0 %844
    %v850 = vadd.f32 %v834, %v839
    %v851 = vadd.f32 %v835, %v841
    %v852 = vadd.f32 %v836, %v843
    %v853 = vadd.f32 %v837, %v845
    %854 = vrot.lane.b32.xlu0 %v766, 122
    %v855 = vpop.permute.xlu0 %854
    %856 = vrot.lane.b32.xlu0 %v767, 122
    %v857 = vpop.permute.xlu0 %856
    %858 = vrot.lane.b32.xlu0 %v768, 122
    %v859 = vpop.permute.xlu0 %858
    %860 = vrot.lane.b32.xlu0 %v769, 122
    %v861 = vpop.permute.xlu0 %860
    %v866 = vadd.f32 %v850, %v855
    %v867 = vadd.f32 %v851, %v857
    %v868 = vadd.f32 %v852, %v859
    %v869 = vadd.f32 %v853, %v861
    %870 = vrot.lane.b32.xlu0 %v766, 121
    %v871 = vpop.permute.xlu0 %870
    %872 = vrot.lane.b32.xlu0 %v767, 121
    %v873 = vpop.permute.xlu0 %872
    %874 = vrot.lane.b32.xlu0 %v768, 121
    %v875 = vpop.permute.xlu0 %874
    %876 = vrot.lane.b32.xlu0 %v769, 121
    %v877 = vpop.permute.xlu0 %876
    %v882 = vadd.f32 %v866, %v871
    %v883 = vadd.f32 %v867, %v873
    %v884 = vadd.f32 %v868, %v875
    %v885 = vadd.f32 %v869, %v877
    %886 = vrot.lane.b32.xlu0 %v766, 120
    %v887 = vpop.permute.xlu0 %886
    %888 = vrot.lane.b32.xlu0 %v767, 120
    %v889 = vpop.permute.xlu0 %888
    %890 = vrot.lane.b32.xlu0 %v768, 120
    %v891 = vpop.permute.xlu0 %890
    %892 = vrot.lane.b32.xlu0 %v769, 120
    %v893 = vpop.permute.xlu0 %892
    %v898 = vadd.f32 %v882, %v887
    %v899 = vadd.f32 %v883, %v889
    %v900 = vadd.f32 %v884, %v891
    %v901 = vadd.f32 %v885, %v893
    %902 = vrot.lane.b32.xlu0 %v766, 119
    %v903 = vpop.permute.xlu0 %902
    %904 = vrot.lane.b32.xlu0 %v767, 119
    %v905 = vpop.permute.xlu0 %904
    %906 = vrot.lane.b32.xlu0 %v768, 119
    %v907 = vpop.permute.xlu0 %906
    %908 = vrot.lane.b32.xlu0 %v769, 119
    %v909 = vpop.permute.xlu0 %908
    %v914 = vadd.f32 %v898, %v903
    %v915 = vadd.f32 %v899, %v905
    %v916 = vadd.f32 %v900, %v907
    %v917 = vadd.f32 %v901, %v909
    %918 = vrot.lane.b32.xlu0 %v766, 118
    %v919 = vpop.permute.xlu0 %918
    %920 = vrot.lane.b32.xlu0 %v767, 118
    %v921 = vpop.permute.xlu0 %920
    %922 = vrot.lane.b32.xlu0 %v768, 118
    %v923 = vpop.permute.xlu0 %922
    %924 = vrot.lane.b32.xlu0 %v769, 118
    %v925 = vpop.permute.xlu0 %924
    %v930 = vadd.f32 %v914, %v919
    %v931 = vadd.f32 %v915, %v921
    %v932 = vadd.f32 %v916, %v923
    %v933 = vadd.f32 %v917, %v925
    %v937 = vrot.slane %v930, 1
    %v938 = vrot.slane %v931, 1
    %v939 = vsel %vm187, %v937, %v938
    %v940 = vrot.slane %v932, 1
    %v941 = vsel %vm187, %v938, %v940
    %v944 = vadd.f32 %v930, %v939
    %v945 = vadd.f32 %v931, %v941
    %v946 = vrot.slane %v930, 2
    %v947 = vrot.slane %v931, 2
    %v948 = vsel %vm197, %v946, %v947
    %v949 = vrot.slane %v932, 2
    %v950 = vsel %vm197, %v947, %v949
    %v953 = vadd.f32 %v944, %v948
    %v954 = vadd.f32 %v945, %v950
    %v955 = vrot.slane %v930, 3
    %v956 = vrot.slane %v931, 3
    %v957 = vsel %vm207, %v955, %v956
    %v958 = vrot.slane %v932, 3
    %v959 = vsel %vm207, %v956, %v958
    %v962 = vadd.f32 %v953, %v957
    %v963 = vadd.f32 %v954, %v959
    %v964 = vrot.slane %v930, 4
    %v965 = vrot.slane %v931, 4
    %v966 = vsel %vm217, %v964, %v965
    %v967 = vrot.slane %v932, 4
    %v968 = vsel %vm217, %v965, %v967
    %v971 = vadd.f32 %v962, %v966
    %v972 = vadd.f32 %v963, %v968
    %v973 = vrot.slane %v930, 5
    %v974 = vrot.slane %v931, 5
    %v975 = vsel %vm227, %v973, %v974
    %v976 = vrot.slane %v932, 5
    %v977 = vsel %vm227, %v974, %v976
    %v980 = vadd.f32 %v971, %v975
    %v981 = vadd.f32 %v972, %v977
    %v982 = vrot.slane %v930, 6
    %v983 = vrot.slane %v931, 6
    %v984 = vsel %vm237, %v982, %v983
    %v985 = vrot.slane %v932, 6
    %v986 = vsel %vm237, %v983, %v985
    %v989 = vadd.f32 %v980, %v984
    %v990 = vadd.f32 %v981, %v986
    %v991 = vrot.slane %v930, 7
    %v992 = vrot.slane %v931, 7
    %v993 = vsel %vm247, %v991, %v992
    %v994 = vrot.slane %v932, 7
    %v995 = vsel %vm247, %v992, %v994
    %v998 = vadd.f32 %v989, %v993
    %v999 = vadd.f32 %v990, %v995
    %v1000 = vadd.f32 %v998, %v931
    %v1001 = vadd.f32 %v999, %v932
    %v1003 = vrot.slane %v933, 1
    %v1004 = vsel %vm187, %v940, %v1003
    %v1006 = vadd.f32 %v1000, %v941
    %v1007 = vadd.f32 %v1001, %v1004
    %v1008 = vrot.slane %v933, 2
    %v1009 = vsel %vm197, %v949, %v1008
    %v1011 = vadd.f32 %v1006, %v950
    %v1012 = vadd.f32 %v1007, %v1009
    %v1013 = vmul.f32 %v1011, 0.008264462
    %v1014 = vmul.f32 %v1012, 0.008264462
    %v1015 = vmul.f32 %v12, %v16
    %v1016 = vmul.f32 %v13, %v17
    %v1017 = vmul.f32 %v14, %v18
    %v1018 = vmul.f32 %v15, %v19
    %1023 = vrot.lane.b32.xlu0 %v1015, 127
    %v1024 = vpop.permute.xlu0 %1023
    %1025 = vrot.lane.b32.xlu0 %v1016, 127
    %v1026 = vpop.permute.xlu0 %1025
    %1027 = vrot.lane.b32.xlu0 %v1017, 127
    %v1028 = vpop.permute.xlu0 %1027
    %1029 = vrot.lane.b32.xlu0 %v1018, 127
    %v1030 = vpop.permute.xlu0 %1029
    %v1035 = vadd.f32 %v1015, %v1024
    %v1036 = vadd.f32 %v1016, %v1026
    %v1037 = vadd.f32 %v1017, %v1028
    %v1038 = vadd.f32 %v1018, %v1030
    %1039 = vrot.lane.b32.xlu0 %v1015, 126
    %v1040 = vpop.permute.xlu0 %1039
    %1041 = vrot.lane.b32.xlu0 %v1016, 126
    %v1042 = vpop.permute.xlu0 %1041
    %1043 = vrot.lane.b32.xlu0 %v1017, 126
    %v1044 = vpop.permute.xlu0 %1043
    %1045 = vrot.lane.b32.xlu0 %v1018, 126
    %v1046 = vpop.permute.xlu0 %1045
    %v1051 = vadd.f32 %v1035, %v1040
    %v1052 = vadd.f32 %v1036, %v1042
    %v1053 = vadd.f32 %v1037, %v1044
    %v1054 = vadd.f32 %v1038, %v1046
    %1055 = vrot.lane.b32.xlu0 %v1015, 125
    %v1056 = vpop.permute.xlu0 %1055
    %1057 = vrot.lane.b32.xlu0 %v1016, 125
    %v1058 = vpop.permute.xlu0 %1057
    %1059 = vrot.lane.b32.xlu0 %v1017, 125
    %v1060 = vpop.permute.xlu0 %1059
    %1061 = vrot.lane.b32.xlu0 %v1018, 125
    %v1062 = vpop.permute.xlu0 %1061
    %v1067 = vadd.f32 %v1051, %v1056
    %v1068 = vadd.f32 %v1052, %v1058
    %v1069 = vadd.f32 %v1053, %v1060
    %v1070 = vadd.f32 %v1054, %v1062
    %1071 = vrot.lane.b32.xlu0 %v1015, 124
    %v1072 = vpop.permute.xlu0 %1071
    %1073 = vrot.lane.b32.xlu0 %v1016, 124
    %v1074 = vpop.permute.xlu0 %1073
    %1075 = vrot.lane.b32.xlu0 %v1017, 124
    %v1076 = vpop.permute.xlu0 %1075
    %1077 = vrot.lane.b32.xlu0 %v1018, 124
    %v1078 = vpop.permute.xlu0 %1077
    %v1083 = vadd.f32 %v1067, %v1072
    %v1084 = vadd.f32 %v1068, %v1074
    %v1085 = vadd.f32 %v1069, %v1076
    %v1086 = vadd.f32 %v1070, %v1078
    %1087 = vrot.lane.b32.xlu0 %v1015, 123
    %v1088 = vpop.permute.xlu0 %1087
    %1089 = vrot.lane.b32.xlu0 %v1016, 123
    %v1090 = vpop.permute.xlu0 %1089
    %1091 = vrot.lane.b32.xlu0 %v1017, 123
    %v1092 = vpop.permute.xlu0 %1091
    %1093 = vrot.lane.b32.xlu0 %v1018, 123
    %v1094 = vpop.permute.xlu0 %1093
    %v1099 = vadd.f32 %v1083, %v1088
    %v1100 = vadd.f32 %v1084, %v1090
    %v1101 = vadd.f32 %v1085, %v1092
    %v1102 = vadd.f32 %v1086, %v1094
    %1103 = vrot.lane.b32.xlu0 %v1015, 122
    %v1104 = vpop.permute.xlu0 %1103
    %1105 = vrot.lane.b32.xlu0 %v1016, 122
    %v1106 = vpop.permute.xlu0 %1105
    %1107 = vrot.lane.b32.xlu0 %v1017, 122
    %v1108 = vpop.permute.xlu0 %1107
    %1109 = vrot.lane.b32.xlu0 %v1018, 122
    %v1110 = vpop.permute.xlu0 %1109
    %v1115 = vadd.f32 %v1099, %v1104
    %v1116 = vadd.f32 %v1100, %v1106
    %v1117 = vadd.f32 %v1101, %v1108
    %v1118 = vadd.f32 %v1102, %v1110
    %1119 = vrot.lane.b32.xlu0 %v1015, 121
    %v1120 = vpop.permute.xlu0 %1119
    %1121 = vrot.lane.b32.xlu0 %v1016, 121
    %v1122 = vpop.permute.xlu0 %1121
    %1123 = vrot.lane.b32.xlu0 %v1017, 121
    %v1124 = vpop.permute.xlu0 %1123
    %1125 = vrot.lane.b32.xlu0 %v1018, 121
    %v1126 = vpop.permute.xlu0 %1125
    %v1131 = vadd.f32 %v1115, %v1120
    %v1132 = vadd.f32 %v1116, %v1122
    %v1133 = vadd.f32 %v1117, %v1124
    %v1134 = vadd.f32 %v1118, %v1126
    %1135 = vrot.lane.b32.xlu0 %v1015, 120
    %v1136 = vpop.permute.xlu0 %1135
    %1137 = vrot.lane.b32.xlu0 %v1016, 120
    %v1138 = vpop.permute.xlu0 %1137
    %1139 = vrot.lane.b32.xlu0 %v1017, 120
    %v1140 = vpop.permute.xlu0 %1139
    %1141 = vrot.lane.b32.xlu0 %v1018, 120
    %v1142 = vpop.permute.xlu0 %1141
    %v1147 = vadd.f32 %v1131, %v1136
    %v1148 = vadd.f32 %v1132, %v1138
    %v1149 = vadd.f32 %v1133, %v1140
    %v1150 = vadd.f32 %v1134, %v1142
    %1151 = vrot.lane.b32.xlu0 %v1015, 119
    %v1152 = vpop.permute.xlu0 %1151
    %1153 = vrot.lane.b32.xlu0 %v1016, 119
    %v1154 = vpop.permute.xlu0 %1153
    %1155 = vrot.lane.b32.xlu0 %v1017, 119
    %v1156 = vpop.permute.xlu0 %1155
    %1157 = vrot.lane.b32.xlu0 %v1018, 119
    %v1158 = vpop.permute.xlu0 %1157
    %v1163 = vadd.f32 %v1147, %v1152
    %v1164 = vadd.f32 %v1148, %v1154
    %v1165 = vadd.f32 %v1149, %v1156
    %v1166 = vadd.f32 %v1150, %v1158
    %1167 = vrot.lane.b32.xlu0 %v1015, 118
    %v1168 = vpop.permute.xlu0 %1167
    %1169 = vrot.lane.b32.xlu0 %v1016, 118
    %v1170 = vpop.permute.xlu0 %1169
    %1171 = vrot.lane.b32.xlu0 %v1017, 118
    %v1172 = vpop.permute.xlu0 %1171
    %1173 = vrot.lane.b32.xlu0 %v1018, 118
    %v1174 = vpop.permute.xlu0 %1173
    %v1179 = vadd.f32 %v1163, %v1168
    %v1180 = vadd.f32 %v1164, %v1170
    %v1181 = vadd.f32 %v1165, %v1172
    %v1182 = vadd.f32 %v1166, %v1174
    %v1186 = vrot.slane %v1179, 1
    %v1187 = vrot.slane %v1180, 1
    %v1188 = vsel %vm187, %v1186, %v1187
    %v1189 = vrot.slane %v1181, 1
    %v1190 = vsel %vm187, %v1187, %v1189
    %v1193 = vadd.f32 %v1179, %v1188
    %v1194 = vadd.f32 %v1180, %v1190
    %v1195 = vrot.slane %v1179, 2
    %v1196 = vrot.slane %v1180, 2
    %v1197 = vsel %vm197, %v1195, %v1196
    %v1198 = vrot.slane %v1181, 2
    %v1199 = vsel %vm197, %v1196, %v1198
    %v1202 = vadd.f32 %v1193, %v1197
    %v1203 = vadd.f32 %v1194, %v1199
    %v1204 = vrot.slane %v1179, 3
    %v1205 = vrot.slane %v1180, 3
    %v1206 = vsel %vm207, %v1204, %v1205
    %v1207 = vrot.slane %v1181, 3
    %v1208 = vsel %vm207, %v1205, %v1207
    %v1211 = vadd.f32 %v1202, %v1206
    %v1212 = vadd.f32 %v1203, %v1208
    %v1213 = vrot.slane %v1179, 4
    %v1214 = vrot.slane %v1180, 4
    %v1215 = vsel %vm217, %v1213, %v1214
    %v1216 = vrot.slane %v1181, 4
    %v1217 = vsel %vm217, %v1214, %v1216
    %v1220 = vadd.f32 %v1211, %v1215
    %v1221 = vadd.f32 %v1212, %v1217
    %v1222 = vrot.slane %v1179, 5
    %v1223 = vrot.slane %v1180, 5
    %v1224 = vsel %vm227, %v1222, %v1223
    %v1225 = vrot.slane %v1181, 5
    %v1226 = vsel %vm227, %v1223, %v1225
    %v1229 = vadd.f32 %v1220, %v1224
    %v1230 = vadd.f32 %v1221, %v1226
    %v1231 = vrot.slane %v1179, 6
    %v1232 = vrot.slane %v1180, 6
    %v1233 = vsel %vm237, %v1231, %v1232
    %v1234 = vrot.slane %v1181, 6
    %v1235 = vsel %vm237, %v1232, %v1234
    %v1238 = vadd.f32 %v1229, %v1233
    %v1239 = vadd.f32 %v1230, %v1235
    %v1240 = vrot.slane %v1179, 7
    %v1241 = vrot.slane %v1180, 7
    %v1242 = vsel %vm247, %v1240, %v1241
    %v1243 = vrot.slane %v1181, 7
    %v1244 = vsel %vm247, %v1241, %v1243
    %v1247 = vadd.f32 %v1238, %v1242
    %v1248 = vadd.f32 %v1239, %v1244
    %v1249 = vadd.f32 %v1247, %v1180
    %v1250 = vadd.f32 %v1248, %v1181
    %v1252 = vrot.slane %v1182, 1
    %v1253 = vsel %vm187, %v1189, %v1252
    %v1255 = vadd.f32 %v1249, %v1190
    %v1256 = vadd.f32 %v1250, %v1253
    %v1257 = vrot.slane %v1182, 2
    %v1258 = vsel %vm197, %v1198, %v1257
    %v1260 = vadd.f32 %v1255, %v1199
    %v1261 = vadd.f32 %v1256, %v1258
    %v1262 = vmul.f32 %v1260, 0.008264462
    %v1263 = vmul.f32 %v1261, 0.008264462
    %v1264 = vmul.f32 %v270, %v270
    %v1265 = vmul.f32 %v271, %v271
    %v1266 = vsub.f32 %v764, %v1264
    %v1267 = vsub.f32 %v765, %v1265
    %v1268 = vmul.f32 %v515, %v515
    %v1269 = vmul.f32 %v516, %v516
    %v1270 = vsub.f32 %v1013, %v1268
    %v1271 = vsub.f32 %v1014, %v1269
    %v1272 = vmul.f32 %v270, %v515
    %v1273 = vmul.f32 %v271, %v516
    %v1274 = vsub.f32 %v1262, %v1272
    %v1275 = vsub.f32 %v1263, %v1273
    %v1276 = vmul.f32 %v270, 2.0
    %v1277 = vmul.f32 %v271, 2.0
    %v1278 = vmul.f32 %v1276, %v515
    %v1279 = vmul.f32 %v1277, %v516
    %v1280 = vadd.f32 %v1278, 0.0001
    %v1281 = vadd.f32 %v1279, 0.0001
    %v1282 = vmul.f32 %v1274, 2.0
    %v1283 = vmul.f32 %v1275, 2.0
    %v1284 = vadd.f32 %v1282, 0.0009
    %v1285 = vadd.f32 %v1283, 0.0009
    %v1286 = vmul.f32 %v1280, %v1284
    %v1287 = vmul.f32 %v1281, %v1285
    %v1288 = vadd.f32 %v1264, %v1268
    %v1289 = vadd.f32 %v1265, %v1269
    %v1290 = vadd.f32 %v1288, 0.0001
    %v1291 = vadd.f32 %v1289, 0.0001
    %v1292 = vadd.f32 %v1266, %v1270
    %v1293 = vadd.f32 %v1267, %v1271
    %v1294 = vadd.f32 %v1292, 0.0009
    %v1295 = vadd.f32 %v1293, 0.0009
    %v1296 = vmul.f32 %v1290, %v1294
    %v1297 = vmul.f32 %v1291, %v1295
    %v1298 = vrcp.pop %v1296
    %v1299 = vmul.f32 %v1286, %v1298
    %v1300 = vrcp.pop %v1297
    %v1301 = vmul.f32 %v1287, %v1300
    %vm1302 = vcmask 130048
    %v1303 = vsel %vm1302, %v1299, 0.0
    %v1304 = vsel %vm1302, %v1301, 0.0
    %v1305 = vadd.f32 %v1303, %v1304
    %1306 = vadd.xlane.f32.xlu0 %v1305
    %v1307 = vpop.xlane.xlu0 %1306
    %v1308 = vrot.slane %v1307, 4
    %v1309 = vadd.f32 %v1307, %v1308
    %v1310 = vrot.slane %v1309, 2
    %v1311 = vadd.f32 %v1309, %v1310
    %v1312 = vrot.slane %v1311, 1
    %v1313 = vadd.f32 %v1311, %v1312
    %s1314 = vtos %v1313
    %v1315 = vstv %s1314
    %v1316 = vadd.f32 %v1315, 0.0
    %s1317 = scalar_lea.vmem %s0, 32
    %v1318 = vld [vmem:[%s1317] sm:$0xff]
    %v1319 = vld [vmem:[%s1317 + $0x8] sm:$0xff]
    %v1320 = vld [vmem:[%s1317 + $0x10] sm:$0xff]
    %v1321 = vld [vmem:[%s1317 + $0x18] sm:$0x3]
    %s1322 = scalar_lea.vmem %s1, 32
    %v1323 = vld [vmem:[%s1322] sm:$0xff]
    %v1324 = vld [vmem:[%s1322 + $0x8] sm:$0xff]
    %v1325 = vld [vmem:[%s1322 + $0x10] sm:$0xff]
    %v1326 = vld [vmem:[%s1322 + $0x18] sm:$0x3]
    %1331 = vrot.lane.b32.xlu0 %v1318, 127
    %v1332 = vpop.permute.xlu0 %1331
    %1333 = vrot.lane.b32.xlu0 %v1319, 127
    %v1334 = vpop.permute.xlu0 %1333
    %1335 = vrot.lane.b32.xlu0 %v1320, 127
    %v1336 = vpop.permute.xlu0 %1335
    %1337 = vrot.lane.b32.xlu0 %v1321, 127
    %v1338 = vpop.permute.xlu0 %1337
    %v1343 = vadd.f32 %v1318, %v1332
    %v1344 = vadd.f32 %v1319, %v1334
    %v1345 = vadd.f32 %v1320, %v1336
    %v1346 = vadd.f32 %v1321, %v1338
    %1347 = vrot.lane.b32.xlu0 %v1318, 126
    %v1348 = vpop.permute.xlu0 %1347
    %1349 = vrot.lane.b32.xlu0 %v1319, 126
    %v1350 = vpop.permute.xlu0 %1349
    %1351 = vrot.lane.b32.xlu0 %v1320, 126
    %v1352 = vpop.permute.xlu0 %1351
    %1353 = vrot.lane.b32.xlu0 %v1321, 126
    %v1354 = vpop.permute.xlu0 %1353
    %v1359 = vadd.f32 %v1343, %v1348
    %v1360 = vadd.f32 %v1344, %v1350
    %v1361 = vadd.f32 %v1345, %v1352
    %v1362 = vadd.f32 %v1346, %v1354
    %1363 = vrot.lane.b32.xlu0 %v1318, 125
    %v1364 = vpop.permute.xlu0 %1363
    %1365 = vrot.lane.b32.xlu0 %v1319, 125
    %v1366 = vpop.permute.xlu0 %1365
    %1367 = vrot.lane.b32.xlu0 %v1320, 125
    %v1368 = vpop.permute.xlu0 %1367
    %1369 = vrot.lane.b32.xlu0 %v1321, 125
    %v1370 = vpop.permute.xlu0 %1369
    %v1375 = vadd.f32 %v1359, %v1364
    %v1376 = vadd.f32 %v1360, %v1366
    %v1377 = vadd.f32 %v1361, %v1368
    %v1378 = vadd.f32 %v1362, %v1370
    %1379 = vrot.lane.b32.xlu0 %v1318, 124
    %v1380 = vpop.permute.xlu0 %1379
    %1381 = vrot.lane.b32.xlu0 %v1319, 124
    %v1382 = vpop.permute.xlu0 %1381
    %1383 = vrot.lane.b32.xlu0 %v1320, 124
    %v1384 = vpop.permute.xlu0 %1383
    %1385 = vrot.lane.b32.xlu0 %v1321, 124
    %v1386 = vpop.permute.xlu0 %1385
    %v1391 = vadd.f32 %v1375, %v1380
    %v1392 = vadd.f32 %v1376, %v1382
    %v1393 = vadd.f32 %v1377, %v1384
    %v1394 = vadd.f32 %v1378, %v1386
    %1395 = vrot.lane.b32.xlu0 %v1318, 123
    %v1396 = vpop.permute.xlu0 %1395
    %1397 = vrot.lane.b32.xlu0 %v1319, 123
    %v1398 = vpop.permute.xlu0 %1397
    %1399 = vrot.lane.b32.xlu0 %v1320, 123
    %v1400 = vpop.permute.xlu0 %1399
    %1401 = vrot.lane.b32.xlu0 %v1321, 123
    %v1402 = vpop.permute.xlu0 %1401
    %v1407 = vadd.f32 %v1391, %v1396
    %v1408 = vadd.f32 %v1392, %v1398
    %v1409 = vadd.f32 %v1393, %v1400
    %v1410 = vadd.f32 %v1394, %v1402
    %1411 = vrot.lane.b32.xlu0 %v1318, 122
    %v1412 = vpop.permute.xlu0 %1411
    %1413 = vrot.lane.b32.xlu0 %v1319, 122
    %v1414 = vpop.permute.xlu0 %1413
    %1415 = vrot.lane.b32.xlu0 %v1320, 122
    %v1416 = vpop.permute.xlu0 %1415
    %1417 = vrot.lane.b32.xlu0 %v1321, 122
    %v1418 = vpop.permute.xlu0 %1417
    %v1423 = vadd.f32 %v1407, %v1412
    %v1424 = vadd.f32 %v1408, %v1414
    %v1425 = vadd.f32 %v1409, %v1416
    %v1426 = vadd.f32 %v1410, %v1418
    %1427 = vrot.lane.b32.xlu0 %v1318, 121
    %v1428 = vpop.permute.xlu0 %1427
    %1429 = vrot.lane.b32.xlu0 %v1319, 121
    %v1430 = vpop.permute.xlu0 %1429
    %1431 = vrot.lane.b32.xlu0 %v1320, 121
    %v1432 = vpop.permute.xlu0 %1431
    %1433 = vrot.lane.b32.xlu0 %v1321, 121
    %v1434 = vpop.permute.xlu0 %1433
    %v1439 = vadd.f32 %v1423, %v1428
    %v1440 = vadd.f32 %v1424, %v1430
    %v1441 = vadd.f32 %v1425, %v1432
    %v1442 = vadd.f32 %v1426, %v1434
    %1443 = vrot.lane.b32.xlu0 %v1318, 120
    %v1444 = vpop.permute.xlu0 %1443
    %1445 = vrot.lane.b32.xlu0 %v1319, 120
    %v1446 = vpop.permute.xlu0 %1445
    %1447 = vrot.lane.b32.xlu0 %v1320, 120
    %v1448 = vpop.permute.xlu0 %1447
    %1449 = vrot.lane.b32.xlu0 %v1321, 120
    %v1450 = vpop.permute.xlu0 %1449
    %v1455 = vadd.f32 %v1439, %v1444
    %v1456 = vadd.f32 %v1440, %v1446
    %v1457 = vadd.f32 %v1441, %v1448
    %v1458 = vadd.f32 %v1442, %v1450
    %1459 = vrot.lane.b32.xlu0 %v1318, 119
    %v1460 = vpop.permute.xlu0 %1459
    %1461 = vrot.lane.b32.xlu0 %v1319, 119
    %v1462 = vpop.permute.xlu0 %1461
    %1463 = vrot.lane.b32.xlu0 %v1320, 119
    %v1464 = vpop.permute.xlu0 %1463
    %1465 = vrot.lane.b32.xlu0 %v1321, 119
    %v1466 = vpop.permute.xlu0 %1465
    %v1471 = vadd.f32 %v1455, %v1460
    %v1472 = vadd.f32 %v1456, %v1462
    %v1473 = vadd.f32 %v1457, %v1464
    %v1474 = vadd.f32 %v1458, %v1466
    %1475 = vrot.lane.b32.xlu0 %v1318, 118
    %v1476 = vpop.permute.xlu0 %1475
    %1477 = vrot.lane.b32.xlu0 %v1319, 118
    %v1478 = vpop.permute.xlu0 %1477
    %1479 = vrot.lane.b32.xlu0 %v1320, 118
    %v1480 = vpop.permute.xlu0 %1479
    %1481 = vrot.lane.b32.xlu0 %v1321, 118
    %v1482 = vpop.permute.xlu0 %1481
    %v1487 = vadd.f32 %v1471, %v1476
    %v1488 = vadd.f32 %v1472, %v1478
    %v1489 = vadd.f32 %v1473, %v1480
    %v1490 = vadd.f32 %v1474, %v1482
    %v1494 = vrot.slane %v1487, 1
    %v1495 = vrot.slane %v1488, 1
    %v1496 = vsel %vm187, %v1494, %v1495
    %v1497 = vrot.slane %v1489, 1
    %v1498 = vsel %vm187, %v1495, %v1497
    %v1501 = vadd.f32 %v1487, %v1496
    %v1502 = vadd.f32 %v1488, %v1498
    %v1503 = vrot.slane %v1487, 2
    %v1504 = vrot.slane %v1488, 2
    %v1505 = vsel %vm197, %v1503, %v1504
    %v1506 = vrot.slane %v1489, 2
    %v1507 = vsel %vm197, %v1504, %v1506
    %v1510 = vadd.f32 %v1501, %v1505
    %v1511 = vadd.f32 %v1502, %v1507
    %v1512 = vrot.slane %v1487, 3
    %v1513 = vrot.slane %v1488, 3
    %v1514 = vsel %vm207, %v1512, %v1513
    %v1515 = vrot.slane %v1489, 3
    %v1516 = vsel %vm207, %v1513, %v1515
    %v1519 = vadd.f32 %v1510, %v1514
    %v1520 = vadd.f32 %v1511, %v1516
    %v1521 = vrot.slane %v1487, 4
    %v1522 = vrot.slane %v1488, 4
    %v1523 = vsel %vm217, %v1521, %v1522
    %v1524 = vrot.slane %v1489, 4
    %v1525 = vsel %vm217, %v1522, %v1524
    %v1528 = vadd.f32 %v1519, %v1523
    %v1529 = vadd.f32 %v1520, %v1525
    %v1530 = vrot.slane %v1487, 5
    %v1531 = vrot.slane %v1488, 5
    %v1532 = vsel %vm227, %v1530, %v1531
    %v1533 = vrot.slane %v1489, 5
    %v1534 = vsel %vm227, %v1531, %v1533
    %v1537 = vadd.f32 %v1528, %v1532
    %v1538 = vadd.f32 %v1529, %v1534
    %v1539 = vrot.slane %v1487, 6
    %v1540 = vrot.slane %v1488, 6
    %v1541 = vsel %vm237, %v1539, %v1540
    %v1542 = vrot.slane %v1489, 6
    %v1543 = vsel %vm237, %v1540, %v1542
    %v1546 = vadd.f32 %v1537, %v1541
    %v1547 = vadd.f32 %v1538, %v1543
    %v1548 = vrot.slane %v1487, 7
    %v1549 = vrot.slane %v1488, 7
    %v1550 = vsel %vm247, %v1548, %v1549
    %v1551 = vrot.slane %v1489, 7
    %v1552 = vsel %vm247, %v1549, %v1551
    %v1555 = vadd.f32 %v1546, %v1550
    %v1556 = vadd.f32 %v1547, %v1552
    %v1557 = vadd.f32 %v1555, %v1488
    %v1558 = vadd.f32 %v1556, %v1489
    %v1560 = vrot.slane %v1490, 1
    %v1561 = vsel %vm187, %v1497, %v1560
    %v1563 = vadd.f32 %v1557, %v1498
    %v1564 = vadd.f32 %v1558, %v1561
    %v1565 = vrot.slane %v1490, 2
    %v1566 = vsel %vm197, %v1506, %v1565
    %v1568 = vadd.f32 %v1563, %v1507
    %v1569 = vadd.f32 %v1564, %v1566
    %v1570 = vmul.f32 %v1568, 0.008264462
    %v1571 = vmul.f32 %v1569, 0.008264462
    %1576 = vrot.lane.b32.xlu0 %v1323, 127
    %v1577 = vpop.permute.xlu0 %1576
    %1578 = vrot.lane.b32.xlu0 %v1324, 127
    %v1579 = vpop.permute.xlu0 %1578
    %1580 = vrot.lane.b32.xlu0 %v1325, 127
    %v1581 = vpop.permute.xlu0 %1580
    %1582 = vrot.lane.b32.xlu0 %v1326, 127
    %v1583 = vpop.permute.xlu0 %1582
    %v1588 = vadd.f32 %v1323, %v1577
    %v1589 = vadd.f32 %v1324, %v1579
    %v1590 = vadd.f32 %v1325, %v1581
    %v1591 = vadd.f32 %v1326, %v1583
    %1592 = vrot.lane.b32.xlu0 %v1323, 126
    %v1593 = vpop.permute.xlu0 %1592
    %1594 = vrot.lane.b32.xlu0 %v1324, 126
    %v1595 = vpop.permute.xlu0 %1594
    %1596 = vrot.lane.b32.xlu0 %v1325, 126
    %v1597 = vpop.permute.xlu0 %1596
    %1598 = vrot.lane.b32.xlu0 %v1326, 126
    %v1599 = vpop.permute.xlu0 %1598
    %v1604 = vadd.f32 %v1588, %v1593
    %v1605 = vadd.f32 %v1589, %v1595
    %v1606 = vadd.f32 %v1590, %v1597
    %v1607 = vadd.f32 %v1591, %v1599
    %1608 = vrot.lane.b32.xlu0 %v1323, 125
    %v1609 = vpop.permute.xlu0 %1608
    %1610 = vrot.lane.b32.xlu0 %v1324, 125
    %v1611 = vpop.permute.xlu0 %1610
    %1612 = vrot.lane.b32.xlu0 %v1325, 125
    %v1613 = vpop.permute.xlu0 %1612
    %1614 = vrot.lane.b32.xlu0 %v1326, 125
    %v1615 = vpop.permute.xlu0 %1614
    %v1620 = vadd.f32 %v1604, %v1609
    %v1621 = vadd.f32 %v1605, %v1611
    %v1622 = vadd.f32 %v1606, %v1613
    %v1623 = vadd.f32 %v1607, %v1615
    %1624 = vrot.lane.b32.xlu0 %v1323, 124
    %v1625 = vpop.permute.xlu0 %1624
    %1626 = vrot.lane.b32.xlu0 %v1324, 124
    %v1627 = vpop.permute.xlu0 %1626
    %1628 = vrot.lane.b32.xlu0 %v1325, 124
    %v1629 = vpop.permute.xlu0 %1628
    %1630 = vrot.lane.b32.xlu0 %v1326, 124
    %v1631 = vpop.permute.xlu0 %1630
    %v1636 = vadd.f32 %v1620, %v1625
    %v1637 = vadd.f32 %v1621, %v1627
    %v1638 = vadd.f32 %v1622, %v1629
    %v1639 = vadd.f32 %v1623, %v1631
    %1640 = vrot.lane.b32.xlu0 %v1323, 123
    %v1641 = vpop.permute.xlu0 %1640
    %1642 = vrot.lane.b32.xlu0 %v1324, 123
    %v1643 = vpop.permute.xlu0 %1642
    %1644 = vrot.lane.b32.xlu0 %v1325, 123
    %v1645 = vpop.permute.xlu0 %1644
    %1646 = vrot.lane.b32.xlu0 %v1326, 123
    %v1647 = vpop.permute.xlu0 %1646
    %v1652 = vadd.f32 %v1636, %v1641
    %v1653 = vadd.f32 %v1637, %v1643
    %v1654 = vadd.f32 %v1638, %v1645
    %v1655 = vadd.f32 %v1639, %v1647
    %1656 = vrot.lane.b32.xlu0 %v1323, 122
    %v1657 = vpop.permute.xlu0 %1656
    %1658 = vrot.lane.b32.xlu0 %v1324, 122
    %v1659 = vpop.permute.xlu0 %1658
    %1660 = vrot.lane.b32.xlu0 %v1325, 122
    %v1661 = vpop.permute.xlu0 %1660
    %1662 = vrot.lane.b32.xlu0 %v1326, 122
    %v1663 = vpop.permute.xlu0 %1662
    %v1668 = vadd.f32 %v1652, %v1657
    %v1669 = vadd.f32 %v1653, %v1659
    %v1670 = vadd.f32 %v1654, %v1661
    %v1671 = vadd.f32 %v1655, %v1663
    %1672 = vrot.lane.b32.xlu0 %v1323, 121
    %v1673 = vpop.permute.xlu0 %1672
    %1674 = vrot.lane.b32.xlu0 %v1324, 121
    %v1675 = vpop.permute.xlu0 %1674
    %1676 = vrot.lane.b32.xlu0 %v1325, 121
    %v1677 = vpop.permute.xlu0 %1676
    %1678 = vrot.lane.b32.xlu0 %v1326, 121
    %v1679 = vpop.permute.xlu0 %1678
    %v1684 = vadd.f32 %v1668, %v1673
    %v1685 = vadd.f32 %v1669, %v1675
    %v1686 = vadd.f32 %v1670, %v1677
    %v1687 = vadd.f32 %v1671, %v1679
    %1688 = vrot.lane.b32.xlu0 %v1323, 120
    %v1689 = vpop.permute.xlu0 %1688
    %1690 = vrot.lane.b32.xlu0 %v1324, 120
    %v1691 = vpop.permute.xlu0 %1690
    %1692 = vrot.lane.b32.xlu0 %v1325, 120
    %v1693 = vpop.permute.xlu0 %1692
    %1694 = vrot.lane.b32.xlu0 %v1326, 120
    %v1695 = vpop.permute.xlu0 %1694
    %v1700 = vadd.f32 %v1684, %v1689
    %v1701 = vadd.f32 %v1685, %v1691
    %v1702 = vadd.f32 %v1686, %v1693
    %v1703 = vadd.f32 %v1687, %v1695
    %1704 = vrot.lane.b32.xlu0 %v1323, 119
    %v1705 = vpop.permute.xlu0 %1704
    %1706 = vrot.lane.b32.xlu0 %v1324, 119
    %v1707 = vpop.permute.xlu0 %1706
    %1708 = vrot.lane.b32.xlu0 %v1325, 119
    %v1709 = vpop.permute.xlu0 %1708
    %1710 = vrot.lane.b32.xlu0 %v1326, 119
    %v1711 = vpop.permute.xlu0 %1710
    %v1716 = vadd.f32 %v1700, %v1705
    %v1717 = vadd.f32 %v1701, %v1707
    %v1718 = vadd.f32 %v1702, %v1709
    %v1719 = vadd.f32 %v1703, %v1711
    %1720 = vrot.lane.b32.xlu0 %v1323, 118
    %v1721 = vpop.permute.xlu0 %1720
    %1722 = vrot.lane.b32.xlu0 %v1324, 118
    %v1723 = vpop.permute.xlu0 %1722
    %1724 = vrot.lane.b32.xlu0 %v1325, 118
    %v1725 = vpop.permute.xlu0 %1724
    %1726 = vrot.lane.b32.xlu0 %v1326, 118
    %v1727 = vpop.permute.xlu0 %1726
    %v1732 = vadd.f32 %v1716, %v1721
    %v1733 = vadd.f32 %v1717, %v1723
    %v1734 = vadd.f32 %v1718, %v1725
    %v1735 = vadd.f32 %v1719, %v1727
    %v1739 = vrot.slane %v1732, 1
    %v1740 = vrot.slane %v1733, 1
    %v1741 = vsel %vm187, %v1739, %v1740
    %v1742 = vrot.slane %v1734, 1
    %v1743 = vsel %vm187, %v1740, %v1742
    %v1746 = vadd.f32 %v1732, %v1741
    %v1747 = vadd.f32 %v1733, %v1743
    %v1748 = vrot.slane %v1732, 2
    %v1749 = vrot.slane %v1733, 2
    %v1750 = vsel %vm197, %v1748, %v1749
    %v1751 = vrot.slane %v1734, 2
    %v1752 = vsel %vm197, %v1749, %v1751
    %v1755 = vadd.f32 %v1746, %v1750
    %v1756 = vadd.f32 %v1747, %v1752
    %v1757 = vrot.slane %v1732, 3
    %v1758 = vrot.slane %v1733, 3
    %v1759 = vsel %vm207, %v1757, %v1758
    %v1760 = vrot.slane %v1734, 3
    %v1761 = vsel %vm207, %v1758, %v1760
    %v1764 = vadd.f32 %v1755, %v1759
    %v1765 = vadd.f32 %v1756, %v1761
    %v1766 = vrot.slane %v1732, 4
    %v1767 = vrot.slane %v1733, 4
    %v1768 = vsel %vm217, %v1766, %v1767
    %v1769 = vrot.slane %v1734, 4
    %v1770 = vsel %vm217, %v1767, %v1769
    %v1773 = vadd.f32 %v1764, %v1768
    %v1774 = vadd.f32 %v1765, %v1770
    %v1775 = vrot.slane %v1732, 5
    %v1776 = vrot.slane %v1733, 5
    %v1777 = vsel %vm227, %v1775, %v1776
    %v1778 = vrot.slane %v1734, 5
    %v1779 = vsel %vm227, %v1776, %v1778
    %v1782 = vadd.f32 %v1773, %v1777
    %v1783 = vadd.f32 %v1774, %v1779
    %v1784 = vrot.slane %v1732, 6
    %v1785 = vrot.slane %v1733, 6
    %v1786 = vsel %vm237, %v1784, %v1785
    %v1787 = vrot.slane %v1734, 6
    %v1788 = vsel %vm237, %v1785, %v1787
    %v1791 = vadd.f32 %v1782, %v1786
    %v1792 = vadd.f32 %v1783, %v1788
    %v1793 = vrot.slane %v1732, 7
    %v1794 = vrot.slane %v1733, 7
    %v1795 = vsel %vm247, %v1793, %v1794
    %v1796 = vrot.slane %v1734, 7
    %v1797 = vsel %vm247, %v1794, %v1796
    %v1800 = vadd.f32 %v1791, %v1795
    %v1801 = vadd.f32 %v1792, %v1797
    %v1802 = vadd.f32 %v1800, %v1733
    %v1803 = vadd.f32 %v1801, %v1734
    %v1805 = vrot.slane %v1735, 1
    %v1806 = vsel %vm187, %v1742, %v1805
    %v1808 = vadd.f32 %v1802, %v1743
    %v1809 = vadd.f32 %v1803, %v1806
    %v1810 = vrot.slane %v1735, 2
    %v1811 = vsel %vm197, %v1751, %v1810
    %v1813 = vadd.f32 %v1808, %v1752
    %v1814 = vadd.f32 %v1809, %v1811
    %v1815 = vmul.f32 %v1813, 0.008264462
    %v1816 = vmul.f32 %v1814, 0.008264462
    %v1817 = vmul.f32 %v1318, %v1318
    %v1818 = vmul.f32 %v1319, %v1319
    %v1819 = vmul.f32 %v1320, %v1320
    %v1820 = vmul.f32 %v1321, %v1321
    %1825 = vrot.lane.b32.xlu0 %v1817, 127
    %v1826 = vpop.permute.xlu0 %1825
    %1827 = vrot.lane.b32.xlu0 %v1818, 127
    %v1828 = vpop.permute.xlu0 %1827
    %1829 = vrot.lane.b32.xlu0 %v1819, 127
    %v1830 = vpop.permute.xlu0 %1829
    %1831 = vrot.lane.b32.xlu0 %v1820, 127
    %v1832 = vpop.permute.xlu0 %1831
    %v1837 = vadd.f32 %v1817, %v1826
    %v1838 = vadd.f32 %v1818, %v1828
    %v1839 = vadd.f32 %v1819, %v1830
    %v1840 = vadd.f32 %v1820, %v1832
    %1841 = vrot.lane.b32.xlu0 %v1817, 126
    %v1842 = vpop.permute.xlu0 %1841
    %1843 = vrot.lane.b32.xlu0 %v1818, 126
    %v1844 = vpop.permute.xlu0 %1843
    %1845 = vrot.lane.b32.xlu0 %v1819, 126
    %v1846 = vpop.permute.xlu0 %1845
    %1847 = vrot.lane.b32.xlu0 %v1820, 126
    %v1848 = vpop.permute.xlu0 %1847
    %v1853 = vadd.f32 %v1837, %v1842
    %v1854 = vadd.f32 %v1838, %v1844
    %v1855 = vadd.f32 %v1839, %v1846
    %v1856 = vadd.f32 %v1840, %v1848
    %1857 = vrot.lane.b32.xlu0 %v1817, 125
    %v1858 = vpop.permute.xlu0 %1857
    %1859 = vrot.lane.b32.xlu0 %v1818, 125
    %v1860 = vpop.permute.xlu0 %1859
    %1861 = vrot.lane.b32.xlu0 %v1819, 125
    %v1862 = vpop.permute.xlu0 %1861
    %1863 = vrot.lane.b32.xlu0 %v1820, 125
    %v1864 = vpop.permute.xlu0 %1863
    %v1869 = vadd.f32 %v1853, %v1858
    %v1870 = vadd.f32 %v1854, %v1860
    %v1871 = vadd.f32 %v1855, %v1862
    %v1872 = vadd.f32 %v1856, %v1864
    %1873 = vrot.lane.b32.xlu0 %v1817, 124
    %v1874 = vpop.permute.xlu0 %1873
    %1875 = vrot.lane.b32.xlu0 %v1818, 124
    %v1876 = vpop.permute.xlu0 %1875
    %1877 = vrot.lane.b32.xlu0 %v1819, 124
    %v1878 = vpop.permute.xlu0 %1877
    %1879 = vrot.lane.b32.xlu0 %v1820, 124
    %v1880 = vpop.permute.xlu0 %1879
    %v1885 = vadd.f32 %v1869, %v1874
    %v1886 = vadd.f32 %v1870, %v1876
    %v1887 = vadd.f32 %v1871, %v1878
    %v1888 = vadd.f32 %v1872, %v1880
    %1889 = vrot.lane.b32.xlu0 %v1817, 123
    %v1890 = vpop.permute.xlu0 %1889
    %1891 = vrot.lane.b32.xlu0 %v1818, 123
    %v1892 = vpop.permute.xlu0 %1891
    %1893 = vrot.lane.b32.xlu0 %v1819, 123
    %v1894 = vpop.permute.xlu0 %1893
    %1895 = vrot.lane.b32.xlu0 %v1820, 123
    %v1896 = vpop.permute.xlu0 %1895
    %v1901 = vadd.f32 %v1885, %v1890
    %v1902 = vadd.f32 %v1886, %v1892
    %v1903 = vadd.f32 %v1887, %v1894
    %v1904 = vadd.f32 %v1888, %v1896
    %1905 = vrot.lane.b32.xlu0 %v1817, 122
    %v1906 = vpop.permute.xlu0 %1905
    %1907 = vrot.lane.b32.xlu0 %v1818, 122
    %v1908 = vpop.permute.xlu0 %1907
    %1909 = vrot.lane.b32.xlu0 %v1819, 122
    %v1910 = vpop.permute.xlu0 %1909
    %1911 = vrot.lane.b32.xlu0 %v1820, 122
    %v1912 = vpop.permute.xlu0 %1911
    %v1917 = vadd.f32 %v1901, %v1906
    %v1918 = vadd.f32 %v1902, %v1908
    %v1919 = vadd.f32 %v1903, %v1910
    %v1920 = vadd.f32 %v1904, %v1912
    %1921 = vrot.lane.b32.xlu0 %v1817, 121
    %v1922 = vpop.permute.xlu0 %1921
    %1923 = vrot.lane.b32.xlu0 %v1818, 121
    %v1924 = vpop.permute.xlu0 %1923
    %1925 = vrot.lane.b32.xlu0 %v1819, 121
    %v1926 = vpop.permute.xlu0 %1925
    %1927 = vrot.lane.b32.xlu0 %v1820, 121
    %v1928 = vpop.permute.xlu0 %1927
    %v1933 = vadd.f32 %v1917, %v1922
    %v1934 = vadd.f32 %v1918, %v1924
    %v1935 = vadd.f32 %v1919, %v1926
    %v1936 = vadd.f32 %v1920, %v1928
    %1937 = vrot.lane.b32.xlu0 %v1817, 120
    %v1938 = vpop.permute.xlu0 %1937
    %1939 = vrot.lane.b32.xlu0 %v1818, 120
    %v1940 = vpop.permute.xlu0 %1939
    %1941 = vrot.lane.b32.xlu0 %v1819, 120
    %v1942 = vpop.permute.xlu0 %1941
    %1943 = vrot.lane.b32.xlu0 %v1820, 120
    %v1944 = vpop.permute.xlu0 %1943
    %v1949 = vadd.f32 %v1933, %v1938
    %v1950 = vadd.f32 %v1934, %v1940
    %v1951 = vadd.f32 %v1935, %v1942
    %v1952 = vadd.f32 %v1936, %v1944
    %1953 = vrot.lane.b32.xlu0 %v1817, 119
    %v1954 = vpop.permute.xlu0 %1953
    %1955 = vrot.lane.b32.xlu0 %v1818, 119
    %v1956 = vpop.permute.xlu0 %1955
    %1957 = vrot.lane.b32.xlu0 %v1819, 119
    %v1958 = vpop.permute.xlu0 %1957
    %1959 = vrot.lane.b32.xlu0 %v1820, 119
    %v1960 = vpop.permute.xlu0 %1959
    %v1965 = vadd.f32 %v1949, %v1954
    %v1966 = vadd.f32 %v1950, %v1956
    %v1967 = vadd.f32 %v1951, %v1958
    %v1968 = vadd.f32 %v1952, %v1960
    %1969 = vrot.lane.b32.xlu0 %v1817, 118
    %v1970 = vpop.permute.xlu0 %1969
    %1971 = vrot.lane.b32.xlu0 %v1818, 118
    %v1972 = vpop.permute.xlu0 %1971
    %1973 = vrot.lane.b32.xlu0 %v1819, 118
    %v1974 = vpop.permute.xlu0 %1973
    %1975 = vrot.lane.b32.xlu0 %v1820, 118
    %v1976 = vpop.permute.xlu0 %1975
    %v1981 = vadd.f32 %v1965, %v1970
    %v1982 = vadd.f32 %v1966, %v1972
    %v1983 = vadd.f32 %v1967, %v1974
    %v1984 = vadd.f32 %v1968, %v1976
    %v1988 = vrot.slane %v1981, 1
    %v1989 = vrot.slane %v1982, 1
    %v1990 = vsel %vm187, %v1988, %v1989
    %v1991 = vrot.slane %v1983, 1
    %v1992 = vsel %vm187, %v1989, %v1991
    %v1995 = vadd.f32 %v1981, %v1990
    %v1996 = vadd.f32 %v1982, %v1992
    %v1997 = vrot.slane %v1981, 2
    %v1998 = vrot.slane %v1982, 2
    %v1999 = vsel %vm197, %v1997, %v1998
    %v2000 = vrot.slane %v1983, 2
    %v2001 = vsel %vm197, %v1998, %v2000
    %v2004 = vadd.f32 %v1995, %v1999
    %v2005 = vadd.f32 %v1996, %v2001
    %v2006 = vrot.slane %v1981, 3
    %v2007 = vrot.slane %v1982, 3
    %v2008 = vsel %vm207, %v2006, %v2007
    %v2009 = vrot.slane %v1983, 3
    %v2010 = vsel %vm207, %v2007, %v2009
    %v2013 = vadd.f32 %v2004, %v2008
    %v2014 = vadd.f32 %v2005, %v2010
    %v2015 = vrot.slane %v1981, 4
    %v2016 = vrot.slane %v1982, 4
    %v2017 = vsel %vm217, %v2015, %v2016
    %v2018 = vrot.slane %v1983, 4
    %v2019 = vsel %vm217, %v2016, %v2018
    %v2022 = vadd.f32 %v2013, %v2017
    %v2023 = vadd.f32 %v2014, %v2019
    %v2024 = vrot.slane %v1981, 5
    %v2025 = vrot.slane %v1982, 5
    %v2026 = vsel %vm227, %v2024, %v2025
    %v2027 = vrot.slane %v1983, 5
    %v2028 = vsel %vm227, %v2025, %v2027
    %v2031 = vadd.f32 %v2022, %v2026
    %v2032 = vadd.f32 %v2023, %v2028
    %v2033 = vrot.slane %v1981, 6
    %v2034 = vrot.slane %v1982, 6
    %v2035 = vsel %vm237, %v2033, %v2034
    %v2036 = vrot.slane %v1983, 6
    %v2037 = vsel %vm237, %v2034, %v2036
    %v2040 = vadd.f32 %v2031, %v2035
    %v2041 = vadd.f32 %v2032, %v2037
    %v2042 = vrot.slane %v1981, 7
    %v2043 = vrot.slane %v1982, 7
    %v2044 = vsel %vm247, %v2042, %v2043
    %v2045 = vrot.slane %v1983, 7
    %v2046 = vsel %vm247, %v2043, %v2045
    %v2049 = vadd.f32 %v2040, %v2044
    %v2050 = vadd.f32 %v2041, %v2046
    %v2051 = vadd.f32 %v2049, %v1982
    %v2052 = vadd.f32 %v2050, %v1983
    %v2054 = vrot.slane %v1984, 1
    %v2055 = vsel %vm187, %v1991, %v2054
    %v2057 = vadd.f32 %v2051, %v1992
    %v2058 = vadd.f32 %v2052, %v2055
    %v2059 = vrot.slane %v1984, 2
    %v2060 = vsel %vm197, %v2000, %v2059
    %v2062 = vadd.f32 %v2057, %v2001
    %v2063 = vadd.f32 %v2058, %v2060
    %v2064 = vmul.f32 %v2062, 0.008264462
    %v2065 = vmul.f32 %v2063, 0.008264462
    %v2066 = vmul.f32 %v1323, %v1323
    %v2067 = vmul.f32 %v1324, %v1324
    %v2068 = vmul.f32 %v1325, %v1325
    %v2069 = vmul.f32 %v1326, %v1326
    %2074 = vrot.lane.b32.xlu0 %v2066, 127
    %v2075 = vpop.permute.xlu0 %2074
    %2076 = vrot.lane.b32.xlu0 %v2067, 127
    %v2077 = vpop.permute.xlu0 %2076
    %2078 = vrot.lane.b32.xlu0 %v2068, 127
    %v2079 = vpop.permute.xlu0 %2078
    %2080 = vrot.lane.b32.xlu0 %v2069, 127
    %v2081 = vpop.permute.xlu0 %2080
    %v2086 = vadd.f32 %v2066, %v2075
    %v2087 = vadd.f32 %v2067, %v2077
    %v2088 = vadd.f32 %v2068, %v2079
    %v2089 = vadd.f32 %v2069, %v2081
    %2090 = vrot.lane.b32.xlu0 %v2066, 126
    %v2091 = vpop.permute.xlu0 %2090
    %2092 = vrot.lane.b32.xlu0 %v2067, 126
    %v2093 = vpop.permute.xlu0 %2092
    %2094 = vrot.lane.b32.xlu0 %v2068, 126
    %v2095 = vpop.permute.xlu0 %2094
    %2096 = vrot.lane.b32.xlu0 %v2069, 126
    %v2097 = vpop.permute.xlu0 %2096
    %v2102 = vadd.f32 %v2086, %v2091
    %v2103 = vadd.f32 %v2087, %v2093
    %v2104 = vadd.f32 %v2088, %v2095
    %v2105 = vadd.f32 %v2089, %v2097
    %2106 = vrot.lane.b32.xlu0 %v2066, 125
    %v2107 = vpop.permute.xlu0 %2106
    %2108 = vrot.lane.b32.xlu0 %v2067, 125
    %v2109 = vpop.permute.xlu0 %2108
    %2110 = vrot.lane.b32.xlu0 %v2068, 125
    %v2111 = vpop.permute.xlu0 %2110
    %2112 = vrot.lane.b32.xlu0 %v2069, 125
    %v2113 = vpop.permute.xlu0 %2112
    %v2118 = vadd.f32 %v2102, %v2107
    %v2119 = vadd.f32 %v2103, %v2109
    %v2120 = vadd.f32 %v2104, %v2111
    %v2121 = vadd.f32 %v2105, %v2113
    %2122 = vrot.lane.b32.xlu0 %v2066, 124
    %v2123 = vpop.permute.xlu0 %2122
    %2124 = vrot.lane.b32.xlu0 %v2067, 124
    %v2125 = vpop.permute.xlu0 %2124
    %2126 = vrot.lane.b32.xlu0 %v2068, 124
    %v2127 = vpop.permute.xlu0 %2126
    %2128 = vrot.lane.b32.xlu0 %v2069, 124
    %v2129 = vpop.permute.xlu0 %2128
    %v2134 = vadd.f32 %v2118, %v2123
    %v2135 = vadd.f32 %v2119, %v2125
    %v2136 = vadd.f32 %v2120, %v2127
    %v2137 = vadd.f32 %v2121, %v2129
    %2138 = vrot.lane.b32.xlu0 %v2066, 123
    %v2139 = vpop.permute.xlu0 %2138
    %2140 = vrot.lane.b32.xlu0 %v2067, 123
    %v2141 = vpop.permute.xlu0 %2140
    %2142 = vrot.lane.b32.xlu0 %v2068, 123
    %v2143 = vpop.permute.xlu0 %2142
    %2144 = vrot.lane.b32.xlu0 %v2069, 123
    %v2145 = vpop.permute.xlu0 %2144
    %v2150 = vadd.f32 %v2134, %v2139
    %v2151 = vadd.f32 %v2135, %v2141
    %v2152 = vadd.f32 %v2136, %v2143
    %v2153 = vadd.f32 %v2137, %v2145
    %2154 = vrot.lane.b32.xlu0 %v2066, 122
    %v2155 = vpop.permute.xlu0 %2154
    %2156 = vrot.lane.b32.xlu0 %v2067, 122
    %v2157 = vpop.permute.xlu0 %2156
    %2158 = vrot.lane.b32.xlu0 %v2068, 122
    %v2159 = vpop.permute.xlu0 %2158
    %2160 = vrot.lane.b32.xlu0 %v2069, 122
    %v2161 = vpop.permute.xlu0 %2160
    %v2166 = vadd.f32 %v2150, %v2155
    %v2167 = vadd.f32 %v2151, %v2157
    %v2168 = vadd.f32 %v2152, %v2159
    %v2169 = vadd.f32 %v2153, %v2161
    %2170 = vrot.lane.b32.xlu0 %v2066, 121
    %v2171 = vpop.permute.xlu0 %2170
    %2172 = vrot.lane.b32.xlu0 %v2067, 121
    %v2173 = vpop.permute.xlu0 %2172
    %2174 = vrot.lane.b32.xlu0 %v2068, 121
    %v2175 = vpop.permute.xlu0 %2174
    %2176 = vrot.lane.b32.xlu0 %v2069, 121
    %v2177 = vpop.permute.xlu0 %2176
    %v2182 = vadd.f32 %v2166, %v2171
    %v2183 = vadd.f32 %v2167, %v2173
    %v2184 = vadd.f32 %v2168, %v2175
    %v2185 = vadd.f32 %v2169, %v2177
    %2186 = vrot.lane.b32.xlu0 %v2066, 120
    %v2187 = vpop.permute.xlu0 %2186
    %2188 = vrot.lane.b32.xlu0 %v2067, 120
    %v2189 = vpop.permute.xlu0 %2188
    %2190 = vrot.lane.b32.xlu0 %v2068, 120
    %v2191 = vpop.permute.xlu0 %2190
    %2192 = vrot.lane.b32.xlu0 %v2069, 120
    %v2193 = vpop.permute.xlu0 %2192
    %v2198 = vadd.f32 %v2182, %v2187
    %v2199 = vadd.f32 %v2183, %v2189
    %v2200 = vadd.f32 %v2184, %v2191
    %v2201 = vadd.f32 %v2185, %v2193
    %2202 = vrot.lane.b32.xlu0 %v2066, 119
    %v2203 = vpop.permute.xlu0 %2202
    %2204 = vrot.lane.b32.xlu0 %v2067, 119
    %v2205 = vpop.permute.xlu0 %2204
    %2206 = vrot.lane.b32.xlu0 %v2068, 119
    %v2207 = vpop.permute.xlu0 %2206
    %2208 = vrot.lane.b32.xlu0 %v2069, 119
    %v2209 = vpop.permute.xlu0 %2208
    %v2214 = vadd.f32 %v2198, %v2203
    %v2215 = vadd.f32 %v2199, %v2205
    %v2216 = vadd.f32 %v2200, %v2207
    %v2217 = vadd.f32 %v2201, %v2209
    %2218 = vrot.lane.b32.xlu0 %v2066, 118
    %v2219 = vpop.permute.xlu0 %2218
    %2220 = vrot.lane.b32.xlu0 %v2067, 118
    %v2221 = vpop.permute.xlu0 %2220
    %2222 = vrot.lane.b32.xlu0 %v2068, 118
    %v2223 = vpop.permute.xlu0 %2222
    %2224 = vrot.lane.b32.xlu0 %v2069, 118
    %v2225 = vpop.permute.xlu0 %2224
    %v2230 = vadd.f32 %v2214, %v2219
    %v2231 = vadd.f32 %v2215, %v2221
    %v2232 = vadd.f32 %v2216, %v2223
    %v2233 = vadd.f32 %v2217, %v2225
    %v2237 = vrot.slane %v2230, 1
    %v2238 = vrot.slane %v2231, 1
    %v2239 = vsel %vm187, %v2237, %v2238
    %v2240 = vrot.slane %v2232, 1
    %v2241 = vsel %vm187, %v2238, %v2240
    %v2244 = vadd.f32 %v2230, %v2239
    %v2245 = vadd.f32 %v2231, %v2241
    %v2246 = vrot.slane %v2230, 2
    %v2247 = vrot.slane %v2231, 2
    %v2248 = vsel %vm197, %v2246, %v2247
    %v2249 = vrot.slane %v2232, 2
    %v2250 = vsel %vm197, %v2247, %v2249
    %v2253 = vadd.f32 %v2244, %v2248
    %v2254 = vadd.f32 %v2245, %v2250
    %v2255 = vrot.slane %v2230, 3
    %v2256 = vrot.slane %v2231, 3
    %v2257 = vsel %vm207, %v2255, %v2256
    %v2258 = vrot.slane %v2232, 3
    %v2259 = vsel %vm207, %v2256, %v2258
    %v2262 = vadd.f32 %v2253, %v2257
    %v2263 = vadd.f32 %v2254, %v2259
    %v2264 = vrot.slane %v2230, 4
    %v2265 = vrot.slane %v2231, 4
    %v2266 = vsel %vm217, %v2264, %v2265
    %v2267 = vrot.slane %v2232, 4
    %v2268 = vsel %vm217, %v2265, %v2267
    %v2271 = vadd.f32 %v2262, %v2266
    %v2272 = vadd.f32 %v2263, %v2268
    %v2273 = vrot.slane %v2230, 5
    %v2274 = vrot.slane %v2231, 5
    %v2275 = vsel %vm227, %v2273, %v2274
    %v2276 = vrot.slane %v2232, 5
    %v2277 = vsel %vm227, %v2274, %v2276
    %v2280 = vadd.f32 %v2271, %v2275
    %v2281 = vadd.f32 %v2272, %v2277
    %v2282 = vrot.slane %v2230, 6
    %v2283 = vrot.slane %v2231, 6
    %v2284 = vsel %vm237, %v2282, %v2283
    %v2285 = vrot.slane %v2232, 6
    %v2286 = vsel %vm237, %v2283, %v2285
    %v2289 = vadd.f32 %v2280, %v2284
    %v2290 = vadd.f32 %v2281, %v2286
    %v2291 = vrot.slane %v2230, 7
    %v2292 = vrot.slane %v2231, 7
    %v2293 = vsel %vm247, %v2291, %v2292
    %v2294 = vrot.slane %v2232, 7
    %v2295 = vsel %vm247, %v2292, %v2294
    %v2298 = vadd.f32 %v2289, %v2293
    %v2299 = vadd.f32 %v2290, %v2295
    %v2300 = vadd.f32 %v2298, %v2231
    %v2301 = vadd.f32 %v2299, %v2232
    %v2303 = vrot.slane %v2233, 1
    %v2304 = vsel %vm187, %v2240, %v2303
    %v2306 = vadd.f32 %v2300, %v2241
    %v2307 = vadd.f32 %v2301, %v2304
    %v2308 = vrot.slane %v2233, 2
    %v2309 = vsel %vm197, %v2249, %v2308
    %v2311 = vadd.f32 %v2306, %v2250
    %v2312 = vadd.f32 %v2307, %v2309
    %v2313 = vmul.f32 %v2311, 0.008264462
    %v2314 = vmul.f32 %v2312, 0.008264462
    %v2315 = vmul.f32 %v1318, %v1323
    %v2316 = vmul.f32 %v1319, %v1324
    %v2317 = vmul.f32 %v1320, %v1325
    %v2318 = vmul.f32 %v1321, %v1326
    %2323 = vrot.lane.b32.xlu0 %v2315, 127
    %v2324 = vpop.permute.xlu0 %2323
    %2325 = vrot.lane.b32.xlu0 %v2316, 127
    %v2326 = vpop.permute.xlu0 %2325
    %2327 = vrot.lane.b32.xlu0 %v2317, 127
    %v2328 = vpop.permute.xlu0 %2327
    %2329 = vrot.lane.b32.xlu0 %v2318, 127
    %v2330 = vpop.permute.xlu0 %2329
    %v2335 = vadd.f32 %v2315, %v2324
    %v2336 = vadd.f32 %v2316, %v2326
    %v2337 = vadd.f32 %v2317, %v2328
    %v2338 = vadd.f32 %v2318, %v2330
    %2339 = vrot.lane.b32.xlu0 %v2315, 126
    %v2340 = vpop.permute.xlu0 %2339
    %2341 = vrot.lane.b32.xlu0 %v2316, 126
    %v2342 = vpop.permute.xlu0 %2341
    %2343 = vrot.lane.b32.xlu0 %v2317, 126
    %v2344 = vpop.permute.xlu0 %2343
    %2345 = vrot.lane.b32.xlu0 %v2318, 126
    %v2346 = vpop.permute.xlu0 %2345
    %v2351 = vadd.f32 %v2335, %v2340
    %v2352 = vadd.f32 %v2336, %v2342
    %v2353 = vadd.f32 %v2337, %v2344
    %v2354 = vadd.f32 %v2338, %v2346
    %2355 = vrot.lane.b32.xlu0 %v2315, 125
    %v2356 = vpop.permute.xlu0 %2355
    %2357 = vrot.lane.b32.xlu0 %v2316, 125
    %v2358 = vpop.permute.xlu0 %2357
    %2359 = vrot.lane.b32.xlu0 %v2317, 125
    %v2360 = vpop.permute.xlu0 %2359
    %2361 = vrot.lane.b32.xlu0 %v2318, 125
    %v2362 = vpop.permute.xlu0 %2361
    %v2367 = vadd.f32 %v2351, %v2356
    %v2368 = vadd.f32 %v2352, %v2358
    %v2369 = vadd.f32 %v2353, %v2360
    %v2370 = vadd.f32 %v2354, %v2362
    %2371 = vrot.lane.b32.xlu0 %v2315, 124
    %v2372 = vpop.permute.xlu0 %2371
    %2373 = vrot.lane.b32.xlu0 %v2316, 124
    %v2374 = vpop.permute.xlu0 %2373
    %2375 = vrot.lane.b32.xlu0 %v2317, 124
    %v2376 = vpop.permute.xlu0 %2375
    %2377 = vrot.lane.b32.xlu0 %v2318, 124
    %v2378 = vpop.permute.xlu0 %2377
    %v2383 = vadd.f32 %v2367, %v2372
    %v2384 = vadd.f32 %v2368, %v2374
    %v2385 = vadd.f32 %v2369, %v2376
    %v2386 = vadd.f32 %v2370, %v2378
    %2387 = vrot.lane.b32.xlu0 %v2315, 123
    %v2388 = vpop.permute.xlu0 %2387
    %2389 = vrot.lane.b32.xlu0 %v2316, 123
    %v2390 = vpop.permute.xlu0 %2389
    %2391 = vrot.lane.b32.xlu0 %v2317, 123
    %v2392 = vpop.permute.xlu0 %2391
    %2393 = vrot.lane.b32.xlu0 %v2318, 123
    %v2394 = vpop.permute.xlu0 %2393
    %v2399 = vadd.f32 %v2383, %v2388
    %v2400 = vadd.f32 %v2384, %v2390
    %v2401 = vadd.f32 %v2385, %v2392
    %v2402 = vadd.f32 %v2386, %v2394
    %2403 = vrot.lane.b32.xlu0 %v2315, 122
    %v2404 = vpop.permute.xlu0 %2403
    %2405 = vrot.lane.b32.xlu0 %v2316, 122
    %v2406 = vpop.permute.xlu0 %2405
    %2407 = vrot.lane.b32.xlu0 %v2317, 122
    %v2408 = vpop.permute.xlu0 %2407
    %2409 = vrot.lane.b32.xlu0 %v2318, 122
    %v2410 = vpop.permute.xlu0 %2409
    %v2415 = vadd.f32 %v2399, %v2404
    %v2416 = vadd.f32 %v2400, %v2406
    %v2417 = vadd.f32 %v2401, %v2408
    %v2418 = vadd.f32 %v2402, %v2410
    %2419 = vrot.lane.b32.xlu0 %v2315, 121
    %v2420 = vpop.permute.xlu0 %2419
    %2421 = vrot.lane.b32.xlu0 %v2316, 121
    %v2422 = vpop.permute.xlu0 %2421
    %2423 = vrot.lane.b32.xlu0 %v2317, 121
    %v2424 = vpop.permute.xlu0 %2423
    %2425 = vrot.lane.b32.xlu0 %v2318, 121
    %v2426 = vpop.permute.xlu0 %2425
    %v2431 = vadd.f32 %v2415, %v2420
    %v2432 = vadd.f32 %v2416, %v2422
    %v2433 = vadd.f32 %v2417, %v2424
    %v2434 = vadd.f32 %v2418, %v2426
    %2435 = vrot.lane.b32.xlu0 %v2315, 120
    %v2436 = vpop.permute.xlu0 %2435
    %2437 = vrot.lane.b32.xlu0 %v2316, 120
    %v2438 = vpop.permute.xlu0 %2437
    %2439 = vrot.lane.b32.xlu0 %v2317, 120
    %v2440 = vpop.permute.xlu0 %2439
    %2441 = vrot.lane.b32.xlu0 %v2318, 120
    %v2442 = vpop.permute.xlu0 %2441
    %v2447 = vadd.f32 %v2431, %v2436
    %v2448 = vadd.f32 %v2432, %v2438
    %v2449 = vadd.f32 %v2433, %v2440
    %v2450 = vadd.f32 %v2434, %v2442
    %2451 = vrot.lane.b32.xlu0 %v2315, 119
    %v2452 = vpop.permute.xlu0 %2451
    %2453 = vrot.lane.b32.xlu0 %v2316, 119
    %v2454 = vpop.permute.xlu0 %2453
    %2455 = vrot.lane.b32.xlu0 %v2317, 119
    %v2456 = vpop.permute.xlu0 %2455
    %2457 = vrot.lane.b32.xlu0 %v2318, 119
    %v2458 = vpop.permute.xlu0 %2457
    %v2463 = vadd.f32 %v2447, %v2452
    %v2464 = vadd.f32 %v2448, %v2454
    %v2465 = vadd.f32 %v2449, %v2456
    %v2466 = vadd.f32 %v2450, %v2458
    %2467 = vrot.lane.b32.xlu0 %v2315, 118
    %v2468 = vpop.permute.xlu0 %2467
    %2469 = vrot.lane.b32.xlu0 %v2316, 118
    %v2470 = vpop.permute.xlu0 %2469
    %2471 = vrot.lane.b32.xlu0 %v2317, 118
    %v2472 = vpop.permute.xlu0 %2471
    %2473 = vrot.lane.b32.xlu0 %v2318, 118
    %v2474 = vpop.permute.xlu0 %2473
    %v2479 = vadd.f32 %v2463, %v2468
    %v2480 = vadd.f32 %v2464, %v2470
    %v2481 = vadd.f32 %v2465, %v2472
    %v2482 = vadd.f32 %v2466, %v2474
    %v2486 = vrot.slane %v2479, 1
    %v2487 = vrot.slane %v2480, 1
    %v2488 = vsel %vm187, %v2486, %v2487
    %v2489 = vrot.slane %v2481, 1
    %v2490 = vsel %vm187, %v2487, %v2489
    %v2493 = vadd.f32 %v2479, %v2488
    %v2494 = vadd.f32 %v2480, %v2490
    %v2495 = vrot.slane %v2479, 2
    %v2496 = vrot.slane %v2480, 2
    %v2497 = vsel %vm197, %v2495, %v2496
    %v2498 = vrot.slane %v2481, 2
    %v2499 = vsel %vm197, %v2496, %v2498
    %v2502 = vadd.f32 %v2493, %v2497
    %v2503 = vadd.f32 %v2494, %v2499
    %v2504 = vrot.slane %v2479, 3
    %v2505 = vrot.slane %v2480, 3
    %v2506 = vsel %vm207, %v2504, %v2505
    %v2507 = vrot.slane %v2481, 3
    %v2508 = vsel %vm207, %v2505, %v2507
    %v2511 = vadd.f32 %v2502, %v2506
    %v2512 = vadd.f32 %v2503, %v2508
    %v2513 = vrot.slane %v2479, 4
    %v2514 = vrot.slane %v2480, 4
    %v2515 = vsel %vm217, %v2513, %v2514
    %v2516 = vrot.slane %v2481, 4
    %v2517 = vsel %vm217, %v2514, %v2516
    %v2520 = vadd.f32 %v2511, %v2515
    %v2521 = vadd.f32 %v2512, %v2517
    %v2522 = vrot.slane %v2479, 5
    %v2523 = vrot.slane %v2480, 5
    %v2524 = vsel %vm227, %v2522, %v2523
    %v2525 = vrot.slane %v2481, 5
    %v2526 = vsel %vm227, %v2523, %v2525
    %v2529 = vadd.f32 %v2520, %v2524
    %v2530 = vadd.f32 %v2521, %v2526
    %v2531 = vrot.slane %v2479, 6
    %v2532 = vrot.slane %v2480, 6
    %v2533 = vsel %vm237, %v2531, %v2532
    %v2534 = vrot.slane %v2481, 6
    %v2535 = vsel %vm237, %v2532, %v2534
    %v2538 = vadd.f32 %v2529, %v2533
    %v2539 = vadd.f32 %v2530, %v2535
    %v2540 = vrot.slane %v2479, 7
    %v2541 = vrot.slane %v2480, 7
    %v2542 = vsel %vm247, %v2540, %v2541
    %v2543 = vrot.slane %v2481, 7
    %v2544 = vsel %vm247, %v2541, %v2543
    %v2547 = vadd.f32 %v2538, %v2542
    %v2548 = vadd.f32 %v2539, %v2544
    %v2549 = vadd.f32 %v2547, %v2480
    %v2550 = vadd.f32 %v2548, %v2481
    %v2552 = vrot.slane %v2482, 1
    %v2553 = vsel %vm187, %v2489, %v2552
    %v2555 = vadd.f32 %v2549, %v2490
    %v2556 = vadd.f32 %v2550, %v2553
    %v2557 = vrot.slane %v2482, 2
    %v2558 = vsel %vm197, %v2498, %v2557
    %v2560 = vadd.f32 %v2555, %v2499
    %v2561 = vadd.f32 %v2556, %v2558
    %v2562 = vmul.f32 %v2560, 0.008264462
    %v2563 = vmul.f32 %v2561, 0.008264462
    %v2564 = vmul.f32 %v1570, %v1570
    %v2565 = vmul.f32 %v1571, %v1571
    %v2566 = vsub.f32 %v2064, %v2564
    %v2567 = vsub.f32 %v2065, %v2565
    %v2568 = vmul.f32 %v1815, %v1815
    %v2569 = vmul.f32 %v1816, %v1816
    %v2570 = vsub.f32 %v2313, %v2568
    %v2571 = vsub.f32 %v2314, %v2569
    %v2572 = vmul.f32 %v1570, %v1815
    %v2573 = vmul.f32 %v1571, %v1816
    %v2574 = vsub.f32 %v2562, %v2572
    %v2575 = vsub.f32 %v2563, %v2573
    %v2576 = vmul.f32 %v1570, 2.0
    %v2577 = vmul.f32 %v1571, 2.0
    %v2578 = vmul.f32 %v2576, %v1815
    %v2579 = vmul.f32 %v2577, %v1816
    %v2580 = vadd.f32 %v2578, 0.0001
    %v2581 = vadd.f32 %v2579, 0.0001
    %v2582 = vmul.f32 %v2574, 2.0
    %v2583 = vmul.f32 %v2575, 2.0
    %v2584 = vadd.f32 %v2582, 0.0009
    %v2585 = vadd.f32 %v2583, 0.0009
    %v2586 = vmul.f32 %v2580, %v2584
    %v2587 = vmul.f32 %v2581, %v2585
    %v2588 = vadd.f32 %v2564, %v2568
    %v2589 = vadd.f32 %v2565, %v2569
    %v2590 = vadd.f32 %v2588, 0.0001
    %v2591 = vadd.f32 %v2589, 0.0001
    %v2592 = vadd.f32 %v2566, %v2570
    %v2593 = vadd.f32 %v2567, %v2571
    %v2594 = vadd.f32 %v2592, 0.0009
    %v2595 = vadd.f32 %v2593, 0.0009
    %v2596 = vmul.f32 %v2590, %v2594
    %v2597 = vmul.f32 %v2591, %v2595
    %v2598 = vrcp.pop %v2596
    %v2599 = vmul.f32 %v2586, %v2598
    %v2600 = vrcp.pop %v2597
    %v2601 = vmul.f32 %v2587, %v2600
    %v2602 = vsel %vm1302, %v2599, 0.0
    %v2603 = vsel %vm1302, %v2601, 0.0
    %v2604 = vadd.f32 %v2602, %v2603
    %2605 = vadd.xlane.f32.xlu0 %v2604
    %v2606 = vpop.xlane.xlu0 %2605
    %v2607 = vrot.slane %v2606, 4
    %v2608 = vadd.f32 %v2606, %v2607
    %v2609 = vrot.slane %v2608, 2
    %v2610 = vadd.f32 %v2608, %v2609
    %v2611 = vrot.slane %v2610, 1
    %v2612 = vadd.f32 %v2610, %v2611
    %s2613 = vtos %v2612
    %v2614 = vstv %s2613
    %v2615 = vadd.f32 %v1316, %v2614
    %v2616 = vmul.f32 %v2615, 0.001953125
    %vm2617 = vcmask 0
    %2618 = vst.msk [vmem:[#allocation2] sm:$0x1] %vm2617, %v2616
    // Predicated region
    $region10: #{mmslim_forward.75} parent=1 // pred_check
      _
    $region11: #{mmslim_forward.75} parent=1 // pred_check_branch
      %2620 = sbr.rel (0) target = $region13
    $region12: #{mmslim_forward.75} parent=1 // pred_region
      %s2622 = ssub.s32 16, 16
      %2623 = vsyncadd [#allocation3], %s2622
      %s2625 = sshll.u32 [#allocation2], 4
      %s2626 = int_to_ptr.vmem [resolvable:$true] %s2625
      %2628 = dma.vmem_to_hbm [thread:$0]  %s2626, 16, %s2, [#allocation3]
    $region13: #{mmslim_forward.75} parent=1 // pred_fallthru
      _
    // Predicated region
    $region14: #{mmslim_forward.75} parent=1 // pred_check
      _
    $region15: #{mmslim_forward.75} parent=1 // pred_check_branch
      %2630 = sbr.rel (0) target = $region17
    $region16: #{mmslim_forward.75} parent=1 // pred_region
      %2631 = dma.done [#allocation3], 16
    $region17: #{mmslim_forward.75} parent=1 // pred_fallthru
      _
    %2632 = vsyncpa [#allocation3], 1

</llo_original>
